<compile_context>
chip_gen: v5e
topology: v5e:2x2
jax: 0.10.0
libtpu: 0.0.40
codegen_flags: <defaults>
</compile_context>

<pallas_src>
import functools

import jax
import jax.numpy as jnp
from jax import lax
from jax.experimental import pallas as pl
from jax.experimental.pallas import tpu as pltpu

# ----------------------------- small config ---------------------------------
B = 2             # batch
L = 8             # max_length (seq)
D = 32            # BERT hidden size (small stand-in for 768)
N_LAYERS = 4      # BERT encoder layers; forward uses the last 4 -> 4*D features
FFN = 64          # BERT intermediate size
VOCAB = 100
H_LSTM = 128      # LSTM hidden size (small stand-in for 512), bidirectional -> 2*H
NUM_LABELS = 6
CLS_DIMS = (2 * H_LSTM, 128, 64, 32, NUM_LABELS)   # classifier MLP widths

LB = L * B
GH = 4 * H_LSTM          # per-direction LSTM gate width
OUT_PAD = 128            # lane-padded logits width

# row layout of the packed `vecs` operand (each row 128 lanes, zero-padded)
VEC_EMB_LN_G = 0
VEC_EMB_LN_B = 1
VEC_LAYER0 = 2
VEC_ROWS_PER_LAYER = 6   # [attn_b | ffn_b(bf1|bf2) | ln1_g | ln1_b | ln2_g | ln2_b]
VEC_CLS_B = VEC_LAYER0 + VEC_ROWS_PER_LAYER * N_LAYERS   # 26: then 4 classifier bias rows
VEC_ROWS = VEC_CLS_B + 4                                 # 30

# row layout of the packed classifier weight slab (all blocks 128 lanes wide)
CLS_W1 = 0                       # (256,128) : 2H -> 128
CLS_W2 = CLS_W1 + 2 * H_LSTM     # 256 : (128,128), valid cols 0:64
CLS_W3 = CLS_W2 + 128            # 384 : (128,128), valid rows 0:64, cols 0:32
CLS_W4 = CLS_W3 + 128            # 512 : (128,128), valid rows 0:32, cols 0:6
CLS_ROWS = CLS_W4 + 128          # 640

_VMEM = functools.partial(pl.BlockSpec, memory_space=pltpu.MemorySpace.VMEM)


def _layer_norm(x, gamma, beta, eps=1e-12):
    mu = jnp.mean(x, axis=-1, keepdims=True)
    var = jnp.mean(jnp.square(x - mu), axis=-1, keepdims=True)
    return (x - mu) * lax.rsqrt(var + eps) * gamma + beta


# ------------------- fused BERT + BiLSTM + classifier kernel ------------------
def fused_bert_bilstm_kernel(emb_ref, keybias_ref,
                             attn_w_ref, ffn_w1_ref, ffn_w2_ref, vecs_ref,
                             lstm_wih_ref, lstm_whh_ref, lstm_b_ref, cls_w_ref,
                             out_ref, gx_scr):
    f32 = jnp.float32
    bf16 = jnp.bfloat16
    scale = 1.0 / jnp.sqrt(f32(D))
    NEG = f32(-1e9)

    # ---- attention bias built in-kernel: same-batch block-diagonal + padded keys ----
    ri = lax.broadcasted_iota(jnp.int32, (LB, LB), 0)
    ci = lax.broadcasted_iota(jnp.int32, (LB, LB), 1)
    if (B & (B - 1)) == 0:
        same_batch = (ri & (B - 1)) == (ci & (B - 1))
    else:
        same_batch = (ri % B) == (ci % B)
    mask = jnp.where(same_batch, keybias_ref[...], NEG)          # (LB, LB)

    # ---------------- BERT encoder: N_LAYERS layers, fully unrolled ----------------
    x = _layer_norm(emb_ref[...],
                    vecs_ref[VEC_EMB_LN_G:VEC_EMB_LN_G + 1, :D],
                    vecs_ref[VEC_EMB_LN_B:VEC_EMB_LN_B + 1, :D])  # (LB, D)

    outs = []
    for layer in range(N_LAYERS):
        base = VEC_LAYER0 + VEC_ROWS_PER_LAYER * layer
        w_all = attn_w_ref[layer]                                 # (D, 4D) bf16 [Wq|Wk|Wv|Wo]
        b_all = vecs_ref[base:base + 1, :]                        # (1, 4D) f32

        # full-width projection: one (D,128) matmul, slice q/k/v from the result
        proj = jnp.dot(x.astype(bf16), w_all, preferred_element_type=f32) + b_all
        q = proj[:, :D]
        k = proj[:, D:2 * D]
        v = proj[:, 2 * D:3 * D]

        s = lax.dot_general(q, k, (((1,), (1,)), ((), ())),
                            preferred_element_type=f32) * scale + mask
        s = s - jnp.max(s, axis=-1, keepdims=True)
        p = jnp.exp(s)
        p = p * pl.reciprocal(jnp.sum(p, axis=-1, keepdims=True), approx=True)
        ctx = jnp.dot(p, v, preferred_element_type=f32)           # (LB, D)

        # output projection: full-width matmul against the packed weight, take Wo columns
        attn = (jnp.dot(ctx.astype(bf16), w_all, preferred_element_type=f32)[:, 3 * D:]
                + b_all[:, 3 * D:])

        h = _layer_norm(x + attn,
                        vecs_ref[base + 2:base + 3, :D],
                        vecs_ref[base + 3:base + 4, :D])
        fb = vecs_ref[base + 1:base + 2, :]                       # (1,128): [bf1(64)|bf2(32)|0]
        ff = jax.nn.gelu(jnp.dot(h.astype(bf16), ffn_w1_ref[layer],
                                 preferred_element_type=f32) + fb[:, :FFN],
                         approximate=True)
        ff = jnp.dot(ff.astype(bf16), ffn_w2_ref[layer],
                     preferred_element_type=f32) + fb[:, FFN:FFN + D]
        x = _layer_norm(h + ff,
                        vecs_ref[base + 4:base + 5, :D],
                        vecs_ref[base + 5:base + 6, :D])
        outs.append(x)

    # -------------------------------- BiLSTM ---------------------------------------
    # pooled = cat(hidden_states[-1,-2,-3,-4]); one K=128 input-to-hidden matmul,
    # result staged in VMEM scratch, loaded per step (bounds vreg pressure).
    cat4 = jnp.concatenate([outs[3], outs[2], outs[1], outs[0]], axis=-1)  # (LB, 4D)=(16,128)
    gx_scr[...] = jnp.dot(cat4.astype(bf16), lstm_wih_ref[...],
                          preferred_element_type=f32)                      # (LB, 8H)

    whh = lstm_whh_ref[...]          # (2H, 8H) bf16 block-diag [fwd | bwd], gate cols (i,f,o,g)
    b_cat = lstm_b_ref[...]          # (1, 8H) f32 combined b_ih + b_hh, [fwd | bwd]

    h_cat = jnp.zeros((B, 2 * H_LSTM), f32)
    cf = jnp.zeros((B, H_LSTM), f32)
    cb = jnp.zeros((B, H_LSTM), f32)
    sum_cat = jnp.zeros((B, 2 * H_LSTM), f32)

    def cell(g, c):
        # gate columns reordered to (i,f,o,g): one sigmoid slab + one tanh slab
        sg = jax.nn.sigmoid(g[:, :3 * H_LSTM])
        gt = jnp.tanh(g[:, 3 * H_LSTM:])
        i = sg[:, :H_LSTM]
        f = sg[:, H_LSTM:2 * H_LSTM]
        o = sg[:, 2 * H_LSTM:]
        c_new = f * c + i * gt
        return o * jnp.tanh(c_new), c_new

    # fully unrolled (L static); ONE fused fwd+bwd recurrence matmul per step (K=2H=256)
    for step in range(L):
        t_f = step
        t_b = L - 1 - step
        hh = jnp.dot(h_cat.astype(bf16), whh, preferred_element_type=f32) + b_cat  # (B, 8H)
        gate_f = gx_scr[t_f * B:(t_f + 1) * B, :GH] + hh[:, :GH]
        gate_b = gx_scr[t_b * B:(t_b + 1) * B, GH:] + hh[:, GH:]
        hf, cf = cell(gate_f, cf)
        hb, cb = cell(gate_b, cb)
        h_cat = jnp.concatenate([hf, hb], axis=-1)
        sum_cat = sum_cat + h_cat

    # torch.mean(lstm, 1): mean over time of concat(h_fwd, h_bwd) == concat of means
    fc = sum_cat * f32(1.0 / L)                                   # (B, 2H)

    # ------------------------ classifier MLP (lane-dense, padded to 128) -----------
    b1 = vecs_ref[VEC_CLS_B + 0:VEC_CLS_B + 1, :]
    b2 = vecs_ref[VEC_CLS_B + 1:VEC_CLS_B + 2, :]
    b3 = vecs_ref[VEC_CLS_B + 2:VEC_CLS_B + 3, :]
    b4 = vecs_ref[VEC_CLS_B + 3:VEC_CLS_B + 4, :]
    h1 = jnp.maximum(jnp.dot(fc.astype(bf16), cls_w_ref[CLS_W1:CLS_W2, :],
                             preferred_element_type=f32) + b1, 0.0)
    h2 = jnp.maximum(jnp.dot(h1.astype(bf16), cls_w_ref[CLS_W2:CLS_W3, :],
                             preferred_element_type=f32) + b2, 0.0)
    h3 = jnp.maximum(jnp.dot(h2.astype(bf16), cls_w_ref[CLS_W3:CLS_W4, :],
                             preferred_element_type=f32) + b3, 0.0)
    out_ref[...] = jnp.dot(h3.astype(bf16), cls_w_ref[CLS_W4:CLS_ROWS, :],
                           preferred_element_type=f32) + b4       # (B, 128); lanes 6.. are 0


# ------------------------------- full forward --------------------------------
def bert_classifier_forward(input_ids, attention_mask, packed):
    # Embeddings (gather lookups stay in plain JAX glue).
    emb = (jnp.take(packed['word_emb'], input_ids, axis=0)
           + packed['pos_emb'][None, :, :]
           + packed['type_emb'][0][None, None, :])                 # (B, L, D)
    emb_tm = jnp.transpose(emb, (1, 0, 2)).reshape(LB, D)          # row = t*B + b

    # (1, L*B) additive key bias (0 for valid keys, -1e9 for padded); batch block-diagonal
    # structure is generated inside the kernel from iota.
    am = attention_mask.astype(jnp.float32)                        # (B, L)
    keybias = ((1.0 - am) * jnp.float32(-1e9)).T.reshape(1, LB)    # col = t*B + b

    args = (emb_tm, keybias,
            packed['attn_w'], packed['ffn_w1'], packed['ffn_w2'], packed['vecs'],
            packed['lstm_wih'], packed['lstm_whh'], packed['lstm_b'], packed['cls_w'])
    logits_pad = pl.pallas_call(
        fused_bert_bilstm_kernel,
        out_shape=jax.ShapeDtypeStruct((B, OUT_PAD), jnp.float32),
        in_specs=[_VMEM() for _ in args],
        out_specs=_VMEM(),
        scratch_shapes=[pltpu.VMEM((LB, 2 * GH), jnp.float32)],
    )(*args)
    return logits_pad[:, :NUM_LABELS]


# ------------------------------ parameter init --------------------------------
def init_params(key):
    """Canonical (PyTorch-like) parameter structure with deterministic init."""
    ks = iter(jax.random.split(key, 128))
    f32 = jnp.float32

    def nrm(shape, scale=0.02):
        return (scale * jax.random.normal(next(ks), shape)).astype(f32)

    params = {
        'word_emb': nrm((VOCAB, D)),
        'pos_emb': nrm((L, D)),
        'type_emb': nrm((2, D)),
        'emb_ln_g': jnp.ones((1, D), f32),
        'emb_ln_b': jnp.zeros((1, D), f32),
        'layers': [],
    }
    for _ in range(N_LAYERS):
        params['layers'].append({
            'wq': nrm((D, D)), 'bq': jnp.zeros((1, D), f32),
            'wk': nrm((D, D)), 'bk': jnp.zeros((1, D), f32),
            'wv': nrm((D, D)), 'bv': jnp.zeros((1, D), f32),
            'wo': nrm((D, D)), 'bo': jnp.zeros((1, D), f32),
            'ln1_g': jnp.ones((1, D), f32), 'ln1_b': jnp.zeros((1, D), f32),
            'wf1': nrm((D, FFN)), 'bf1': jnp.zeros((1, FFN), f32),
            'wf2': nrm((FFN, D)), 'bf2': jnp.zeros((1, D), f32),
            'ln2_g': jnp.ones((1, D), f32), 'ln2_b': jnp.zeros((1, D), f32),
        })
    # LSTM weights stored transposed, gate columns in PyTorch order (i, f, g, o);
    # biases are the combined b_ih + b_hh.
    params['lstm'] = {
        'wih_f': nrm((4 * D, 4 * H_LSTM), 0.05),
        'whh_f': nrm((H_LSTM, 4 * H_LSTM), 0.05),
        'b_f':   jnp.zeros((1, 4 * H_LSTM), f32),
        'wih_b': nrm((4 * D, 4 * H_LSTM), 0.05),
        'whh_b': nrm((H_LSTM, 4 * H_LSTM), 0.05),
        'b_b':   jnp.zeros((1, 4 * H_LSTM), f32),
    }
    cls = []
    for i in range(4):
        cls.append(nrm((CLS_DIMS[i], CLS_DIMS[i + 1]), 0.05))
        cls.append(jnp.zeros((1, CLS_DIMS[i + 1]), jnp.float32))
    params['cls'] = tuple(cls)
    return params


def pack_params(p):
    """Pack / stack parameters into the kernel-ready layout (done once, off-path)."""
    f32 = jnp.float32
    bf16 = jnp.bfloat16

    def padrow(v, width=128):
        return jnp.pad(v, ((0, 0), (0, width - v.shape[1])))

    # stacked encoder weights (bf16 MXU path)
    attn_w = jnp.stack([jnp.concatenate([lp['wq'], lp['wk'], lp['wv'], lp['wo']], axis=-1)
                        for lp in p['layers']]).astype(bf16)               # (N, D, 4D)
    ffn_w1 = jnp.stack([lp['wf1'] for lp in p['layers']]).astype(bf16)     # (N, D, FFN)
    ffn_w2 = jnp.stack([lp['wf2'] for lp in p['layers']]).astype(bf16)     # (N, FFN, D)

    # one f32 slab of all small bias / LN vectors (VPU path stays f32)
    rows = [padrow(p['emb_ln_g']), padrow(p['emb_ln_b'])]
    for lp in p['layers']:
        rows.append(jnp.concatenate([lp['bq'], lp['bk'], lp['bv'], lp['bo']], axis=-1))
        rows.append(padrow(jnp.concatenate([lp['bf1'], lp['bf2']], axis=-1)))
        rows += [padrow(lp['ln1_g']), padrow(lp['ln1_b']),
                 padrow(lp['ln2_g']), padrow(lp['ln2_b'])]
    cls = p['cls']
    rows += [padrow(cls[1]), padrow(cls[3]), padrow(cls[5]), padrow(cls[7])]
    vecs = jnp.concatenate(rows, axis=0).astype(f32)                       # (VEC_ROWS, 128)
    assert vecs.shape == (VEC_ROWS, 128), vecs.shape

    # LSTM: gate columns (i,f,g,o) -> (i,f,o,g); W_ih as one (4D, 8H) slab (K=128 matmul),
    # W_hh as a block-diagonal (2H, 8H) so fwd+bwd recurrence is one matmul per step.
    def reorder(w):
        i, f, g, o = jnp.split(w, 4, axis=-1)
        return jnp.concatenate([i, f, o, g], axis=-1)

    lp = p['lstm']
    lstm_wih = jnp.concatenate([reorder(lp['wih_f']), reorder(lp['wih_b'])],
                               axis=-1).astype(bf16)                       # (4D, 8H)
    z = jnp.zeros((H_LSTM, GH), f32)
    lstm_whh = jnp.concatenate(
        [jnp.concatenate([reorder(lp['whh_f']), z], axis=-1),
         jnp.concatenate([z, reorder(lp['whh_b'])], axis=-1)],
        axis=0).astype(bf16)                                               # (2H, 8H)
    lstm_b = jnp.concatenate([reorder(lp['b_f']), reorder(lp['b_b'])],
                             axis=-1).astype(f32)                          # (1, 8H)

    # classifier weights: one lane-dense (640,128) slab; padded rows/cols are zero so the
    # padded lanes of every hidden activation stay exactly zero through the ReLU MLP.
    def padw(w, rows_to=128, cols_to=128):
        return jnp.pad(w, ((0, rows_to - w.shape[0]), (0, cols_to - w.shape[1])))

    cls_w = jnp.concatenate([cls[0], padw(cls[2]), padw(cls[4]), padw(cls[6])],
                            axis=0).astype(bf16)                           # (CLS_ROWS, 128)
    assert cls_w.shape == (CLS_ROWS, 128), cls_w.shape

    return {
        'word_emb': p['word_emb'], 'pos_emb': p['pos_emb'], 'type_emb': p['type_emb'],
        'attn_w': attn_w, 'ffn_w1': ffn_w1, 'ffn_w2': ffn_w2, 'vecs': vecs,
        'lstm_wih': lstm_wih, 'lstm_whh': lstm_whh, 'lstm_b': lstm_b, 'cls_w': cls_w,
    }


if __name__ == "__main__":
    key = jax.random.PRNGKey(0)
    pkey, dkey = jax.random.split(key)
    params = init_params(pkey)
    packed = pack_params(params)

    input_ids = jax.random.randint(dkey, (B, L), 0, VOCAB, dtype=jnp.int32)
    attention_mask = jnp.ones((B, L), dtype=jnp.int32).at[1, L - 2:].set(0)

    logits = jax.jit(bert_classifier_forward)(input_ids, attention_mask, packed)
    logits = jax.block_until_ready(logits)

    assert logits.shape == (B, NUM_LABELS), logits.shape
    assert bool(jnp.all(jnp.isfinite(logits)))
    print("KERNEL_OK")
</pallas_src>

<mosaic_0001>
module attributes {stable_mosaic.version = 11 : i64} {
  func.func @fused_bert_bilstm_kernel(%arg0: memref<16x32xf32, #tpu.memory_space<vmem>>, %arg1: memref<1x16xf32, #tpu.memory_space<vmem>>, %arg2: memref<4x32x128xbf16, #tpu.memory_space<vmem>>, %arg3: memref<4x32x64xbf16, #tpu.memory_space<vmem>>, %arg4: memref<4x64x32xbf16, #tpu.memory_space<vmem>>, %arg5: memref<30x128xf32, #tpu.memory_space<vmem>>, %arg6: memref<128x1024xbf16, #tpu.memory_space<vmem>>, %arg7: memref<256x1024xbf16, #tpu.memory_space<vmem>>, %arg8: memref<1x1024xf32, #tpu.memory_space<vmem>>, %arg9: memref<640x128xbf16, #tpu.memory_space<vmem>>, %arg10: memref<2x128xf32, #tpu.memory_space<vmem>>, %arg11: memref<16x1024xf32, #tpu.memory_space<vmem>>) attributes {dimension_semantics = [], scalar_prefetch = 0 : i64, scratch_operands = 1 : i64, tpu.core_type = #tpu.core_type<tc>} {
    %cst = arith.constant 3.200000e+01 : f32
    %0 = math.sqrt %cst : f32
    %cst_0 = arith.constant 1.000000e+00 : f32
    %1 = arith.divf %cst_0, %0 : f32
    %2 = tpu.iota {dimensions = array<i32: 0>} : vector<16x16xi32>
    %3 = tpu.iota {dimensions = array<i32: 1>} : vector<16x16xi32>
    %c1_i32 = arith.constant 1 : i32
    %4 = vector.broadcast %c1_i32 : i32 to vector<16x16xi32>
    %5 = arith.andi %2, %4 : vector<16x16xi32>
    %c1_i32_1 = arith.constant 1 : i32
    %6 = vector.broadcast %c1_i32_1 : i32 to vector<16x16xi32>
    %7 = arith.andi %3, %6 : vector<16x16xi32>
    %8 = arith.cmpi eq, %5, %7 : vector<16x16xi32>
    %c0 = arith.constant 0 : index
    %c0_2 = arith.constant 0 : index
    %9 = vector.load %arg1[%c0, %c0_2] : memref<1x16xf32, #tpu.memory_space<vmem>>, vector<1x16xf32>
    %cst_3 = arith.constant -1.000000e+09 : f32
    %10 = vector.shape_cast %9 : vector<1x16xf32> to vector<1x16xf32>
    %11 = vector.broadcast %10 : vector<1x16xf32> to vector<16x16xf32>
    %12 = vector.broadcast %cst_3 : f32 to vector<16x16xf32>
    %13 = arith.select %8, %11, %12 : vector<16x16xi1>, vector<16x16xf32>
    %c0_4 = arith.constant 0 : index
    %c0_5 = arith.constant 0 : index
    %14 = vector.load %arg0[%c0_4, %c0_5] : memref<16x32xf32, #tpu.memory_space<vmem>>, vector<16x32xf32>
    %c0_6 = arith.constant 0 : index
    %c0_7 = arith.constant 0 : index
    %15 = vector.load %arg5[%c0_6, %c0_7] : memref<30x128xf32, #tpu.memory_space<vmem>>, vector<1x32xf32>
    %c1 = arith.constant 1 : index
    %c0_8 = arith.constant 0 : index
    %16 = vector.load %arg5[%c1, %c0_8] : memref<30x128xf32, #tpu.memory_space<vmem>>, vector<1x32xf32>
    %cst_9 = arith.constant dense<0.000000e+00> : vector<16xf32>
    %17 = vector.multi_reduction <add>, %14, %cst_9 [1] : vector<16x32xf32> to vector<16xf32>
    %18 = vector.shape_cast %17 : vector<16xf32> to vector<16x1xf32>
    %cst_10 = arith.constant 3.200000e+01 : f32
    %19 = vector.broadcast %cst_10 : f32 to vector<16x1xf32>
    %20 = arith.divf %18, %19 : vector<16x1xf32>
    %21 = vector.broadcast %20 : vector<16x1xf32> to vector<16x32xf32>
    %22 = arith.subf %14, %21 : vector<16x32xf32>
    %23 = arith.mulf %22, %22 : vector<16x32xf32>
    %cst_11 = arith.constant dense<0.000000e+00> : vector<16xf32>
    %24 = vector.multi_reduction <add>, %23, %cst_11 [1] : vector<16x32xf32> to vector<16xf32>
    %25 = vector.shape_cast %24 : vector<16xf32> to vector<16x1xf32>
    %cst_12 = arith.constant 3.200000e+01 : f32
    %26 = vector.broadcast %cst_12 : f32 to vector<16x1xf32>
    %27 = arith.divf %25, %26 : vector<16x1xf32>
    %28 = vector.broadcast %20 : vector<16x1xf32> to vector<16x32xf32>
    %29 = arith.subf %14, %28 : vector<16x32xf32>
    %cst_13 = arith.constant 9.99999996E-13 : f32
    %30 = vector.broadcast %cst_13 : f32 to vector<16x1xf32>
    %31 = arith.addf %27, %30 : vector<16x1xf32>
    %32 = math.rsqrt %31 : vector<16x1xf32>
    %33 = vector.broadcast %32 : vector<16x1xf32> to vector<16x32xf32>
    %34 = arith.mulf %29, %33 : vector<16x32xf32>
    %35 = vector.broadcast %15 : vector<1x32xf32> to vector<16x32xf32>
    %36 = arith.mulf %34, %35 : vector<16x32xf32>
    %37 = vector.broadcast %16 : vector<1x32xf32> to vector<16x32xf32>
    %38 = arith.addf %36, %37 : vector<16x32xf32>
    %c0_14 = arith.constant 0 : index
    %c0_15 = arith.constant 0 : index
    %c0_16 = arith.constant 0 : index
    %39 = vector.load %arg2[%c0_14, %c0_15, %c0_16] : memref<4x32x128xbf16, #tpu.memory_space<vmem>>, vector<1x32x128xbf16>
    %40 = vector.shape_cast %39 : vector<1x32x128xbf16> to vector<32x128xbf16>
    %c2 = arith.constant 2 : index
    %c0_17 = arith.constant 0 : index
    %41 = vector.load %arg5[%c2, %c0_17] : memref<30x128xf32, #tpu.memory_space<vmem>>, vector<1x128xf32>
    %42 = arith.truncf %38 : vector<16x32xf32> to vector<16x32xbf16>
    %cst_18 = arith.constant dense<0.000000e+00> : vector<16x128xf32>
    %43 = tpu.matmul %42, %40, %cst_18 {dimension_numbers = #tpu.dot_dimension_numbers<[1], [0], [0], [1], [0, 0, 1, 1], [], []>} : vector<16x32xbf16>, vector<32x128xbf16>, vector<16x128xf32> -> vector<16x128xf32>
    %44 = vector.broadcast %41 : vector<1x128xf32> to vector<16x128xf32>
    %45 = arith.addf %43, %44 : vector<16x128xf32>
    %46 = vector.extract_strided_slice %45 {offsets = [0, 0], sizes = [16, 32], strides = [1, 1]} : vector<16x128xf32> to vector<16x32xf32>
    %47 = vector.extract_strided_slice %45 {offsets = [0, 32], sizes = [16, 32], strides = [1, 1]} : vector<16x128xf32> to vector<16x32xf32>
    %48 = vector.extract_strided_slice %45 {offsets = [0, 64], sizes = [16, 32], strides = [1, 1]} : vector<16x128xf32> to vector<16x32xf32>
    %cst_19 = arith.constant dense<0.000000e+00> : vector<16x16xf32>
    %49 = tpu.matmul %46, %47, %cst_19 {dimension_numbers = #tpu.dot_dimension_numbers<[1], [1], [0], [0], [0, 0, 1, 0], [], []>} : vector<16x32xf32>, vector<16x32xf32>, vector<16x16xf32> -> vector<16x16xf32>
    %50 = vector.broadcast %1 : f32 to vector<16x16xf32>
    %51 = arith.mulf %49, %50 : vector<16x16xf32>
    %52 = arith.addf %51, %13 : vector<16x16xf32>
    %cst_20 = arith.constant dense<0xFF800000> : vector<16xf32>
    %53 = vector.multi_reduction <maximumf>, %52, %cst_20 [1] : vector<16x16xf32> to vector<16xf32>
    %54 = vector.shape_cast %53 : vector<16xf32> to vector<16x1xf32>
    %55 = vector.broadcast %54 : vector<16x1xf32> to vector<16x16xf32>
    %56 = arith.subf %52, %55 : vector<16x16xf32>
    %57 = math.exp %56 : vector<16x16xf32>
    %cst_21 = arith.constant dense<0.000000e+00> : vector<16xf32>
    %58 = vector.multi_reduction <add>, %57, %cst_21 [1] : vector<16x16xf32> to vector<16xf32>
    %59 = vector.shape_cast %58 : vector<16xf32> to vector<16x1xf32>
    %60 = tpu.reciprocal %59 {approx = true} : vector<16x1xf32> -> vector<16x1xf32>
    %61 = vector.broadcast %60 : vector<16x1xf32> to vector<16x16xf32>
    %62 = arith.mulf %57, %61 : vector<16x16xf32>
    %cst_22 = arith.constant dense<0.000000e+00> : vector<16x32xf32>
    %63 = tpu.matmul %62, %48, %cst_22 {dimension_numbers = #tpu.dot_dimension_numbers<[1], [0], [0], [1], [0, 0, 1, 1], [], []>} : vector<16x16xf32>, vector<16x32xf32>, vector<16x32xf32> -> vector<16x32xf32>
    %64 = arith.truncf %63 : vector<16x32xf32> to vector<16x32xbf16>
    %cst_23 = arith.constant dense<0.000000e+00> : vector<16x128xf32>
    %65 = tpu.matmul %64, %40, %cst_23 {dimension_numbers = #tpu.dot_dimension_numbers<[1], [0], [0], [1], [0, 0, 1, 1], [], []>} : vector<16x32xbf16>, vector<32x128xbf16>, vector<16x128xf32> -> vector<16x128xf32>
    %66 = vector.extract_strided_slice %65 {offsets = [0, 96], sizes = [16, 32], strides = [1, 1]} : vector<16x128xf32> to vector<16x32xf32>
    %67 = vector.extract_strided_slice %41 {offsets = [0, 96], sizes = [1, 32], strides = [1, 1]} : vector<1x128xf32> to vector<1x32xf32>
    %68 = vector.broadcast %67 : vector<1x32xf32> to vector<16x32xf32>
    %69 = arith.addf %66, %68 : vector<16x32xf32>
    %70 = arith.addf %38, %69 : vector<16x32xf32>
    %c4 = arith.constant 4 : index
    %c0_24 = arith.constant 0 : index
    %71 = vector.load %arg5[%c4, %c0_24] : memref<30x128xf32, #tpu.memory_space<vmem>>, vector<1x32xf32>
    %c5 = arith.constant 5 : index
    %c0_25 = arith.constant 0 : index
    %72 = vector.load %arg5[%c5, %c0_25] : memref<30x128xf32, #tpu.memory_space<vmem>>, vector<1x32xf32>
    %cst_26 = arith.constant dense<0.000000e+00> : vector<16xf32>
    %73 = vector.multi_reduction <add>, %70, %cst_26 [1] : vector<16x32xf32> to vector<16xf32>
    %74 = vector.shape_cast %73 : vector<16xf32> to vector<16x1xf32>
    %cst_27 = arith.constant 3.200000e+01 : f32
    %75 = vector.broadcast %cst_27 : f32 to vector<16x1xf32>
    %76 = arith.divf %74, %75 : vector<16x1xf32>
    %77 = vector.broadcast %76 : vector<16x1xf32> to vector<16x32xf32>
    %78 = arith.subf %70, %77 : vector<16x32xf32>
    %79 = arith.mulf %78, %78 : vector<16x32xf32>
    %cst_28 = arith.constant dense<0.000000e+00> : vector<16xf32>
    %80 = vector.multi_reduction <add>, %79, %cst_28 [1] : vector<16x32xf32> to vector<16xf32>
    %81 = vector.shape_cast %80 : vector<16xf32> to vector<16x1xf32>
    %cst_29 = arith.constant 3.200000e+01 : f32
    %82 = vector.broadcast %cst_29 : f32 to vector<16x1xf32>
    %83 = arith.divf %81, %82 : vector<16x1xf32>
    %84 = vector.broadcast %76 : vector<16x1xf32> to vector<16x32xf32>
    %85 = arith.subf %70, %84 : vector<16x32xf32>
    %cst_30 = arith.constant 9.99999996E-13 : f32
    %86 = vector.broadcast %cst_30 : f32 to vector<16x1xf32>
    %87 = arith.addf %83, %86 : vector<16x1xf32>
    %88 = math.rsqrt %87 : vector<16x1xf32>
    %89 = vector.broadcast %88 : vector<16x1xf32> to vector<16x32xf32>
    %90 = arith.mulf %85, %89 : vector<16x32xf32>
    %91 = vector.broadcast %71 : vector<1x32xf32> to vector<16x32xf32>
    %92 = arith.mulf %90, %91 : vector<16x32xf32>
    %93 = vector.broadcast %72 : vector<1x32xf32> to vector<16x32xf32>
    %94 = arith.addf %92, %93 : vector<16x32xf32>
    %c3 = arith.constant 3 : index
    %c0_31 = arith.constant 0 : index
    %95 = vector.load %arg5[%c3, %c0_31] : memref<30x128xf32, #tpu.memory_space<vmem>>, vector<1x128xf32>
    %96 = arith.truncf %94 : vector<16x32xf32> to vector<16x32xbf16>
    %c0_32 = arith.constant 0 : index
    %c0_33 = arith.constant 0 : index
    %c0_34 = arith.constant 0 : index
    %97 = vector.load %arg3[%c0_32, %c0_33, %c0_34] : memref<4x32x64xbf16, #tpu.memory_space<vmem>>, vector<1x32x64xbf16>
    %98 = vector.shape_cast %97 : vector<1x32x64xbf16> to vector<32x64xbf16>
    %cst_35 = arith.constant dense<0.000000e+00> : vector<16x64xf32>
    %99 = tpu.matmul %96, %98, %cst_35 {dimension_numbers = #tpu.dot_dimension_numbers<[1], [0], [0], [1], [0, 0, 1, 1], [], []>} : vector<16x32xbf16>, vector<32x64xbf16>, vector<16x64xf32> -> vector<16x64xf32>
    %100 = vector.extract_strided_slice %95 {offsets = [0, 0], sizes = [1, 64], strides = [1, 1]} : vector<1x128xf32> to vector<1x64xf32>
    %101 = vector.broadcast %100 : vector<1x64xf32> to vector<16x64xf32>
    %102 = arith.addf %99, %101 : vector<16x64xf32>
    %103 = arith.mulf %102, %102 : vector<16x64xf32>
    %104 = arith.mulf %102, %103 : vector<16x64xf32>
    %cst_36 = arith.constant 4.471500e-02 : f32
    %105 = vector.broadcast %cst_36 : f32 to vector<16x64xf32>
    %106 = arith.mulf %105, %104 : vector<16x64xf32>
    %107 = arith.addf %102, %106 : vector<16x64xf32>
    %cst_37 = arith.constant 0.797884583 : f32
    %108 = vector.broadcast %cst_37 : f32 to vector<16x64xf32>
    %109 = arith.mulf %108, %107 : vector<16x64xf32>
    %110 = math.tanh %109 : vector<16x64xf32>
    %cst_38 = arith.constant 1.000000e+00 : f32
    %111 = vector.broadcast %cst_38 : f32 to vector<16x64xf32>
    %112 = arith.addf %111, %110 : vector<16x64xf32>
    %cst_39 = arith.constant 5.000000e-01 : f32
    %113 = vector.broadcast %cst_39 : f32 to vector<16x64xf32>
    %114 = arith.mulf %113, %112 : vector<16x64xf32>
    %115 = arith.mulf %102, %114 : vector<16x64xf32>
    %116 = arith.truncf %115 : vector<16x64xf32> to vector<16x64xbf16>
    %c0_40 = arith.constant 0 : index
    %c0_41 = arith.constant 0 : index
    %c0_42 = arith.constant 0 : index
    %117 = vector.load %arg4[%c0_40, %c0_41, %c0_42] : memref<4x64x32xbf16, #tpu.memory_space<vmem>>, vector<1x64x32xbf16>
    %118 = vector.shape_cast %117 : vector<1x64x32xbf16> to vector<64x32xbf16>
    %cst_43 = arith.constant dense<0.000000e+00> : vector<16x32xf32>
    %119 = tpu.matmul %116, %118, %cst_43 {dimension_numbers = #tpu.dot_dimension_numbers<[1], [0], [0], [1], [0, 0, 1, 1], [], []>} : vector<16x64xbf16>, vector<64x32xbf16>, vector<16x32xf32> -> vector<16x32xf32>
    %120 = vector.extract_strided_slice %95 {offsets = [0, 64], sizes = [1, 32], strides = [1, 1]} : vector<1x128xf32> to vector<1x32xf32>
    %121 = vector.broadcast %120 : vector<1x32xf32> to vector<16x32xf32>
    %122 = arith.addf %119, %121 : vector<16x32xf32>
    %123 = arith.addf %94, %122 : vector<16x32xf32>
    %c6 = arith.constant 6 : index
    %c0_44 = arith.constant 0 : index
    %124 = vector.load %arg5[%c6, %c0_44] : memref<30x128xf32, #tpu.memory_space<vmem>>, vector<1x32xf32>
    %c7 = arith.constant 7 : index
    %c0_45 = arith.constant 0 : index
    %125 = vector.load %arg5[%c7, %c0_45] : memref<30x128xf32, #tpu.memory_space<vmem>>, vector<1x32xf32>
    %cst_46 = arith.constant dense<0.000000e+00> : vector<16xf32>
    %126 = vector.multi_reduction <add>, %123, %cst_46 [1] : vector<16x32xf32> to vector<16xf32>
    %127 = vector.shape_cast %126 : vector<16xf32> to vector<16x1xf32>
    %cst_47 = arith.constant 3.200000e+01 : f32
    %128 = vector.broadcast %cst_47 : f32 to vector<16x1xf32>
    %129 = arith.divf %127, %128 : vector<16x1xf32>
    %130 = vector.broadcast %129 : vector<16x1xf32> to vector<16x32xf32>
    %131 = arith.subf %123, %130 : vector<16x32xf32>
    %132 = arith.mulf %131, %131 : vector<16x32xf32>
    %cst_48 = arith.constant dense<0.000000e+00> : vector<16xf32>
    %133 = vector.multi_reduction <add>, %132, %cst_48 [1] : vector<16x32xf32> to vector<16xf32>
    %134 = vector.shape_cast %133 : vector<16xf32> to vector<16x1xf32>
    %cst_49 = arith.constant 3.200000e+01 : f32
    %135 = vector.broadcast %cst_49 : f32 to vector<16x1xf32>
    %136 = arith.divf %134, %135 : vector<16x1xf32>
    %137 = vector.broadcast %129 : vector<16x1xf32> to vector<16x32xf32>
    %138 = arith.subf %123, %137 : vector<16x32xf32>
    %cst_50 = arith.constant 9.99999996E-13 : f32
    %139 = vector.broadcast %cst_50 : f32 to vector<16x1xf32>
    %140 = arith.addf %136, %139 : vector<16x1xf32>
    %141 = math.rsqrt %140 : vector<16x1xf32>
    %142 = vector.broadcast %141 : vector<16x1xf32> to vector<16x32xf32>
    %143 = arith.mulf %138, %142 : vector<16x32xf32>
    %144 = vector.broadcast %124 : vector<1x32xf32> to vector<16x32xf32>
    %145 = arith.mulf %143, %144 : vector<16x32xf32>
    %146 = vector.broadcast %125 : vector<1x32xf32> to vector<16x32xf32>
    %147 = arith.addf %145, %146 : vector<16x32xf32>
    %c1_51 = arith.constant 1 : index
    %c0_52 = arith.constant 0 : index
    %c0_53 = arith.constant 0 : index
    %148 = vector.load %arg2[%c1_51, %c0_52, %c0_53] : memref<4x32x128xbf16, #tpu.memory_space<vmem>>, vector<1x32x128xbf16>
    %149 = vector.shape_cast %148 : vector<1x32x128xbf16> to vector<32x128xbf16>
    %c8 = arith.constant 8 : index
    %c0_54 = arith.constant 0 : index
    %150 = vector.load %arg5[%c8, %c0_54] : memref<30x128xf32, #tpu.memory_space<vmem>>, vector<1x128xf32>
    %151 = arith.truncf %147 : vector<16x32xf32> to vector<16x32xbf16>
    %cst_55 = arith.constant dense<0.000000e+00> : vector<16x128xf32>
    %152 = tpu.matmul %151, %149, %cst_55 {dimension_numbers = #tpu.dot_dimension_numbers<[1], [0], [0], [1], [0, 0, 1, 1], [], []>} : vector<16x32xbf16>, vector<32x128xbf16>, vector<16x128xf32> -> vector<16x128xf32>
    %153 = vector.broadcast %150 : vector<1x128xf32> to vector<16x128xf32>
    %154 = arith.addf %152, %153 : vector<16x128xf32>
    %155 = vector.extract_strided_slice %154 {offsets = [0, 0], sizes = [16, 32], strides = [1, 1]} : vector<16x128xf32> to vector<16x32xf32>
    %156 = vector.extract_strided_slice %154 {offsets = [0, 32], sizes = [16, 32], strides = [1, 1]} : vector<16x128xf32> to vector<16x32xf32>
    %157 = vector.extract_strided_slice %154 {offsets = [0, 64], sizes = [16, 32], strides = [1, 1]} : vector<16x128xf32> to vector<16x32xf32>
    %cst_56 = arith.constant dense<0.000000e+00> : vector<16x16xf32>
    %158 = tpu.matmul %155, %156, %cst_56 {dimension_numbers = #tpu.dot_dimension_numbers<[1], [1], [0], [0], [0, 0, 1, 0], [], []>} : vector<16x32xf32>, vector<16x32xf32>, vector<16x16xf32> -> vector<16x16xf32>
    %159 = vector.broadcast %1 : f32 to vector<16x16xf32>
    %160 = arith.mulf %158, %159 : vector<16x16xf32>
    %161 = arith.addf %160, %13 : vector<16x16xf32>
    %cst_57 = arith.constant dense<0xFF800000> : vector<16xf32>
    %162 = vector.multi_reduction <maximumf>, %161, %cst_57 [1] : vector<16x16xf32> to vector<16xf32>
    %163 = vector.shape_cast %162 : vector<16xf32> to vector<16x1xf32>
    %164 = vector.broadcast %163 : vector<16x1xf32> to vector<16x16xf32>
    %165 = arith.subf %161, %164 : vector<16x16xf32>
    %166 = math.exp %165 : vector<16x16xf32>
    %cst_58 = arith.constant dense<0.000000e+00> : vector<16xf32>
    %167 = vector.multi_reduction <add>, %166, %cst_58 [1] : vector<16x16xf32> to vector<16xf32>
    %168 = vector.shape_cast %167 : vector<16xf32> to vector<16x1xf32>
    %169 = tpu.reciprocal %168 {approx = true} : vector<16x1xf32> -> vector<16x1xf32>
    %170 = vector.broadcast %169 : vector<16x1xf32> to vector<16x16xf32>
    %171 = arith.mulf %166, %170 : vector<16x16xf32>
    %cst_59 = arith.constant dense<0.000000e+00> : vector<16x32xf32>
    %172 = tpu.matmul %171, %157, %cst_59 {dimension_numbers = #tpu.dot_dimension_numbers<[1], [0], [0], [1], [0, 0, 1, 1], [], []>} : vector<16x16xf32>, vector<16x32xf32>, vector<16x32xf32> -> vector<16x32xf32>
    %173 = arith.truncf %172 : vector<16x32xf32> to vector<16x32xbf16>
    %cst_60 = arith.constant dense<0.000000e+00> : vector<16x128xf32>
    %174 = tpu.matmul %173, %149, %cst_60 {dimension_numbers = #tpu.dot_dimension_numbers<[1], [0], [0], [1], [0, 0, 1, 1], [], []>} : vector<16x32xbf16>, vector<32x128xbf16>, vector<16x128xf32> -> vector<16x128xf32>
    %175 = vector.extract_strided_slice %174 {offsets = [0, 96], sizes = [16, 32], strides = [1, 1]} : vector<16x128xf32> to vector<16x32xf32>
    %176 = vector.extract_strided_slice %150 {offsets = [0, 96], sizes = [1, 32], strides = [1, 1]} : vector<1x128xf32> to vector<1x32xf32>
    %177 = vector.broadcast %176 : vector<1x32xf32> to vector<16x32xf32>
    %178 = arith.addf %175, %177 : vector<16x32xf32>
    %179 = arith.addf %147, %178 : vector<16x32xf32>
    %c10 = arith.constant 10 : index
    %c0_61 = arith.constant 0 : index
    %180 = vector.load %arg5[%c10, %c0_61] : memref<30x128xf32, #tpu.memory_space<vmem>>, vector<1x32xf32>
    %c11 = arith.constant 11 : index
    %c0_62 = arith.constant 0 : index
    %181 = vector.load %arg5[%c11, %c0_62] : memref<30x128xf32, #tpu.memory_space<vmem>>, vector<1x32xf32>
    %cst_63 = arith.constant dense<0.000000e+00> : vector<16xf32>
    %182 = vector.multi_reduction <add>, %179, %cst_63 [1] : vector<16x32xf32> to vector<16xf32>
    %183 = vector.shape_cast %182 : vector<16xf32> to vector<16x1xf32>
    %cst_64 = arith.constant 3.200000e+01 : f32
    %184 = vector.broadcast %cst_64 : f32 to vector<16x1xf32>
    %185 = arith.divf %183, %184 : vector<16x1xf32>
    %186 = vector.broadcast %185 : vector<16x1xf32> to vector<16x32xf32>
    %187 = arith.subf %179, %186 : vector<16x32xf32>
    %188 = arith.mulf %187, %187 : vector<16x32xf32>
    %cst_65 = arith.constant dense<0.000000e+00> : vector<16xf32>
    %189 = vector.multi_reduction <add>, %188, %cst_65 [1] : vector<16x32xf32> to vector<16xf32>
    %190 = vector.shape_cast %189 : vector<16xf32> to vector<16x1xf32>
    %cst_66 = arith.constant 3.200000e+01 : f32
    %191 = vector.broadcast %cst_66 : f32 to vector<16x1xf32>
    %192 = arith.divf %190, %191 : vector<16x1xf32>
    %193 = vector.broadcast %185 : vector<16x1xf32> to vector<16x32xf32>
    %194 = arith.subf %179, %193 : vector<16x32xf32>
    %cst_67 = arith.constant 9.99999996E-13 : f32
    %195 = vector.broadcast %cst_67 : f32 to vector<16x1xf32>
    %196 = arith.addf %192, %195 : vector<16x1xf32>
    %197 = math.rsqrt %196 : vector<16x1xf32>
    %198 = vector.broadcast %197 : vector<16x1xf32> to vector<16x32xf32>
    %199 = arith.mulf %194, %198 : vector<16x32xf32>
    %200 = vector.broadcast %180 : vector<1x32xf32> to vector<16x32xf32>
    %201 = arith.mulf %199, %200 : vector<16x32xf32>
    %202 = vector.broadcast %181 : vector<1x32xf32> to vector<16x32xf32>
    %203 = arith.addf %201, %202 : vector<16x32xf32>
    %c9 = arith.constant 9 : index
    %c0_68 = arith.constant 0 : index
    %204 = vector.load %arg5[%c9, %c0_68] : memref<30x128xf32, #tpu.memory_space<vmem>>, vector<1x128xf32>
    %205 = arith.truncf %203 : vector<16x32xf32> to vector<16x32xbf16>
    %c1_69 = arith.constant 1 : index
    %c0_70 = arith.constant 0 : index
    %c0_71 = arith.constant 0 : index
    %206 = vector.load %arg3[%c1_69, %c0_70, %c0_71] : memref<4x32x64xbf16, #tpu.memory_space<vmem>>, vector<1x32x64xbf16>
    %207 = vector.shape_cast %206 : vector<1x32x64xbf16> to vector<32x64xbf16>
    %cst_72 = arith.constant dense<0.000000e+00> : vector<16x64xf32>
    %208 = tpu.matmul %205, %207, %cst_72 {dimension_numbers = #tpu.dot_dimension_numbers<[1], [0], [0], [1], [0, 0, 1, 1], [], []>} : vector<16x32xbf16>, vector<32x64xbf16>, vector<16x64xf32> -> vector<16x64xf32>
    %209 = vector.extract_strided_slice %204 {offsets = [0, 0], sizes = [1, 64], strides = [1, 1]} : vector<1x128xf32> to vector<1x64xf32>
    %210 = vector.broadcast %209 : vector<1x64xf32> to vector<16x64xf32>
    %211 = arith.addf %208, %210 : vector<16x64xf32>
    %212 = arith.mulf %211, %211 : vector<16x64xf32>
    %213 = arith.mulf %211, %212 : vector<16x64xf32>
    %cst_73 = arith.constant 4.471500e-02 : f32
    %214 = vector.broadcast %cst_73 : f32 to vector<16x64xf32>
    %215 = arith.mulf %214, %213 : vector<16x64xf32>
    %216 = arith.addf %211, %215 : vector<16x64xf32>
    %cst_74 = arith.constant 0.797884583 : f32
    %217 = vector.broadcast %cst_74 : f32 to vector<16x64xf32>
    %218 = arith.mulf %217, %216 : vector<16x64xf32>
    %219 = math.tanh %218 : vector<16x64xf32>
    %cst_75 = arith.constant 1.000000e+00 : f32
    %220 = vector.broadcast %cst_75 : f32 to vector<16x64xf32>
    %221 = arith.addf %220, %219 : vector<16x64xf32>
    %cst_76 = arith.constant 5.000000e-01 : f32
    %222 = vector.broadcast %cst_76 : f32 to vector<16x64xf32>
    %223 = arith.mulf %222, %221 : vector<16x64xf32>
    %224 = arith.mulf %211, %223 : vector<16x64xf32>
    %225 = arith.truncf %224 : vector<16x64xf32> to vector<16x64xbf16>
    %c1_77 = arith.constant 1 : index
    %c0_78 = arith.constant 0 : index
    %c0_79 = arith.constant 0 : index
    %226 = vector.load %arg4[%c1_77, %c0_78, %c0_79] : memref<4x64x32xbf16, #tpu.memory_space<vmem>>, vector<1x64x32xbf16>
    %227 = vector.shape_cast %226 : vector<1x64x32xbf16> to vector<64x32xbf16>
    %cst_80 = arith.constant dense<0.000000e+00> : vector<16x32xf32>
    %228 = tpu.matmul %225, %227, %cst_80 {dimension_numbers = #tpu.dot_dimension_numbers<[1], [0], [0], [1], [0, 0, 1, 1], [], []>} : vector<16x64xbf16>, vector<64x32xbf16>, vector<16x32xf32> -> vector<16x32xf32>
    %229 = vector.extract_strided_slice %204 {offsets = [0, 64], sizes = [1, 32], strides = [1, 1]} : vector<1x128xf32> to vector<1x32xf32>
    %230 = vector.broadcast %229 : vector<1x32xf32> to vector<16x32xf32>
    %231 = arith.addf %228, %230 : vector<16x32xf32>
    %232 = arith.addf %203, %231 : vector<16x32xf32>
    %c12 = arith.constant 12 : index
    %c0_81 = arith.constant 0 : index
    %233 = vector.load %arg5[%c12, %c0_81] : memref<30x128xf32, #tpu.memory_space<vmem>>, vector<1x32xf32>
    %c13 = arith.constant 13 : index
    %c0_82 = arith.constant 0 : index
    %234 = vector.load %arg5[%c13, %c0_82] : memref<30x128xf32, #tpu.memory_space<vmem>>, vector<1x32xf32>
    %cst_83 = arith.constant dense<0.000000e+00> : vector<16xf32>
    %235 = vector.multi_reduction <add>, %232, %cst_83 [1] : vector<16x32xf32> to vector<16xf32>
    %236 = vector.shape_cast %235 : vector<16xf32> to vector<16x1xf32>
    %cst_84 = arith.constant 3.200000e+01 : f32
    %237 = vector.broadcast %cst_84 : f32 to vector<16x1xf32>
    %238 = arith.divf %236, %237 : vector<16x1xf32>
    %239 = vector.broadcast %238 : vector<16x1xf32> to vector<16x32xf32>
    %240 = arith.subf %232, %239 : vector<16x32xf32>
    %241 = arith.mulf %240, %240 : vector<16x32xf32>
    %cst_85 = arith.constant dense<0.000000e+00> : vector<16xf32>
    %242 = vector.multi_reduction <add>, %241, %cst_85 [1] : vector<16x32xf32> to vector<16xf32>
    %243 = vector.shape_cast %242 : vector<16xf32> to vector<16x1xf32>
    %cst_86 = arith.constant 3.200000e+01 : f32
    %244 = vector.broadcast %cst_86 : f32 to vector<16x1xf32>
    %245 = arith.divf %243, %244 : vector<16x1xf32>
    %246 = vector.broadcast %238 : vector<16x1xf32> to vector<16x32xf32>
    %247 = arith.subf %232, %246 : vector<16x32xf32>
    %cst_87 = arith.constant 9.99999996E-13 : f32
    %248 = vector.broadcast %cst_87 : f32 to vector<16x1xf32>
    %249 = arith.addf %245, %248 : vector<16x1xf32>
    %250 = math.rsqrt %249 : vector<16x1xf32>
    %251 = vector.broadcast %250 : vector<16x1xf32> to vector<16x32xf32>
    %252 = arith.mulf %247, %251 : vector<16x32xf32>
    %253 = vector.broadcast %233 : vector<1x32xf32> to vector<16x32xf32>
    %254 = arith.mulf %252, %253 : vector<16x32xf32>
    %255 = vector.broadcast %234 : vector<1x32xf32> to vector<16x32xf32>
    %256 = arith.addf %254, %255 : vector<16x32xf32>
    %c2_88 = arith.constant 2 : index
    %c0_89 = arith.constant 0 : index
    %c0_90 = arith.constant 0 : index
    %257 = vector.load %arg2[%c2_88, %c0_89, %c0_90] : memref<4x32x128xbf16, #tpu.memory_space<vmem>>, vector<1x32x128xbf16>
    %258 = vector.shape_cast %257 : vector<1x32x128xbf16> to vector<32x128xbf16>
    %c14 = arith.constant 14 : index
    %c0_91 = arith.constant 0 : index
    %259 = vector.load %arg5[%c14, %c0_91] : memref<30x128xf32, #tpu.memory_space<vmem>>, vector<1x128xf32>
    %260 = arith.truncf %256 : vector<16x32xf32> to vector<16x32xbf16>
    %cst_92 = arith.constant dense<0.000000e+00> : vector<16x128xf32>
    %261 = tpu.matmul %260, %258, %cst_92 {dimension_numbers = #tpu.dot_dimension_numbers<[1], [0], [0], [1], [0, 0, 1, 1], [], []>} : vector<16x32xbf16>, vector<32x128xbf16>, vector<16x128xf32> -> vector<16x128xf32>
    %262 = vector.broadcast %259 : vector<1x128xf32> to vector<16x128xf32>
    %263 = arith.addf %261, %262 : vector<16x128xf32>
    %264 = vector.extract_strided_slice %263 {offsets = [0, 0], sizes = [16, 32], strides = [1, 1]} : vector<16x128xf32> to vector<16x32xf32>
    %265 = vector.extract_strided_slice %263 {offsets = [0, 32], sizes = [16, 32], strides = [1, 1]} : vector<16x128xf32> to vector<16x32xf32>
    %266 = vector.extract_strided_slice %263 {offsets = [0, 64], sizes = [16, 32], strides = [1, 1]} : vector<16x128xf32> to vector<16x32xf32>
    %cst_93 = arith.constant dense<0.000000e+00> : vector<16x16xf32>
    %267 = tpu.matmul %264, %265, %cst_93 {dimension_numbers = #tpu.dot_dimension_numbers<[1], [1], [0], [0], [0, 0, 1, 0], [], []>} : vector<16x32xf32>, vector<16x32xf32>, vector<16x16xf32> -> vector<16x16xf32>
    %268 = vector.broadcast %1 : f32 to vector<16x16xf32>
    %269 = arith.mulf %267, %268 : vector<16x16xf32>
    %270 = arith.addf %269, %13 : vector<16x16xf32>
    %cst_94 = arith.constant dense<0xFF800000> : vector<16xf32>
    %271 = vector.multi_reduction <maximumf>, %270, %cst_94 [1] : vector<16x16xf32> to vector<16xf32>
    %272 = vector.shape_cast %271 : vector<16xf32> to vector<16x1xf32>
    %273 = vector.broadcast %272 : vector<16x1xf32> to vector<16x16xf32>
    %274 = arith.subf %270, %273 : vector<16x16xf32>
    %275 = math.exp %274 : vector<16x16xf32>
    %cst_95 = arith.constant dense<0.000000e+00> : vector<16xf32>
    %276 = vector.multi_reduction <add>, %275, %cst_95 [1] : vector<16x16xf32> to vector<16xf32>
    %277 = vector.shape_cast %276 : vector<16xf32> to vector<16x1xf32>
    %278 = tpu.reciprocal %277 {approx = true} : vector<16x1xf32> -> vector<16x1xf32>
    %279 = vector.broadcast %278 : vector<16x1xf32> to vector<16x16xf32>
    %280 = arith.mulf %275, %279 : vector<16x16xf32>
    %cst_96 = arith.constant dense<0.000000e+00> : vector<16x32xf32>
    %281 = tpu.matmul %280, %266, %cst_96 {dimension_numbers = #tpu.dot_dimension_numbers<[1], [0], [0], [1], [0, 0, 1, 1], [], []>} : vector<16x16xf32>, vector<16x32xf32>, vector<16x32xf32> -> vector<16x32xf32>
    %282 = arith.truncf %281 : vector<16x32xf32> to vector<16x32xbf16>
    %cst_97 = arith.constant dense<0.000000e+00> : vector<16x128xf32>
    %283 = tpu.matmul %282, %258, %cst_97 {dimension_numbers = #tpu.dot_dimension_numbers<[1], [0], [0], [1], [0, 0, 1, 1], [], []>} : vector<16x32xbf16>, vector<32x128xbf16>, vector<16x128xf32> -> vector<16x128xf32>
    %284 = vector.extract_strided_slice %283 {offsets = [0, 96], sizes = [16, 32], strides = [1, 1]} : vector<16x128xf32> to vector<16x32xf32>
    %285 = vector.extract_strided_slice %259 {offsets = [0, 96], sizes = [1, 32], strides = [1, 1]} : vector<1x128xf32> to vector<1x32xf32>
    %286 = vector.broadcast %285 : vector<1x32xf32> to vector<16x32xf32>
    %287 = arith.addf %284, %286 : vector<16x32xf32>
    %288 = arith.addf %256, %287 : vector<16x32xf32>
    %c16 = arith.constant 16 : index
    %c0_98 = arith.constant 0 : index
    %289 = vector.load %arg5[%c16, %c0_98] : memref<30x128xf32, #tpu.memory_space<vmem>>, vector<1x32xf32>
    %c17 = arith.constant 17 : index
    %c0_99 = arith.constant 0 : index
    %290 = vector.load %arg5[%c17, %c0_99] : memref<30x128xf32, #tpu.memory_space<vmem>>, vector<1x32xf32>
    %cst_100 = arith.constant dense<0.000000e+00> : vector<16xf32>
    %291 = vector.multi_reduction <add>, %288, %cst_100 [1] : vector<16x32xf32> to vector<16xf32>
    %292 = vector.shape_cast %291 : vector<16xf32> to vector<16x1xf32>
    %cst_101 = arith.constant 3.200000e+01 : f32
    %293 = vector.broadcast %cst_101 : f32 to vector<16x1xf32>
    %294 = arith.divf %292, %293 : vector<16x1xf32>
    %295 = vector.broadcast %294 : vector<16x1xf32> to vector<16x32xf32>
    %296 = arith.subf %288, %295 : vector<16x32xf32>
    %297 = arith.mulf %296, %296 : vector<16x32xf32>
    %cst_102 = arith.constant dense<0.000000e+00> : vector<16xf32>
    %298 = vector.multi_reduction <add>, %297, %cst_102 [1] : vector<16x32xf32> to vector<16xf32>
    %299 = vector.shape_cast %298 : vector<16xf32> to vector<16x1xf32>
    %cst_103 = arith.constant 3.200000e+01 : f32
    %300 = vector.broadcast %cst_103 : f32 to vector<16x1xf32>
    %301 = arith.divf %299, %300 : vector<16x1xf32>
    %302 = vector.broadcast %294 : vector<16x1xf32> to vector<16x32xf32>
    %303 = arith.subf %288, %302 : vector<16x32xf32>
    %cst_104 = arith.constant 9.99999996E-13 : f32
    %304 = vector.broadcast %cst_104 : f32 to vector<16x1xf32>
    %305 = arith.addf %301, %304 : vector<16x1xf32>
    %306 = math.rsqrt %305 : vector<16x1xf32>
    %307 = vector.broadcast %306 : vector<16x1xf32> to vector<16x32xf32>
    %308 = arith.mulf %303, %307 : vector<16x32xf32>
    %309 = vector.broadcast %289 : vector<1x32xf32> to vector<16x32xf32>
    %310 = arith.mulf %308, %309 : vector<16x32xf32>
    %311 = vector.broadcast %290 : vector<1x32xf32> to vector<16x32xf32>
    %312 = arith.addf %310, %311 : vector<16x32xf32>
    %c15 = arith.constant 15 : index
    %c0_105 = arith.constant 0 : index
    %313 = vector.load %arg5[%c15, %c0_105] : memref<30x128xf32, #tpu.memory_space<vmem>>, vector<1x128xf32>
    %314 = arith.truncf %312 : vector<16x32xf32> to vector<16x32xbf16>
    %c2_106 = arith.constant 2 : index
    %c0_107 = arith.constant 0 : index
    %c0_108 = arith.constant 0 : index
    %315 = vector.load %arg3[%c2_106, %c0_107, %c0_108] : memref<4x32x64xbf16, #tpu.memory_space<vmem>>, vector<1x32x64xbf16>
    %316 = vector.shape_cast %315 : vector<1x32x64xbf16> to vector<32x64xbf16>
    %cst_109 = arith.constant dense<0.000000e+00> : vector<16x64xf32>
    %317 = tpu.matmul %314, %316, %cst_109 {dimension_numbers = #tpu.dot_dimension_numbers<[1], [0], [0], [1], [0, 0, 1, 1], [], []>} : vector<16x32xbf16>, vector<32x64xbf16>, vector<16x64xf32> -> vector<16x64xf32>
    %318 = vector.extract_strided_slice %313 {offsets = [0, 0], sizes = [1, 64], strides = [1, 1]} : vector<1x128xf32> to vector<1x64xf32>
    %319 = vector.broadcast %318 : vector<1x64xf32> to vector<16x64xf32>
    %320 = arith.addf %317, %319 : vector<16x64xf32>
    %321 = arith.mulf %320, %320 : vector<16x64xf32>
    %322 = arith.mulf %320, %321 : vector<16x64xf32>
    %cst_110 = arith.constant 4.471500e-02 : f32
    %323 = vector.broadcast %cst_110 : f32 to vector<16x64xf32>
    %324 = arith.mulf %323, %322 : vector<16x64xf32>
    %325 = arith.addf %320, %324 : vector<16x64xf32>
    %cst_111 = arith.constant 0.797884583 : f32
    %326 = vector.broadcast %cst_111 : f32 to vector<16x64xf32>
    %327 = arith.mulf %326, %325 : vector<16x64xf32>
    %328 = math.tanh %327 : vector<16x64xf32>
    %cst_112 = arith.constant 1.000000e+00 : f32
    %329 = vector.broadcast %cst_112 : f32 to vector<16x64xf32>
    %330 = arith.addf %329, %328 : vector<16x64xf32>
    %cst_113 = arith.constant 5.000000e-01 : f32
    %331 = vector.broadcast %cst_113 : f32 to vector<16x64xf32>
    %332 = arith.mulf %331, %330 : vector<16x64xf32>
    %333 = arith.mulf %320, %332 : vector<16x64xf32>
    %334 = arith.truncf %333 : vector<16x64xf32> to vector<16x64xbf16>
    %c2_114 = arith.constant 2 : index
    %c0_115 = arith.constant 0 : index
    %c0_116 = arith.constant 0 : index
    %335 = vector.load %arg4[%c2_114, %c0_115, %c0_116] : memref<4x64x32xbf16, #tpu.memory_space<vmem>>, vector<1x64x32xbf16>
    %336 = vector.shape_cast %335 : vector<1x64x32xbf16> to vector<64x32xbf16>
    %cst_117 = arith.constant dense<0.000000e+00> : vector<16x32xf32>
    %337 = tpu.matmul %334, %336, %cst_117 {dimension_numbers = #tpu.dot_dimension_numbers<[1], [0], [0], [1], [0, 0, 1, 1], [], []>} : vector<16x64xbf16>, vector<64x32xbf16>, vector<16x32xf32> -> vector<16x32xf32>
    %338 = vector.extract_strided_slice %313 {offsets = [0, 64], sizes = [1, 32], strides = [1, 1]} : vector<1x128xf32> to vector<1x32xf32>
    %339 = vector.broadcast %338 : vector<1x32xf32> to vector<16x32xf32>
    %340 = arith.addf %337, %339 : vector<16x32xf32>
    %341 = arith.addf %312, %340 : vector<16x32xf32>
    %c18 = arith.constant 18 : index
    %c0_118 = arith.constant 0 : index
    %342 = vector.load %arg5[%c18, %c0_118] : memref<30x128xf32, #tpu.memory_space<vmem>>, vector<1x32xf32>
    %c19 = arith.constant 19 : index
    %c0_119 = arith.constant 0 : index
    %343 = vector.load %arg5[%c19, %c0_119] : memref<30x128xf32, #tpu.memory_space<vmem>>, vector<1x32xf32>
    %cst_120 = arith.constant dense<0.000000e+00> : vector<16xf32>
    %344 = vector.multi_reduction <add>, %341, %cst_120 [1] : vector<16x32xf32> to vector<16xf32>
    %345 = vector.shape_cast %344 : vector<16xf32> to vector<16x1xf32>
    %cst_121 = arith.constant 3.200000e+01 : f32
    %346 = vector.broadcast %cst_121 : f32 to vector<16x1xf32>
    %347 = arith.divf %345, %346 : vector<16x1xf32>
    %348 = vector.broadcast %347 : vector<16x1xf32> to vector<16x32xf32>
    %349 = arith.subf %341, %348 : vector<16x32xf32>
    %350 = arith.mulf %349, %349 : vector<16x32xf32>
    %cst_122 = arith.constant dense<0.000000e+00> : vector<16xf32>
    %351 = vector.multi_reduction <add>, %350, %cst_122 [1] : vector<16x32xf32> to vector<16xf32>
    %352 = vector.shape_cast %351 : vector<16xf32> to vector<16x1xf32>
    %cst_123 = arith.constant 3.200000e+01 : f32
    %353 = vector.broadcast %cst_123 : f32 to vector<16x1xf32>
    %354 = arith.divf %352, %353 : vector<16x1xf32>
    %355 = vector.broadcast %347 : vector<16x1xf32> to vector<16x32xf32>
    %356 = arith.subf %341, %355 : vector<16x32xf32>
    %cst_124 = arith.constant 9.99999996E-13 : f32
    %357 = vector.broadcast %cst_124 : f32 to vector<16x1xf32>
    %358 = arith.addf %354, %357 : vector<16x1xf32>
    %359 = math.rsqrt %358 : vector<16x1xf32>
    %360 = vector.broadcast %359 : vector<16x1xf32> to vector<16x32xf32>
    %361 = arith.mulf %356, %360 : vector<16x32xf32>
    %362 = vector.broadcast %342 : vector<1x32xf32> to vector<16x32xf32>
    %363 = arith.mulf %361, %362 : vector<16x32xf32>
    %364 = vector.broadcast %343 : vector<1x32xf32> to vector<16x32xf32>
    %365 = arith.addf %363, %364 : vector<16x32xf32>
    %c3_125 = arith.constant 3 : index
    %c0_126 = arith.constant 0 : index
    %c0_127 = arith.constant 0 : index
    %366 = vector.load %arg2[%c3_125, %c0_126, %c0_127] : memref<4x32x128xbf16, #tpu.memory_space<vmem>>, vector<1x32x128xbf16>
    %367 = vector.shape_cast %366 : vector<1x32x128xbf16> to vector<32x128xbf16>
    %c20 = arith.constant 20 : index
    %c0_128 = arith.constant 0 : index
    %368 = vector.load %arg5[%c20, %c0_128] : memref<30x128xf32, #tpu.memory_space<vmem>>, vector<1x128xf32>
    %369 = arith.truncf %365 : vector<16x32xf32> to vector<16x32xbf16>
    %cst_129 = arith.constant dense<0.000000e+00> : vector<16x128xf32>
    %370 = tpu.matmul %369, %367, %cst_129 {dimension_numbers = #tpu.dot_dimension_numbers<[1], [0], [0], [1], [0, 0, 1, 1], [], []>} : vector<16x32xbf16>, vector<32x128xbf16>, vector<16x128xf32> -> vector<16x128xf32>
    %371 = vector.broadcast %368 : vector<1x128xf32> to vector<16x128xf32>
    %372 = arith.addf %370, %371 : vector<16x128xf32>
    %373 = vector.extract_strided_slice %372 {offsets = [0, 0], sizes = [16, 32], strides = [1, 1]} : vector<16x128xf32> to vector<16x32xf32>
    %374 = vector.extract_strided_slice %372 {offsets = [0, 32], sizes = [16, 32], strides = [1, 1]} : vector<16x128xf32> to vector<16x32xf32>
    %375 = vector.extract_strided_slice %372 {offsets = [0, 64], sizes = [16, 32], strides = [1, 1]} : vector<16x128xf32> to vector<16x32xf32>
    %cst_130 = arith.constant dense<0.000000e+00> : vector<16x16xf32>
    %376 = tpu.matmul %373, %374, %cst_130 {dimension_numbers = #tpu.dot_dimension_numbers<[1], [1], [0], [0], [0, 0, 1, 0], [], []>} : vector<16x32xf32>, vector<16x32xf32>, vector<16x16xf32> -> vector<16x16xf32>
    %377 = vector.broadcast %1 : f32 to vector<16x16xf32>
    %378 = arith.mulf %376, %377 : vector<16x16xf32>
    %379 = arith.addf %378, %13 : vector<16x16xf32>
    %cst_131 = arith.constant dense<0xFF800000> : vector<16xf32>
    %380 = vector.multi_reduction <maximumf>, %379, %cst_131 [1] : vector<16x16xf32> to vector<16xf32>
    %381 = vector.shape_cast %380 : vector<16xf32> to vector<16x1xf32>
    %382 = vector.broadcast %381 : vector<16x1xf32> to vector<16x16xf32>
    %383 = arith.subf %379, %382 : vector<16x16xf32>
    %384 = math.exp %383 : vector<16x16xf32>
    %cst_132 = arith.constant dense<0.000000e+00> : vector<16xf32>
    %385 = vector.multi_reduction <add>, %384, %cst_132 [1] : vector<16x16xf32> to vector<16xf32>
    %386 = vector.shape_cast %385 : vector<16xf32> to vector<16x1xf32>
    %387 = tpu.reciprocal %386 {approx = true} : vector<16x1xf32> -> vector<16x1xf32>
    %388 = vector.broadcast %387 : vector<16x1xf32> to vector<16x16xf32>
    %389 = arith.mulf %384, %388 : vector<16x16xf32>
    %cst_133 = arith.constant dense<0.000000e+00> : vector<16x32xf32>
    %390 = tpu.matmul %389, %375, %cst_133 {dimension_numbers = #tpu.dot_dimension_numbers<[1], [0], [0], [1], [0, 0, 1, 1], [], []>} : vector<16x16xf32>, vector<16x32xf32>, vector<16x32xf32> -> vector<16x32xf32>
    %391 = arith.truncf %390 : vector<16x32xf32> to vector<16x32xbf16>
    %cst_134 = arith.constant dense<0.000000e+00> : vector<16x128xf32>
    %392 = tpu.matmul %391, %367, %cst_134 {dimension_numbers = #tpu.dot_dimension_numbers<[1], [0], [0], [1], [0, 0, 1, 1], [], []>} : vector<16x32xbf16>, vector<32x128xbf16>, vector<16x128xf32> -> vector<16x128xf32>
    %393 = vector.extract_strided_slice %392 {offsets = [0, 96], sizes = [16, 32], strides = [1, 1]} : vector<16x128xf32> to vector<16x32xf32>
    %394 = vector.extract_strided_slice %368 {offsets = [0, 96], sizes = [1, 32], strides = [1, 1]} : vector<1x128xf32> to vector<1x32xf32>
    %395 = vector.broadcast %394 : vector<1x32xf32> to vector<16x32xf32>
    %396 = arith.addf %393, %395 : vector<16x32xf32>
    %397 = arith.addf %365, %396 : vector<16x32xf32>
    %c22 = arith.constant 22 : index
    %c0_135 = arith.constant 0 : index
    %398 = vector.load %arg5[%c22, %c0_135] : memref<30x128xf32, #tpu.memory_space<vmem>>, vector<1x32xf32>
    %c23 = arith.constant 23 : index
    %c0_136 = arith.constant 0 : index
    %399 = vector.load %arg5[%c23, %c0_136] : memref<30x128xf32, #tpu.memory_space<vmem>>, vector<1x32xf32>
    %cst_137 = arith.constant dense<0.000000e+00> : vector<16xf32>
    %400 = vector.multi_reduction <add>, %397, %cst_137 [1] : vector<16x32xf32> to vector<16xf32>
    %401 = vector.shape_cast %400 : vector<16xf32> to vector<16x1xf32>
    %cst_138 = arith.constant 3.200000e+01 : f32
    %402 = vector.broadcast %cst_138 : f32 to vector<16x1xf32>
    %403 = arith.divf %401, %402 : vector<16x1xf32>
    %404 = vector.broadcast %403 : vector<16x1xf32> to vector<16x32xf32>
    %405 = arith.subf %397, %404 : vector<16x32xf32>
    %406 = arith.mulf %405, %405 : vector<16x32xf32>
    %cst_139 = arith.constant dense<0.000000e+00> : vector<16xf32>
    %407 = vector.multi_reduction <add>, %406, %cst_139 [1] : vector<16x32xf32> to vector<16xf32>
    %408 = vector.shape_cast %407 : vector<16xf32> to vector<16x1xf32>
    %cst_140 = arith.constant 3.200000e+01 : f32
    %409 = vector.broadcast %cst_140 : f32 to vector<16x1xf32>
    %410 = arith.divf %408, %409 : vector<16x1xf32>
    %411 = vector.broadcast %403 : vector<16x1xf32> to vector<16x32xf32>
    %412 = arith.subf %397, %411 : vector<16x32xf32>
    %cst_141 = arith.constant 9.99999996E-13 : f32
    %413 = vector.broadcast %cst_141 : f32 to vector<16x1xf32>
    %414 = arith.addf %410, %413 : vector<16x1xf32>
    %415 = math.rsqrt %414 : vector<16x1xf32>
    %416 = vector.broadcast %415 : vector<16x1xf32> to vector<16x32xf32>
    %417 = arith.mulf %412, %416 : vector<16x32xf32>
    %418 = vector.broadcast %398 : vector<1x32xf32> to vector<16x32xf32>
    %419 = arith.mulf %417, %418 : vector<16x32xf32>
    %420 = vector.broadcast %399 : vector<1x32xf32> to vector<16x32xf32>
    %421 = arith.addf %419, %420 : vector<16x32xf32>
    %c21 = arith.constant 21 : index
    %c0_142 = arith.constant 0 : index
    %422 = vector.load %arg5[%c21, %c0_142] : memref<30x128xf32, #tpu.memory_space<vmem>>, vector<1x128xf32>
    %423 = arith.truncf %421 : vector<16x32xf32> to vector<16x32xbf16>
    %c3_143 = arith.constant 3 : index
    %c0_144 = arith.constant 0 : index
    %c0_145 = arith.constant 0 : index
    %424 = vector.load %arg3[%c3_143, %c0_144, %c0_145] : memref<4x32x64xbf16, #tpu.memory_space<vmem>>, vector<1x32x64xbf16>
    %425 = vector.shape_cast %424 : vector<1x32x64xbf16> to vector<32x64xbf16>
    %cst_146 = arith.constant dense<0.000000e+00> : vector<16x64xf32>
    %426 = tpu.matmul %423, %425, %cst_146 {dimension_numbers = #tpu.dot_dimension_numbers<[1], [0], [0], [1], [0, 0, 1, 1], [], []>} : vector<16x32xbf16>, vector<32x64xbf16>, vector<16x64xf32> -> vector<16x64xf32>
    %427 = vector.extract_strided_slice %422 {offsets = [0, 0], sizes = [1, 64], strides = [1, 1]} : vector<1x128xf32> to vector<1x64xf32>
    %428 = vector.broadcast %427 : vector<1x64xf32> to vector<16x64xf32>
    %429 = arith.addf %426, %428 : vector<16x64xf32>
    %430 = arith.mulf %429, %429 : vector<16x64xf32>
    %431 = arith.mulf %429, %430 : vector<16x64xf32>
    %cst_147 = arith.constant 4.471500e-02 : f32
    %432 = vector.broadcast %cst_147 : f32 to vector<16x64xf32>
    %433 = arith.mulf %432, %431 : vector<16x64xf32>
    %434 = arith.addf %429, %433 : vector<16x64xf32>
    %cst_148 = arith.constant 0.797884583 : f32
    %435 = vector.broadcast %cst_148 : f32 to vector<16x64xf32>
    %436 = arith.mulf %435, %434 : vector<16x64xf32>
    %437 = math.tanh %436 : vector<16x64xf32>
    %cst_149 = arith.constant 1.000000e+00 : f32
    %438 = vector.broadcast %cst_149 : f32 to vector<16x64xf32>
    %439 = arith.addf %438, %437 : vector<16x64xf32>
    %cst_150 = arith.constant 5.000000e-01 : f32
    %440 = vector.broadcast %cst_150 : f32 to vector<16x64xf32>
    %441 = arith.mulf %440, %439 : vector<16x64xf32>
    %442 = arith.mulf %429, %441 : vector<16x64xf32>
    %443 = arith.truncf %442 : vector<16x64xf32> to vector<16x64xbf16>
    %c3_151 = arith.constant 3 : index
    %c0_152 = arith.constant 0 : index
    %c0_153 = arith.constant 0 : index
    %444 = vector.load %arg4[%c3_151, %c0_152, %c0_153] : memref<4x64x32xbf16, #tpu.memory_space<vmem>>, vector<1x64x32xbf16>
    %445 = vector.shape_cast %444 : vector<1x64x32xbf16> to vector<64x32xbf16>
    %cst_154 = arith.constant dense<0.000000e+00> : vector<16x32xf32>
    %446 = tpu.matmul %443, %445, %cst_154 {dimension_numbers = #tpu.dot_dimension_numbers<[1], [0], [0], [1], [0, 0, 1, 1], [], []>} : vector<16x64xbf16>, vector<64x32xbf16>, vector<16x32xf32> -> vector<16x32xf32>
    %447 = vector.extract_strided_slice %422 {offsets = [0, 64], sizes = [1, 32], strides = [1, 1]} : vector<1x128xf32> to vector<1x32xf32>
    %448 = vector.broadcast %447 : vector<1x32xf32> to vector<16x32xf32>
    %449 = arith.addf %446, %448 : vector<16x32xf32>
    %450 = arith.addf %421, %449 : vector<16x32xf32>
    %c24 = arith.constant 24 : index
    %c0_155 = arith.constant 0 : index
    %451 = vector.load %arg5[%c24, %c0_155] : memref<30x128xf32, #tpu.memory_space<vmem>>, vector<1x32xf32>
    %c25 = arith.constant 25 : index
    %c0_156 = arith.constant 0 : index
    %452 = vector.load %arg5[%c25, %c0_156] : memref<30x128xf32, #tpu.memory_space<vmem>>, vector<1x32xf32>
    %cst_157 = arith.constant dense<0.000000e+00> : vector<16xf32>
    %453 = vector.multi_reduction <add>, %450, %cst_157 [1] : vector<16x32xf32> to vector<16xf32>
    %454 = vector.shape_cast %453 : vector<16xf32> to vector<16x1xf32>
    %cst_158 = arith.constant 3.200000e+01 : f32
    %455 = vector.broadcast %cst_158 : f32 to vector<16x1xf32>
    %456 = arith.divf %454, %455 : vector<16x1xf32>
    %457 = vector.broadcast %456 : vector<16x1xf32> to vector<16x32xf32>
    %458 = arith.subf %450, %457 : vector<16x32xf32>
    %459 = arith.mulf %458, %458 : vector<16x32xf32>
    %cst_159 = arith.constant dense<0.000000e+00> : vector<16xf32>
    %460 = vector.multi_reduction <add>, %459, %cst_159 [1] : vector<16x32xf32> to vector<16xf32>
    %461 = vector.shape_cast %460 : vector<16xf32> to vector<16x1xf32>
    %cst_160 = arith.constant 3.200000e+01 : f32
    %462 = vector.broadcast %cst_160 : f32 to vector<16x1xf32>
    %463 = arith.divf %461, %462 : vector<16x1xf32>
    %464 = vector.broadcast %456 : vector<16x1xf32> to vector<16x32xf32>
    %465 = arith.subf %450, %464 : vector<16x32xf32>
    %cst_161 = arith.constant 9.99999996E-13 : f32
    %466 = vector.broadcast %cst_161 : f32 to vector<16x1xf32>
    %467 = arith.addf %463, %466 : vector<16x1xf32>
    %468 = math.rsqrt %467 : vector<16x1xf32>
    %469 = vector.broadcast %468 : vector<16x1xf32> to vector<16x32xf32>
    %470 = arith.mulf %465, %469 : vector<16x32xf32>
    %471 = vector.broadcast %451 : vector<1x32xf32> to vector<16x32xf32>
    %472 = arith.mulf %470, %471 : vector<16x32xf32>
    %473 = vector.broadcast %452 : vector<1x32xf32> to vector<16x32xf32>
    %474 = arith.addf %472, %473 : vector<16x32xf32>
    %475 = tpu.concatenate %474, %365, %256, %147 in 1 : vector<16x32xf32>, vector<16x32xf32>, vector<16x32xf32>, vector<16x32xf32> -> vector<16x128xf32>
    %476 = arith.truncf %475 : vector<16x128xf32> to vector<16x128xbf16>
    %c0_162 = arith.constant 0 : index
    %c0_163 = arith.constant 0 : index
    %477 = vector.load %arg6[%c0_162, %c0_163] : memref<128x1024xbf16, #tpu.memory_space<vmem>>, vector<128x1024xbf16>
    %cst_164 = arith.constant dense<0.000000e+00> : vector<16x1024xf32>
    %478 = tpu.matmul %476, %477, %cst_164 {dimension_numbers = #tpu.dot_dimension_numbers<[1], [0], [0], [1], [0, 0, 1, 1], [], []>} : vector<16x128xbf16>, vector<128x1024xbf16>, vector<16x1024xf32> -> vector<16x1024xf32>
    %c0_165 = arith.constant 0 : index
    %c0_166 = arith.constant 0 : index
    %479 = vector.load %arg11[%c0_165, %c0_166] : memref<16x1024xf32, #tpu.memory_space<vmem>>, vector<16x1024xf32>
    tpu.vector_store %arg11[%c0_165, %c0_166], %478 {strides = array<i32>} : memref<16x1024xf32, #tpu.memory_space<vmem>>, vector<16x1024xf32>,
    %c0_167 = arith.constant 0 : index
    %c0_168 = arith.constant 0 : index
    %480 = vector.load %arg7[%c0_167, %c0_168] : memref<256x1024xbf16, #tpu.memory_space<vmem>>, vector<256x1024xbf16>
    %c0_169 = arith.constant 0 : index
    %c0_170 = arith.constant 0 : index
    %481 = vector.load %arg8[%c0_169, %c0_170] : memref<1x1024xf32, #tpu.memory_space<vmem>>, vector<1x1024xf32>
    %cst_171 = arith.constant 0.000000e+00 : f32
    %482 = vector.broadcast %cst_171 : f32 to vector<2x256xf32>
    %cst_172 = arith.constant 0.000000e+00 : f32
    %483 = vector.broadcast %cst_172 : f32 to vector<2x128xf32>
    %cst_173 = arith.constant 0.000000e+00 : f32
    %484 = vector.broadcast %cst_173 : f32 to vector<2x128xf32>
    %cst_174 = arith.constant 0.000000e+00 : f32
    %485 = vector.broadcast %cst_174 : f32 to vector<2x256xf32>
    %486 = arith.truncf %482 : vector<2x256xf32> to vector<2x256xbf16>
    %cst_175 = arith.constant dense<0.000000e+00> : vector<2x1024xf32>
    %487 = tpu.matmul %486, %480, %cst_175 {dimension_numbers = #tpu.dot_dimension_numbers<[1], [0], [0], [1], [0, 0, 1, 1], [], []>} : vector<2x256xbf16>, vector<256x1024xbf16>, vector<2x1024xf32> -> vector<2x1024xf32>
    %488 = vector.broadcast %481 : vector<1x1024xf32> to vector<2x1024xf32>
    %489 = arith.addf %487, %488 : vector<2x1024xf32>
    %c0_176 = arith.constant 0 : index
    %c0_177 = arith.constant 0 : index
    %490 = vector.load %arg11[%c0_176, %c0_177] : memref<16x1024xf32, #tpu.memory_space<vmem>>, vector<2x512xf32>
    %491 = vector.extract_strided_slice %489 {offsets = [0, 0], sizes = [2, 512], strides = [1, 1]} : vector<2x1024xf32> to vector<2x512xf32>
    %492 = arith.addf %490, %491 : vector<2x512xf32>
    %c14_178 = arith.constant 14 : index
    %c512 = arith.constant 512 : index
    %493 = vector.load %arg11[%c14_178, %c512] : memref<16x1024xf32, #tpu.memory_space<vmem>>, vector<2x512xf32>
    %494 = vector.extract_strided_slice %489 {offsets = [0, 512], sizes = [2, 512], strides = [1, 1]} : vector<2x1024xf32> to vector<2x512xf32>
    %495 = arith.addf %493, %494 : vector<2x512xf32>
    %496 = vector.extract_strided_slice %492 {offsets = [0, 0], sizes = [2, 384], strides = [1, 1]} : vector<2x512xf32> to vector<2x384xf32>
    %497 = arith.negf %496 : vector<2x384xf32>
    %498 = math.exp %497 : vector<2x384xf32>
    %cst_179 = arith.constant 1.000000e+00 : f32
    %499 = vector.broadcast %cst_179 : f32 to vector<2x384xf32>
    %500 = arith.addf %499, %498 : vector<2x384xf32>
    %501 = arith.divf %499, %500 : vector<2x384xf32>
    %502 = vector.extract_strided_slice %492 {offsets = [0, 384], sizes = [2, 128], strides = [1, 1]} : vector<2x512xf32> to vector<2x128xf32>
    %503 = math.tanh %502 : vector<2x128xf32>
    %504 = vector.extract_strided_slice %501 {offsets = [0, 0], sizes = [2, 128], strides = [1, 1]} : vector<2x384xf32> to vector<2x128xf32>
    %505 = vector.extract_strided_slice %501 {offsets = [0, 128], sizes = [2, 128], strides = [1, 1]} : vector<2x384xf32> to vector<2x128xf32>
    %506 = vector.extract_strided_slice %501 {offsets = [0, 256], sizes = [2, 128], strides = [1, 1]} : vector<2x384xf32> to vector<2x128xf32>
    %507 = arith.mulf %505, %483 : vector<2x128xf32>
    %508 = arith.mulf %504, %503 : vector<2x128xf32>
    %509 = arith.addf %507, %508 : vector<2x128xf32>
    %510 = math.tanh %509 : vector<2x128xf32>
    %511 = arith.mulf %506, %510 : vector<2x128xf32>
    %512 = vector.extract_strided_slice %495 {offsets = [0, 0], sizes = [2, 384], strides = [1, 1]} : vector<2x512xf32> to vector<2x384xf32>
    %513 = arith.negf %512 : vector<2x384xf32>
    %514 = math.exp %513 : vector<2x384xf32>
    %cst_180 = arith.constant 1.000000e+00 : f32
    %515 = vector.broadcast %cst_180 : f32 to vector<2x384xf32>
    %516 = arith.addf %515, %514 : vector<2x384xf32>
    %517 = arith.divf %515, %516 : vector<2x384xf32>
    %518 = vector.extract_strided_slice %495 {offsets = [0, 384], sizes = [2, 128], strides = [1, 1]} : vector<2x512xf32> to vector<2x128xf32>
    %519 = math.tanh %518 : vector<2x128xf32>
    %520 = vector.extract_strided_slice %517 {offsets = [0, 0], sizes = [2, 128], strides = [1, 1]} : vector<2x384xf32> to vector<2x128xf32>
    %521 = vector.extract_strided_slice %517 {offsets = [0, 128], sizes = [2, 128], strides = [1, 1]} : vector<2x384xf32> to vector<2x128xf32>
    %522 = vector.extract_strided_slice %517 {offsets = [0, 256], sizes = [2, 128], strides = [1, 1]} : vector<2x384xf32> to vector<2x128xf32>
    %523 = arith.mulf %521, %484 : vector<2x128xf32>
    %524 = arith.mulf %520, %519 : vector<2x128xf32>
    %525 = arith.addf %523, %524 : vector<2x128xf32>
    %526 = math.tanh %525 : vector<2x128xf32>
    %527 = arith.mulf %522, %526 : vector<2x128xf32>
    %528 = tpu.concatenate %511, %527 in 1 : vector<2x128xf32>, vector<2x128xf32> -> vector<2x256xf32>
    %529 = arith.addf %485, %528 : vector<2x256xf32>
    %530 = arith.truncf %528 : vector<2x256xf32> to vector<2x256xbf16>
    %cst_181 = arith.constant dense<0.000000e+00> : vector<2x1024xf32>
    %531 = tpu.matmul %530, %480, %cst_181 {dimension_numbers = #tpu.dot_dimension_numbers<[1], [0], [0], [1], [0, 0, 1, 1], [], []>} : vector<2x256xbf16>, vector<256x1024xbf16>, vector<2x1024xf32> -> vector<2x1024xf32>
    %532 = vector.broadcast %481 : vector<1x1024xf32> to vector<2x1024xf32>
    %533 = arith.addf %531, %532 : vector<2x1024xf32>
    %c2_182 = arith.constant 2 : index
    %c0_183 = arith.constant 0 : index
    %534 = vector.load %arg11[%c2_182, %c0_183] : memref<16x1024xf32, #tpu.memory_space<vmem>>, vector<2x512xf32>
    %535 = vector.extract_strided_slice %533 {offsets = [0, 0], sizes = [2, 512], strides = [1, 1]} : vector<2x1024xf32> to vector<2x512xf32>
    %536 = arith.addf %534, %535 : vector<2x512xf32>
    %c12_184 = arith.constant 12 : index
    %c512_185 = arith.constant 512 : index
    %537 = vector.load %arg11[%c12_184, %c512_185] : memref<16x1024xf32, #tpu.memory_space<vmem>>, vector<2x512xf32>
    %538 = vector.extract_strided_slice %533 {offsets = [0, 512], sizes = [2, 512], strides = [1, 1]} : vector<2x1024xf32> to vector<2x512xf32>
    %539 = arith.addf %537, %538 : vector<2x512xf32>
    %540 = vector.extract_strided_slice %536 {offsets = [0, 0], sizes = [2, 384], strides = [1, 1]} : vector<2x512xf32> to vector<2x384xf32>
    %541 = arith.negf %540 : vector<2x384xf32>
    %542 = math.exp %541 : vector<2x384xf32>
    %cst_186 = arith.constant 1.000000e+00 : f32
    %543 = vector.broadcast %cst_186 : f32 to vector<2x384xf32>
    %544 = arith.addf %543, %542 : vector<2x384xf32>
    %545 = arith.divf %543, %544 : vector<2x384xf32>
    %546 = vector.extract_strided_slice %536 {offsets = [0, 384], sizes = [2, 128], strides = [1, 1]} : vector<2x512xf32> to vector<2x128xf32>
    %547 = math.tanh %546 : vector<2x128xf32>
    %548 = vector.extract_strided_slice %545 {offsets = [0, 0], sizes = [2, 128], strides = [1, 1]} : vector<2x384xf32> to vector<2x128xf32>
    %549 = vector.extract_strided_slice %545 {offsets = [0, 128], sizes = [2, 128], strides = [1, 1]} : vector<2x384xf32> to vector<2x128xf32>
    %550 = vector.extract_strided_slice %545 {offsets = [0, 256], sizes = [2, 128], strides = [1, 1]} : vector<2x384xf32> to vector<2x128xf32>
    %551 = arith.mulf %549, %509 : vector<2x128xf32>
    %552 = arith.mulf %548, %547 : vector<2x128xf32>
    %553 = arith.addf %551, %552 : vector<2x128xf32>
    %554 = math.tanh %553 : vector<2x128xf32>
    %555 = arith.mulf %550, %554 : vector<2x128xf32>
    %556 = vector.extract_strided_slice %539 {offsets = [0, 0], sizes = [2, 384], strides = [1, 1]} : vector<2x512xf32> to vector<2x384xf32>
    %557 = arith.negf %556 : vector<2x384xf32>
    %558 = math.exp %557 : vector<2x384xf32>
    %cst_187 = arith.constant 1.000000e+00 : f32
    %559 = vector.broadcast %cst_187 : f32 to vector<2x384xf32>
    %560 = arith.addf %559, %558 : vector<2x384xf32>
    %561 = arith.divf %559, %560 : vector<2x384xf32>
    %562 = vector.extract_strided_slice %539 {offsets = [0, 384], sizes = [2, 128], strides = [1, 1]} : vector<2x512xf32> to vector<2x128xf32>
    %563 = math.tanh %562 : vector<2x128xf32>
    %564 = vector.extract_strided_slice %561 {offsets = [0, 0], sizes = [2, 128], strides = [1, 1]} : vector<2x384xf32> to vector<2x128xf32>
    %565 = vector.extract_strided_slice %561 {offsets = [0, 128], sizes = [2, 128], strides = [1, 1]} : vector<2x384xf32> to vector<2x128xf32>
    %566 = vector.extract_strided_slice %561 {offsets = [0, 256], sizes = [2, 128], strides = [1, 1]} : vector<2x384xf32> to vector<2x128xf32>
    %567 = arith.mulf %565, %525 : vector<2x128xf32>
    %568 = arith.mulf %564, %563 : vector<2x128xf32>
    %569 = arith.addf %567, %568 : vector<2x128xf32>
    %570 = math.tanh %569 : vector<2x128xf32>
    %571 = arith.mulf %566, %570 : vector<2x128xf32>
    %572 = tpu.concatenate %555, %571 in 1 : vector<2x128xf32>, vector<2x128xf32> -> vector<2x256xf32>
    %573 = arith.addf %529, %572 : vector<2x256xf32>
    %574 = arith.truncf %572 : vector<2x256xf32> to vector<2x256xbf16>
    %cst_188 = arith.constant dense<0.000000e+00> : vector<2x1024xf32>
    %575 = tpu.matmul %574, %480, %cst_188 {dimension_numbers = #tpu.dot_dimension_numbers<[1], [0], [0], [1], [0, 0, 1, 1], [], []>} : vector<2x256xbf16>, vector<256x1024xbf16>, vector<2x1024xf32> -> vector<2x1024xf32>
    %576 = vector.broadcast %481 : vector<1x1024xf32> to vector<2x1024xf32>
    %577 = arith.addf %575, %576 : vector<2x1024xf32>
    %c4_189 = arith.constant 4 : index
    %c0_190 = arith.constant 0 : index
    %578 = vector.load %arg11[%c4_189, %c0_190] : memref<16x1024xf32, #tpu.memory_space<vmem>>, vector<2x512xf32>
    %579 = vector.extract_strided_slice %577 {offsets = [0, 0], sizes = [2, 512], strides = [1, 1]} : vector<2x1024xf32> to vector<2x512xf32>
    %580 = arith.addf %578, %579 : vector<2x512xf32>
    %c10_191 = arith.constant 10 : index
    %c512_192 = arith.constant 512 : index
    %581 = vector.load %arg11[%c10_191, %c512_192] : memref<16x1024xf32, #tpu.memory_space<vmem>>, vector<2x512xf32>
    %582 = vector.extract_strided_slice %577 {offsets = [0, 512], sizes = [2, 512], strides = [1, 1]} : vector<2x1024xf32> to vector<2x512xf32>
    %583 = arith.addf %581, %582 : vector<2x512xf32>
    %584 = vector.extract_strided_slice %580 {offsets = [0, 0], sizes = [2, 384], strides = [1, 1]} : vector<2x512xf32> to vector<2x384xf32>
    %585 = arith.negf %584 : vector<2x384xf32>
    %586 = math.exp %585 : vector<2x384xf32>
    %cst_193 = arith.constant 1.000000e+00 : f32
    %587 = vector.broadcast %cst_193 : f32 to vector<2x384xf32>
    %588 = arith.addf %587, %586 : vector<2x384xf32>
    %589 = arith.divf %587, %588 : vector<2x384xf32>
    %590 = vector.extract_strided_slice %580 {offsets = [0, 384], sizes = [2, 128], strides = [1, 1]} : vector<2x512xf32> to vector<2x128xf32>
    %591 = math.tanh %590 : vector<2x128xf32>
    %592 = vector.extract_strided_slice %589 {offsets = [0, 0], sizes = [2, 128], strides = [1, 1]} : vector<2x384xf32> to vector<2x128xf32>
    %593 = vector.extract_strided_slice %589 {offsets = [0, 128], sizes = [2, 128], strides = [1, 1]} : vector<2x384xf32> to vector<2x128xf32>
    %594 = vector.extract_strided_slice %589 {offsets = [0, 256], sizes = [2, 128], strides = [1, 1]} : vector<2x384xf32> to vector<2x128xf32>
    %595 = arith.mulf %593, %553 : vector<2x128xf32>
    %596 = arith.mulf %592, %591 : vector<2x128xf32>
    %597 = arith.addf %595, %596 : vector<2x128xf32>
    %598 = math.tanh %597 : vector<2x128xf32>
    %599 = arith.mulf %594, %598 : vector<2x128xf32>
    %600 = vector.extract_strided_slice %583 {offsets = [0, 0], sizes = [2, 384], strides = [1, 1]} : vector<2x512xf32> to vector<2x384xf32>
    %601 = arith.negf %600 : vector<2x384xf32>
    %602 = math.exp %601 : vector<2x384xf32>
    %cst_194 = arith.constant 1.000000e+00 : f32
    %603 = vector.broadcast %cst_194 : f32 to vector<2x384xf32>
    %604 = arith.addf %603, %602 : vector<2x384xf32>
    %605 = arith.divf %603, %604 : vector<2x384xf32>
    %606 = vector.extract_strided_slice %583 {offsets = [0, 384], sizes = [2, 128], strides = [1, 1]} : vector<2x512xf32> to vector<2x128xf32>
    %607 = math.tanh %606 : vector<2x128xf32>
    %608 = vector.extract_strided_slice %605 {offsets = [0, 0], sizes = [2, 128], strides = [1, 1]} : vector<2x384xf32> to vector<2x128xf32>
    %609 = vector.extract_strided_slice %605 {offsets = [0, 128], sizes = [2, 128], strides = [1, 1]} : vector<2x384xf32> to vector<2x128xf32>
    %610 = vector.extract_strided_slice %605 {offsets = [0, 256], sizes = [2, 128], strides = [1, 1]} : vector<2x384xf32> to vector<2x128xf32>
    %611 = arith.mulf %609, %569 : vector<2x128xf32>
    %612 = arith.mulf %608, %607 : vector<2x128xf32>
    %613 = arith.addf %611, %612 : vector<2x128xf32>
    %614 = math.tanh %613 : vector<2x128xf32>
    %615 = arith.mulf %610, %614 : vector<2x128xf32>
    %616 = tpu.concatenate %599, %615 in 1 : vector<2x128xf32>, vector<2x128xf32> -> vector<2x256xf32>
    %617 = arith.addf %573, %616 : vector<2x256xf32>
    %618 = arith.truncf %616 : vector<2x256xf32> to vector<2x256xbf16>
    %cst_195 = arith.constant dense<0.000000e+00> : vector<2x1024xf32>
    %619 = tpu.matmul %618, %480, %cst_195 {dimension_numbers = #tpu.dot_dimension_numbers<[1], [0], [0], [1], [0, 0, 1, 1], [], []>} : vector<2x256xbf16>, vector<256x1024xbf16>, vector<2x1024xf32> -> vector<2x1024xf32>
    %620 = vector.broadcast %481 : vector<1x1024xf32> to vector<2x1024xf32>
    %621 = arith.addf %619, %620 : vector<2x1024xf32>
    %c6_196 = arith.constant 6 : index
    %c0_197 = arith.constant 0 : index
    %622 = vector.load %arg11[%c6_196, %c0_197] : memref<16x1024xf32, #tpu.memory_space<vmem>>, vector<2x512xf32>
    %623 = vector.extract_strided_slice %621 {offsets = [0, 0], sizes = [2, 512], strides = [1, 1]} : vector<2x1024xf32> to vector<2x512xf32>
    %624 = arith.addf %622, %623 : vector<2x512xf32>
    %c8_198 = arith.constant 8 : index
    %c512_199 = arith.constant 512 : index
    %625 = vector.load %arg11[%c8_198, %c512_199] : memref<16x1024xf32, #tpu.memory_space<vmem>>, vector<2x512xf32>
    %626 = vector.extract_strided_slice %621 {offsets = [0, 512], sizes = [2, 512], strides = [1, 1]} : vector<2x1024xf32> to vector<2x512xf32>
    %627 = arith.addf %625, %626 : vector<2x512xf32>
    %628 = vector.extract_strided_slice %624 {offsets = [0, 0], sizes = [2, 384], strides = [1, 1]} : vector<2x512xf32> to vector<2x384xf32>
    %629 = arith.negf %628 : vector<2x384xf32>
    %630 = math.exp %629 : vector<2x384xf32>
    %cst_200 = arith.constant 1.000000e+00 : f32
    %631 = vector.broadcast %cst_200 : f32 to vector<2x384xf32>
    %632 = arith.addf %631, %630 : vector<2x384xf32>
    %633 = arith.divf %631, %632 : vector<2x384xf32>
    %634 = vector.extract_strided_slice %624 {offsets = [0, 384], sizes = [2, 128], strides = [1, 1]} : vector<2x512xf32> to vector<2x128xf32>
    %635 = math.tanh %634 : vector<2x128xf32>
    %636 = vector.extract_strided_slice %633 {offsets = [0, 0], sizes = [2, 128], strides = [1, 1]} : vector<2x384xf32> to vector<2x128xf32>
    %637 = vector.extract_strided_slice %633 {offsets = [0, 128], sizes = [2, 128], strides = [1, 1]} : vector<2x384xf32> to vector<2x128xf32>
    %638 = vector.extract_strided_slice %633 {offsets = [0, 256], sizes = [2, 128], strides = [1, 1]} : vector<2x384xf32> to vector<2x128xf32>
    %639 = arith.mulf %637, %597 : vector<2x128xf32>
    %640 = arith.mulf %636, %635 : vector<2x128xf32>
    %641 = arith.addf %639, %640 : vector<2x128xf32>
    %642 = math.tanh %641 : vector<2x128xf32>
    %643 = arith.mulf %638, %642 : vector<2x128xf32>
    %644 = vector.extract_strided_slice %627 {offsets = [0, 0], sizes = [2, 384], strides = [1, 1]} : vector<2x512xf32> to vector<2x384xf32>
    %645 = arith.negf %644 : vector<2x384xf32>
    %646 = math.exp %645 : vector<2x384xf32>
    %cst_201 = arith.constant 1.000000e+00 : f32
    %647 = vector.broadcast %cst_201 : f32 to vector<2x384xf32>
    %648 = arith.addf %647, %646 : vector<2x384xf32>
    %649 = arith.divf %647, %648 : vector<2x384xf32>
    %650 = vector.extract_strided_slice %627 {offsets = [0, 384], sizes = [2, 128], strides = [1, 1]} : vector<2x512xf32> to vector<2x128xf32>
    %651 = math.tanh %650 : vector<2x128xf32>
    %652 = vector.extract_strided_slice %649 {offsets = [0, 0], sizes = [2, 128], strides = [1, 1]} : vector<2x384xf32> to vector<2x128xf32>
    %653 = vector.extract_strided_slice %649 {offsets = [0, 128], sizes = [2, 128], strides = [1, 1]} : vector<2x384xf32> to vector<2x128xf32>
    %654 = vector.extract_strided_slice %649 {offsets = [0, 256], sizes = [2, 128], strides = [1, 1]} : vector<2x384xf32> to vector<2x128xf32>
    %655 = arith.mulf %653, %613 : vector<2x128xf32>
    %656 = arith.mulf %652, %651 : vector<2x128xf32>
    %657 = arith.addf %655, %656 : vector<2x128xf32>
    %658 = math.tanh %657 : vector<2x128xf32>
    %659 = arith.mulf %654, %658 : vector<2x128xf32>
    %660 = tpu.concatenate %643, %659 in 1 : vector<2x128xf32>, vector<2x128xf32> -> vector<2x256xf32>
    %661 = arith.addf %617, %660 : vector<2x256xf32>
    %662 = arith.truncf %660 : vector<2x256xf32> to vector<2x256xbf16>
    %cst_202 = arith.constant dense<0.000000e+00> : vector<2x1024xf32>
    %663 = tpu.matmul %662, %480, %cst_202 {dimension_numbers = #tpu.dot_dimension_numbers<[1], [0], [0], [1], [0, 0, 1, 1], [], []>} : vector<2x256xbf16>, vector<256x1024xbf16>, vector<2x1024xf32> -> vector<2x1024xf32>
    %664 = vector.broadcast %481 : vector<1x1024xf32> to vector<2x1024xf32>
    %665 = arith.addf %663, %664 : vector<2x1024xf32>
    %c8_203 = arith.constant 8 : index
    %c0_204 = arith.constant 0 : index
    %666 = vector.load %arg11[%c8_203, %c0_204] : memref<16x1024xf32, #tpu.memory_space<vmem>>, vector<2x512xf32>
    %667 = vector.extract_strided_slice %665 {offsets = [0, 0], sizes = [2, 512], strides = [1, 1]} : vector<2x1024xf32> to vector<2x512xf32>
    %668 = arith.addf %666, %667 : vector<2x512xf32>
    %c6_205 = arith.constant 6 : index
    %c512_206 = arith.constant 512 : index
    %669 = vector.load %arg11[%c6_205, %c512_206] : memref<16x1024xf32, #tpu.memory_space<vmem>>, vector<2x512xf32>
    %670 = vector.extract_strided_slice %665 {offsets = [0, 512], sizes = [2, 512], strides = [1, 1]} : vector<2x1024xf32> to vector<2x512xf32>
    %671 = arith.addf %669, %670 : vector<2x512xf32>
    %672 = vector.extract_strided_slice %668 {offsets = [0, 0], sizes = [2, 384], strides = [1, 1]} : vector<2x512xf32> to vector<2x384xf32>
    %673 = arith.negf %672 : vector<2x384xf32>
    %674 = math.exp %673 : vector<2x384xf32>
    %cst_207 = arith.constant 1.000000e+00 : f32
    %675 = vector.broadcast %cst_207 : f32 to vector<2x384xf32>
    %676 = arith.addf %675, %674 : vector<2x384xf32>
    %677 = arith.divf %675, %676 : vector<2x384xf32>
    %678 = vector.extract_strided_slice %668 {offsets = [0, 384], sizes = [2, 128], strides = [1, 1]} : vector<2x512xf32> to vector<2x128xf32>
    %679 = math.tanh %678 : vector<2x128xf32>
    %680 = vector.extract_strided_slice %677 {offsets = [0, 0], sizes = [2, 128], strides = [1, 1]} : vector<2x384xf32> to vector<2x128xf32>
    %681 = vector.extract_strided_slice %677 {offsets = [0, 128], sizes = [2, 128], strides = [1, 1]} : vector<2x384xf32> to vector<2x128xf32>
    %682 = vector.extract_strided_slice %677 {offsets = [0, 256], sizes = [2, 128], strides = [1, 1]} : vector<2x384xf32> to vector<2x128xf32>
    %683 = arith.mulf %681, %641 : vector<2x128xf32>
    %684 = arith.mulf %680, %679 : vector<2x128xf32>
    %685 = arith.addf %683, %684 : vector<2x128xf32>
    %686 = math.tanh %685 : vector<2x128xf32>
    %687 = arith.mulf %682, %686 : vector<2x128xf32>
    %688 = vector.extract_strided_slice %671 {offsets = [0, 0], sizes = [2, 384], strides = [1, 1]} : vector<2x512xf32> to vector<2x384xf32>
    %689 = arith.negf %688 : vector<2x384xf32>
    %690 = math.exp %689 : vector<2x384xf32>
    %cst_208 = arith.constant 1.000000e+00 : f32
    %691 = vector.broadcast %cst_208 : f32 to vector<2x384xf32>
    %692 = arith.addf %691, %690 : vector<2x384xf32>
    %693 = arith.divf %691, %692 : vector<2x384xf32>
    %694 = vector.extract_strided_slice %671 {offsets = [0, 384], sizes = [2, 128], strides = [1, 1]} : vector<2x512xf32> to vector<2x128xf32>
    %695 = math.tanh %694 : vector<2x128xf32>
    %696 = vector.extract_strided_slice %693 {offsets = [0, 0], sizes = [2, 128], strides = [1, 1]} : vector<2x384xf32> to vector<2x128xf32>
    %697 = vector.extract_strided_slice %693 {offsets = [0, 128], sizes = [2, 128], strides = [1, 1]} : vector<2x384xf32> to vector<2x128xf32>
    %698 = vector.extract_strided_slice %693 {offsets = [0, 256], sizes = [2, 128], strides = [1, 1]} : vector<2x384xf32> to vector<2x128xf32>
    %699 = arith.mulf %697, %657 : vector<2x128xf32>
    %700 = arith.mulf %696, %695 : vector<2x128xf32>
    %701 = arith.addf %699, %700 : vector<2x128xf32>
    %702 = math.tanh %701 : vector<2x128xf32>
    %703 = arith.mulf %698, %702 : vector<2x128xf32>
    %704 = tpu.concatenate %687, %703 in 1 : vector<2x128xf32>, vector<2x128xf32> -> vector<2x256xf32>
    %705 = arith.addf %661, %704 : vector<2x256xf32>
    %706 = arith.truncf %704 : vector<2x256xf32> to vector<2x256xbf16>
    %cst_209 = arith.constant dense<0.000000e+00> : vector<2x1024xf32>
    %707 = tpu.matmul %706, %480, %cst_209 {dimension_numbers = #tpu.dot_dimension_numbers<[1], [0], [0], [1], [0, 0, 1, 1], [], []>} : vector<2x256xbf16>, vector<256x1024xbf16>, vector<2x1024xf32> -> vector<2x1024xf32>
    %708 = vector.broadcast %481 : vector<1x1024xf32> to vector<2x1024xf32>
    %709 = arith.addf %707, %708 : vector<2x1024xf32>
    %c10_210 = arith.constant 10 : index
    %c0_211 = arith.constant 0 : index
    %710 = vector.load %arg11[%c10_210, %c0_211] : memref<16x1024xf32, #tpu.memory_space<vmem>>, vector<2x512xf32>
    %711 = vector.extract_strided_slice %709 {offsets = [0, 0], sizes = [2, 512], strides = [1, 1]} : vector<2x1024xf32> to vector<2x512xf32>
    %712 = arith.addf %710, %711 : vector<2x512xf32>
    %c4_212 = arith.constant 4 : index
    %c512_213 = arith.constant 512 : index
    %713 = vector.load %arg11[%c4_212, %c512_213] : memref<16x1024xf32, #tpu.memory_space<vmem>>, vector<2x512xf32>
    %714 = vector.extract_strided_slice %709 {offsets = [0, 512], sizes = [2, 512], strides = [1, 1]} : vector<2x1024xf32> to vector<2x512xf32>
    %715 = arith.addf %713, %714 : vector<2x512xf32>
    %716 = vector.extract_strided_slice %712 {offsets = [0, 0], sizes = [2, 384], strides = [1, 1]} : vector<2x512xf32> to vector<2x384xf32>
    %717 = arith.negf %716 : vector<2x384xf32>
    %718 = math.exp %717 : vector<2x384xf32>
    %cst_214 = arith.constant 1.000000e+00 : f32
    %719 = vector.broadcast %cst_214 : f32 to vector<2x384xf32>
    %720 = arith.addf %719, %718 : vector<2x384xf32>
    %721 = arith.divf %719, %720 : vector<2x384xf32>
    %722 = vector.extract_strided_slice %712 {offsets = [0, 384], sizes = [2, 128], strides = [1, 1]} : vector<2x512xf32> to vector<2x128xf32>
    %723 = math.tanh %722 : vector<2x128xf32>
    %724 = vector.extract_strided_slice %721 {offsets = [0, 0], sizes = [2, 128], strides = [1, 1]} : vector<2x384xf32> to vector<2x128xf32>
    %725 = vector.extract_strided_slice %721 {offsets = [0, 128], sizes = [2, 128], strides = [1, 1]} : vector<2x384xf32> to vector<2x128xf32>
    %726 = vector.extract_strided_slice %721 {offsets = [0, 256], sizes = [2, 128], strides = [1, 1]} : vector<2x384xf32> to vector<2x128xf32>
    %727 = arith.mulf %725, %685 : vector<2x128xf32>
    %728 = arith.mulf %724, %723 : vector<2x128xf32>
    %729 = arith.addf %727, %728 : vector<2x128xf32>
    %730 = math.tanh %729 : vector<2x128xf32>
    %731 = arith.mulf %726, %730 : vector<2x128xf32>
    %732 = vector.extract_strided_slice %715 {offsets = [0, 0], sizes = [2, 384], strides = [1, 1]} : vector<2x512xf32> to vector<2x384xf32>
    %733 = arith.negf %732 : vector<2x384xf32>
    %734 = math.exp %733 : vector<2x384xf32>
    %cst_215 = arith.constant 1.000000e+00 : f32
    %735 = vector.broadcast %cst_215 : f32 to vector<2x384xf32>
    %736 = arith.addf %735, %734 : vector<2x384xf32>
    %737 = arith.divf %735, %736 : vector<2x384xf32>
    %738 = vector.extract_strided_slice %715 {offsets = [0, 384], sizes = [2, 128], strides = [1, 1]} : vector<2x512xf32> to vector<2x128xf32>
    %739 = math.tanh %738 : vector<2x128xf32>
    %740 = vector.extract_strided_slice %737 {offsets = [0, 0], sizes = [2, 128], strides = [1, 1]} : vector<2x384xf32> to vector<2x128xf32>
    %741 = vector.extract_strided_slice %737 {offsets = [0, 128], sizes = [2, 128], strides = [1, 1]} : vector<2x384xf32> to vector<2x128xf32>
    %742 = vector.extract_strided_slice %737 {offsets = [0, 256], sizes = [2, 128], strides = [1, 1]} : vector<2x384xf32> to vector<2x128xf32>
    %743 = arith.mulf %741, %701 : vector<2x128xf32>
    %744 = arith.mulf %740, %739 : vector<2x128xf32>
    %745 = arith.addf %743, %744 : vector<2x128xf32>
    %746 = math.tanh %745 : vector<2x128xf32>
    %747 = arith.mulf %742, %746 : vector<2x128xf32>
    %748 = tpu.concatenate %731, %747 in 1 : vector<2x128xf32>, vector<2x128xf32> -> vector<2x256xf32>
    %749 = arith.addf %705, %748 : vector<2x256xf32>
    %750 = arith.truncf %748 : vector<2x256xf32> to vector<2x256xbf16>
    %cst_216 = arith.constant dense<0.000000e+00> : vector<2x1024xf32>
    %751 = tpu.matmul %750, %480, %cst_216 {dimension_numbers = #tpu.dot_dimension_numbers<[1], [0], [0], [1], [0, 0, 1, 1], [], []>} : vector<2x256xbf16>, vector<256x1024xbf16>, vector<2x1024xf32> -> vector<2x1024xf32>
    %752 = vector.broadcast %481 : vector<1x1024xf32> to vector<2x1024xf32>
    %753 = arith.addf %751, %752 : vector<2x1024xf32>
    %c12_217 = arith.constant 12 : index
    %c0_218 = arith.constant 0 : index
    %754 = vector.load %arg11[%c12_217, %c0_218] : memref<16x1024xf32, #tpu.memory_space<vmem>>, vector<2x512xf32>
    %755 = vector.extract_strided_slice %753 {offsets = [0, 0], sizes = [2, 512], strides = [1, 1]} : vector<2x1024xf32> to vector<2x512xf32>
    %756 = arith.addf %754, %755 : vector<2x512xf32>
    %c2_219 = arith.constant 2 : index
    %c512_220 = arith.constant 512 : index
    %757 = vector.load %arg11[%c2_219, %c512_220] : memref<16x1024xf32, #tpu.memory_space<vmem>>, vector<2x512xf32>
    %758 = vector.extract_strided_slice %753 {offsets = [0, 512], sizes = [2, 512], strides = [1, 1]} : vector<2x1024xf32> to vector<2x512xf32>
    %759 = arith.addf %757, %758 : vector<2x512xf32>
    %760 = vector.extract_strided_slice %756 {offsets = [0, 0], sizes = [2, 384], strides = [1, 1]} : vector<2x512xf32> to vector<2x384xf32>
    %761 = arith.negf %760 : vector<2x384xf32>
    %762 = math.exp %761 : vector<2x384xf32>
    %cst_221 = arith.constant 1.000000e+00 : f32
    %763 = vector.broadcast %cst_221 : f32 to vector<2x384xf32>
    %764 = arith.addf %763, %762 : vector<2x384xf32>
    %765 = arith.divf %763, %764 : vector<2x384xf32>
    %766 = vector.extract_strided_slice %756 {offsets = [0, 384], sizes = [2, 128], strides = [1, 1]} : vector<2x512xf32> to vector<2x128xf32>
    %767 = math.tanh %766 : vector<2x128xf32>
    %768 = vector.extract_strided_slice %765 {offsets = [0, 0], sizes = [2, 128], strides = [1, 1]} : vector<2x384xf32> to vector<2x128xf32>
    %769 = vector.extract_strided_slice %765 {offsets = [0, 128], sizes = [2, 128], strides = [1, 1]} : vector<2x384xf32> to vector<2x128xf32>
    %770 = vector.extract_strided_slice %765 {offsets = [0, 256], sizes = [2, 128], strides = [1, 1]} : vector<2x384xf32> to vector<2x128xf32>
    %771 = arith.mulf %769, %729 : vector<2x128xf32>
    %772 = arith.mulf %768, %767 : vector<2x128xf32>
    %773 = arith.addf %771, %772 : vector<2x128xf32>
    %774 = math.tanh %773 : vector<2x128xf32>
    %775 = arith.mulf %770, %774 : vector<2x128xf32>
    %776 = vector.extract_strided_slice %759 {offsets = [0, 0], sizes = [2, 384], strides = [1, 1]} : vector<2x512xf32> to vector<2x384xf32>
    %777 = arith.negf %776 : vector<2x384xf32>
    %778 = math.exp %777 : vector<2x384xf32>
    %cst_222 = arith.constant 1.000000e+00 : f32
    %779 = vector.broadcast %cst_222 : f32 to vector<2x384xf32>
    %780 = arith.addf %779, %778 : vector<2x384xf32>
    %781 = arith.divf %779, %780 : vector<2x384xf32>
    %782 = vector.extract_strided_slice %759 {offsets = [0, 384], sizes = [2, 128], strides = [1, 1]} : vector<2x512xf32> to vector<2x128xf32>
    %783 = math.tanh %782 : vector<2x128xf32>
    %784 = vector.extract_strided_slice %781 {offsets = [0, 0], sizes = [2, 128], strides = [1, 1]} : vector<2x384xf32> to vector<2x128xf32>
    %785 = vector.extract_strided_slice %781 {offsets = [0, 128], sizes = [2, 128], strides = [1, 1]} : vector<2x384xf32> to vector<2x128xf32>
    %786 = vector.extract_strided_slice %781 {offsets = [0, 256], sizes = [2, 128], strides = [1, 1]} : vector<2x384xf32> to vector<2x128xf32>
    %787 = arith.mulf %785, %745 : vector<2x128xf32>
    %788 = arith.mulf %784, %783 : vector<2x128xf32>
    %789 = arith.addf %787, %788 : vector<2x128xf32>
    %790 = math.tanh %789 : vector<2x128xf32>
    %791 = arith.mulf %786, %790 : vector<2x128xf32>
    %792 = tpu.concatenate %775, %791 in 1 : vector<2x128xf32>, vector<2x128xf32> -> vector<2x256xf32>
    %793 = arith.addf %749, %792 : vector<2x256xf32>
    %794 = arith.truncf %792 : vector<2x256xf32> to vector<2x256xbf16>
    %cst_223 = arith.constant dense<0.000000e+00> : vector<2x1024xf32>
    %795 = tpu.matmul %794, %480, %cst_223 {dimension_numbers = #tpu.dot_dimension_numbers<[1], [0], [0], [1], [0, 0, 1, 1], [], []>} : vector<2x256xbf16>, vector<256x1024xbf16>, vector<2x1024xf32> -> vector<2x1024xf32>
    %796 = vector.broadcast %481 : vector<1x1024xf32> to vector<2x1024xf32>
    %797 = arith.addf %795, %796 : vector<2x1024xf32>
    %c14_224 = arith.constant 14 : index
    %c0_225 = arith.constant 0 : index
    %798 = vector.load %arg11[%c14_224, %c0_225] : memref<16x1024xf32, #tpu.memory_space<vmem>>, vector<2x512xf32>
    %799 = vector.extract_strided_slice %797 {offsets = [0, 0], sizes = [2, 512], strides = [1, 1]} : vector<2x1024xf32> to vector<2x512xf32>
    %800 = arith.addf %798, %799 : vector<2x512xf32>
    %c0_226 = arith.constant 0 : index
    %c512_227 = arith.constant 512 : index
    %801 = vector.load %arg11[%c0_226, %c512_227] : memref<16x1024xf32, #tpu.memory_space<vmem>>, vector<2x512xf32>
    %802 = vector.extract_strided_slice %797 {offsets = [0, 512], sizes = [2, 512], strides = [1, 1]} : vector<2x1024xf32> to vector<2x512xf32>
    %803 = arith.addf %801, %802 : vector<2x512xf32>
    %804 = vector.extract_strided_slice %800 {offsets = [0, 0], sizes = [2, 384], strides = [1, 1]} : vector<2x512xf32> to vector<2x384xf32>
    %805 = arith.negf %804 : vector<2x384xf32>
    %806 = math.exp %805 : vector<2x384xf32>
    %cst_228 = arith.constant 1.000000e+00 : f32
    %807 = vector.broadcast %cst_228 : f32 to vector<2x384xf32>
    %808 = arith.addf %807, %806 : vector<2x384xf32>
    %809 = arith.divf %807, %808 : vector<2x384xf32>
    %810 = vector.extract_strided_slice %800 {offsets = [0, 384], sizes = [2, 128], strides = [1, 1]} : vector<2x512xf32> to vector<2x128xf32>
    %811 = math.tanh %810 : vector<2x128xf32>
    %812 = vector.extract_strided_slice %809 {offsets = [0, 0], sizes = [2, 128], strides = [1, 1]} : vector<2x384xf32> to vector<2x128xf32>
    %813 = vector.extract_strided_slice %809 {offsets = [0, 128], sizes = [2, 128], strides = [1, 1]} : vector<2x384xf32> to vector<2x128xf32>
    %814 = vector.extract_strided_slice %809 {offsets = [0, 256], sizes = [2, 128], strides = [1, 1]} : vector<2x384xf32> to vector<2x128xf32>
    %815 = arith.mulf %813, %773 : vector<2x128xf32>
    %816 = arith.mulf %812, %811 : vector<2x128xf32>
    %817 = arith.addf %815, %816 : vector<2x128xf32>
    %818 = math.tanh %817 : vector<2x128xf32>
    %819 = arith.mulf %814, %818 : vector<2x128xf32>
    %820 = vector.extract_strided_slice %803 {offsets = [0, 0], sizes = [2, 384], strides = [1, 1]} : vector<2x512xf32> to vector<2x384xf32>
    %821 = arith.negf %820 : vector<2x384xf32>
    %822 = math.exp %821 : vector<2x384xf32>
    %cst_229 = arith.constant 1.000000e+00 : f32
    %823 = vector.broadcast %cst_229 : f32 to vector<2x384xf32>
    %824 = arith.addf %823, %822 : vector<2x384xf32>
    %825 = arith.divf %823, %824 : vector<2x384xf32>
    %826 = vector.extract_strided_slice %803 {offsets = [0, 384], sizes = [2, 128], strides = [1, 1]} : vector<2x512xf32> to vector<2x128xf32>
    %827 = math.tanh %826 : vector<2x128xf32>
    %828 = vector.extract_strided_slice %825 {offsets = [0, 0], sizes = [2, 128], strides = [1, 1]} : vector<2x384xf32> to vector<2x128xf32>
    %829 = vector.extract_strided_slice %825 {offsets = [0, 128], sizes = [2, 128], strides = [1, 1]} : vector<2x384xf32> to vector<2x128xf32>
    %830 = vector.extract_strided_slice %825 {offsets = [0, 256], sizes = [2, 128], strides = [1, 1]} : vector<2x384xf32> to vector<2x128xf32>
    %831 = arith.mulf %829, %789 : vector<2x128xf32>
    %832 = arith.mulf %828, %827 : vector<2x128xf32>
    %833 = arith.addf %831, %832 : vector<2x128xf32>
    %834 = math.tanh %833 : vector<2x128xf32>
    %835 = arith.mulf %830, %834 : vector<2x128xf32>
    %836 = tpu.concatenate %819, %835 in 1 : vector<2x128xf32>, vector<2x128xf32> -> vector<2x256xf32>
    %837 = arith.addf %793, %836 : vector<2x256xf32>
    %cst_230 = arith.constant 1.250000e-01 : f32
    %838 = vector.broadcast %cst_230 : f32 to vector<2x256xf32>
    %839 = arith.mulf %837, %838 : vector<2x256xf32>
    %c26 = arith.constant 26 : index
    %c0_231 = arith.constant 0 : index
    %840 = vector.load %arg5[%c26, %c0_231] : memref<30x128xf32, #tpu.memory_space<vmem>>, vector<1x128xf32>
    %c27 = arith.constant 27 : index
    %c0_232 = arith.constant 0 : index
    %841 = vector.load %arg5[%c27, %c0_232] : memref<30x128xf32, #tpu.memory_space<vmem>>, vector<1x128xf32>
    %c28 = arith.constant 28 : index
    %c0_233 = arith.constant 0 : index
    %842 = vector.load %arg5[%c28, %c0_233] : memref<30x128xf32, #tpu.memory_space<vmem>>, vector<1x128xf32>
    %c29 = arith.constant 29 : index
    %c0_234 = arith.constant 0 : index
    %843 = vector.load %arg5[%c29, %c0_234] : memref<30x128xf32, #tpu.memory_space<vmem>>, vector<1x128xf32>
    %844 = arith.truncf %839 : vector<2x256xf32> to vector<2x256xbf16>
    %c0_235 = arith.constant 0 : index
    %c0_236 = arith.constant 0 : index
    %845 = vector.load %arg9[%c0_235, %c0_236] : memref<640x128xbf16, #tpu.memory_space<vmem>>, vector<256x128xbf16>
    %cst_237 = arith.constant dense<0.000000e+00> : vector<2x128xf32>
    %846 = tpu.matmul %844, %845, %cst_237 {dimension_numbers = #tpu.dot_dimension_numbers<[1], [0], [0], [1], [0, 0, 1, 1], [], []>} : vector<2x256xbf16>, vector<256x128xbf16>, vector<2x128xf32> -> vector<2x128xf32>
    %847 = vector.broadcast %840 : vector<1x128xf32> to vector<2x128xf32>
    %848 = arith.addf %846, %847 : vector<2x128xf32>
    %cst_238 = arith.constant 0.000000e+00 : f32
    %849 = vector.broadcast %cst_238 : f32 to vector<2x128xf32>
    %850 = arith.maximumf %848, %849 : vector<2x128xf32>
    %851 = arith.truncf %850 : vector<2x128xf32> to vector<2x128xbf16>
    %c256 = arith.constant 256 : index
    %c0_239 = arith.constant 0 : index
    %852 = vector.load %arg9[%c256, %c0_239] : memref<640x128xbf16, #tpu.memory_space<vmem>>, vector<128x128xbf16>
    %cst_240 = arith.constant dense<0.000000e+00> : vector<2x128xf32>
    %853 = tpu.matmul %851, %852, %cst_240 {dimension_numbers = #tpu.dot_dimension_numbers<[1], [0], [0], [1], [0, 0, 1, 1], [], []>} : vector<2x128xbf16>, vector<128x128xbf16>, vector<2x128xf32> -> vector<2x128xf32>
    %854 = vector.broadcast %841 : vector<1x128xf32> to vector<2x128xf32>
    %855 = arith.addf %853, %854 : vector<2x128xf32>
    %cst_241 = arith.constant 0.000000e+00 : f32
    %856 = vector.broadcast %cst_241 : f32 to vector<2x128xf32>
    %857 = arith.maximumf %855, %856 : vector<2x128xf32>
    %858 = arith.truncf %857 : vector<2x128xf32> to vector<2x128xbf16>
    %c384 = arith.constant 384 : index
    %c0_242 = arith.constant 0 : index
    %859 = vector.load %arg9[%c384, %c0_242] : memref<640x128xbf16, #tpu.memory_space<vmem>>, vector<128x128xbf16>
    %cst_243 = arith.constant dense<0.000000e+00> : vector<2x128xf32>
    %860 = tpu.matmul %858, %859, %cst_243 {dimension_numbers = #tpu.dot_dimension_numbers<[1], [0], [0], [1], [0, 0, 1, 1], [], []>} : vector<2x128xbf16>, vector<128x128xbf16>, vector<2x128xf32> -> vector<2x128xf32>
    %861 = vector.broadcast %842 : vector<1x128xf32> to vector<2x128xf32>
    %862 = arith.addf %860, %861 : vector<2x128xf32>
    %cst_244 = arith.constant 0.000000e+00 : f32
    %863 = vector.broadcast %cst_244 : f32 to vector<2x128xf32>
    %864 = arith.maximumf %862, %863 : vector<2x128xf32>
    %865 = arith.truncf %864 : vector<2x128xf32> to vector<2x128xbf16>
    %c512_245 = arith.constant 512 : index
    %c0_246 = arith.constant 0 : index
    %866 = vector.load %arg9[%c512_245, %c0_246] : memref<640x128xbf16, #tpu.memory_space<vmem>>, vector<128x128xbf16>
    %cst_247 = arith.constant dense<0.000000e+00> : vector<2x128xf32>
    %867 = tpu.matmul %865, %866, %cst_247 {dimension_numbers = #tpu.dot_dimension_numbers<[1], [0], [0], [1], [0, 0, 1, 1], [], []>} : vector<2x128xbf16>, vector<128x128xbf16>, vector<2x128xf32> -> vector<2x128xf32>
    %868 = vector.broadcast %843 : vector<1x128xf32> to vector<2x128xf32>
    %869 = arith.addf %867, %868 : vector<2x128xf32>
    %c0_248 = arith.constant 0 : index
    %c0_249 = arith.constant 0 : index
    %870 = vector.load %arg10[%c0_248, %c0_249] : memref<2x128xf32, #tpu.memory_space<vmem>>, vector<2x128xf32>
    tpu.vector_store %arg10[%c0_248, %c0_249], %869 {strides = array<i32>} : memref<2x128xf32, #tpu.memory_space<vmem>>, vector<2x128xf32>,
    return
  }
}

</mosaic_0001>

<llo_original>
// kernel: bert_classifier_forward.1
$region0: #{bert_classifier_forward.1}
  #allocation0 [shape = 'u32[]', space=smem, size = 0x4, offset = 0x4, fixed_abs, tag = 'smem constant byte address 0x4 - core index']
  #allocation1 [shape = 'u32[72,128]{1,0:T(1,128)}', space=vmem, size = 0x9000, scoped, tag = 'internal scratch']
  #allocation2 [shape = 'f32[16,1024]{1,0:T(8,128)}', space=vmem, size = 0x10000, scoped, tag = 'scratch operand']
  %s0 = inlined_call_operand.vmem [shape: f32[16,32], index: 0, kind: input, shape index: {}]
  %s1 = inlined_call_operand.vmem [shape: f32[1,16], index: 1, kind: input, shape index: {}]
  %s2 = inlined_call_operand.vmem [shape: bf16[4,32,128], index: 2, kind: input, shape index: {}]
  %s3 = inlined_call_operand.vmem [shape: bf16[4,32,64], index: 3, kind: input, shape index: {}]
  %s4 = inlined_call_operand.vmem [shape: bf16[4,64,32], index: 4, kind: input, shape index: {}]
  %s5 = inlined_call_operand.vmem [shape: f32[30,128], index: 5, kind: input, shape index: {}]
  %s6 = inlined_call_operand.hbm [shape: bf16[128,1024], index: 6, kind: input, shape index: {}]
  %s7 = inlined_call_operand.hbm [shape: bf16[256,1024], index: 7, kind: input, shape index: {}]
  %s8 = inlined_call_operand.vmem [shape: f32[1,1024], index: 8, kind: input, shape index: {}]
  %s9 = inlined_call_operand.hbm [shape: bf16[640,128], index: 9, kind: input, shape index: {}]
  %s10 = inlined_call_operand.hbm [shape: f32[2,128], index: 10, kind: output, shape index: {}]
  %s11 = sld [smem:[#allocation0]]
  $region62: #{bert_classifier_forward.1} parent=0
    _
  %s13 = ssub.s32 1, %s11
  %s14 = scalar_select 0, %s13, %s11
  $region1: #{bert_classifier_forward.1} parent=0
    #allocation3 [shape = 'u8[262144]{0}', space=vmem, size = 0x40000, scoped, tag = 'input window, operand 6, single buffered']
    #allocation4 [shape = 's32[1]{0}', space=sflag, size = 0x4, scoped, tag = 'scoped memory for bert_classifier_forward.1']
    #allocation5 [shape = 's32[1]{0}', space=sflag, size = 0x4, scoped, tag = 'scoped memory for bert_classifier_forward.1']
    #allocation6 [shape = 'u8[524288]{0}', space=vmem, size = 0x80000, scoped, tag = 'input window, operand 7, single buffered']
    #allocation7 [shape = 's32[1]{0}', space=sflag, size = 0x4, scoped, tag = 'scoped memory for bert_classifier_forward.1']
    #allocation8 [shape = 'u8[163840]{0}', space=vmem, size = 0x28000, scoped, tag = 'input window, operand 9, single buffered']
    #allocation9 [shape = 'u8[1024]{0}', space=vmem, size = 0x400, scoped, tag = 'output window, operand 0, single buffered']
    %15 = vsyncpa [#allocation4], 0
    %16 = vsyncpa [#allocation7], 0
    %17 = vsyncpa [#allocation5], 0
    // Predicated region
    $region2: #{bert_classifier_forward.1} parent=1 // pred_check
      _
    $region3: #{bert_classifier_forward.1} parent=1 // pred_check_branch
      %19 = sbr.rel (0) target = $region5
    $region4: #{bert_classifier_forward.1} parent=1 // pred_region
      _
    $region5: #{bert_classifier_forward.1} parent=1 // pred_fallthru
      _
    // Predicated region
    $region6: #{bert_classifier_forward.1} parent=1 // pred_check
      _
    $region7: #{bert_classifier_forward.1} parent=1 // pred_check_branch
      %21 = sbr.rel (0) target = $region9
    $region8: #{bert_classifier_forward.1} parent=1 // pred_region
      _
    $region9: #{bert_classifier_forward.1} parent=1 // pred_fallthru
      _
    // Predicated region
    $region10: #{bert_classifier_forward.1} parent=1 // pred_check
      _
    $region11: #{bert_classifier_forward.1} parent=1 // pred_check_branch
      %23 = sbr.rel (0) target = $region13
    $region12: #{bert_classifier_forward.1} parent=1 // pred_region
      _
    $region13: #{bert_classifier_forward.1} parent=1 // pred_fallthru
      _
    // Predicated region
    $region14: #{bert_classifier_forward.1} parent=1 // pred_check
      _
    $region15: #{bert_classifier_forward.1} parent=1 // pred_check_branch
      %25 = sbr.rel (0) target = $region17
    $region16: #{bert_classifier_forward.1} parent=1 // pred_region
      _
    $region17: #{bert_classifier_forward.1} parent=1 // pred_fallthru
      _
    // Predicated region
    $region18: #{bert_classifier_forward.1} parent=1 // pred_check
      _
    $region19: #{bert_classifier_forward.1} parent=1 // pred_check_branch
      %27 = sbr.rel (0) target = $region21
    $region20: #{bert_classifier_forward.1} parent=1 // pred_region
      _
    $region21: #{bert_classifier_forward.1} parent=1 // pred_fallthru
      _
    // Predicated region
    $region22: #{bert_classifier_forward.1} parent=1 // pred_check
      _
    $region23: #{bert_classifier_forward.1} parent=1 // pred_check_branch
      %29 = sbr.rel (0) target = $region25
    $region24: #{bert_classifier_forward.1} parent=1 // pred_region
      _
    $region25: #{bert_classifier_forward.1} parent=1 // pred_fallthru
      _
    // Predicated region
    $region26: #{bert_classifier_forward.1} parent=1 // pred_check
      _
    $region27: #{bert_classifier_forward.1} parent=1 // pred_check_branch
      %31 = sbr.rel (0) target = $region29
    $region28: #{bert_classifier_forward.1} parent=1 // pred_region
      %33 = vsyncadd [#allocation4], 0
      %s34 = sshll.u32 %s6, 4
      %s35 = int_to_ptr.hbm [resolvable:$true] %s34
      %s36 = sshll.u32 [#allocation3], 4
      %s37 = int_to_ptr.vmem [resolvable:$true] %s36
      %42 = dma.hbm_to_vmem [thread:$0]  %s35, 8192, %s37, [#allocation4], 512, 512, 32
    $region29: #{bert_classifier_forward.1} parent=1 // pred_fallthru
      _
    // Predicated region
    $region30: #{bert_classifier_forward.1} parent=1 // pred_check
      _
    $region31: #{bert_classifier_forward.1} parent=1 // pred_check_branch
      %44 = sbr.rel (0) target = $region33
    $region32: #{bert_classifier_forward.1} parent=1 // pred_region
      %46 = vsyncadd [#allocation7], 0
      %s47 = sshll.u32 %s7, 4
      %s48 = int_to_ptr.hbm [resolvable:$true] %s47
      %s49 = sshll.u32 [#allocation6], 4
      %s50 = int_to_ptr.vmem [resolvable:$true] %s49
      %55 = dma.hbm_to_vmem [thread:$0]  %s48, 16384, %s50, [#allocation7], 512, 512, 32
    $region33: #{bert_classifier_forward.1} parent=1 // pred_fallthru
      _
    // Predicated region
    $region34: #{bert_classifier_forward.1} parent=1 // pred_check
      _
    $region35: #{bert_classifier_forward.1} parent=1 // pred_check_branch
      %57 = sbr.rel (0) target = $region37
    $region36: #{bert_classifier_forward.1} parent=1 // pred_region
      _
    $region37: #{bert_classifier_forward.1} parent=1 // pred_fallthru
      _
    // Predicated region
    $region38: #{bert_classifier_forward.1} parent=1 // pred_check
      _
    $region39: #{bert_classifier_forward.1} parent=1 // pred_check_branch
      %59 = sbr.rel (0) target = $region41
    $region40: #{bert_classifier_forward.1} parent=1 // pred_region
      %61 = vsyncadd [#allocation7], 0
      %s62 = sshll.u32 %s9, 4
      %s63 = int_to_ptr.hbm [resolvable:$true] %s62
      %s64 = sshll.u32 [#allocation8], 4
      %s65 = int_to_ptr.vmem [resolvable:$true] %s64
      %70 = dma.hbm_to_vmem [thread:$0]  %s63, 5120, %s65, [#allocation7], 64, 64, 4
    $region41: #{bert_classifier_forward.1} parent=1 // pred_fallthru
      _
    // Predicated region
    $region42: #{bert_classifier_forward.1} parent=1 // pred_check
      _
    $region43: #{bert_classifier_forward.1} parent=1 // pred_check_branch
      %72 = sbr.rel (0) target = $region45
    $region44: #{bert_classifier_forward.1} parent=1 // pred_region
      %74 = dma.done [#allocation4], 8192
    $region45: #{bert_classifier_forward.1} parent=1 // pred_fallthru
      _
    // Predicated region
    $region46: #{bert_classifier_forward.1} parent=1 // pred_check
      _
    $region47: #{bert_classifier_forward.1} parent=1 // pred_check_branch
      %76 = sbr.rel (0) target = $region49
    $region48: #{bert_classifier_forward.1} parent=1 // pred_region
      %78 = dma.done [#allocation7], 16384
    $region49: #{bert_classifier_forward.1} parent=1 // pred_fallthru
      _
    // Predicated region
    $region50: #{bert_classifier_forward.1} parent=1 // pred_check
      _
    $region51: #{bert_classifier_forward.1} parent=1 // pred_check_branch
      %80 = sbr.rel (0) target = $region53
    $region52: #{bert_classifier_forward.1} parent=1 // pred_region
      %82 = dma.done [#allocation7], 5120
    $region53: #{bert_classifier_forward.1} parent=1 // pred_fallthru
      _
    %v84 = vlaneseq
    %v85 = vshrl.u32 %v84, 7
    %v86 = vadd.s32 %v85, 8
    %v87 = vlaneseq
    %v88 = vand.u32 %v87, 127
    %v89 = vand.u32 %v85, 1
    %v90 = vand.u32 %v86, 1
    %v91 = vand.u32 %v88, 1
    %vm92 = vcmp.eq.s32.totalorder %v89, %v91
    %vm93 = vcmp.eq.s32.totalorder %v90, %v91
    %v94 = vld [vmem:[%s1] sm:$0x1]
    %v96 = vperm.slane %v94, 0
    %v98 = vsel %vm92, %v96, -1e+09
    %v99 = vsel %vm93, %v96, -1e+09
    %v100 = vld [vmem:[%s0] sm:$0xff]
    %v101 = vld [vmem:[%s0 + $0x8] sm:$0xff]
    %v102 = vld [vmem:[%s5] sm:$0x1]
    %v103 = vld [vmem:[%s5 + $0x1] sm:$0x1]
    %vm104 = vcmask 261120
    %v105 = vsel %vm104, %v100, 0.0
    %106 = vadd.xlane.f32.xlu0 %v105
    %v107 = vpop.xlane.xlu0 %106
    %v108 = vsel %vm104, %v101, 0.0
    %109 = vadd.xlane.f32.xlu0 %v108
    %v110 = vpop.xlane.xlu0 %109
    %v111 = vrcp.pop 32.0
    %v112 = vmul.f32 32.0, %v111
    %v113 = vsub.f32 1.0, %v112
    %v114 = vmul.f32 %v111, %v113
    %v115 = vadd.f32 %v111, %v114
    %vm116 = vweird.f32 %v111
    %v117 = vsel %vm116, %v111, %v115
    %v118 = vmul.f32 %v107, %v117
    %v119 = vmul.f32 %v110, %v117
    %v120 = vsub.f32 %v100, %v118
    %v121 = vsub.f32 %v101, %v119
    %v122 = vmul.f32 %v120, %v120
    %v123 = vmul.f32 %v121, %v121
    %v124 = vsel %vm104, %v122, 0.0
    %125 = vadd.xlane.f32.xlu0 %v124
    %v126 = vpop.xlane.xlu0 %125
    %v127 = vsel %vm104, %v123, 0.0
    %128 = vadd.xlane.f32.xlu0 %v127
    %v129 = vpop.xlane.xlu0 %128
    %v130 = vmul.f32 %v126, %v117
    %v131 = vmul.f32 %v129, %v117
    %v132 = vadd.f32 %v130, 1e-12
    %v133 = vadd.f32 %v131, 1e-12
    %v134 = vrsqrt.pop %v132
    %v135 = vmul.f32 %v134, %v132
    %v136 = vmul.f32 %v135, %v134
    %v137 = vmul.f32 0.5, %v136
    %v138 = vsub.f32 1.5, %v137
    %v139 = vmul.f32 %v134, %v138
    %vm140 = vweird.f32 %v132
    %vm141 = vweird.f32 %v134
    %vm142 = vmor %vm140, %vm141
    %v143 = vsel %vm142, %v134, %v139
    %v144 = vrsqrt.pop %v133
    %v145 = vmul.f32 %v144, %v133
    %v146 = vmul.f32 %v145, %v144
    %v147 = vmul.f32 0.5, %v146
    %v148 = vsub.f32 1.5, %v147
    %v149 = vmul.f32 %v144, %v148
    %vm150 = vweird.f32 %v133
    %vm151 = vweird.f32 %v144
    %vm152 = vmor %vm150, %vm151
    %v153 = vsel %vm152, %v144, %v149
    %v154 = vmul.f32 %v120, %v143
    %v155 = vmul.f32 %v121, %v153
    %v156 = vperm.slane %v102, 0
    %v157 = vmul.f32 %v154, %v156
    %v158 = vmul.f32 %v155, %v156
    %v159 = vperm.slane %v103, 0
    %v160 = vadd.f32 %v157, %v159
    %v161 = vadd.f32 %v158, %v159
    %v162 = vld [vmem:[%s2] sm:$0xf]
    %v163 = vld [vmem:[%s2 + $0x4] sm:$0xf]
    %v164 = vld [vmem:[%s2 + $0x8] sm:$0xf]
    %v165 = vld [vmem:[%s2 + $0xc] sm:$0xf]
    %v166 = vld [vmem:[%s5 + $0x2] sm:$0x1]
    %v167 = vpack.c.bf16 %v161, %v160
    %v168 = vperm.slane %v166, 0
    %v173 = vunpack.c.l.b16 %v162
    %v174 = vunpack.c.l.b16 %v163
    %v175 = vunpack.c.l.b16 %v164
    %v176 = vunpack.c.l.b16 %v165
    %v177 = vpack.c.b16 %v174, %v173
    %v178 = vpack.c.b16 %v176, %v175
    %v182 = vsel %vm104, %v167, 0
    %184 = vmatpush.bf16.msra.mxu0 0
    %185 = vmatpush.bf16.msra.mxu0 0
    %186 = vmatpush.bf16.msra.mxu0 0
    %187 = vmatpush.bf16.msra.mxu0 0
    %188 = vmatpush.bf16.msra.mxu0 0
    %189 = vmatpush.bf16.msra.mxu0 0
    %190 = vmatpush.bf16.msra.mxu0 %v178
    %191 = vmatpush.bf16.msra.mxu0 %v177
    %192 = vmatmul.bf16.gmra.mxu0 %v182
    %v193 = vpop.f32.mrf.mxu0
    %v194 = vadd.f32 %v168, %v193
    %v195 = vpop.f32.mrf.mxu0
    %v196 = vadd.f32 %v168, %v195
    %197 = vdwg.mxu0
    %200 = vrot.lane.b32.xlu0 %v194, 96
    %v201 = vpop.permute.xlu0 %200
    %202 = vrot.lane.b32.xlu0 %v196, 96
    %v203 = vpop.permute.xlu0 %202
    %v204 = vsel %vm104, %v194, 0
    %v206 = vsel %vm104, %v196, 0
    %v208 = vsel %vm104, %v201, 0
    %v210 = vsel %vm104, %v203, 0
    %212 = vmatpush.xpose.msra.mxu0 0.0
    %213 = vmatpush.xpose.msra.mxu0 0.0
    %214 = vmatpush.xpose.msra.mxu0 0.0
    %215 = vmatpush.xpose.msra.mxu0 0.0
    %216 = vmatpush.xpose.msra.mxu0 0.0
    %217 = vmatpush.xpose.msra.mxu0 0.0
    %218 = vmatpush.xpose.msra.mxu0 0.0
    %219 = vmatpush.xpose.msra.mxu0 0.0
    %220 = vmatpush.xpose.msra.mxu0 0.0
    %221 = vmatpush.xpose.msra.mxu0 0.0
    %222 = vmatpush.xpose.msra.mxu0 0.0
    %223 = vmatpush.xpose.msra.mxu0 0.0
    %224 = vmatpush.xpose.msra.mxu0 0.0
    %225 = vmatpush.xpose.msra.mxu0 0.0
    %226 = vmatpush.xpose.msra.mxu0 %v210
    %227 = vmatpush.xpose.msra.mxu0 %v208
    %228 = vmatmul.f32.gmra.mxu0 %v204
    %v229 = vpop.f32.mrf.mxu0
    %v230 = vadd.f32 0.0, %v229
    %231 = vmatmul.f32.gmra.mxu0 %v206
    %v232 = vpop.f32.mrf.mxu0
    %v233 = vadd.f32 0.0, %v232
    %234 = vdwg.mxu0
    %v235 = vmul.f32 %v230, 0.17677669
    %v236 = vmul.f32 %v233, 0.17677669
    %v237 = vadd.f32 %v235, %v98
    %v238 = vadd.f32 %v236, %v99
    %vm239 = vcmask 130048
    %v240 = vsel %vm239, %v237, -inf
    %241 = vmax.xlane.f32.xlu0 %v240
    %v242 = vpop.xlane.xlu0 %241
    %v243 = vsel %vm239, %v238, -inf
    %244 = vmax.xlane.f32.xlu0 %v243
    %v245 = vpop.xlane.xlu0 %244
    %v246 = vsub.f32 %v237, %v242
    %v247 = vsub.f32 %v238, %v245
    %v248 = vmul.f32 %v246, 1.442695
    %v249 = vpow.pop %v248
    %v250 = vmul.f32 %v247, 1.442695
    %v251 = vpow.pop %v250
    %v252 = vsel %vm239, %v249, 0.0
    %253 = vadd.xlane.f32.xlu0 %v252
    %v254 = vpop.xlane.xlu0 %253
    %v255 = vsel %vm239, %v251, 0.0
    %256 = vadd.xlane.f32.xlu0 %v255
    %v257 = vpop.xlane.xlu0 %256
    %v258 = vrcp.pop %v254
    %v259 = vrcp.pop %v257
    %v260 = vmul.f32 %v249, %v258
    %v261 = vmul.f32 %v251, %v259
    %262 = vrot.lane.b32.xlu0 %v194, 64
    %v263 = vpop.permute.xlu0 %262
    %264 = vrot.lane.b32.xlu0 %v196, 64
    %v265 = vpop.permute.xlu0 %264
    %v269 = vsel %vm239, %v260, 0
    %v272 = vsel %vm239, %v261, 0
    %274 = vmatpush.msra.mxu0 0.0
    %275 = vmatpush.msra.mxu0 0.0
    %276 = vmatpush.msra.mxu0 0.0
    %277 = vmatpush.msra.mxu0 0.0
    %278 = vmatpush.msra.mxu0 0.0
    %279 = vmatpush.msra.mxu0 0.0
    %280 = vmatpush.msra.mxu0 0.0
    %281 = vmatpush.msra.mxu0 0.0
    %282 = vmatpush.msra.mxu0 0.0
    %283 = vmatpush.msra.mxu0 0.0
    %284 = vmatpush.msra.mxu0 0.0
    %285 = vmatpush.msra.mxu0 0.0
    %286 = vmatpush.msra.mxu0 0.0
    %287 = vmatpush.msra.mxu0 0.0
    %288 = vmatpush.msra.mxu0 %v265
    %289 = vmatpush.msra.mxu0 %v263
    %290 = vmatmul.f32.gmra.mxu0 %v269
    %v291 = vpop.f32.mrf.mxu0
    %v292 = vadd.f32 0.0, %v291
    %293 = vmatmul.f32.gmra.mxu0 %v272
    %v294 = vpop.f32.mrf.mxu0
    %v295 = vadd.f32 0.0, %v294
    %296 = vdwg.mxu0
    %v297 = vpack.c.bf16 %v295, %v292
    %v299 = vsel %vm104, %v297, 0
    %301 = vmatpush.bf16.msra.mxu0 0
    %302 = vmatpush.bf16.msra.mxu0 0
    %303 = vmatpush.bf16.msra.mxu0 0
    %304 = vmatpush.bf16.msra.mxu0 0
    %305 = vmatpush.bf16.msra.mxu0 0
    %306 = vmatpush.bf16.msra.mxu0 0
    %307 = vmatpush.bf16.msra.mxu0 %v178
    %308 = vmatpush.bf16.msra.mxu0 %v177
    %309 = vmatmul.bf16.gmra.mxu0 %v299
    %v310 = vpop.f32.mrf.mxu0
    %v311 = vadd.f32 0.0, %v310
    %v312 = vpop.f32.mrf.mxu0
    %v313 = vadd.f32 0.0, %v312
    %314 = vdwg.mxu0
    %v315 = vadd.f32 %v311, %v168
    %v316 = vadd.f32 %v313, %v168
    %319 = vrot.lane.b32.xlu0 %v315, 32
    %v320 = vpop.permute.xlu0 %319
    %321 = vrot.lane.b32.xlu0 %v316, 32
    %v322 = vpop.permute.xlu0 %321
    %v325 = vadd.f32 %v160, %v320
    %v326 = vadd.f32 %v161, %v322
    %v327 = vld [vmem:[%s5 + $0x4] sm:$0x1]
    %v328 = vld [vmem:[%s5 + $0x5] sm:$0x1]
    %v329 = vsel %vm104, %v325, 0.0
    %330 = vadd.xlane.f32.xlu0 %v329
    %v331 = vpop.xlane.xlu0 %330
    %v332 = vsel %vm104, %v326, 0.0
    %333 = vadd.xlane.f32.xlu0 %v332
    %v334 = vpop.xlane.xlu0 %333
    %v335 = vmul.f32 %v331, %v117
    %v336 = vmul.f32 %v334, %v117
    %v337 = vsub.f32 %v325, %v335
    %v338 = vsub.f32 %v326, %v336
    %v339 = vmul.f32 %v337, %v337
    %v340 = vmul.f32 %v338, %v338
    %v341 = vsel %vm104, %v339, 0.0
    %342 = vadd.xlane.f32.xlu0 %v341
    %v343 = vpop.xlane.xlu0 %342
    %v344 = vsel %vm104, %v340, 0.0
    %345 = vadd.xlane.f32.xlu0 %v344
    %v346 = vpop.xlane.xlu0 %345
    %v347 = vmul.f32 %v343, %v117
    %v348 = vmul.f32 %v346, %v117
    %v349 = vadd.f32 %v347, 1e-12
    %v350 = vadd.f32 %v348, 1e-12
    %v351 = vrsqrt.pop %v349
    %v352 = vmul.f32 %v351, %v349
    %v353 = vmul.f32 %v352, %v351
    %v354 = vmul.f32 0.5, %v353
    %v355 = vsub.f32 1.5, %v354
    %v356 = vmul.f32 %v351, %v355
    %vm357 = vweird.f32 %v349
    %vm358 = vweird.f32 %v351
    %vm359 = vmor %vm357, %vm358
    %v360 = vsel %vm359, %v351, %v356
    %v361 = vrsqrt.pop %v350
    %v362 = vmul.f32 %v361, %v350
    %v363 = vmul.f32 %v362, %v361
    %v364 = vmul.f32 0.5, %v363
    %v365 = vsub.f32 1.5, %v364
    %v366 = vmul.f32 %v361, %v365
    %vm367 = vweird.f32 %v350
    %vm368 = vweird.f32 %v361
    %vm369 = vmor %vm367, %vm368
    %v370 = vsel %vm369, %v361, %v366
    %v371 = vmul.f32 %v337, %v360
    %v372 = vmul.f32 %v338, %v370
    %v373 = vperm.slane %v327, 0
    %v374 = vmul.f32 %v371, %v373
    %v375 = vmul.f32 %v372, %v373
    %v376 = vperm.slane %v328, 0
    %v377 = vadd.f32 %v374, %v376
    %v378 = vadd.f32 %v375, %v376
    %v379 = vld [vmem:[%s5 + $0x3] sm:$0x1]
    %v380 = vpack.c.bf16 %v378, %v377
    %v381 = vld [vmem:[%s3] sm:$0xf]
    %v382 = vld [vmem:[%s3 + $0x4] sm:$0xf]
    %v383 = vld [vmem:[%s3 + $0x8] sm:$0xf]
    %v384 = vld [vmem:[%s3 + $0xc] sm:$0xf]
    %v385 = vperm.slane %v379, 0
    %v390 = vunpack.c.l.b16 %v381
    %v391 = vunpack.c.l.b16 %v382
    %v392 = vunpack.c.l.b16 %v383
    %v393 = vunpack.c.l.b16 %v384
    %v394 = vpack.c.b16 %v391, %v390
    %v395 = vpack.c.b16 %v393, %v392
    %v399 = vsel %vm104, %v380, 0
    %401 = vmatpush.bf16.msra.mxu0 0
    %402 = vmatpush.bf16.msra.mxu0 0
    %403 = vmatpush.bf16.msra.mxu0 0
    %404 = vmatpush.bf16.msra.mxu0 0
    %405 = vmatpush.bf16.msra.mxu0 0
    %406 = vmatpush.bf16.msra.mxu0 0
    %407 = vmatpush.bf16.msra.mxu0 %v395
    %408 = vmatpush.bf16.msra.mxu0 %v394
    %409 = vmatmul.bf16.gmra.mxu0 %v399
    %v410 = vpop.f32.mrf.mxu0
    %v411 = vadd.f32 %v385, %v410
    %v412 = vpop.f32.mrf.mxu0
    %v413 = vadd.f32 %v385, %v412
    %414 = vdwg.mxu0
    %v415 = vmul.f32 %v411, %v411
    %v416 = vmul.f32 %v413, %v413
    %v417 = vmul.f32 %v411, %v415
    %v418 = vmul.f32 %v413, %v416
    %v419 = vmul.f32 %v417, 0.044715
    %v420 = vmul.f32 %v418, 0.044715
    %v421 = vadd.f32 %v411, %v419
    %v422 = vadd.f32 %v413, %v420
    %v423 = vmul.f32 %v421, 0.7978846
    %v424 = vmul.f32 %v422, 0.7978846
    %v425 = vtanh.pop %v423
    %v426 = vtanh.pop %v424
    %v427 = vadd.f32 %v425, 1.0
    %v428 = vadd.f32 %v426, 1.0
    %v429 = vmul.f32 %v427, 0.5
    %v430 = vmul.f32 %v428, 0.5
    %v431 = vmul.f32 %v411, %v429
    %v432 = vmul.f32 %v413, %v430
    %v433 = vpack.c.bf16 %v432, %v431
    %v434 = vld [vmem:[%s4] sm:$0xf]
    %v435 = vld [vmem:[%s4 + $0x4] sm:$0xf]
    %v436 = vld [vmem:[%s4 + $0x8] sm:$0xf]
    %v437 = vld [vmem:[%s4 + $0xc] sm:$0xf]
    %v438 = vld [vmem:[%s4 + $0x10] sm:$0xf]
    %v439 = vld [vmem:[%s4 + $0x14] sm:$0xf]
    %v440 = vld [vmem:[%s4 + $0x18] sm:$0xf]
    %v441 = vld [vmem:[%s4 + $0x1c] sm:$0xf]
    %v450 = vunpack.c.l.b16 %v434
    %v451 = vunpack.c.l.b16 %v435
    %v452 = vunpack.c.l.b16 %v436
    %v453 = vunpack.c.l.b16 %v437
    %v454 = vunpack.c.l.b16 %v438
    %v455 = vunpack.c.l.b16 %v439
    %v456 = vunpack.c.l.b16 %v440
    %v457 = vunpack.c.l.b16 %v441
    %v458 = vpack.c.b16 %v451, %v450
    %v459 = vpack.c.b16 %v453, %v452
    %v460 = vpack.c.b16 %v455, %v454
    %v461 = vpack.c.b16 %v457, %v456
    %467 = vrot.lane.b32.xlu0 %v385, 64
    %v468 = vpop.permute.xlu0 %467
    %vm470 = vcmask 523264
    %v472 = vsel %vm470, %v433, 0
    %474 = vmatpush.bf16.msra.mxu0 0
    %475 = vmatpush.bf16.msra.mxu0 0
    %476 = vmatpush.bf16.msra.mxu0 0
    %477 = vmatpush.bf16.msra.mxu0 0
    %478 = vmatpush.bf16.msra.mxu0 %v461
    %479 = vmatpush.bf16.msra.mxu0 %v460
    %480 = vmatpush.bf16.msra.mxu0 %v459
    %481 = vmatpush.bf16.msra.mxu0 %v458
    %482 = vmatmul.bf16.gmra.mxu0 %v472
    %v483 = vpop.f32.mrf.mxu0
    %v484 = vadd.f32 %v468, %v483
    %v485 = vpop.f32.mrf.mxu0
    %v486 = vadd.f32 %v468, %v485
    %487 = vdwg.mxu0
    %v488 = vadd.f32 %v377, %v484
    %v489 = vadd.f32 %v378, %v486
    %v490 = vld [vmem:[%s5 + $0x6] sm:$0x1]
    %v491 = vld [vmem:[%s5 + $0x7] sm:$0x1]
    %v492 = vsel %vm104, %v488, 0.0
    %493 = vadd.xlane.f32.xlu0 %v492
    %v494 = vpop.xlane.xlu0 %493
    %v495 = vsel %vm104, %v489, 0.0
    %496 = vadd.xlane.f32.xlu0 %v495
    %v497 = vpop.xlane.xlu0 %496
    %v498 = vmul.f32 %v494, %v117
    %v499 = vmul.f32 %v497, %v117
    %v500 = vsub.f32 %v488, %v498
    %v501 = vsub.f32 %v489, %v499
    %v502 = vmul.f32 %v500, %v500
    %v503 = vmul.f32 %v501, %v501
    %v504 = vsel %vm104, %v502, 0.0
    %505 = vadd.xlane.f32.xlu0 %v504
    %v506 = vpop.xlane.xlu0 %505
    %v507 = vsel %vm104, %v503, 0.0
    %508 = vadd.xlane.f32.xlu0 %v507
    %v509 = vpop.xlane.xlu0 %508
    %v510 = vmul.f32 %v506, %v117
    %v511 = vmul.f32 %v509, %v117
    %v512 = vadd.f32 %v510, 1e-12
    %v513 = vadd.f32 %v511, 1e-12
    %v514 = vrsqrt.pop %v512
    %v515 = vmul.f32 %v514, %v512
    %v516 = vmul.f32 %v515, %v514
    %v517 = vmul.f32 0.5, %v516
    %v518 = vsub.f32 1.5, %v517
    %v519 = vmul.f32 %v514, %v518
    %vm520 = vweird.f32 %v512
    %vm521 = vweird.f32 %v514
    %vm522 = vmor %vm520, %vm521
    %v523 = vsel %vm522, %v514, %v519
    %v524 = vrsqrt.pop %v513
    %v525 = vmul.f32 %v524, %v513
    %v526 = vmul.f32 %v525, %v524
    %v527 = vmul.f32 0.5, %v526
    %v528 = vsub.f32 1.5, %v527
    %v529 = vmul.f32 %v524, %v528
    %vm530 = vweird.f32 %v513
    %vm531 = vweird.f32 %v524
    %vm532 = vmor %vm530, %vm531
    %v533 = vsel %vm532, %v524, %v529
    %v534 = vmul.f32 %v500, %v523
    %v535 = vmul.f32 %v501, %v533
    %v536 = vperm.slane %v490, 0
    %v537 = vmul.f32 %v534, %v536
    %v538 = vmul.f32 %v535, %v536
    %v539 = vperm.slane %v491, 0
    %v540 = vadd.f32 %v537, %v539
    %v541 = vadd.f32 %v538, %v539
    %s542 = scalar_lea.vmem %s2, 16
    %v543 = vld [vmem:[%s542] sm:$0xf]
    %v544 = vld [vmem:[%s542 + $0x4] sm:$0xf]
    %v545 = vld [vmem:[%s542 + $0x8] sm:$0xf]
    %v546 = vld [vmem:[%s542 + $0xc] sm:$0xf]
    %v547 = vld [vmem:[%s5 + $0x8] sm:$0x1]
    %v548 = vpack.c.bf16 %v541, %v540
    %v549 = vperm.slane %v547, 0
    %v554 = vunpack.c.l.b16 %v543
    %v555 = vunpack.c.l.b16 %v544
    %v556 = vunpack.c.l.b16 %v545
    %v557 = vunpack.c.l.b16 %v546
    %v558 = vpack.c.b16 %v555, %v554
    %v559 = vpack.c.b16 %v557, %v556
    %v563 = vsel %vm104, %v548, 0
    %565 = vmatpush.bf16.msra.mxu0 0
    %566 = vmatpush.bf16.msra.mxu0 0
    %567 = vmatpush.bf16.msra.mxu0 0
    %568 = vmatpush.bf16.msra.mxu0 0
    %569 = vmatpush.bf16.msra.mxu0 0
    %570 = vmatpush.bf16.msra.mxu0 0
    %571 = vmatpush.bf16.msra.mxu0 %v559
    %572 = vmatpush.bf16.msra.mxu0 %v558
    %573 = vmatmul.bf16.gmra.mxu0 %v563
    %v574 = vpop.f32.mrf.mxu0
    %v575 = vadd.f32 %v549, %v574
    %v576 = vpop.f32.mrf.mxu0
    %v577 = vadd.f32 %v549, %v576
    %578 = vdwg.mxu0
    %581 = vrot.lane.b32.xlu0 %v575, 96
    %v582 = vpop.permute.xlu0 %581
    %583 = vrot.lane.b32.xlu0 %v577, 96
    %v584 = vpop.permute.xlu0 %583
    %v585 = vsel %vm104, %v575, 0
    %v587 = vsel %vm104, %v577, 0
    %v589 = vsel %vm104, %v582, 0
    %v591 = vsel %vm104, %v584, 0
    %593 = vmatpush.xpose.msra.mxu0 0.0
    %594 = vmatpush.xpose.msra.mxu0 0.0
    %595 = vmatpush.xpose.msra.mxu0 0.0
    %596 = vmatpush.xpose.msra.mxu0 0.0
    %597 = vmatpush.xpose.msra.mxu0 0.0
    %598 = vmatpush.xpose.msra.mxu0 0.0
    %599 = vmatpush.xpose.msra.mxu0 0.0
    %600 = vmatpush.xpose.msra.mxu0 0.0
    %601 = vmatpush.xpose.msra.mxu0 0.0
    %602 = vmatpush.xpose.msra.mxu0 0.0
    %603 = vmatpush.xpose.msra.mxu0 0.0
    %604 = vmatpush.xpose.msra.mxu0 0.0
    %605 = vmatpush.xpose.msra.mxu0 0.0
    %606 = vmatpush.xpose.msra.mxu0 0.0
    %607 = vmatpush.xpose.msra.mxu0 %v591
    %608 = vmatpush.xpose.msra.mxu0 %v589
    %609 = vmatmul.f32.gmra.mxu0 %v585
    %v610 = vpop.f32.mrf.mxu0
    %v611 = vadd.f32 0.0, %v610
    %612 = vmatmul.f32.gmra.mxu0 %v587
    %v613 = vpop.f32.mrf.mxu0
    %v614 = vadd.f32 0.0, %v613
    %615 = vdwg.mxu0
    %v616 = vmul.f32 %v611, 0.17677669
    %v617 = vmul.f32 %v614, 0.17677669
    %v618 = vadd.f32 %v616, %v98
    %v619 = vadd.f32 %v617, %v99
    %v620 = vsel %vm239, %v618, -inf
    %621 = vmax.xlane.f32.xlu0 %v620
    %v622 = vpop.xlane.xlu0 %621
    %v623 = vsel %vm239, %v619, -inf
    %624 = vmax.xlane.f32.xlu0 %v623
    %v625 = vpop.xlane.xlu0 %624
    %v626 = vsub.f32 %v618, %v622
    %v627 = vsub.f32 %v619, %v625
    %v628 = vmul.f32 %v626, 1.442695
    %v629 = vpow.pop %v628
    %v630 = vmul.f32 %v627, 1.442695
    %v631 = vpow.pop %v630
    %v632 = vsel %vm239, %v629, 0.0
    %633 = vadd.xlane.f32.xlu0 %v632
    %v634 = vpop.xlane.xlu0 %633
    %v635 = vsel %vm239, %v631, 0.0
    %636 = vadd.xlane.f32.xlu0 %v635
    %v637 = vpop.xlane.xlu0 %636
    %v638 = vrcp.pop %v634
    %v639 = vrcp.pop %v637
    %v640 = vmul.f32 %v629, %v638
    %v641 = vmul.f32 %v631, %v639
    %642 = vrot.lane.b32.xlu0 %v575, 64
    %v643 = vpop.permute.xlu0 %642
    %644 = vrot.lane.b32.xlu0 %v577, 64
    %v645 = vpop.permute.xlu0 %644
    %v649 = vsel %vm239, %v640, 0
    %v652 = vsel %vm239, %v641, 0
    %654 = vmatpush.msra.mxu0 0.0
    %655 = vmatpush.msra.mxu0 0.0
    %656 = vmatpush.msra.mxu0 0.0
    %657 = vmatpush.msra.mxu0 0.0
    %658 = vmatpush.msra.mxu0 0.0
    %659 = vmatpush.msra.mxu0 0.0
    %660 = vmatpush.msra.mxu0 0.0
    %661 = vmatpush.msra.mxu0 0.0
    %662 = vmatpush.msra.mxu0 0.0
    %663 = vmatpush.msra.mxu0 0.0
    %664 = vmatpush.msra.mxu0 0.0
    %665 = vmatpush.msra.mxu0 0.0
    %666 = vmatpush.msra.mxu0 0.0
    %667 = vmatpush.msra.mxu0 0.0
    %668 = vmatpush.msra.mxu0 %v645
    %669 = vmatpush.msra.mxu0 %v643
    %670 = vmatmul.f32.gmra.mxu0 %v649
    %v671 = vpop.f32.mrf.mxu0
    %v672 = vadd.f32 0.0, %v671
    %673 = vmatmul.f32.gmra.mxu0 %v652
    %v674 = vpop.f32.mrf.mxu0
    %v675 = vadd.f32 0.0, %v674
    %676 = vdwg.mxu0
    %v677 = vpack.c.bf16 %v675, %v672
    %v679 = vsel %vm104, %v677, 0
    %681 = vmatpush.bf16.msra.mxu0 0
    %682 = vmatpush.bf16.msra.mxu0 0
    %683 = vmatpush.bf16.msra.mxu0 0
    %684 = vmatpush.bf16.msra.mxu0 0
    %685 = vmatpush.bf16.msra.mxu0 0
    %686 = vmatpush.bf16.msra.mxu0 0
    %687 = vmatpush.bf16.msra.mxu0 %v559
    %688 = vmatpush.bf16.msra.mxu0 %v558
    %689 = vmatmul.bf16.gmra.mxu0 %v679
    %v690 = vpop.f32.mrf.mxu0
    %v691 = vadd.f32 0.0, %v690
    %v692 = vpop.f32.mrf.mxu0
    %v693 = vadd.f32 0.0, %v692
    %694 = vdwg.mxu0
    %v695 = vadd.f32 %v691, %v549
    %v696 = vadd.f32 %v693, %v549
    %699 = vrot.lane.b32.xlu0 %v695, 32
    %v700 = vpop.permute.xlu0 %699
    %701 = vrot.lane.b32.xlu0 %v696, 32
    %v702 = vpop.permute.xlu0 %701
    %v705 = vadd.f32 %v540, %v700
    %v706 = vadd.f32 %v541, %v702
    %v707 = vld [vmem:[%s5 + $0xa] sm:$0x1]
    %v708 = vld [vmem:[%s5 + $0xb] sm:$0x1]
    %v709 = vsel %vm104, %v705, 0.0
    %710 = vadd.xlane.f32.xlu0 %v709
    %v711 = vpop.xlane.xlu0 %710
    %v712 = vsel %vm104, %v706, 0.0
    %713 = vadd.xlane.f32.xlu0 %v712
    %v714 = vpop.xlane.xlu0 %713
    %v715 = vmul.f32 %v711, %v117
    %v716 = vmul.f32 %v714, %v117
    %v717 = vsub.f32 %v705, %v715
    %v718 = vsub.f32 %v706, %v716
    %v719 = vmul.f32 %v717, %v717
    %v720 = vmul.f32 %v718, %v718
    %v721 = vsel %vm104, %v719, 0.0
    %722 = vadd.xlane.f32.xlu0 %v721
    %v723 = vpop.xlane.xlu0 %722
    %v724 = vsel %vm104, %v720, 0.0
    %725 = vadd.xlane.f32.xlu0 %v724
    %v726 = vpop.xlane.xlu0 %725
    %v727 = vmul.f32 %v723, %v117
    %v728 = vmul.f32 %v726, %v117
    %v729 = vadd.f32 %v727, 1e-12
    %v730 = vadd.f32 %v728, 1e-12
    %v731 = vrsqrt.pop %v729
    %v732 = vmul.f32 %v731, %v729
    %v733 = vmul.f32 %v732, %v731
    %v734 = vmul.f32 0.5, %v733
    %v735 = vsub.f32 1.5, %v734
    %v736 = vmul.f32 %v731, %v735
    %vm737 = vweird.f32 %v729
    %vm738 = vweird.f32 %v731
    %vm739 = vmor %vm737, %vm738
    %v740 = vsel %vm739, %v731, %v736
    %v741 = vrsqrt.pop %v730
    %v742 = vmul.f32 %v741, %v730
    %v743 = vmul.f32 %v742, %v741
    %v744 = vmul.f32 0.5, %v743
    %v745 = vsub.f32 1.5, %v744
    %v746 = vmul.f32 %v741, %v745
    %vm747 = vweird.f32 %v730
    %vm748 = vweird.f32 %v741
    %vm749 = vmor %vm747, %vm748
    %v750 = vsel %vm749, %v741, %v746
    %v751 = vmul.f32 %v717, %v740
    %v752 = vmul.f32 %v718, %v750
    %v753 = vperm.slane %v707, 0
    %v754 = vmul.f32 %v751, %v753
    %v755 = vmul.f32 %v752, %v753
    %v756 = vperm.slane %v708, 0
    %v757 = vadd.f32 %v754, %v756
    %v758 = vadd.f32 %v755, %v756
    %v759 = vld [vmem:[%s5 + $0x9] sm:$0x1]
    %v760 = vpack.c.bf16 %v758, %v757
    %s761 = scalar_lea.vmem %s3, 16
    %v762 = vld [vmem:[%s761] sm:$0xf]
    %v763 = vld [vmem:[%s761 + $0x4] sm:$0xf]
    %v764 = vld [vmem:[%s761 + $0x8] sm:$0xf]
    %v765 = vld [vmem:[%s761 + $0xc] sm:$0xf]
    %v766 = vperm.slane %v759, 0
    %v771 = vunpack.c.l.b16 %v762
    %v772 = vunpack.c.l.b16 %v763
    %v773 = vunpack.c.l.b16 %v764
    %v774 = vunpack.c.l.b16 %v765
    %v775 = vpack.c.b16 %v772, %v771
    %v776 = vpack.c.b16 %v774, %v773
    %v780 = vsel %vm104, %v760, 0
    %782 = vmatpush.bf16.msra.mxu0 0
    %783 = vmatpush.bf16.msra.mxu0 0
    %784 = vmatpush.bf16.msra.mxu0 0
    %785 = vmatpush.bf16.msra.mxu0 0
    %786 = vmatpush.bf16.msra.mxu0 0
    %787 = vmatpush.bf16.msra.mxu0 0
    %788 = vmatpush.bf16.msra.mxu0 %v776
    %789 = vmatpush.bf16.msra.mxu0 %v775
    %790 = vmatmul.bf16.gmra.mxu0 %v780
    %v791 = vpop.f32.mrf.mxu0
    %v792 = vadd.f32 %v766, %v791
    %v793 = vpop.f32.mrf.mxu0
    %v794 = vadd.f32 %v766, %v793
    %795 = vdwg.mxu0
    %v796 = vmul.f32 %v792, %v792
    %v797 = vmul.f32 %v794, %v794
    %v798 = vmul.f32 %v792, %v796
    %v799 = vmul.f32 %v794, %v797
    %v800 = vmul.f32 %v798, 0.044715
    %v801 = vmul.f32 %v799, 0.044715
    %v802 = vadd.f32 %v792, %v800
    %v803 = vadd.f32 %v794, %v801
    %v804 = vmul.f32 %v802, 0.7978846
    %v805 = vmul.f32 %v803, 0.7978846
    %v806 = vtanh.pop %v804
    %v807 = vtanh.pop %v805
    %v808 = vadd.f32 %v806, 1.0
    %v809 = vadd.f32 %v807, 1.0
    %v810 = vmul.f32 %v808, 0.5
    %v811 = vmul.f32 %v809, 0.5
    %v812 = vmul.f32 %v792, %v810
    %v813 = vmul.f32 %v794, %v811
    %v814 = vpack.c.bf16 %v813, %v812
    %s815 = scalar_lea.vmem %s4, 32
    %v816 = vld [vmem:[%s815] sm:$0xf]
    %v817 = vld [vmem:[%s815 + $0x4] sm:$0xf]
    %v818 = vld [vmem:[%s815 + $0x8] sm:$0xf]
    %v819 = vld [vmem:[%s815 + $0xc] sm:$0xf]
    %v820 = vld [vmem:[%s815 + $0x10] sm:$0xf]
    %v821 = vld [vmem:[%s815 + $0x14] sm:$0xf]
    %v822 = vld [vmem:[%s815 + $0x18] sm:$0xf]
    %v823 = vld [vmem:[%s815 + $0x1c] sm:$0xf]
    %v832 = vunpack.c.l.b16 %v816
    %v833 = vunpack.c.l.b16 %v817
    %v834 = vunpack.c.l.b16 %v818
    %v835 = vunpack.c.l.b16 %v819
    %v836 = vunpack.c.l.b16 %v820
    %v837 = vunpack.c.l.b16 %v821
    %v838 = vunpack.c.l.b16 %v822
    %v839 = vunpack.c.l.b16 %v823
    %v840 = vpack.c.b16 %v833, %v832
    %v841 = vpack.c.b16 %v835, %v834
    %v842 = vpack.c.b16 %v837, %v836
    %v843 = vpack.c.b16 %v839, %v838
    %849 = vrot.lane.b32.xlu0 %v766, 64
    %v850 = vpop.permute.xlu0 %849
    %v853 = vsel %vm470, %v814, 0
    %855 = vmatpush.bf16.msra.mxu0 0
    %856 = vmatpush.bf16.msra.mxu0 0
    %857 = vmatpush.bf16.msra.mxu0 0
    %858 = vmatpush.bf16.msra.mxu0 0
    %859 = vmatpush.bf16.msra.mxu0 %v843
    %860 = vmatpush.bf16.msra.mxu0 %v842
    %861 = vmatpush.bf16.msra.mxu0 %v841
    %862 = vmatpush.bf16.msra.mxu0 %v840
    %863 = vmatmul.bf16.gmra.mxu0 %v853
    %v864 = vpop.f32.mrf.mxu0
    %v865 = vadd.f32 %v850, %v864
    %v866 = vpop.f32.mrf.mxu0
    %v867 = vadd.f32 %v850, %v866
    %868 = vdwg.mxu0
    %v869 = vadd.f32 %v757, %v865
    %v870 = vadd.f32 %v758, %v867
    %v871 = vld [vmem:[%s5 + $0xc] sm:$0x1]
    %v872 = vld [vmem:[%s5 + $0xd] sm:$0x1]
    %v873 = vsel %vm104, %v869, 0.0
    %874 = vadd.xlane.f32.xlu0 %v873
    %v875 = vpop.xlane.xlu0 %874
    %v876 = vsel %vm104, %v870, 0.0
    %877 = vadd.xlane.f32.xlu0 %v876
    %v878 = vpop.xlane.xlu0 %877
    %v879 = vmul.f32 %v875, %v117
    %v880 = vmul.f32 %v878, %v117
    %v881 = vsub.f32 %v869, %v879
    %v882 = vsub.f32 %v870, %v880
    %v883 = vmul.f32 %v881, %v881
    %v884 = vmul.f32 %v882, %v882
    %v885 = vsel %vm104, %v883, 0.0
    %886 = vadd.xlane.f32.xlu0 %v885
    %v887 = vpop.xlane.xlu0 %886
    %v888 = vsel %vm104, %v884, 0.0
    %889 = vadd.xlane.f32.xlu0 %v888
    %v890 = vpop.xlane.xlu0 %889
    %v891 = vmul.f32 %v887, %v117
    %v892 = vmul.f32 %v890, %v117
    %v893 = vadd.f32 %v891, 1e-12
    %v894 = vadd.f32 %v892, 1e-12
    %v895 = vrsqrt.pop %v893
    %v896 = vmul.f32 %v895, %v893
    %v897 = vmul.f32 %v896, %v895
    %v898 = vmul.f32 0.5, %v897
    %v899 = vsub.f32 1.5, %v898
    %v900 = vmul.f32 %v895, %v899
    %vm901 = vweird.f32 %v893
    %vm902 = vweird.f32 %v895
    %vm903 = vmor %vm901, %vm902
    %v904 = vsel %vm903, %v895, %v900
    %v905 = vrsqrt.pop %v894
    %v906 = vmul.f32 %v905, %v894
    %v907 = vmul.f32 %v906, %v905
    %v908 = vmul.f32 0.5, %v907
    %v909 = vsub.f32 1.5, %v908
    %v910 = vmul.f32 %v905, %v909
    %vm911 = vweird.f32 %v894
    %vm912 = vweird.f32 %v905
    %vm913 = vmor %vm911, %vm912
    %v914 = vsel %vm913, %v905, %v910
    %v915 = vmul.f32 %v881, %v904
    %v916 = vmul.f32 %v882, %v914
    %v917 = vperm.slane %v871, 0
    %v918 = vmul.f32 %v915, %v917
    %v919 = vmul.f32 %v916, %v917
    %v920 = vperm.slane %v872, 0
    %v921 = vadd.f32 %v918, %v920
    %v922 = vadd.f32 %v919, %v920
    %s923 = scalar_lea.vmem %s2, 32
    %v924 = vld [vmem:[%s923] sm:$0xf]
    %v925 = vld [vmem:[%s923 + $0x4] sm:$0xf]
    %v926 = vld [vmem:[%s923 + $0x8] sm:$0xf]
    %v927 = vld [vmem:[%s923 + $0xc] sm:$0xf]
    %v928 = vld [vmem:[%s5 + $0xe] sm:$0x1]
    %v929 = vpack.c.bf16 %v922, %v921
    %v930 = vperm.slane %v928, 0
    %v935 = vunpack.c.l.b16 %v924
    %v936 = vunpack.c.l.b16 %v925
    %v937 = vunpack.c.l.b16 %v926
    %v938 = vunpack.c.l.b16 %v927
    %v939 = vpack.c.b16 %v936, %v935
    %v940 = vpack.c.b16 %v938, %v937
    %v944 = vsel %vm104, %v929, 0
    %946 = vmatpush.bf16.msra.mxu0 0
    %947 = vmatpush.bf16.msra.mxu0 0
    %948 = vmatpush.bf16.msra.mxu0 0
    %949 = vmatpush.bf16.msra.mxu0 0
    %950 = vmatpush.bf16.msra.mxu0 0
    %951 = vmatpush.bf16.msra.mxu0 0
    %952 = vmatpush.bf16.msra.mxu0 %v940
    %953 = vmatpush.bf16.msra.mxu0 %v939
    %954 = vmatmul.bf16.gmra.mxu0 %v944
    %v955 = vpop.f32.mrf.mxu0
    %v956 = vadd.f32 %v930, %v955
    %v957 = vpop.f32.mrf.mxu0
    %v958 = vadd.f32 %v930, %v957
    %959 = vdwg.mxu0
    %962 = vrot.lane.b32.xlu0 %v956, 96
    %v963 = vpop.permute.xlu0 %962
    %964 = vrot.lane.b32.xlu0 %v958, 96
    %v965 = vpop.permute.xlu0 %964
    %v966 = vsel %vm104, %v956, 0
    %v968 = vsel %vm104, %v958, 0
    %v970 = vsel %vm104, %v963, 0
    %v972 = vsel %vm104, %v965, 0
    %974 = vmatpush.xpose.msra.mxu0 0.0
    %975 = vmatpush.xpose.msra.mxu0 0.0
    %976 = vmatpush.xpose.msra.mxu0 0.0
    %977 = vmatpush.xpose.msra.mxu0 0.0
    %978 = vmatpush.xpose.msra.mxu0 0.0
    %979 = vmatpush.xpose.msra.mxu0 0.0
    %980 = vmatpush.xpose.msra.mxu0 0.0
    %981 = vmatpush.xpose.msra.mxu0 0.0
    %982 = vmatpush.xpose.msra.mxu0 0.0
    %983 = vmatpush.xpose.msra.mxu0 0.0
    %984 = vmatpush.xpose.msra.mxu0 0.0
    %985 = vmatpush.xpose.msra.mxu0 0.0
    %986 = vmatpush.xpose.msra.mxu0 0.0
    %987 = vmatpush.xpose.msra.mxu0 0.0
    %988 = vmatpush.xpose.msra.mxu0 %v972
    %989 = vmatpush.xpose.msra.mxu0 %v970
    %990 = vmatmul.f32.gmra.mxu0 %v966
    %v991 = vpop.f32.mrf.mxu0
    %v992 = vadd.f32 0.0, %v991
    %993 = vmatmul.f32.gmra.mxu0 %v968
    %v994 = vpop.f32.mrf.mxu0
    %v995 = vadd.f32 0.0, %v994
    %996 = vdwg.mxu0
    %v997 = vmul.f32 %v992, 0.17677669
    %v998 = vmul.f32 %v995, 0.17677669
    %v999 = vadd.f32 %v997, %v98
    %v1000 = vadd.f32 %v998, %v99
    %v1001 = vsel %vm239, %v999, -inf
    %1002 = vmax.xlane.f32.xlu0 %v1001
    %v1003 = vpop.xlane.xlu0 %1002
    %v1004 = vsel %vm239, %v1000, -inf
    %1005 = vmax.xlane.f32.xlu0 %v1004
    %v1006 = vpop.xlane.xlu0 %1005
    %v1007 = vsub.f32 %v999, %v1003
    %v1008 = vsub.f32 %v1000, %v1006
    %v1009 = vmul.f32 %v1007, 1.442695
    %v1010 = vpow.pop %v1009
    %v1011 = vmul.f32 %v1008, 1.442695
    %v1012 = vpow.pop %v1011
    %v1013 = vsel %vm239, %v1010, 0.0
    %1014 = vadd.xlane.f32.xlu0 %v1013
    %v1015 = vpop.xlane.xlu0 %1014
    %v1016 = vsel %vm239, %v1012, 0.0
    %1017 = vadd.xlane.f32.xlu0 %v1016
    %v1018 = vpop.xlane.xlu0 %1017
    %v1019 = vrcp.pop %v1015
    %v1020 = vrcp.pop %v1018
    %v1021 = vmul.f32 %v1010, %v1019
    %v1022 = vmul.f32 %v1012, %v1020
    %1023 = vrot.lane.b32.xlu0 %v956, 64
    %v1024 = vpop.permute.xlu0 %1023
    %1025 = vrot.lane.b32.xlu0 %v958, 64
    %v1026 = vpop.permute.xlu0 %1025
    %v1030 = vsel %vm239, %v1021, 0
    %v1033 = vsel %vm239, %v1022, 0
    %1035 = vmatpush.msra.mxu0 0.0
    %1036 = vmatpush.msra.mxu0 0.0
    %1037 = vmatpush.msra.mxu0 0.0
    %1038 = vmatpush.msra.mxu0 0.0
    %1039 = vmatpush.msra.mxu0 0.0
    %1040 = vmatpush.msra.mxu0 0.0
    %1041 = vmatpush.msra.mxu0 0.0
    %1042 = vmatpush.msra.mxu0 0.0
    %1043 = vmatpush.msra.mxu0 0.0
    %1044 = vmatpush.msra.mxu0 0.0
    %1045 = vmatpush.msra.mxu0 0.0
    %1046 = vmatpush.msra.mxu0 0.0
    %1047 = vmatpush.msra.mxu0 0.0
    %1048 = vmatpush.msra.mxu0 0.0
    %1049 = vmatpush.msra.mxu0 %v1026
    %1050 = vmatpush.msra.mxu0 %v1024
    %1051 = vmatmul.f32.gmra.mxu0 %v1030
    %v1052 = vpop.f32.mrf.mxu0
    %v1053 = vadd.f32 0.0, %v1052
    %1054 = vmatmul.f32.gmra.mxu0 %v1033
    %v1055 = vpop.f32.mrf.mxu0
    %v1056 = vadd.f32 0.0, %v1055
    %1057 = vdwg.mxu0
    %v1058 = vpack.c.bf16 %v1056, %v1053
    %v1060 = vsel %vm104, %v1058, 0
    %1062 = vmatpush.bf16.msra.mxu0 0
    %1063 = vmatpush.bf16.msra.mxu0 0
    %1064 = vmatpush.bf16.msra.mxu0 0
    %1065 = vmatpush.bf16.msra.mxu0 0
    %1066 = vmatpush.bf16.msra.mxu0 0
    %1067 = vmatpush.bf16.msra.mxu0 0
    %1068 = vmatpush.bf16.msra.mxu0 %v940
    %1069 = vmatpush.bf16.msra.mxu0 %v939
    %1070 = vmatmul.bf16.gmra.mxu0 %v1060
    %v1071 = vpop.f32.mrf.mxu0
    %v1072 = vadd.f32 0.0, %v1071
    %v1073 = vpop.f32.mrf.mxu0
    %v1074 = vadd.f32 0.0, %v1073
    %1075 = vdwg.mxu0
    %v1076 = vadd.f32 %v1072, %v930
    %v1077 = vadd.f32 %v1074, %v930
    %1080 = vrot.lane.b32.xlu0 %v1076, 32
    %v1081 = vpop.permute.xlu0 %1080
    %1082 = vrot.lane.b32.xlu0 %v1077, 32
    %v1083 = vpop.permute.xlu0 %1082
    %v1086 = vadd.f32 %v921, %v1081
    %v1087 = vadd.f32 %v922, %v1083
    %v1088 = vld [vmem:[%s5 + $0x10] sm:$0x1]
    %v1089 = vld [vmem:[%s5 + $0x11] sm:$0x1]
    %v1090 = vsel %vm104, %v1086, 0.0
    %1091 = vadd.xlane.f32.xlu0 %v1090
    %v1092 = vpop.xlane.xlu0 %1091
    %v1093 = vsel %vm104, %v1087, 0.0
    %1094 = vadd.xlane.f32.xlu0 %v1093
    %v1095 = vpop.xlane.xlu0 %1094
    %v1096 = vmul.f32 %v1092, %v117
    %v1097 = vmul.f32 %v1095, %v117
    %v1098 = vsub.f32 %v1086, %v1096
    %v1099 = vsub.f32 %v1087, %v1097
    %v1100 = vmul.f32 %v1098, %v1098
    %v1101 = vmul.f32 %v1099, %v1099
    %v1102 = vsel %vm104, %v1100, 0.0
    %1103 = vadd.xlane.f32.xlu0 %v1102
    %v1104 = vpop.xlane.xlu0 %1103
    %v1105 = vsel %vm104, %v1101, 0.0
    %1106 = vadd.xlane.f32.xlu0 %v1105
    %v1107 = vpop.xlane.xlu0 %1106
    %v1108 = vmul.f32 %v1104, %v117
    %v1109 = vmul.f32 %v1107, %v117
    %v1110 = vadd.f32 %v1108, 1e-12
    %v1111 = vadd.f32 %v1109, 1e-12
    %v1112 = vrsqrt.pop %v1110
    %v1113 = vmul.f32 %v1112, %v1110
    %v1114 = vmul.f32 %v1113, %v1112
    %v1115 = vmul.f32 0.5, %v1114
    %v1116 = vsub.f32 1.5, %v1115
    %v1117 = vmul.f32 %v1112, %v1116
    %vm1118 = vweird.f32 %v1110
    %vm1119 = vweird.f32 %v1112
    %vm1120 = vmor %vm1118, %vm1119
    %v1121 = vsel %vm1120, %v1112, %v1117
    %v1122 = vrsqrt.pop %v1111
    %v1123 = vmul.f32 %v1122, %v1111
    %v1124 = vmul.f32 %v1123, %v1122
    %v1125 = vmul.f32 0.5, %v1124
    %v1126 = vsub.f32 1.5, %v1125
    %v1127 = vmul.f32 %v1122, %v1126
    %vm1128 = vweird.f32 %v1111
    %vm1129 = vweird.f32 %v1122
    %vm1130 = vmor %vm1128, %vm1129
    %v1131 = vsel %vm1130, %v1122, %v1127
    %v1132 = vmul.f32 %v1098, %v1121
    %v1133 = vmul.f32 %v1099, %v1131
    %v1134 = vperm.slane %v1088, 0
    %v1135 = vmul.f32 %v1132, %v1134
    %v1136 = vmul.f32 %v1133, %v1134
    %v1137 = vperm.slane %v1089, 0
    %v1138 = vadd.f32 %v1135, %v1137
    %v1139 = vadd.f32 %v1136, %v1137
    %v1140 = vld [vmem:[%s5 + $0xf] sm:$0x1]
    %v1141 = vpack.c.bf16 %v1139, %v1138
    %s1142 = scalar_lea.vmem %s3, 32
    %v1143 = vld [vmem:[%s1142] sm:$0xf]
    %v1144 = vld [vmem:[%s1142 + $0x4] sm:$0xf]
    %v1145 = vld [vmem:[%s1142 + $0x8] sm:$0xf]
    %v1146 = vld [vmem:[%s1142 + $0xc] sm:$0xf]
    %v1147 = vperm.slane %v1140, 0
    %v1152 = vunpack.c.l.b16 %v1143
    %v1153 = vunpack.c.l.b16 %v1144
    %v1154 = vunpack.c.l.b16 %v1145
    %v1155 = vunpack.c.l.b16 %v1146
    %v1156 = vpack.c.b16 %v1153, %v1152
    %v1157 = vpack.c.b16 %v1155, %v1154
    %v1161 = vsel %vm104, %v1141, 0
    %1163 = vmatpush.bf16.msra.mxu0 0
    %1164 = vmatpush.bf16.msra.mxu0 0
    %1165 = vmatpush.bf16.msra.mxu0 0
    %1166 = vmatpush.bf16.msra.mxu0 0
    %1167 = vmatpush.bf16.msra.mxu0 0
    %1168 = vmatpush.bf16.msra.mxu0 0
    %1169 = vmatpush.bf16.msra.mxu0 %v1157
    %1170 = vmatpush.bf16.msra.mxu0 %v1156
    %1171 = vmatmul.bf16.gmra.mxu0 %v1161
    %v1172 = vpop.f32.mrf.mxu0
    %v1173 = vadd.f32 %v1147, %v1172
    %v1174 = vpop.f32.mrf.mxu0
    %v1175 = vadd.f32 %v1147, %v1174
    %1176 = vdwg.mxu0
    %v1177 = vmul.f32 %v1173, %v1173
    %v1178 = vmul.f32 %v1175, %v1175
    %v1179 = vmul.f32 %v1173, %v1177
    %v1180 = vmul.f32 %v1175, %v1178
    %v1181 = vmul.f32 %v1179, 0.044715
    %v1182 = vmul.f32 %v1180, 0.044715
    %v1183 = vadd.f32 %v1173, %v1181
    %v1184 = vadd.f32 %v1175, %v1182
    %v1185 = vmul.f32 %v1183, 0.7978846
    %v1186 = vmul.f32 %v1184, 0.7978846
    %v1187 = vtanh.pop %v1185
    %v1188 = vtanh.pop %v1186
    %v1189 = vadd.f32 %v1187, 1.0
    %v1190 = vadd.f32 %v1188, 1.0
    %v1191 = vmul.f32 %v1189, 0.5
    %v1192 = vmul.f32 %v1190, 0.5
    %v1193 = vmul.f32 %v1173, %v1191
    %v1194 = vmul.f32 %v1175, %v1192
    %v1195 = vpack.c.bf16 %v1194, %v1193
    %s1196 = scalar_lea.vmem %s4, 64
    %v1197 = vld [vmem:[%s1196] sm:$0xf]
    %v1198 = vld [vmem:[%s1196 + $0x4] sm:$0xf]
    %v1199 = vld [vmem:[%s1196 + $0x8] sm:$0xf]
    %v1200 = vld [vmem:[%s1196 + $0xc] sm:$0xf]
    %v1201 = vld [vmem:[%s1196 + $0x10] sm:$0xf]
    %v1202 = vld [vmem:[%s1196 + $0x14] sm:$0xf]
    %v1203 = vld [vmem:[%s1196 + $0x18] sm:$0xf]
    %v1204 = vld [vmem:[%s1196 + $0x1c] sm:$0xf]
    %v1213 = vunpack.c.l.b16 %v1197
    %v1214 = vunpack.c.l.b16 %v1198
    %v1215 = vunpack.c.l.b16 %v1199
    %v1216 = vunpack.c.l.b16 %v1200
    %v1217 = vunpack.c.l.b16 %v1201
    %v1218 = vunpack.c.l.b16 %v1202
    %v1219 = vunpack.c.l.b16 %v1203
    %v1220 = vunpack.c.l.b16 %v1204
    %v1221 = vpack.c.b16 %v1214, %v1213
    %v1222 = vpack.c.b16 %v1216, %v1215
    %v1223 = vpack.c.b16 %v1218, %v1217
    %v1224 = vpack.c.b16 %v1220, %v1219
    %1230 = vrot.lane.b32.xlu0 %v1147, 64
    %v1231 = vpop.permute.xlu0 %1230
    %v1234 = vsel %vm470, %v1195, 0
    %1236 = vmatpush.bf16.msra.mxu0 0
    %1237 = vmatpush.bf16.msra.mxu0 0
    %1238 = vmatpush.bf16.msra.mxu0 0
    %1239 = vmatpush.bf16.msra.mxu0 0
    %1240 = vmatpush.bf16.msra.mxu0 %v1224
    %1241 = vmatpush.bf16.msra.mxu0 %v1223
    %1242 = vmatpush.bf16.msra.mxu0 %v1222
    %1243 = vmatpush.bf16.msra.mxu0 %v1221
    %1244 = vmatmul.bf16.gmra.mxu0 %v1234
    %v1245 = vpop.f32.mrf.mxu0
    %v1246 = vadd.f32 %v1231, %v1245
    %v1247 = vpop.f32.mrf.mxu0
    %v1248 = vadd.f32 %v1231, %v1247
    %1249 = vdwg.mxu0
    %v1250 = vadd.f32 %v1138, %v1246
    %v1251 = vadd.f32 %v1139, %v1248
    %v1252 = vld [vmem:[%s5 + $0x12] sm:$0x1]
    %v1253 = vld [vmem:[%s5 + $0x13] sm:$0x1]
    %v1254 = vsel %vm104, %v1250, 0.0
    %1255 = vadd.xlane.f32.xlu0 %v1254
    %v1256 = vpop.xlane.xlu0 %1255
    %v1257 = vsel %vm104, %v1251, 0.0
    %1258 = vadd.xlane.f32.xlu0 %v1257
    %v1259 = vpop.xlane.xlu0 %1258
    %v1260 = vmul.f32 %v1256, %v117
    %v1261 = vmul.f32 %v1259, %v117
    %v1262 = vsub.f32 %v1250, %v1260
    %v1263 = vsub.f32 %v1251, %v1261
    %v1264 = vmul.f32 %v1262, %v1262
    %v1265 = vmul.f32 %v1263, %v1263
    %v1266 = vsel %vm104, %v1264, 0.0
    %1267 = vadd.xlane.f32.xlu0 %v1266
    %v1268 = vpop.xlane.xlu0 %1267
    %v1269 = vsel %vm104, %v1265, 0.0
    %1270 = vadd.xlane.f32.xlu0 %v1269
    %v1271 = vpop.xlane.xlu0 %1270
    %v1272 = vmul.f32 %v1268, %v117
    %v1273 = vmul.f32 %v1271, %v117
    %v1274 = vadd.f32 %v1272, 1e-12
    %v1275 = vadd.f32 %v1273, 1e-12
    %v1276 = vrsqrt.pop %v1274
    %v1277 = vmul.f32 %v1276, %v1274
    %v1278 = vmul.f32 %v1277, %v1276
    %v1279 = vmul.f32 0.5, %v1278
    %v1280 = vsub.f32 1.5, %v1279
    %v1281 = vmul.f32 %v1276, %v1280
    %vm1282 = vweird.f32 %v1274
    %vm1283 = vweird.f32 %v1276
    %vm1284 = vmor %vm1282, %vm1283
    %v1285 = vsel %vm1284, %v1276, %v1281
    %v1286 = vrsqrt.pop %v1275
    %v1287 = vmul.f32 %v1286, %v1275
    %v1288 = vmul.f32 %v1287, %v1286
    %v1289 = vmul.f32 0.5, %v1288
    %v1290 = vsub.f32 1.5, %v1289
    %v1291 = vmul.f32 %v1286, %v1290
    %vm1292 = vweird.f32 %v1275
    %vm1293 = vweird.f32 %v1286
    %vm1294 = vmor %vm1292, %vm1293
    %v1295 = vsel %vm1294, %v1286, %v1291
    %v1296 = vmul.f32 %v1262, %v1285
    %v1297 = vmul.f32 %v1263, %v1295
    %v1298 = vperm.slane %v1252, 0
    %v1299 = vmul.f32 %v1296, %v1298
    %v1300 = vmul.f32 %v1297, %v1298
    %v1301 = vperm.slane %v1253, 0
    %v1302 = vadd.f32 %v1299, %v1301
    %v1303 = vadd.f32 %v1300, %v1301
    %s1304 = scalar_lea.vmem %s2, 48
    %v1305 = vld [vmem:[%s1304] sm:$0xf]
    %v1306 = vld [vmem:[%s1304 + $0x4] sm:$0xf]
    %v1307 = vld [vmem:[%s1304 + $0x8] sm:$0xf]
    %v1308 = vld [vmem:[%s1304 + $0xc] sm:$0xf]
    %v1309 = vld [vmem:[%s5 + $0x14] sm:$0x1]
    %v1310 = vpack.c.bf16 %v1303, %v1302
    %v1311 = vperm.slane %v1309, 0
    %v1316 = vunpack.c.l.b16 %v1305
    %v1317 = vunpack.c.l.b16 %v1306
    %v1318 = vunpack.c.l.b16 %v1307
    %v1319 = vunpack.c.l.b16 %v1308
    %v1320 = vpack.c.b16 %v1317, %v1316
    %v1321 = vpack.c.b16 %v1319, %v1318
    %v1325 = vsel %vm104, %v1310, 0
    %1327 = vmatpush.bf16.msra.mxu0 0
    %1328 = vmatpush.bf16.msra.mxu0 0
    %1329 = vmatpush.bf16.msra.mxu0 0
    %1330 = vmatpush.bf16.msra.mxu0 0
    %1331 = vmatpush.bf16.msra.mxu0 0
    %1332 = vmatpush.bf16.msra.mxu0 0
    %1333 = vmatpush.bf16.msra.mxu0 %v1321
    %1334 = vmatpush.bf16.msra.mxu0 %v1320
    %1335 = vmatmul.bf16.gmra.mxu0 %v1325
    %v1336 = vpop.f32.mrf.mxu0
    %v1337 = vadd.f32 %v1311, %v1336
    %v1338 = vpop.f32.mrf.mxu0
    %v1339 = vadd.f32 %v1311, %v1338
    %1340 = vdwg.mxu0
    %1343 = vrot.lane.b32.xlu0 %v1337, 96
    %v1344 = vpop.permute.xlu0 %1343
    %1345 = vrot.lane.b32.xlu0 %v1339, 96
    %v1346 = vpop.permute.xlu0 %1345
    %v1347 = vsel %vm104, %v1337, 0
    %v1349 = vsel %vm104, %v1339, 0
    %v1351 = vsel %vm104, %v1344, 0
    %v1353 = vsel %vm104, %v1346, 0
    %1355 = vmatpush.xpose.msra.mxu0 0.0
    %1356 = vmatpush.xpose.msra.mxu0 0.0
    %1357 = vmatpush.xpose.msra.mxu0 0.0
    %1358 = vmatpush.xpose.msra.mxu0 0.0
    %1359 = vmatpush.xpose.msra.mxu0 0.0
    %1360 = vmatpush.xpose.msra.mxu0 0.0
    %1361 = vmatpush.xpose.msra.mxu0 0.0
    %1362 = vmatpush.xpose.msra.mxu0 0.0
    %1363 = vmatpush.xpose.msra.mxu0 0.0
    %1364 = vmatpush.xpose.msra.mxu0 0.0
    %1365 = vmatpush.xpose.msra.mxu0 0.0
    %1366 = vmatpush.xpose.msra.mxu0 0.0
    %1367 = vmatpush.xpose.msra.mxu0 0.0
    %1368 = vmatpush.xpose.msra.mxu0 0.0
    %1369 = vmatpush.xpose.msra.mxu0 %v1353
    %1370 = vmatpush.xpose.msra.mxu0 %v1351
    %1371 = vmatmul.f32.gmra.mxu0 %v1347
    %v1372 = vpop.f32.mrf.mxu0
    %v1373 = vadd.f32 0.0, %v1372
    %1374 = vmatmul.f32.gmra.mxu0 %v1349
    %v1375 = vpop.f32.mrf.mxu0
    %v1376 = vadd.f32 0.0, %v1375
    %1377 = vdwg.mxu0
    %v1378 = vmul.f32 %v1373, 0.17677669
    %v1379 = vmul.f32 %v1376, 0.17677669
    %v1380 = vadd.f32 %v1378, %v98
    %v1381 = vadd.f32 %v1379, %v99
    %v1382 = vsel %vm239, %v1380, -inf
    %1383 = vmax.xlane.f32.xlu0 %v1382
    %v1384 = vpop.xlane.xlu0 %1383
    %v1385 = vsel %vm239, %v1381, -inf
    %1386 = vmax.xlane.f32.xlu0 %v1385
    %v1387 = vpop.xlane.xlu0 %1386
    %v1388 = vsub.f32 %v1380, %v1384
    %v1389 = vsub.f32 %v1381, %v1387
    %v1390 = vmul.f32 %v1388, 1.442695
    %v1391 = vpow.pop %v1390
    %v1392 = vmul.f32 %v1389, 1.442695
    %v1393 = vpow.pop %v1392
    %v1394 = vsel %vm239, %v1391, 0.0
    %1395 = vadd.xlane.f32.xlu0 %v1394
    %v1396 = vpop.xlane.xlu0 %1395
    %v1397 = vsel %vm239, %v1393, 0.0
    %1398 = vadd.xlane.f32.xlu0 %v1397
    %v1399 = vpop.xlane.xlu0 %1398
    %v1400 = vrcp.pop %v1396
    %v1401 = vrcp.pop %v1399
    %v1402 = vmul.f32 %v1391, %v1400
    %v1403 = vmul.f32 %v1393, %v1401
    %1404 = vrot.lane.b32.xlu0 %v1337, 64
    %v1405 = vpop.permute.xlu0 %1404
    %1406 = vrot.lane.b32.xlu0 %v1339, 64
    %v1407 = vpop.permute.xlu0 %1406
    %v1411 = vsel %vm239, %v1402, 0
    %v1414 = vsel %vm239, %v1403, 0
    %1416 = vmatpush.msra.mxu0 0.0
    %1417 = vmatpush.msra.mxu0 0.0
    %1418 = vmatpush.msra.mxu0 0.0
    %1419 = vmatpush.msra.mxu0 0.0
    %1420 = vmatpush.msra.mxu0 0.0
    %1421 = vmatpush.msra.mxu0 0.0
    %1422 = vmatpush.msra.mxu0 0.0
    %1423 = vmatpush.msra.mxu0 0.0
    %1424 = vmatpush.msra.mxu0 0.0
    %1425 = vmatpush.msra.mxu0 0.0
    %1426 = vmatpush.msra.mxu0 0.0
    %1427 = vmatpush.msra.mxu0 0.0
    %1428 = vmatpush.msra.mxu0 0.0
    %1429 = vmatpush.msra.mxu0 0.0
    %1430 = vmatpush.msra.mxu0 %v1407
    %1431 = vmatpush.msra.mxu0 %v1405
    %1432 = vmatmul.f32.gmra.mxu0 %v1411
    %v1433 = vpop.f32.mrf.mxu0
    %v1434 = vadd.f32 0.0, %v1433
    %1435 = vmatmul.f32.gmra.mxu0 %v1414
    %v1436 = vpop.f32.mrf.mxu0
    %v1437 = vadd.f32 0.0, %v1436
    %1438 = vdwg.mxu0
    %v1439 = vpack.c.bf16 %v1437, %v1434
    %v1441 = vsel %vm104, %v1439, 0
    %1443 = vmatpush.bf16.msra.mxu0 0
    %1444 = vmatpush.bf16.msra.mxu0 0
    %1445 = vmatpush.bf16.msra.mxu0 0
    %1446 = vmatpush.bf16.msra.mxu0 0
    %1447 = vmatpush.bf16.msra.mxu0 0
    %1448 = vmatpush.bf16.msra.mxu0 0
    %1449 = vmatpush.bf16.msra.mxu0 %v1321
    %1450 = vmatpush.bf16.msra.mxu0 %v1320
    %1451 = vmatmul.bf16.gmra.mxu0 %v1441
    %v1452 = vpop.f32.mrf.mxu0
    %v1453 = vadd.f32 0.0, %v1452
    %v1454 = vpop.f32.mrf.mxu0
    %v1455 = vadd.f32 0.0, %v1454
    %1456 = vdwg.mxu0
    %v1457 = vadd.f32 %v1453, %v1311
    %v1458 = vadd.f32 %v1455, %v1311
    %1461 = vrot.lane.b32.xlu0 %v1457, 32
    %v1462 = vpop.permute.xlu0 %1461
    %1463 = vrot.lane.b32.xlu0 %v1458, 32
    %v1464 = vpop.permute.xlu0 %1463
    %v1467 = vadd.f32 %v1302, %v1462
    %v1468 = vadd.f32 %v1303, %v1464
    %v1469 = vld [vmem:[%s5 + $0x16] sm:$0x1]
    %v1470 = vld [vmem:[%s5 + $0x17] sm:$0x1]
    %v1471 = vsel %vm104, %v1467, 0.0
    %1472 = vadd.xlane.f32.xlu0 %v1471
    %v1473 = vpop.xlane.xlu0 %1472
    %v1474 = vsel %vm104, %v1468, 0.0
    %1475 = vadd.xlane.f32.xlu0 %v1474
    %v1476 = vpop.xlane.xlu0 %1475
    %v1477 = vmul.f32 %v1473, %v117
    %v1478 = vmul.f32 %v1476, %v117
    %v1479 = vsub.f32 %v1467, %v1477
    %v1480 = vsub.f32 %v1468, %v1478
    %v1481 = vmul.f32 %v1479, %v1479
    %v1482 = vmul.f32 %v1480, %v1480
    %v1483 = vsel %vm104, %v1481, 0.0
    %1484 = vadd.xlane.f32.xlu0 %v1483
    %v1485 = vpop.xlane.xlu0 %1484
    %v1486 = vsel %vm104, %v1482, 0.0
    %1487 = vadd.xlane.f32.xlu0 %v1486
    %v1488 = vpop.xlane.xlu0 %1487
    %v1489 = vmul.f32 %v1485, %v117
    %v1490 = vmul.f32 %v1488, %v117
    %v1491 = vadd.f32 %v1489, 1e-12
    %v1492 = vadd.f32 %v1490, 1e-12
    %v1493 = vrsqrt.pop %v1491
    %v1494 = vmul.f32 %v1493, %v1491
    %v1495 = vmul.f32 %v1494, %v1493
    %v1496 = vmul.f32 0.5, %v1495
    %v1497 = vsub.f32 1.5, %v1496
    %v1498 = vmul.f32 %v1493, %v1497
    %vm1499 = vweird.f32 %v1491
    %vm1500 = vweird.f32 %v1493
    %vm1501 = vmor %vm1499, %vm1500
    %v1502 = vsel %vm1501, %v1493, %v1498
    %v1503 = vrsqrt.pop %v1492
    %v1504 = vmul.f32 %v1503, %v1492
    %v1505 = vmul.f32 %v1504, %v1503
    %v1506 = vmul.f32 0.5, %v1505
    %v1507 = vsub.f32 1.5, %v1506
    %v1508 = vmul.f32 %v1503, %v1507
    %vm1509 = vweird.f32 %v1492
    %vm1510 = vweird.f32 %v1503
    %vm1511 = vmor %vm1509, %vm1510
    %v1512 = vsel %vm1511, %v1503, %v1508
    %v1513 = vmul.f32 %v1479, %v1502
    %v1514 = vmul.f32 %v1480, %v1512
    %v1515 = vperm.slane %v1469, 0
    %v1516 = vmul.f32 %v1513, %v1515
    %v1517 = vmul.f32 %v1514, %v1515
    %v1518 = vperm.slane %v1470, 0
    %v1519 = vadd.f32 %v1516, %v1518
    %v1520 = vadd.f32 %v1517, %v1518
    %v1521 = vld [vmem:[%s5 + $0x15] sm:$0x1]
    %v1522 = vpack.c.bf16 %v1520, %v1519
    %s1523 = scalar_lea.vmem %s3, 48
    %v1524 = vld [vmem:[%s1523] sm:$0xf]
    %v1525 = vld [vmem:[%s1523 + $0x4] sm:$0xf]
    %v1526 = vld [vmem:[%s1523 + $0x8] sm:$0xf]
    %v1527 = vld [vmem:[%s1523 + $0xc] sm:$0xf]
    %v1528 = vperm.slane %v1521, 0
    %v1533 = vunpack.c.l.b16 %v1524
    %v1534 = vunpack.c.l.b16 %v1525
    %v1535 = vunpack.c.l.b16 %v1526
    %v1536 = vunpack.c.l.b16 %v1527
    %v1537 = vpack.c.b16 %v1534, %v1533
    %v1538 = vpack.c.b16 %v1536, %v1535
    %v1542 = vsel %vm104, %v1522, 0
    %1544 = vmatpush.bf16.msra.mxu0 0
    %1545 = vmatpush.bf16.msra.mxu0 0
    %1546 = vmatpush.bf16.msra.mxu0 0
    %1547 = vmatpush.bf16.msra.mxu0 0
    %1548 = vmatpush.bf16.msra.mxu0 0
    %1549 = vmatpush.bf16.msra.mxu0 0
    %1550 = vmatpush.bf16.msra.mxu0 %v1538
    %1551 = vmatpush.bf16.msra.mxu0 %v1537
    %1552 = vmatmul.bf16.gmra.mxu0 %v1542
    %v1553 = vpop.f32.mrf.mxu0
    %v1554 = vadd.f32 %v1528, %v1553
    %v1555 = vpop.f32.mrf.mxu0
    %v1556 = vadd.f32 %v1528, %v1555
    %1557 = vdwg.mxu0
    %v1558 = vmul.f32 %v1554, %v1554
    %v1559 = vmul.f32 %v1556, %v1556
    %v1560 = vmul.f32 %v1554, %v1558
    %v1561 = vmul.f32 %v1556, %v1559
    %v1562 = vmul.f32 %v1560, 0.044715
    %v1563 = vmul.f32 %v1561, 0.044715
    %v1564 = vadd.f32 %v1554, %v1562
    %v1565 = vadd.f32 %v1556, %v1563
    %v1566 = vmul.f32 %v1564, 0.7978846
    %v1567 = vmul.f32 %v1565, 0.7978846
    %v1568 = vtanh.pop %v1566
    %v1569 = vtanh.pop %v1567
    %v1570 = vadd.f32 %v1568, 1.0
    %v1571 = vadd.f32 %v1569, 1.0
    %v1572 = vmul.f32 %v1570, 0.5
    %v1573 = vmul.f32 %v1571, 0.5
    %v1574 = vmul.f32 %v1554, %v1572
    %v1575 = vmul.f32 %v1556, %v1573
    %v1576 = vpack.c.bf16 %v1575, %v1574
    %s1577 = scalar_lea.vmem %s4, 96
    %v1578 = vld [vmem:[%s1577] sm:$0xf]
    %v1579 = vld [vmem:[%s1577 + $0x4] sm:$0xf]
    %v1580 = vld [vmem:[%s1577 + $0x8] sm:$0xf]
    %v1581 = vld [vmem:[%s1577 + $0xc] sm:$0xf]
    %v1582 = vld [vmem:[%s1577 + $0x10] sm:$0xf]
    %v1583 = vld [vmem:[%s1577 + $0x14] sm:$0xf]
    %v1584 = vld [vmem:[%s1577 + $0x18] sm:$0xf]
    %v1585 = vld [vmem:[%s1577 + $0x1c] sm:$0xf]
    %v1594 = vunpack.c.l.b16 %v1578
    %v1595 = vunpack.c.l.b16 %v1579
    %v1596 = vunpack.c.l.b16 %v1580
    %v1597 = vunpack.c.l.b16 %v1581
    %v1598 = vunpack.c.l.b16 %v1582
    %v1599 = vunpack.c.l.b16 %v1583
    %v1600 = vunpack.c.l.b16 %v1584
    %v1601 = vunpack.c.l.b16 %v1585
    %v1602 = vpack.c.b16 %v1595, %v1594
    %v1603 = vpack.c.b16 %v1597, %v1596
    %v1604 = vpack.c.b16 %v1599, %v1598
    %v1605 = vpack.c.b16 %v1601, %v1600
    %1611 = vrot.lane.b32.xlu0 %v1528, 64
    %v1612 = vpop.permute.xlu0 %1611
    %v1615 = vsel %vm470, %v1576, 0
    %1617 = vmatpush.bf16.msra.mxu0 0
    %1618 = vmatpush.bf16.msra.mxu0 0
    %1619 = vmatpush.bf16.msra.mxu0 0
    %1620 = vmatpush.bf16.msra.mxu0 0
    %1621 = vmatpush.bf16.msra.mxu0 %v1605
    %1622 = vmatpush.bf16.msra.mxu0 %v1604
    %1623 = vmatpush.bf16.msra.mxu0 %v1603
    %1624 = vmatpush.bf16.msra.mxu0 %v1602
    %1625 = vmatmul.bf16.gmra.mxu0 %v1615
    %v1626 = vpop.f32.mrf.mxu0
    %v1627 = vadd.f32 %v1612, %v1626
    %v1628 = vpop.f32.mrf.mxu0
    %v1629 = vadd.f32 %v1612, %v1628
    %1630 = vdwg.mxu0
    %v1631 = vadd.f32 %v1519, %v1627
    %v1632 = vadd.f32 %v1520, %v1629
    %v1633 = vld [vmem:[%s5 + $0x18] sm:$0x1]
    %v1634 = vld [vmem:[%s5 + $0x19] sm:$0x1]
    %v1635 = vsel %vm104, %v1631, 0.0
    %1636 = vadd.xlane.f32.xlu0 %v1635
    %v1637 = vpop.xlane.xlu0 %1636
    %v1638 = vsel %vm104, %v1632, 0.0
    %1639 = vadd.xlane.f32.xlu0 %v1638
    %v1640 = vpop.xlane.xlu0 %1639
    %v1641 = vmul.f32 %v1637, %v117
    %v1642 = vmul.f32 %v1640, %v117
    %v1643 = vsub.f32 %v1631, %v1641
    %v1644 = vsub.f32 %v1632, %v1642
    %v1645 = vmul.f32 %v1643, %v1643
    %v1646 = vmul.f32 %v1644, %v1644
    %v1647 = vsel %vm104, %v1645, 0.0
    %1648 = vadd.xlane.f32.xlu0 %v1647
    %v1649 = vpop.xlane.xlu0 %1648
    %v1650 = vsel %vm104, %v1646, 0.0
    %1651 = vadd.xlane.f32.xlu0 %v1650
    %v1652 = vpop.xlane.xlu0 %1651
    %v1653 = vmul.f32 %v1649, %v117
    %v1654 = vmul.f32 %v1652, %v117
    %v1655 = vadd.f32 %v1653, 1e-12
    %v1656 = vadd.f32 %v1654, 1e-12
    %v1657 = vrsqrt.pop %v1655
    %v1658 = vmul.f32 %v1657, %v1655
    %v1659 = vmul.f32 %v1658, %v1657
    %v1660 = vmul.f32 0.5, %v1659
    %v1661 = vsub.f32 1.5, %v1660
    %v1662 = vmul.f32 %v1657, %v1661
    %vm1663 = vweird.f32 %v1655
    %vm1664 = vweird.f32 %v1657
    %vm1665 = vmor %vm1663, %vm1664
    %v1666 = vsel %vm1665, %v1657, %v1662
    %v1667 = vrsqrt.pop %v1656
    %v1668 = vmul.f32 %v1667, %v1656
    %v1669 = vmul.f32 %v1668, %v1667
    %v1670 = vmul.f32 0.5, %v1669
    %v1671 = vsub.f32 1.5, %v1670
    %v1672 = vmul.f32 %v1667, %v1671
    %vm1673 = vweird.f32 %v1656
    %vm1674 = vweird.f32 %v1667
    %vm1675 = vmor %vm1673, %vm1674
    %v1676 = vsel %vm1675, %v1667, %v1672
    %v1677 = vmul.f32 %v1643, %v1666
    %v1678 = vmul.f32 %v1644, %v1676
    %v1679 = vperm.slane %v1633, 0
    %v1680 = vmul.f32 %v1677, %v1679
    %v1681 = vmul.f32 %v1678, %v1679
    %v1682 = vperm.slane %v1634, 0
    %v1683 = vadd.f32 %v1680, %v1682
    %v1684 = vadd.f32 %v1681, %v1682
    %1687 = vrot.lane.b32.xlu0 %v1302, 32
    %v1688 = vpop.permute.xlu0 %1687
    %1689 = vrot.lane.b32.xlu0 %v1303, 32
    %v1690 = vpop.permute.xlu0 %1689
    %1695 = vrot.lane.b32.xlu0 %v921, 64
    %v1696 = vpop.permute.xlu0 %1695
    %1697 = vrot.lane.b32.xlu0 %v922, 64
    %v1698 = vpop.permute.xlu0 %1697
    %1703 = vrot.lane.b32.xlu0 %v540, 96
    %v1704 = vpop.permute.xlu0 %1703
    %1705 = vrot.lane.b32.xlu0 %v541, 96
    %v1706 = vpop.permute.xlu0 %1705
    %v1709 = vsel %vm104, %v1683, %v1688
    %v1710 = vsel %vm104, %v1684, %v1690
    %v1711 = vsel %vm470, %v1709, %v1696
    %v1712 = vsel %vm470, %v1710, %v1698
    %vm1713 = vcmask 785408
    %v1714 = vsel %vm1713, %v1711, %v1704
    %v1715 = vsel %vm1713, %v1712, %v1706
    %v1716 = vpack.c.bf16 %v1715, %v1714
    %v1717 = vld [vmem:[#allocation3] sm:$0xff]
    %v1718 = vld [vmem:[#allocation3 + $0x8] sm:$0xff]
    %v1719 = vld [vmem:[#allocation3 + $0x10] sm:$0xff]
    %v1720 = vld [vmem:[#allocation3 + $0x18] sm:$0xff]
    %v1721 = vld [vmem:[#allocation3 + $0x20] sm:$0xff]
    %v1722 = vld [vmem:[#allocation3 + $0x28] sm:$0xff]
    %v1723 = vld [vmem:[#allocation3 + $0x30] sm:$0xff]
    %v1724 = vld [vmem:[#allocation3 + $0x38] sm:$0xff]
    %v1725 = vld [vmem:[#allocation3 + $0x40] sm:$0xff]
    %v1726 = vld [vmem:[#allocation3 + $0x48] sm:$0xff]
    %v1727 = vld [vmem:[#allocation3 + $0x50] sm:$0xff]
    %v1728 = vld [vmem:[#allocation3 + $0x58] sm:$0xff]
    %v1729 = vld [vmem:[#allocation3 + $0x60] sm:$0xff]
    %v1730 = vld [vmem:[#allocation3 + $0x68] sm:$0xff]
    %v1731 = vld [vmem:[#allocation3 + $0x70] sm:$0xff]
    %v1732 = vld [vmem:[#allocation3 + $0x78] sm:$0xff]
    %v1733 = vld [vmem:[#allocation3 + $0x80] sm:$0xff]
    %v1734 = vld [vmem:[#allocation3 + $0x88] sm:$0xff]
    %v1735 = vld [vmem:[#allocation3 + $0x90] sm:$0xff]
    %v1736 = vld [vmem:[#allocation3 + $0x98] sm:$0xff]
    %v1737 = vld [vmem:[#allocation3 + $0xa0] sm:$0xff]
    %v1738 = vld [vmem:[#allocation3 + $0xa8] sm:$0xff]
    %v1739 = vld [vmem:[#allocation3 + $0xb0] sm:$0xff]
    %v1740 = vld [vmem:[#allocation3 + $0xb8] sm:$0xff]
    %v1741 = vld [vmem:[#allocation3 + $0xc0] sm:$0xff]
    %v1742 = vld [vmem:[#allocation3 + $0xc8] sm:$0xff]
    %v1743 = vld [vmem:[#allocation3 + $0xd0] sm:$0xff]
    %v1744 = vld [vmem:[#allocation3 + $0xd8] sm:$0xff]
    %v1745 = vld [vmem:[#allocation3 + $0xe0] sm:$0xff]
    %v1746 = vld [vmem:[#allocation3 + $0xe8] sm:$0xff]
    %v1747 = vld [vmem:[#allocation3 + $0xf0] sm:$0xff]
    %v1748 = vld [vmem:[#allocation3 + $0xf8] sm:$0xff]
    %v1749 = vld [vmem:[#allocation3 + $0x100] sm:$0xff]
    %v1750 = vld [vmem:[#allocation3 + $0x108] sm:$0xff]
    %v1751 = vld [vmem:[#allocation3 + $0x110] sm:$0xff]
    %v1752 = vld [vmem:[#allocation3 + $0x118] sm:$0xff]
    %v1753 = vld [vmem:[#allocation3 + $0x120] sm:$0xff]
    %v1754 = vld [vmem:[#allocation3 + $0x128] sm:$0xff]
    %v1755 = vld [vmem:[#allocation3 + $0x130] sm:$0xff]
    %v1756 = vld [vmem:[#allocation3 + $0x138] sm:$0xff]
    %v1757 = vld [vmem:[#allocation3 + $0x140] sm:$0xff]
    %v1758 = vld [vmem:[#allocation3 + $0x148] sm:$0xff]
    %v1759 = vld [vmem:[#allocation3 + $0x150] sm:$0xff]
    %v1760 = vld [vmem:[#allocation3 + $0x158] sm:$0xff]
    %v1761 = vld [vmem:[#allocation3 + $0x160] sm:$0xff]
    %v1762 = vld [vmem:[#allocation3 + $0x168] sm:$0xff]
    %v1763 = vld [vmem:[#allocation3 + $0x170] sm:$0xff]
    %v1764 = vld [vmem:[#allocation3 + $0x178] sm:$0xff]
    %v1765 = vld [vmem:[#allocation3 + $0x180] sm:$0xff]
    %v1766 = vld [vmem:[#allocation3 + $0x188] sm:$0xff]
    %v1767 = vld [vmem:[#allocation3 + $0x190] sm:$0xff]
    %v1768 = vld [vmem:[#allocation3 + $0x198] sm:$0xff]
    %v1769 = vld [vmem:[#allocation3 + $0x1a0] sm:$0xff]
    %v1770 = vld [vmem:[#allocation3 + $0x1a8] sm:$0xff]
    %v1771 = vld [vmem:[#allocation3 + $0x1b0] sm:$0xff]
    %v1772 = vld [vmem:[#allocation3 + $0x1b8] sm:$0xff]
    %v1773 = vld [vmem:[#allocation3 + $0x1c0] sm:$0xff]
    %v1774 = vld [vmem:[#allocation3 + $0x1c8] sm:$0xff]
    %v1775 = vld [vmem:[#allocation3 + $0x1d0] sm:$0xff]
    %v1776 = vld [vmem:[#allocation3 + $0x1d8] sm:$0xff]
    %v1777 = vld [vmem:[#allocation3 + $0x1e0] sm:$0xff]
    %v1778 = vld [vmem:[#allocation3 + $0x1e8] sm:$0xff]
    %v1779 = vld [vmem:[#allocation3 + $0x1f0] sm:$0xff]
    %v1780 = vld [vmem:[#allocation3 + $0x1f8] sm:$0xff]
    %v1845 = vunpack.c.l.b16 %v1717
    %v1846 = vunpack.c.h.b16 %v1717
    %v1847 = vunpack.c.l.b16 %v1718
    %v1848 = vunpack.c.h.b16 %v1718
    %v1849 = vunpack.c.l.b16 %v1719
    %v1850 = vunpack.c.h.b16 %v1719
    %v1851 = vunpack.c.l.b16 %v1720
    %v1852 = vunpack.c.h.b16 %v1720
    %v1853 = vunpack.c.l.b16 %v1721
    %v1854 = vunpack.c.h.b16 %v1721
    %v1855 = vunpack.c.l.b16 %v1722
    %v1856 = vunpack.c.h.b16 %v1722
    %v1857 = vunpack.c.l.b16 %v1723
    %v1858 = vunpack.c.h.b16 %v1723
    %v1859 = vunpack.c.l.b16 %v1724
    %v1860 = vunpack.c.h.b16 %v1724
    %v1861 = vunpack.c.l.b16 %v1725
    %v1862 = vunpack.c.h.b16 %v1725
    %v1863 = vunpack.c.l.b16 %v1726
    %v1864 = vunpack.c.h.b16 %v1726
    %v1865 = vunpack.c.l.b16 %v1727
    %v1866 = vunpack.c.h.b16 %v1727
    %v1867 = vunpack.c.l.b16 %v1728
    %v1868 = vunpack.c.h.b16 %v1728
    %v1869 = vunpack.c.l.b16 %v1729
    %v1870 = vunpack.c.h.b16 %v1729
    %v1871 = vunpack.c.l.b16 %v1730
    %v1872 = vunpack.c.h.b16 %v1730
    %v1873 = vunpack.c.l.b16 %v1731
    %v1874 = vunpack.c.h.b16 %v1731
    %v1875 = vunpack.c.l.b16 %v1732
    %v1876 = vunpack.c.h.b16 %v1732
    %v1877 = vunpack.c.l.b16 %v1733
    %v1878 = vunpack.c.h.b16 %v1733
    %v1879 = vunpack.c.l.b16 %v1734
    %v1880 = vunpack.c.h.b16 %v1734
    %v1881 = vunpack.c.l.b16 %v1735
    %v1882 = vunpack.c.h.b16 %v1735
    %v1883 = vunpack.c.l.b16 %v1736
    %v1884 = vunpack.c.h.b16 %v1736
    %v1885 = vunpack.c.l.b16 %v1737
    %v1886 = vunpack.c.h.b16 %v1737
    %v1887 = vunpack.c.l.b16 %v1738
    %v1888 = vunpack.c.h.b16 %v1738
    %v1889 = vunpack.c.l.b16 %v1739
    %v1890 = vunpack.c.h.b16 %v1739
    %v1891 = vunpack.c.l.b16 %v1740
    %v1892 = vunpack.c.h.b16 %v1740
    %v1893 = vunpack.c.l.b16 %v1741
    %v1894 = vunpack.c.h.b16 %v1741
    %v1895 = vunpack.c.l.b16 %v1742
    %v1896 = vunpack.c.h.b16 %v1742
    %v1897 = vunpack.c.l.b16 %v1743
    %v1898 = vunpack.c.h.b16 %v1743
    %v1899 = vunpack.c.l.b16 %v1744
    %v1900 = vunpack.c.h.b16 %v1744
    %v1901 = vunpack.c.l.b16 %v1745
    %v1902 = vunpack.c.h.b16 %v1745
    %v1903 = vunpack.c.l.b16 %v1746
    %v1904 = vunpack.c.h.b16 %v1746
    %v1905 = vunpack.c.l.b16 %v1747
    %v1906 = vunpack.c.h.b16 %v1747
    %v1907 = vunpack.c.l.b16 %v1748
    %v1908 = vunpack.c.h.b16 %v1748
    %v1909 = vunpack.c.l.b16 %v1749
    %v1910 = vunpack.c.h.b16 %v1749
    %v1911 = vunpack.c.l.b16 %v1750
    %v1912 = vunpack.c.h.b16 %v1750
    %v1913 = vunpack.c.l.b16 %v1751
    %v1914 = vunpack.c.h.b16 %v1751
    %v1915 = vunpack.c.l.b16 %v1752
    %v1916 = vunpack.c.h.b16 %v1752
    %v1917 = vunpack.c.l.b16 %v1753
    %v1918 = vunpack.c.h.b16 %v1753
    %v1919 = vunpack.c.l.b16 %v1754
    %v1920 = vunpack.c.h.b16 %v1754
    %v1921 = vunpack.c.l.b16 %v1755
    %v1922 = vunpack.c.h.b16 %v1755
    %v1923 = vunpack.c.l.b16 %v1756
    %v1924 = vunpack.c.h.b16 %v1756
    %v1925 = vunpack.c.l.b16 %v1757
    %v1926 = vunpack.c.h.b16 %v1757
    %v1927 = vunpack.c.l.b16 %v1758
    %v1928 = vunpack.c.h.b16 %v1758
    %v1929 = vunpack.c.l.b16 %v1759
    %v1930 = vunpack.c.h.b16 %v1759
    %v1931 = vunpack.c.l.b16 %v1760
    %v1932 = vunpack.c.h.b16 %v1760
    %v1933 = vunpack.c.l.b16 %v1761
    %v1934 = vunpack.c.h.b16 %v1761
    %v1935 = vunpack.c.l.b16 %v1762
    %v1936 = vunpack.c.h.b16 %v1762
    %v1937 = vunpack.c.l.b16 %v1763
    %v1938 = vunpack.c.h.b16 %v1763
    %v1939 = vunpack.c.l.b16 %v1764
    %v1940 = vunpack.c.h.b16 %v1764
    %v1941 = vunpack.c.l.b16 %v1765
    %v1942 = vunpack.c.h.b16 %v1765
    %v1943 = vunpack.c.l.b16 %v1766
    %v1944 = vunpack.c.h.b16 %v1766
    %v1945 = vunpack.c.l.b16 %v1767
    %v1946 = vunpack.c.h.b16 %v1767
    %v1947 = vunpack.c.l.b16 %v1768
    %v1948 = vunpack.c.h.b16 %v1768
    %v1949 = vunpack.c.l.b16 %v1769
    %v1950 = vunpack.c.h.b16 %v1769
    %v1951 = vunpack.c.l.b16 %v1770
    %v1952 = vunpack.c.h.b16 %v1770
    %v1953 = vunpack.c.l.b16 %v1771
    %v1954 = vunpack.c.h.b16 %v1771
    %v1955 = vunpack.c.l.b16 %v1772
    %v1956 = vunpack.c.h.b16 %v1772
    %v1957 = vunpack.c.l.b16 %v1773
    %v1958 = vunpack.c.h.b16 %v1773
    %v1959 = vunpack.c.l.b16 %v1774
    %v1960 = vunpack.c.h.b16 %v1774
    %v1961 = vunpack.c.l.b16 %v1775
    %v1962 = vunpack.c.h.b16 %v1775
    %v1963 = vunpack.c.l.b16 %v1776
    %v1964 = vunpack.c.h.b16 %v1776
    %v1965 = vunpack.c.l.b16 %v1777
    %v1966 = vunpack.c.h.b16 %v1777
    %v1967 = vunpack.c.l.b16 %v1778
    %v1968 = vunpack.c.h.b16 %v1778
    %v1969 = vunpack.c.l.b16 %v1779
    %v1970 = vunpack.c.h.b16 %v1779
    %v1971 = vunpack.c.l.b16 %v1780
    %v1972 = vunpack.c.h.b16 %v1780
    %v1973 = vpack.c.b16 %v1853, %v1845
    %v1974 = vpack.c.b16 %v1854, %v1846
    %v1975 = vpack.c.b16 %v1855, %v1847
    %v1976 = vpack.c.b16 %v1856, %v1848
    %v1977 = vpack.c.b16 %v1857, %v1849
    %v1978 = vpack.c.b16 %v1858, %v1850
    %v1979 = vpack.c.b16 %v1859, %v1851
    %v1980 = vpack.c.b16 %v1860, %v1852
    %v1981 = vpack.c.b16 %v1869, %v1861
    %v1982 = vpack.c.b16 %v1870, %v1862
    %v1983 = vpack.c.b16 %v1871, %v1863
    %v1984 = vpack.c.b16 %v1872, %v1864
    %v1985 = vpack.c.b16 %v1873, %v1865
    %v1986 = vpack.c.b16 %v1874, %v1866
    %v1987 = vpack.c.b16 %v1875, %v1867
    %v1988 = vpack.c.b16 %v1876, %v1868
    %v1989 = vpack.c.b16 %v1885, %v1877
    %v1990 = vpack.c.b16 %v1886, %v1878
    %v1991 = vpack.c.b16 %v1887, %v1879
    %v1992 = vpack.c.b16 %v1888, %v1880
    %v1993 = vpack.c.b16 %v1889, %v1881
    %v1994 = vpack.c.b16 %v1890, %v1882
    %v1995 = vpack.c.b16 %v1891, %v1883
    %v1996 = vpack.c.b16 %v1892, %v1884
    %v1997 = vpack.c.b16 %v1901, %v1893
    %v1998 = vpack.c.b16 %v1902, %v1894
    %v1999 = vpack.c.b16 %v1903, %v1895
    %v2000 = vpack.c.b16 %v1904, %v1896
    %v2001 = vpack.c.b16 %v1905, %v1897
    %v2002 = vpack.c.b16 %v1906, %v1898
    %v2003 = vpack.c.b16 %v1907, %v1899
    %v2004 = vpack.c.b16 %v1908, %v1900
    %v2005 = vpack.c.b16 %v1917, %v1909
    %v2006 = vpack.c.b16 %v1918, %v1910
    %v2007 = vpack.c.b16 %v1919, %v1911
    %v2008 = vpack.c.b16 %v1920, %v1912
    %v2009 = vpack.c.b16 %v1921, %v1913
    %v2010 = vpack.c.b16 %v1922, %v1914
    %v2011 = vpack.c.b16 %v1923, %v1915
    %v2012 = vpack.c.b16 %v1924, %v1916
    %v2013 = vpack.c.b16 %v1933, %v1925
    %v2014 = vpack.c.b16 %v1934, %v1926
    %v2015 = vpack.c.b16 %v1935, %v1927
    %v2016 = vpack.c.b16 %v1936, %v1928
    %v2017 = vpack.c.b16 %v1937, %v1929
    %v2018 = vpack.c.b16 %v1938, %v1930
    %v2019 = vpack.c.b16 %v1939, %v1931
    %v2020 = vpack.c.b16 %v1940, %v1932
    %v2021 = vpack.c.b16 %v1949, %v1941
    %v2022 = vpack.c.b16 %v1950, %v1942
    %v2023 = vpack.c.b16 %v1951, %v1943
    %v2024 = vpack.c.b16 %v1952, %v1944
    %v2025 = vpack.c.b16 %v1953, %v1945
    %v2026 = vpack.c.b16 %v1954, %v1946
    %v2027 = vpack.c.b16 %v1955, %v1947
    %v2028 = vpack.c.b16 %v1956, %v1948
    %v2029 = vpack.c.b16 %v1965, %v1957
    %v2030 = vpack.c.b16 %v1966, %v1958
    %v2031 = vpack.c.b16 %v1967, %v1959
    %v2032 = vpack.c.b16 %v1968, %v1960
    %v2033 = vpack.c.b16 %v1969, %v1961
    %v2034 = vpack.c.b16 %v1970, %v1962
    %v2035 = vpack.c.b16 %v1971, %v1963
    %v2036 = vpack.c.b16 %v1972, %v1964
    %2101 = vmatpush.bf16.msra.mxu0 %v2029
    %2102 = vmatpush.bf16.msra.mxu0 %v2021
    %2103 = vmatpush.bf16.msra.mxu0 %v2013
    %2104 = vmatpush.bf16.msra.mxu0 %v2005
    %2105 = vmatpush.bf16.msra.mxu0 %v1997
    %2106 = vmatpush.bf16.msra.mxu0 %v1989
    %2107 = vmatpush.bf16.msra.mxu0 %v1981
    %2108 = vmatpush.bf16.msra.mxu0 %v1973
    %2109 = vmatmul.bf16.gmra.mxu0 %v1716
    %v2110 = vpop.f32.mrf.mxu0
    %v2111 = vadd.f32 0.0, %v2110
    %v2112 = vpop.f32.mrf.mxu0
    %v2113 = vadd.f32 0.0, %v2112
    %2114 = vdwg.mxu0
    %2115 = vmatpush.bf16.msra.mxu0 %v2030
    %2116 = vmatpush.bf16.msra.mxu0 %v2022
    %2117 = vmatpush.bf16.msra.mxu0 %v2014
    %2118 = vmatpush.bf16.msra.mxu0 %v2006
    %2119 = vmatpush.bf16.msra.mxu0 %v1998
    %2120 = vmatpush.bf16.msra.mxu0 %v1990
    %2121 = vmatpush.bf16.msra.mxu0 %v1982
    %2122 = vmatpush.bf16.msra.mxu0 %v1974
    %2123 = vmatmul.bf16.gmra.mxu0 %v1716
    %v2124 = vpop.f32.mrf.mxu0
    %v2125 = vadd.f32 0.0, %v2124
    %v2126 = vpop.f32.mrf.mxu0
    %v2127 = vadd.f32 0.0, %v2126
    %2128 = vdwg.mxu0
    %2129 = vmatpush.bf16.msra.mxu0 %v2031
    %2130 = vmatpush.bf16.msra.mxu0 %v2023
    %2131 = vmatpush.bf16.msra.mxu0 %v2015
    %2132 = vmatpush.bf16.msra.mxu0 %v2007
    %2133 = vmatpush.bf16.msra.mxu0 %v1999
    %2134 = vmatpush.bf16.msra.mxu0 %v1991
    %2135 = vmatpush.bf16.msra.mxu0 %v1983
    %2136 = vmatpush.bf16.msra.mxu0 %v1975
    %2137 = vmatmul.bf16.gmra.mxu0 %v1716
    %v2138 = vpop.f32.mrf.mxu0
    %v2139 = vadd.f32 0.0, %v2138
    %v2140 = vpop.f32.mrf.mxu0
    %v2141 = vadd.f32 0.0, %v2140
    %2142 = vdwg.mxu0
    %2143 = vmatpush.bf16.msra.mxu0 %v2032
    %2144 = vmatpush.bf16.msra.mxu0 %v2024
    %2145 = vmatpush.bf16.msra.mxu0 %v2016
    %2146 = vmatpush.bf16.msra.mxu0 %v2008
    %2147 = vmatpush.bf16.msra.mxu0 %v2000
    %2148 = vmatpush.bf16.msra.mxu0 %v1992
    %2149 = vmatpush.bf16.msra.mxu0 %v1984
    %2150 = vmatpush.bf16.msra.mxu0 %v1976
    %2151 = vmatmul.bf16.gmra.mxu0 %v1716
    %v2152 = vpop.f32.mrf.mxu0
    %v2153 = vadd.f32 0.0, %v2152
    %v2154 = vpop.f32.mrf.mxu0
    %v2155 = vadd.f32 0.0, %v2154
    %2156 = vdwg.mxu0
    %2157 = vmatpush.bf16.msra.mxu0 %v2033
    %2158 = vmatpush.bf16.msra.mxu0 %v2025
    %2159 = vmatpush.bf16.msra.mxu0 %v2017
    %2160 = vmatpush.bf16.msra.mxu0 %v2009
    %2161 = vmatpush.bf16.msra.mxu0 %v2001
    %2162 = vmatpush.bf16.msra.mxu0 %v1993
    %2163 = vmatpush.bf16.msra.mxu0 %v1985
    %2164 = vmatpush.bf16.msra.mxu0 %v1977
    %2165 = vmatmul.bf16.gmra.mxu0 %v1716
    %v2166 = vpop.f32.mrf.mxu0
    %v2167 = vadd.f32 0.0, %v2166
    %v2168 = vpop.f32.mrf.mxu0
    %v2169 = vadd.f32 0.0, %v2168
    %2170 = vdwg.mxu0
    %2171 = vmatpush.bf16.msra.mxu0 %v2034
    %2172 = vmatpush.bf16.msra.mxu0 %v2026
    %2173 = vmatpush.bf16.msra.mxu0 %v2018
    %2174 = vmatpush.bf16.msra.mxu0 %v2010
    %2175 = vmatpush.bf16.msra.mxu0 %v2002
    %2176 = vmatpush.bf16.msra.mxu0 %v1994
    %2177 = vmatpush.bf16.msra.mxu0 %v1986
    %2178 = vmatpush.bf16.msra.mxu0 %v1978
    %2179 = vmatmul.bf16.gmra.mxu0 %v1716
    %v2180 = vpop.f32.mrf.mxu0
    %v2181 = vadd.f32 0.0, %v2180
    %v2182 = vpop.f32.mrf.mxu0
    %v2183 = vadd.f32 0.0, %v2182
    %2184 = vdwg.mxu0
    %2185 = vmatpush.bf16.msra.mxu0 %v2035
    %2186 = vmatpush.bf16.msra.mxu0 %v2027
    %2187 = vmatpush.bf16.msra.mxu0 %v2019
    %2188 = vmatpush.bf16.msra.mxu0 %v2011
    %2189 = vmatpush.bf16.msra.mxu0 %v2003
    %2190 = vmatpush.bf16.msra.mxu0 %v1995
    %2191 = vmatpush.bf16.msra.mxu0 %v1987
    %2192 = vmatpush.bf16.msra.mxu0 %v1979
    %2193 = vmatmul.bf16.gmra.mxu0 %v1716
    %v2194 = vpop.f32.mrf.mxu0
    %v2195 = vadd.f32 0.0, %v2194
    %v2196 = vpop.f32.mrf.mxu0
    %v2197 = vadd.f32 0.0, %v2196
    %2198 = vdwg.mxu0
    %2199 = vmatpush.bf16.msra.mxu0 %v2036
    %2200 = vmatpush.bf16.msra.mxu0 %v2028
    %2201 = vmatpush.bf16.msra.mxu0 %v2020
    %2202 = vmatpush.bf16.msra.mxu0 %v2012
    %2203 = vmatpush.bf16.msra.mxu0 %v2004
    %2204 = vmatpush.bf16.msra.mxu0 %v1996
    %2205 = vmatpush.bf16.msra.mxu0 %v1988
    %2206 = vmatpush.bf16.msra.mxu0 %v1980
    %2207 = vmatmul.bf16.gmra.mxu0 %v1716
    %v2208 = vpop.f32.mrf.mxu0
    %v2209 = vadd.f32 0.0, %v2208
    %v2210 = vpop.f32.mrf.mxu0
    %v2211 = vadd.f32 0.0, %v2210
    %2212 = vdwg.mxu0
    %2213 = vst [vmem:[#allocation2] sm:$0xff] %v2111
    %2214 = vst [vmem:[#allocation2 + $0x8] sm:$0xff] %v2125
    %2215 = vst [vmem:[#allocation2 + $0x10] sm:$0xff] %v2139
    %2216 = vst [vmem:[#allocation2 + $0x18] sm:$0xff] %v2153
    %2217 = vst [vmem:[#allocation2 + $0x20] sm:$0xff] %v2167
    %2218 = vst [vmem:[#allocation2 + $0x28] sm:$0xff] %v2181
    %2219 = vst [vmem:[#allocation2 + $0x30] sm:$0xff] %v2195
    %2220 = vst [vmem:[#allocation2 + $0x38] sm:$0xff] %v2209
    %2221 = vst [vmem:[#allocation2 + $0x40] sm:$0xff] %v2113
    %2222 = vst [vmem:[#allocation2 + $0x48] sm:$0xff] %v2127
    %2223 = vst [vmem:[#allocation2 + $0x50] sm:$0xff] %v2141
    %2224 = vst [vmem:[#allocation2 + $0x58] sm:$0xff] %v2155
    %2225 = vst [vmem:[#allocation2 + $0x60] sm:$0xff] %v2169
    %2226 = vst [vmem:[#allocation2 + $0x68] sm:$0xff] %v2183
    %2227 = vst [vmem:[#allocation2 + $0x70] sm:$0xff] %v2197
    %2228 = vst [vmem:[#allocation2 + $0x78] sm:$0xff] %v2211
    %v2229 = vld [vmem:[#allocation6] sm:$0xff]
    %v2230 = vld [vmem:[#allocation6 + $0x8] sm:$0xff]
    %v2231 = vld [vmem:[#allocation6 + $0x10] sm:$0xff]
    %v2232 = vld [vmem:[#allocation6 + $0x18] sm:$0xff]
    %v2233 = vld [vmem:[#allocation6 + $0x20] sm:$0xff]
    %v2234 = vld [vmem:[#allocation6 + $0x28] sm:$0xff]
    %v2235 = vld [vmem:[#allocation6 + $0x30] sm:$0xff]
    %v2236 = vld [vmem:[#allocation6 + $0x38] sm:$0xff]
    %v2237 = vld [vmem:[#allocation6 + $0x40] sm:$0xff]
    %v2238 = vld [vmem:[#allocation6 + $0x48] sm:$0xff]
    %v2239 = vld [vmem:[#allocation6 + $0x50] sm:$0xff]
    %v2240 = vld [vmem:[#allocation6 + $0x58] sm:$0xff]
    %v2241 = vld [vmem:[#allocation6 + $0x60] sm:$0xff]
    %v2242 = vld [vmem:[#allocation6 + $0x68] sm:$0xff]
    %v2243 = vld [vmem:[#allocation6 + $0x70] sm:$0xff]
    %v2244 = vld [vmem:[#allocation6 + $0x78] sm:$0xff]
    %v2245 = vld [vmem:[#allocation6 + $0x80] sm:$0xff]
    %v2246 = vld [vmem:[#allocation6 + $0x88] sm:$0xff]
    %v2247 = vld [vmem:[#allocation6 + $0x90] sm:$0xff]
    %v2248 = vld [vmem:[#allocation6 + $0x98] sm:$0xff]
    %v2249 = vld [vmem:[#allocation6 + $0xa0] sm:$0xff]
    %v2250 = vld [vmem:[#allocation6 + $0xa8] sm:$0xff]
    %v2251 = vld [vmem:[#allocation6 + $0xb0] sm:$0xff]
    %v2252 = vld [vmem:[#allocation6 + $0xb8] sm:$0xff]
    %v2253 = vld [vmem:[#allocation6 + $0xc0] sm:$0xff]
    %v2254 = vld [vmem:[#allocation6 + $0xc8] sm:$0xff]
    %v2255 = vld [vmem:[#allocation6 + $0xd0] sm:$0xff]
    %v2256 = vld [vmem:[#allocation6 + $0xd8] sm:$0xff]
    %v2257 = vld [vmem:[#allocation6 + $0xe0] sm:$0xff]
    %v2258 = vld [vmem:[#allocation6 + $0xe8] sm:$0xff]
    %v2259 = vld [vmem:[#allocation6 + $0xf0] sm:$0xff]
    %v2260 = vld [vmem:[#allocation6 + $0xf8] sm:$0xff]
    %v2261 = vld [vmem:[#allocation6 + $0x100] sm:$0xff]
    %v2262 = vld [vmem:[#allocation6 + $0x108] sm:$0xff]
    %v2263 = vld [vmem:[#allocation6 + $0x110] sm:$0xff]
    %v2264 = vld [vmem:[#allocation6 + $0x118] sm:$0xff]
    %v2265 = vld [vmem:[#allocation6 + $0x120] sm:$0xff]
    %v2266 = vld [vmem:[#allocation6 + $0x128] sm:$0xff]
    %v2267 = vld [vmem:[#allocation6 + $0x130] sm:$0xff]
    %v2268 = vld [vmem:[#allocation6 + $0x138] sm:$0xff]
    %v2269 = vld [vmem:[#allocation6 + $0x140] sm:$0xff]
    %v2270 = vld [vmem:[#allocation6 + $0x148] sm:$0xff]
    %v2271 = vld [vmem:[#allocation6 + $0x150] sm:$0xff]
    %v2272 = vld [vmem:[#allocation6 + $0x158] sm:$0xff]
    %v2273 = vld [vmem:[#allocation6 + $0x160] sm:$0xff]
    %v2274 = vld [vmem:[#allocation6 + $0x168] sm:$0xff]
    %v2275 = vld [vmem:[#allocation6 + $0x170] sm:$0xff]
    %v2276 = vld [vmem:[#allocation6 + $0x178] sm:$0xff]
    %v2277 = vld [vmem:[#allocation6 + $0x180] sm:$0xff]
    %v2278 = vld [vmem:[#allocation6 + $0x188] sm:$0xff]
    %v2279 = vld [vmem:[#allocation6 + $0x190] sm:$0xff]
    %v2280 = vld [vmem:[#allocation6 + $0x198] sm:$0xff]
    %v2281 = vld [vmem:[#allocation6 + $0x1a0] sm:$0xff]
    %v2282 = vld [vmem:[#allocation6 + $0x1a8] sm:$0xff]
    %v2283 = vld [vmem:[#allocation6 + $0x1b0] sm:$0xff]
    %v2284 = vld [vmem:[#allocation6 + $0x1b8] sm:$0xff]
    %v2285 = vld [vmem:[#allocation6 + $0x1c0] sm:$0xff]
    %v2286 = vld [vmem:[#allocation6 + $0x1c8] sm:$0xff]
    %v2287 = vld [vmem:[#allocation6 + $0x1d0] sm:$0xff]
    %v2288 = vld [vmem:[#allocation6 + $0x1d8] sm:$0xff]
    %v2289 = vld [vmem:[#allocation6 + $0x1e0] sm:$0xff]
    %v2290 = vld [vmem:[#allocation6 + $0x1e8] sm:$0xff]
    %v2291 = vld [vmem:[#allocation6 + $0x1f0] sm:$0xff]
    %v2292 = vld [vmem:[#allocation6 + $0x1f8] sm:$0xff]
    %v2293 = vld [vmem:[#allocation6 + $0x200] sm:$0xff]
    %v2294 = vld [vmem:[#allocation6 + $0x208] sm:$0xff]
    %v2295 = vld [vmem:[#allocation6 + $0x210] sm:$0xff]
    %v2296 = vld [vmem:[#allocation6 + $0x218] sm:$0xff]
    %v2297 = vld [vmem:[#allocation6 + $0x220] sm:$0xff]
    %v2298 = vld [vmem:[#allocation6 + $0x228] sm:$0xff]
    %v2299 = vld [vmem:[#allocation6 + $0x230] sm:$0xff]
    %v2300 = vld [vmem:[#allocation6 + $0x238] sm:$0xff]
    %v2301 = vld [vmem:[#allocation6 + $0x240] sm:$0xff]
    %v2302 = vld [vmem:[#allocation6 + $0x248] sm:$0xff]
    %v2303 = vld [vmem:[#allocation6 + $0x250] sm:$0xff]
    %v2304 = vld [vmem:[#allocation6 + $0x258] sm:$0xff]
    %v2305 = vld [vmem:[#allocation6 + $0x260] sm:$0xff]
    %v2306 = vld [vmem:[#allocation6 + $0x268] sm:$0xff]
    %v2307 = vld [vmem:[#allocation6 + $0x270] sm:$0xff]
    %v2308 = vld [vmem:[#allocation6 + $0x278] sm:$0xff]
    %v2309 = vld [vmem:[#allocation6 + $0x280] sm:$0xff]
    %v2310 = vld [vmem:[#allocation6 + $0x288] sm:$0xff]
    %v2311 = vld [vmem:[#allocation6 + $0x290] sm:$0xff]
    %v2312 = vld [vmem:[#allocation6 + $0x298] sm:$0xff]
    %v2313 = vld [vmem:[#allocation6 + $0x2a0] sm:$0xff]
    %v2314 = vld [vmem:[#allocation6 + $0x2a8] sm:$0xff]
    %v2315 = vld [vmem:[#allocation6 + $0x2b0] sm:$0xff]
    %v2316 = vld [vmem:[#allocation6 + $0x2b8] sm:$0xff]
    %v2317 = vld [vmem:[#allocation6 + $0x2c0] sm:$0xff]
    %v2318 = vld [vmem:[#allocation6 + $0x2c8] sm:$0xff]
    %v2319 = vld [vmem:[#allocation6 + $0x2d0] sm:$0xff]
    %v2320 = vld [vmem:[#allocation6 + $0x2d8] sm:$0xff]
    %v2321 = vld [vmem:[#allocation6 + $0x2e0] sm:$0xff]
    %v2322 = vld [vmem:[#allocation6 + $0x2e8] sm:$0xff]
    %v2323 = vld [vmem:[#allocation6 + $0x2f0] sm:$0xff]
    %v2324 = vld [vmem:[#allocation6 + $0x2f8] sm:$0xff]
    %v2325 = vld [vmem:[#allocation6 + $0x300] sm:$0xff]
    %v2326 = vld [vmem:[#allocation6 + $0x308] sm:$0xff]
    %v2327 = vld [vmem:[#allocation6 + $0x310] sm:$0xff]
    %v2328 = vld [vmem:[#allocation6 + $0x318] sm:$0xff]
    %v2329 = vld [vmem:[#allocation6 + $0x320] sm:$0xff]
    %v2330 = vld [vmem:[#allocation6 + $0x328] sm:$0xff]
    %v2331 = vld [vmem:[#allocation6 + $0x330] sm:$0xff]
    %v2332 = vld [vmem:[#allocation6 + $0x338] sm:$0xff]
    %v2333 = vld [vmem:[#allocation6 + $0x340] sm:$0xff]
    %v2334 = vld [vmem:[#allocation6 + $0x348] sm:$0xff]
    %v2335 = vld [vmem:[#allocation6 + $0x350] sm:$0xff]
    %v2336 = vld [vmem:[#allocation6 + $0x358] sm:$0xff]
    %v2337 = vld [vmem:[#allocation6 + $0x360] sm:$0xff]
    %v2338 = vld [vmem:[#allocation6 + $0x368] sm:$0xff]
    %v2339 = vld [vmem:[#allocation6 + $0x370] sm:$0xff]
    %v2340 = vld [vmem:[#allocation6 + $0x378] sm:$0xff]
    %v2341 = vld [vmem:[#allocation6 + $0x380] sm:$0xff]
    %v2342 = vld [vmem:[#allocation6 + $0x388] sm:$0xff]
    %v2343 = vld [vmem:[#allocation6 + $0x390] sm:$0xff]
    %v2344 = vld [vmem:[#allocation6 + $0x398] sm:$0xff]
    %v2345 = vld [vmem:[#allocation6 + $0x3a0] sm:$0xff]
    %v2346 = vld [vmem:[#allocation6 + $0x3a8] sm:$0xff]
    %v2347 = vld [vmem:[#allocation6 + $0x3b0] sm:$0xff]
    %v2348 = vld [vmem:[#allocation6 + $0x3b8] sm:$0xff]
    %v2349 = vld [vmem:[#allocation6 + $0x3c0] sm:$0xff]
    %v2350 = vld [vmem:[#allocation6 + $0x3c8] sm:$0xff]
    %v2351 = vld [vmem:[#allocation6 + $0x3d0] sm:$0xff]
    %v2352 = vld [vmem:[#allocation6 + $0x3d8] sm:$0xff]
    %v2353 = vld [vmem:[#allocation6 + $0x3e0] sm:$0xff]
    %v2354 = vld [vmem:[#allocation6 + $0x3e8] sm:$0xff]
    %v2355 = vld [vmem:[#allocation6 + $0x3f0] sm:$0xff]
    %v2356 = vld [vmem:[#allocation6 + $0x3f8] sm:$0xff]
    %v2357 = vld [vmem:[%s8] sm:$0xff]
    %v2359 = vperm.slane %v2357, 0
    %v2360 = vperm.slane %v2357, 1
    %v2361 = vperm.slane %v2357, 2
    %v2362 = vperm.slane %v2357, 3
    %v2363 = vperm.slane %v2357, 4
    %v2364 = vperm.slane %v2357, 5
    %v2365 = vperm.slane %v2357, 6
    %v2366 = vperm.slane %v2357, 7
    %v2503 = vunpack.c.l.b16 %v2229
    %v2504 = vunpack.c.h.b16 %v2229
    %v2505 = vunpack.c.l.b16 %v2230
    %v2506 = vunpack.c.h.b16 %v2230
    %v2507 = vunpack.c.l.b16 %v2231
    %v2508 = vunpack.c.h.b16 %v2231
    %v2509 = vunpack.c.l.b16 %v2232
    %v2510 = vunpack.c.h.b16 %v2232
    %v2511 = vunpack.c.l.b16 %v2233
    %v2512 = vunpack.c.h.b16 %v2233
    %v2513 = vunpack.c.l.b16 %v2234
    %v2514 = vunpack.c.h.b16 %v2234
    %v2515 = vunpack.c.l.b16 %v2235
    %v2516 = vunpack.c.h.b16 %v2235
    %v2517 = vunpack.c.l.b16 %v2236
    %v2518 = vunpack.c.h.b16 %v2236
    %v2519 = vunpack.c.l.b16 %v2237
    %v2520 = vunpack.c.h.b16 %v2237
    %v2521 = vunpack.c.l.b16 %v2238
    %v2522 = vunpack.c.h.b16 %v2238
    %v2523 = vunpack.c.l.b16 %v2239
    %v2524 = vunpack.c.h.b16 %v2239
    %v2525 = vunpack.c.l.b16 %v2240
    %v2526 = vunpack.c.h.b16 %v2240
    %v2527 = vunpack.c.l.b16 %v2241
    %v2528 = vunpack.c.h.b16 %v2241
    %v2529 = vunpack.c.l.b16 %v2242
    %v2530 = vunpack.c.h.b16 %v2242
    %v2531 = vunpack.c.l.b16 %v2243
    %v2532 = vunpack.c.h.b16 %v2243
    %v2533 = vunpack.c.l.b16 %v2244
    %v2534 = vunpack.c.h.b16 %v2244
    %v2535 = vunpack.c.l.b16 %v2245
    %v2536 = vunpack.c.h.b16 %v2245
    %v2537 = vunpack.c.l.b16 %v2246
    %v2538 = vunpack.c.h.b16 %v2246
    %v2539 = vunpack.c.l.b16 %v2247
    %v2540 = vunpack.c.h.b16 %v2247
    %v2541 = vunpack.c.l.b16 %v2248
    %v2542 = vunpack.c.h.b16 %v2248
    %v2543 = vunpack.c.l.b16 %v2249
    %v2544 = vunpack.c.h.b16 %v2249
    %v2545 = vunpack.c.l.b16 %v2250
    %v2546 = vunpack.c.h.b16 %v2250
    %v2547 = vunpack.c.l.b16 %v2251
    %v2548 = vunpack.c.h.b16 %v2251
    %v2549 = vunpack.c.l.b16 %v2252
    %v2550 = vunpack.c.h.b16 %v2252
    %v2551 = vunpack.c.l.b16 %v2253
    %v2552 = vunpack.c.h.b16 %v2253
    %v2553 = vunpack.c.l.b16 %v2254
    %v2554 = vunpack.c.h.b16 %v2254
    %v2555 = vunpack.c.l.b16 %v2255
    %v2556 = vunpack.c.h.b16 %v2255
    %v2557 = vunpack.c.l.b16 %v2256
    %v2558 = vunpack.c.h.b16 %v2256
    %v2559 = vunpack.c.l.b16 %v2257
    %v2560 = vunpack.c.h.b16 %v2257
    %v2561 = vunpack.c.l.b16 %v2258
    %v2562 = vunpack.c.h.b16 %v2258
    %v2563 = vunpack.c.l.b16 %v2259
    %v2564 = vunpack.c.h.b16 %v2259
    %v2565 = vunpack.c.l.b16 %v2260
    %v2566 = vunpack.c.h.b16 %v2260
    %v2567 = vunpack.c.l.b16 %v2261
    %v2568 = vunpack.c.h.b16 %v2261
    %v2569 = vunpack.c.l.b16 %v2262
    %v2570 = vunpack.c.h.b16 %v2262
    %v2571 = vunpack.c.l.b16 %v2263
    %v2572 = vunpack.c.h.b16 %v2263
    %v2573 = vunpack.c.l.b16 %v2264
    %v2574 = vunpack.c.h.b16 %v2264
    %v2575 = vunpack.c.l.b16 %v2265
    %v2576 = vunpack.c.h.b16 %v2265
    %v2577 = vunpack.c.l.b16 %v2266
    %v2578 = vunpack.c.h.b16 %v2266
    %v2579 = vunpack.c.l.b16 %v2267
    %v2580 = vunpack.c.h.b16 %v2267
    %v2581 = vunpack.c.l.b16 %v2268
    %v2582 = vunpack.c.h.b16 %v2268
    %v2583 = vunpack.c.l.b16 %v2269
    %v2584 = vunpack.c.h.b16 %v2269
    %v2585 = vunpack.c.l.b16 %v2270
    %v2586 = vunpack.c.h.b16 %v2270
    %v2587 = vunpack.c.l.b16 %v2271
    %v2588 = vunpack.c.h.b16 %v2271
    %v2589 = vunpack.c.l.b16 %v2272
    %v2590 = vunpack.c.h.b16 %v2272
    %v2591 = vunpack.c.l.b16 %v2273
    %v2592 = vunpack.c.h.b16 %v2273
    %v2593 = vunpack.c.l.b16 %v2274
    %v2594 = vunpack.c.h.b16 %v2274
    %v2595 = vunpack.c.l.b16 %v2275
    %v2596 = vunpack.c.h.b16 %v2275
    %v2597 = vunpack.c.l.b16 %v2276
    %v2598 = vunpack.c.h.b16 %v2276
    %v2599 = vunpack.c.l.b16 %v2277
    %v2600 = vunpack.c.h.b16 %v2277
    %v2601 = vunpack.c.l.b16 %v2278
    %v2602 = vunpack.c.h.b16 %v2278
    %v2603 = vunpack.c.l.b16 %v2279
    %v2604 = vunpack.c.h.b16 %v2279
    %v2605 = vunpack.c.l.b16 %v2280
    %v2606 = vunpack.c.h.b16 %v2280
    %v2607 = vunpack.c.l.b16 %v2281
    %v2608 = vunpack.c.h.b16 %v2281
    %v2609 = vunpack.c.l.b16 %v2282
    %v2610 = vunpack.c.h.b16 %v2282
    %v2611 = vunpack.c.l.b16 %v2283
    %v2612 = vunpack.c.h.b16 %v2283
    %v2613 = vunpack.c.l.b16 %v2284
    %v2614 = vunpack.c.h.b16 %v2284
    %v2615 = vunpack.c.l.b16 %v2285
    %v2616 = vunpack.c.h.b16 %v2285
    %v2617 = vunpack.c.l.b16 %v2286
    %v2618 = vunpack.c.h.b16 %v2286
    %v2619 = vunpack.c.l.b16 %v2287
    %v2620 = vunpack.c.h.b16 %v2287
    %v2621 = vunpack.c.l.b16 %v2288
    %v2622 = vunpack.c.h.b16 %v2288
    %v2623 = vunpack.c.l.b16 %v2289
    %v2624 = vunpack.c.h.b16 %v2289
    %v2625 = vunpack.c.l.b16 %v2290
    %v2626 = vunpack.c.h.b16 %v2290
    %v2627 = vunpack.c.l.b16 %v2291
    %v2628 = vunpack.c.h.b16 %v2291
    %v2629 = vunpack.c.l.b16 %v2292
    %v2630 = vunpack.c.h.b16 %v2292
    %v2631 = vunpack.c.l.b16 %v2293
    %v2632 = vunpack.c.h.b16 %v2293
    %v2633 = vunpack.c.l.b16 %v2294
    %v2634 = vunpack.c.h.b16 %v2294
    %v2635 = vunpack.c.l.b16 %v2295
    %v2636 = vunpack.c.h.b16 %v2295
    %v2637 = vunpack.c.l.b16 %v2296
    %v2638 = vunpack.c.h.b16 %v2296
    %v2639 = vunpack.c.l.b16 %v2297
    %v2640 = vunpack.c.h.b16 %v2297
    %v2641 = vunpack.c.l.b16 %v2298
    %v2642 = vunpack.c.h.b16 %v2298
    %v2643 = vunpack.c.l.b16 %v2299
    %v2644 = vunpack.c.h.b16 %v2299
    %v2645 = vunpack.c.l.b16 %v2300
    %v2646 = vunpack.c.h.b16 %v2300
    %v2647 = vunpack.c.l.b16 %v2301
    %v2648 = vunpack.c.h.b16 %v2301
    %v2649 = vunpack.c.l.b16 %v2302
    %v2650 = vunpack.c.h.b16 %v2302
    %v2651 = vunpack.c.l.b16 %v2303
    %v2652 = vunpack.c.h.b16 %v2303
    %v2653 = vunpack.c.l.b16 %v2304
    %v2654 = vunpack.c.h.b16 %v2304
    %v2655 = vunpack.c.l.b16 %v2305
    %v2656 = vunpack.c.h.b16 %v2305
    %v2657 = vunpack.c.l.b16 %v2306
    %v2658 = vunpack.c.h.b16 %v2306
    %v2659 = vunpack.c.l.b16 %v2307
    %v2660 = vunpack.c.h.b16 %v2307
    %v2661 = vunpack.c.l.b16 %v2308
    %v2662 = vunpack.c.h.b16 %v2308
    %v2663 = vunpack.c.l.b16 %v2309
    %v2664 = vunpack.c.h.b16 %v2309
    %v2665 = vunpack.c.l.b16 %v2310
    %v2666 = vunpack.c.h.b16 %v2310
    %v2667 = vunpack.c.l.b16 %v2311
    %v2668 = vunpack.c.h.b16 %v2311
    %v2669 = vunpack.c.l.b16 %v2312
    %v2670 = vunpack.c.h.b16 %v2312
    %v2671 = vunpack.c.l.b16 %v2313
    %v2672 = vunpack.c.h.b16 %v2313
    %v2673 = vunpack.c.l.b16 %v2314
    %v2674 = vunpack.c.h.b16 %v2314
    %v2675 = vunpack.c.l.b16 %v2315
    %v2676 = vunpack.c.h.b16 %v2315
    %v2677 = vunpack.c.l.b16 %v2316
    %v2678 = vunpack.c.h.b16 %v2316
    %v2679 = vunpack.c.l.b16 %v2317
    %v2680 = vunpack.c.h.b16 %v2317
    %v2681 = vunpack.c.l.b16 %v2318
    %v2682 = vunpack.c.h.b16 %v2318
    %v2683 = vunpack.c.l.b16 %v2319
    %v2684 = vunpack.c.h.b16 %v2319
    %v2685 = vunpack.c.l.b16 %v2320
    %v2686 = vunpack.c.h.b16 %v2320
    %v2687 = vunpack.c.l.b16 %v2321
    %v2688 = vunpack.c.h.b16 %v2321
    %v2689 = vunpack.c.l.b16 %v2322
    %v2690 = vunpack.c.h.b16 %v2322
    %v2691 = vunpack.c.l.b16 %v2323
    %v2692 = vunpack.c.h.b16 %v2323
    %v2693 = vunpack.c.l.b16 %v2324
    %v2694 = vunpack.c.h.b16 %v2324
    %v2695 = vunpack.c.l.b16 %v2325
    %v2696 = vunpack.c.h.b16 %v2325
    %v2697 = vunpack.c.l.b16 %v2326
    %v2698 = vunpack.c.h.b16 %v2326
    %v2699 = vunpack.c.l.b16 %v2327
    %v2700 = vunpack.c.h.b16 %v2327
    %v2701 = vunpack.c.l.b16 %v2328
    %v2702 = vunpack.c.h.b16 %v2328
    %v2703 = vunpack.c.l.b16 %v2329
    %v2704 = vunpack.c.h.b16 %v2329
    %v2705 = vunpack.c.l.b16 %v2330
    %v2706 = vunpack.c.h.b16 %v2330
    %v2707 = vunpack.c.l.b16 %v2331
    %v2708 = vunpack.c.h.b16 %v2331
    %v2709 = vunpack.c.l.b16 %v2332
    %v2710 = vunpack.c.h.b16 %v2332
    %v2711 = vunpack.c.l.b16 %v2333
    %v2712 = vunpack.c.h.b16 %v2333
    %v2713 = vunpack.c.l.b16 %v2334
    %v2714 = vunpack.c.h.b16 %v2334
    %v2715 = vunpack.c.l.b16 %v2335
    %v2716 = vunpack.c.h.b16 %v2335
    %v2717 = vunpack.c.l.b16 %v2336
    %v2718 = vunpack.c.h.b16 %v2336
    %v2719 = vunpack.c.l.b16 %v2337
    %v2720 = vunpack.c.h.b16 %v2337
    %v2721 = vunpack.c.l.b16 %v2338
    %v2722 = vunpack.c.h.b16 %v2338
    %v2723 = vunpack.c.l.b16 %v2339
    %v2724 = vunpack.c.h.b16 %v2339
    %v2725 = vunpack.c.l.b16 %v2340
    %v2726 = vunpack.c.h.b16 %v2340
    %v2727 = vunpack.c.l.b16 %v2341
    %v2728 = vunpack.c.h.b16 %v2341
    %v2729 = vunpack.c.l.b16 %v2342
    %v2730 = vunpack.c.h.b16 %v2342
    %v2731 = vunpack.c.l.b16 %v2343
    %v2732 = vunpack.c.h.b16 %v2343
    %v2733 = vunpack.c.l.b16 %v2344
    %v2734 = vunpack.c.h.b16 %v2344
    %v2735 = vunpack.c.l.b16 %v2345
    %v2736 = vunpack.c.h.b16 %v2345
    %v2737 = vunpack.c.l.b16 %v2346
    %v2738 = vunpack.c.h.b16 %v2346
    %v2739 = vunpack.c.l.b16 %v2347
    %v2740 = vunpack.c.h.b16 %v2347
    %v2741 = vunpack.c.l.b16 %v2348
    %v2742 = vunpack.c.h.b16 %v2348
    %v2743 = vunpack.c.l.b16 %v2349
    %v2744 = vunpack.c.h.b16 %v2349
    %v2745 = vunpack.c.l.b16 %v2350
    %v2746 = vunpack.c.h.b16 %v2350
    %v2747 = vunpack.c.l.b16 %v2351
    %v2748 = vunpack.c.h.b16 %v2351
    %v2749 = vunpack.c.l.b16 %v2352
    %v2750 = vunpack.c.h.b16 %v2352
    %v2751 = vunpack.c.l.b16 %v2353
    %v2752 = vunpack.c.h.b16 %v2353
    %v2753 = vunpack.c.l.b16 %v2354
    %v2754 = vunpack.c.h.b16 %v2354
    %v2755 = vunpack.c.l.b16 %v2355
    %v2756 = vunpack.c.h.b16 %v2355
    %v2757 = vunpack.c.l.b16 %v2356
    %v2758 = vunpack.c.h.b16 %v2356
    %v2759 = vpack.c.b16 %v2511, %v2503
    %v2760 = vpack.c.b16 %v2512, %v2504
    %v2761 = vpack.c.b16 %v2513, %v2505
    %v2762 = vpack.c.b16 %v2514, %v2506
    %v2763 = vpack.c.b16 %v2515, %v2507
    %v2764 = vpack.c.b16 %v2516, %v2508
    %v2765 = vpack.c.b16 %v2517, %v2509
    %v2766 = vpack.c.b16 %v2518, %v2510
    %v2767 = vpack.c.b16 %v2527, %v2519
    %v2768 = vpack.c.b16 %v2528, %v2520
    %v2769 = vpack.c.b16 %v2529, %v2521
    %v2770 = vpack.c.b16 %v2530, %v2522
    %v2771 = vpack.c.b16 %v2531, %v2523
    %v2772 = vpack.c.b16 %v2532, %v2524
    %v2773 = vpack.c.b16 %v2533, %v2525
    %v2774 = vpack.c.b16 %v2534, %v2526
    %v2775 = vpack.c.b16 %v2543, %v2535
    %v2776 = vpack.c.b16 %v2544, %v2536
    %v2777 = vpack.c.b16 %v2545, %v2537
    %v2778 = vpack.c.b16 %v2546, %v2538
    %v2779 = vpack.c.b16 %v2547, %v2539
    %v2780 = vpack.c.b16 %v2548, %v2540
    %v2781 = vpack.c.b16 %v2549, %v2541
    %v2782 = vpack.c.b16 %v2550, %v2542
    %v2783 = vpack.c.b16 %v2559, %v2551
    %v2784 = vpack.c.b16 %v2560, %v2552
    %v2785 = vpack.c.b16 %v2561, %v2553
    %v2786 = vpack.c.b16 %v2562, %v2554
    %v2787 = vpack.c.b16 %v2563, %v2555
    %v2788 = vpack.c.b16 %v2564, %v2556
    %v2789 = vpack.c.b16 %v2565, %v2557
    %v2790 = vpack.c.b16 %v2566, %v2558
    %v2791 = vpack.c.b16 %v2575, %v2567
    %v2792 = vpack.c.b16 %v2576, %v2568
    %v2793 = vpack.c.b16 %v2577, %v2569
    %v2794 = vpack.c.b16 %v2578, %v2570
    %v2795 = vpack.c.b16 %v2579, %v2571
    %v2796 = vpack.c.b16 %v2580, %v2572
    %v2797 = vpack.c.b16 %v2581, %v2573
    %v2798 = vpack.c.b16 %v2582, %v2574
    %v2799 = vpack.c.b16 %v2591, %v2583
    %v2800 = vpack.c.b16 %v2592, %v2584
    %v2801 = vpack.c.b16 %v2593, %v2585
    %v2802 = vpack.c.b16 %v2594, %v2586
    %v2803 = vpack.c.b16 %v2595, %v2587
    %v2804 = vpack.c.b16 %v2596, %v2588
    %v2805 = vpack.c.b16 %v2597, %v2589
    %v2806 = vpack.c.b16 %v2598, %v2590
    %v2807 = vpack.c.b16 %v2607, %v2599
    %v2808 = vpack.c.b16 %v2608, %v2600
    %v2809 = vpack.c.b16 %v2609, %v2601
    %v2810 = vpack.c.b16 %v2610, %v2602
    %v2811 = vpack.c.b16 %v2611, %v2603
    %v2812 = vpack.c.b16 %v2612, %v2604
    %v2813 = vpack.c.b16 %v2613, %v2605
    %v2814 = vpack.c.b16 %v2614, %v2606
    %v2815 = vpack.c.b16 %v2623, %v2615
    %v2816 = vpack.c.b16 %v2624, %v2616
    %v2817 = vpack.c.b16 %v2625, %v2617
    %v2818 = vpack.c.b16 %v2626, %v2618
    %v2819 = vpack.c.b16 %v2627, %v2619
    %v2820 = vpack.c.b16 %v2628, %v2620
    %v2821 = vpack.c.b16 %v2629, %v2621
    %v2822 = vpack.c.b16 %v2630, %v2622
    %v2823 = vpack.c.b16 %v2639, %v2631
    %v2824 = vpack.c.b16 %v2640, %v2632
    %v2825 = vpack.c.b16 %v2641, %v2633
    %v2826 = vpack.c.b16 %v2642, %v2634
    %v2827 = vpack.c.b16 %v2643, %v2635
    %v2828 = vpack.c.b16 %v2644, %v2636
    %v2829 = vpack.c.b16 %v2645, %v2637
    %v2830 = vpack.c.b16 %v2646, %v2638
    %v2831 = vpack.c.b16 %v2655, %v2647
    %v2832 = vpack.c.b16 %v2656, %v2648
    %v2833 = vpack.c.b16 %v2657, %v2649
    %v2834 = vpack.c.b16 %v2658, %v2650
    %v2835 = vpack.c.b16 %v2659, %v2651
    %v2836 = vpack.c.b16 %v2660, %v2652
    %v2837 = vpack.c.b16 %v2661, %v2653
    %v2838 = vpack.c.b16 %v2662, %v2654
    %v2839 = vpack.c.b16 %v2671, %v2663
    %v2840 = vpack.c.b16 %v2672, %v2664
    %v2841 = vpack.c.b16 %v2673, %v2665
    %v2842 = vpack.c.b16 %v2674, %v2666
    %v2843 = vpack.c.b16 %v2675, %v2667
    %v2844 = vpack.c.b16 %v2676, %v2668
    %v2845 = vpack.c.b16 %v2677, %v2669
    %v2846 = vpack.c.b16 %v2678, %v2670
    %v2847 = vpack.c.b16 %v2687, %v2679
    %v2848 = vpack.c.b16 %v2688, %v2680
    %v2849 = vpack.c.b16 %v2689, %v2681
    %v2850 = vpack.c.b16 %v2690, %v2682
    %v2851 = vpack.c.b16 %v2691, %v2683
    %v2852 = vpack.c.b16 %v2692, %v2684
    %v2853 = vpack.c.b16 %v2693, %v2685
    %v2854 = vpack.c.b16 %v2694, %v2686
    %v2855 = vpack.c.b16 %v2703, %v2695
    %v2856 = vpack.c.b16 %v2704, %v2696
    %v2857 = vpack.c.b16 %v2705, %v2697
    %v2858 = vpack.c.b16 %v2706, %v2698
    %v2859 = vpack.c.b16 %v2707, %v2699
    %v2860 = vpack.c.b16 %v2708, %v2700
    %v2861 = vpack.c.b16 %v2709, %v2701
    %v2862 = vpack.c.b16 %v2710, %v2702
    %v2863 = vpack.c.b16 %v2719, %v2711
    %v2864 = vpack.c.b16 %v2720, %v2712
    %v2865 = vpack.c.b16 %v2721, %v2713
    %v2866 = vpack.c.b16 %v2722, %v2714
    %v2867 = vpack.c.b16 %v2723, %v2715
    %v2868 = vpack.c.b16 %v2724, %v2716
    %v2869 = vpack.c.b16 %v2725, %v2717
    %v2870 = vpack.c.b16 %v2726, %v2718
    %v2871 = vpack.c.b16 %v2735, %v2727
    %v2872 = vpack.c.b16 %v2736, %v2728
    %v2873 = vpack.c.b16 %v2737, %v2729
    %v2874 = vpack.c.b16 %v2738, %v2730
    %v2875 = vpack.c.b16 %v2739, %v2731
    %v2876 = vpack.c.b16 %v2740, %v2732
    %v2877 = vpack.c.b16 %v2741, %v2733
    %v2878 = vpack.c.b16 %v2742, %v2734
    %v2879 = vpack.c.b16 %v2751, %v2743
    %v2880 = vpack.c.b16 %v2752, %v2744
    %v2881 = vpack.c.b16 %v2753, %v2745
    %v2882 = vpack.c.b16 %v2754, %v2746
    %v2883 = vpack.c.b16 %v2755, %v2747
    %v2884 = vpack.c.b16 %v2756, %v2748
    %v2885 = vpack.c.b16 %v2757, %v2749
    %v2886 = vpack.c.b16 %v2758, %v2750
    %3015 = vmatpush.bf16.msra.mxu0 %v2815
    %3016 = vmatpush.bf16.msra.mxu0 %v2807
    %3017 = vmatpush.bf16.msra.mxu0 %v2799
    %3018 = vmatpush.bf16.msra.mxu0 %v2791
    %3019 = vmatpush.bf16.msra.mxu0 %v2783
    %3020 = vmatpush.bf16.msra.mxu0 %v2775
    %3021 = vmatpush.bf16.msra.mxu0 %v2767
    %3022 = vmatpush.bf16.msra.mxu0 %v2759
    %3023 = vmatmul.bf16.gmra.mxu0 0
    %v3024 = vpop.f32.mrf.mxu0
    %v3025 = vadd.f32 %v2359, %v3024
    %v3026 = vpop.f32.mrf.mxu0
    %3027 = vdwg.mxu0
    %3028 = vmatpush.bf16.msra.mxu0 %v2879
    %3029 = vmatpush.bf16.msra.mxu0 %v2871
    %3030 = vmatpush.bf16.msra.mxu0 %v2863
    %3031 = vmatpush.bf16.msra.mxu0 %v2855
    %3032 = vmatpush.bf16.msra.mxu0 %v2847
    %3033 = vmatpush.bf16.msra.mxu0 %v2839
    %3034 = vmatpush.bf16.msra.mxu0 %v2831
    %3035 = vmatpush.bf16.msra.mxu0 %v2823
    %3036 = vmatmul.bf16.gmra.mxu0 0
    %v3037 = vpop.f32.mrf.mxu0
    %v3038 = vadd.f32 %v3025, %v3037
    %v3039 = vpop.f32.mrf.mxu0
    %3040 = vdwg.mxu0
    %3041 = vmatpush.bf16.msra.mxu0 %v2816
    %3042 = vmatpush.bf16.msra.mxu0 %v2808
    %3043 = vmatpush.bf16.msra.mxu0 %v2800
    %3044 = vmatpush.bf16.msra.mxu0 %v2792
    %3045 = vmatpush.bf16.msra.mxu0 %v2784
    %3046 = vmatpush.bf16.msra.mxu0 %v2776
    %3047 = vmatpush.bf16.msra.mxu0 %v2768
    %3048 = vmatpush.bf16.msra.mxu0 %v2760
    %3049 = vmatmul.bf16.gmra.mxu0 0
    %v3050 = vpop.f32.mrf.mxu0
    %v3051 = vadd.f32 %v2360, %v3050
    %v3052 = vpop.f32.mrf.mxu0
    %3053 = vdwg.mxu0
    %3054 = vmatpush.bf16.msra.mxu0 %v2880
    %3055 = vmatpush.bf16.msra.mxu0 %v2872
    %3056 = vmatpush.bf16.msra.mxu0 %v2864
    %3057 = vmatpush.bf16.msra.mxu0 %v2856
    %3058 = vmatpush.bf16.msra.mxu0 %v2848
    %3059 = vmatpush.bf16.msra.mxu0 %v2840
    %3060 = vmatpush.bf16.msra.mxu0 %v2832
    %3061 = vmatpush.bf16.msra.mxu0 %v2824
    %3062 = vmatmul.bf16.gmra.mxu0 0
    %v3063 = vpop.f32.mrf.mxu0
    %v3064 = vadd.f32 %v3051, %v3063
    %v3065 = vpop.f32.mrf.mxu0
    %3066 = vdwg.mxu0
    %3067 = vmatpush.bf16.msra.mxu0 %v2817
    %3068 = vmatpush.bf16.msra.mxu0 %v2809
    %3069 = vmatpush.bf16.msra.mxu0 %v2801
    %3070 = vmatpush.bf16.msra.mxu0 %v2793
    %3071 = vmatpush.bf16.msra.mxu0 %v2785
    %3072 = vmatpush.bf16.msra.mxu0 %v2777
    %3073 = vmatpush.bf16.msra.mxu0 %v2769
    %3074 = vmatpush.bf16.msra.mxu0 %v2761
    %3075 = vmatmul.bf16.gmra.mxu0 0
    %v3076 = vpop.f32.mrf.mxu0
    %v3077 = vadd.f32 %v2361, %v3076
    %v3078 = vpop.f32.mrf.mxu0
    %3079 = vdwg.mxu0
    %3080 = vmatpush.bf16.msra.mxu0 %v2881
    %3081 = vmatpush.bf16.msra.mxu0 %v2873
    %3082 = vmatpush.bf16.msra.mxu0 %v2865
    %3083 = vmatpush.bf16.msra.mxu0 %v2857
    %3084 = vmatpush.bf16.msra.mxu0 %v2849
    %3085 = vmatpush.bf16.msra.mxu0 %v2841
    %3086 = vmatpush.bf16.msra.mxu0 %v2833
    %3087 = vmatpush.bf16.msra.mxu0 %v2825
    %3088 = vmatmul.bf16.gmra.mxu0 0
    %v3089 = vpop.f32.mrf.mxu0
    %v3090 = vadd.f32 %v3077, %v3089
    %v3091 = vpop.f32.mrf.mxu0
    %3092 = vdwg.mxu0
    %3093 = vmatpush.bf16.msra.mxu0 %v2818
    %3094 = vmatpush.bf16.msra.mxu0 %v2810
    %3095 = vmatpush.bf16.msra.mxu0 %v2802
    %3096 = vmatpush.bf16.msra.mxu0 %v2794
    %3097 = vmatpush.bf16.msra.mxu0 %v2786
    %3098 = vmatpush.bf16.msra.mxu0 %v2778
    %3099 = vmatpush.bf16.msra.mxu0 %v2770
    %3100 = vmatpush.bf16.msra.mxu0 %v2762
    %3101 = vmatmul.bf16.gmra.mxu0 0
    %v3102 = vpop.f32.mrf.mxu0
    %v3103 = vadd.f32 %v2362, %v3102
    %v3104 = vpop.f32.mrf.mxu0
    %3105 = vdwg.mxu0
    %3106 = vmatpush.bf16.msra.mxu0 %v2882
    %3107 = vmatpush.bf16.msra.mxu0 %v2874
    %3108 = vmatpush.bf16.msra.mxu0 %v2866
    %3109 = vmatpush.bf16.msra.mxu0 %v2858
    %3110 = vmatpush.bf16.msra.mxu0 %v2850
    %3111 = vmatpush.bf16.msra.mxu0 %v2842
    %3112 = vmatpush.bf16.msra.mxu0 %v2834
    %3113 = vmatpush.bf16.msra.mxu0 %v2826
    %3114 = vmatmul.bf16.gmra.mxu0 0
    %v3115 = vpop.f32.mrf.mxu0
    %v3116 = vadd.f32 %v3103, %v3115
    %v3117 = vpop.f32.mrf.mxu0
    %3118 = vdwg.mxu0
    %3119 = vmatpush.bf16.msra.mxu0 %v2819
    %3120 = vmatpush.bf16.msra.mxu0 %v2811
    %3121 = vmatpush.bf16.msra.mxu0 %v2803
    %3122 = vmatpush.bf16.msra.mxu0 %v2795
    %3123 = vmatpush.bf16.msra.mxu0 %v2787
    %3124 = vmatpush.bf16.msra.mxu0 %v2779
    %3125 = vmatpush.bf16.msra.mxu0 %v2771
    %3126 = vmatpush.bf16.msra.mxu0 %v2763
    %3127 = vmatmul.bf16.gmra.mxu0 0
    %v3128 = vpop.f32.mrf.mxu0
    %v3129 = vadd.f32 %v2363, %v3128
    %v3130 = vpop.f32.mrf.mxu0
    %3131 = vdwg.mxu0
    %3132 = vmatpush.bf16.msra.mxu0 %v2883
    %3133 = vmatpush.bf16.msra.mxu0 %v2875
    %3134 = vmatpush.bf16.msra.mxu0 %v2867
    %3135 = vmatpush.bf16.msra.mxu0 %v2859
    %3136 = vmatpush.bf16.msra.mxu0 %v2851
    %3137 = vmatpush.bf16.msra.mxu0 %v2843
    %3138 = vmatpush.bf16.msra.mxu0 %v2835
    %3139 = vmatpush.bf16.msra.mxu0 %v2827
    %3140 = vmatmul.bf16.gmra.mxu0 0
    %v3141 = vpop.f32.mrf.mxu0
    %v3142 = vadd.f32 %v3129, %v3141
    %v3143 = vpop.f32.mrf.mxu0
    %3144 = vdwg.mxu0
    %3145 = vmatpush.bf16.msra.mxu0 %v2820
    %3146 = vmatpush.bf16.msra.mxu0 %v2812
    %3147 = vmatpush.bf16.msra.mxu0 %v2804
    %3148 = vmatpush.bf16.msra.mxu0 %v2796
    %3149 = vmatpush.bf16.msra.mxu0 %v2788
    %3150 = vmatpush.bf16.msra.mxu0 %v2780
    %3151 = vmatpush.bf16.msra.mxu0 %v2772
    %3152 = vmatpush.bf16.msra.mxu0 %v2764
    %3153 = vmatmul.bf16.gmra.mxu0 0
    %v3154 = vpop.f32.mrf.mxu0
    %v3155 = vadd.f32 %v2364, %v3154
    %v3156 = vpop.f32.mrf.mxu0
    %3157 = vdwg.mxu0
    %3158 = vmatpush.bf16.msra.mxu0 %v2884
    %3159 = vmatpush.bf16.msra.mxu0 %v2876
    %3160 = vmatpush.bf16.msra.mxu0 %v2868
    %3161 = vmatpush.bf16.msra.mxu0 %v2860
    %3162 = vmatpush.bf16.msra.mxu0 %v2852
    %3163 = vmatpush.bf16.msra.mxu0 %v2844
    %3164 = vmatpush.bf16.msra.mxu0 %v2836
    %3165 = vmatpush.bf16.msra.mxu0 %v2828
    %3166 = vmatmul.bf16.gmra.mxu0 0
    %v3167 = vpop.f32.mrf.mxu0
    %v3168 = vadd.f32 %v3155, %v3167
    %v3169 = vpop.f32.mrf.mxu0
    %3170 = vdwg.mxu0
    %3171 = vmatpush.bf16.msra.mxu0 %v2821
    %3172 = vmatpush.bf16.msra.mxu0 %v2813
    %3173 = vmatpush.bf16.msra.mxu0 %v2805
    %3174 = vmatpush.bf16.msra.mxu0 %v2797
    %3175 = vmatpush.bf16.msra.mxu0 %v2789
    %3176 = vmatpush.bf16.msra.mxu0 %v2781
    %3177 = vmatpush.bf16.msra.mxu0 %v2773
    %3178 = vmatpush.bf16.msra.mxu0 %v2765
    %3179 = vmatmul.bf16.gmra.mxu0 0
    %v3180 = vpop.f32.mrf.mxu0
    %v3181 = vadd.f32 %v2365, %v3180
    %v3182 = vpop.f32.mrf.mxu0
    %3183 = vdwg.mxu0
    %3184 = vmatpush.bf16.msra.mxu0 %v2885
    %3185 = vmatpush.bf16.msra.mxu0 %v2877
    %3186 = vmatpush.bf16.msra.mxu0 %v2869
    %3187 = vmatpush.bf16.msra.mxu0 %v2861
    %3188 = vmatpush.bf16.msra.mxu0 %v2853
    %3189 = vmatpush.bf16.msra.mxu0 %v2845
    %3190 = vmatpush.bf16.msra.mxu0 %v2837
    %3191 = vmatpush.bf16.msra.mxu0 %v2829
    %3192 = vmatmul.bf16.gmra.mxu0 0
    %v3193 = vpop.f32.mrf.mxu0
    %v3194 = vadd.f32 %v3181, %v3193
    %v3195 = vpop.f32.mrf.mxu0
    %3196 = vdwg.mxu0
    %3197 = vmatpush.bf16.msra.mxu0 %v2822
    %3198 = vmatpush.bf16.msra.mxu0 %v2814
    %3199 = vmatpush.bf16.msra.mxu0 %v2806
    %3200 = vmatpush.bf16.msra.mxu0 %v2798
    %3201 = vmatpush.bf16.msra.mxu0 %v2790
    %3202 = vmatpush.bf16.msra.mxu0 %v2782
    %3203 = vmatpush.bf16.msra.mxu0 %v2774
    %3204 = vmatpush.bf16.msra.mxu0 %v2766
    %3205 = vmatmul.bf16.gmra.mxu0 0
    %v3206 = vpop.f32.mrf.mxu0
    %v3207 = vadd.f32 %v2366, %v3206
    %v3208 = vpop.f32.mrf.mxu0
    %3209 = vdwg.mxu0
    %3210 = vmatpush.bf16.msra.mxu0 %v2886
    %3211 = vmatpush.bf16.msra.mxu0 %v2878
    %3212 = vmatpush.bf16.msra.mxu0 %v2870
    %3213 = vmatpush.bf16.msra.mxu0 %v2862
    %3214 = vmatpush.bf16.msra.mxu0 %v2854
    %3215 = vmatpush.bf16.msra.mxu0 %v2846
    %3216 = vmatpush.bf16.msra.mxu0 %v2838
    %3217 = vmatpush.bf16.msra.mxu0 %v2830
    %3218 = vmatmul.bf16.gmra.mxu0 0
    %v3219 = vpop.f32.mrf.mxu0
    %v3220 = vadd.f32 %v3207, %v3219
    %v3221 = vpop.f32.mrf.mxu0
    %3222 = vdwg.mxu0
    %v3223 = vld [vmem:[#allocation2] sm:$0x3]
    %v3224 = vld [vmem:[#allocation2 + $0x8] sm:$0x3]
    %v3225 = vld [vmem:[#allocation2 + $0x10] sm:$0x3]
    %v3226 = vld [vmem:[#allocation2 + $0x18] sm:$0x3]
    %v3227 = vadd.f32 %v3223, %v3038
    %v3228 = vadd.f32 %v3224, %v3064
    %v3229 = vadd.f32 %v3225, %v3090
    %v3230 = vadd.f32 %v3226, %v3116
    %v3231 = vld [vmem:[#allocation2 + $0x60] sm:$0xc0]
    %v3232 = vld [vmem:[#allocation2 + $0x68] sm:$0xc0]
    %v3233 = vld [vmem:[#allocation2 + $0x70] sm:$0xc0]
    %v3234 = vld [vmem:[#allocation2 + $0x78] sm:$0xc0]
    %v3239 = vrot.slane %v3142, 2
    %v3240 = vrot.slane %v3168, 2
    %v3241 = vrot.slane %v3194, 2
    %v3242 = vrot.slane %v3220, 2
    %v3247 = vadd.f32 %v3231, %v3239
    %v3248 = vadd.f32 %v3232, %v3240
    %v3249 = vadd.f32 %v3233, %v3241
    %v3250 = vadd.f32 %v3234, %v3242
    %v3251 = vxor.u32 %v3227, 2147483648
    %v3252 = vxor.u32 %v3228, 2147483648
    %v3253 = vxor.u32 %v3229, 2147483648
    %v3254 = vmul.f32 %v3251, 1.442695
    %v3255 = vpow.pop %v3254
    %v3256 = vmul.f32 %v3252, 1.442695
    %v3257 = vpow.pop %v3256
    %v3258 = vmul.f32 %v3253, 1.442695
    %v3259 = vpow.pop %v3258
    %v3260 = vadd.f32 %v3255, 1.0
    %v3261 = vadd.f32 %v3257, 1.0
    %v3262 = vadd.f32 %v3259, 1.0
    %v3263 = vrcp.pop %v3260
    %v3264 = vmul.f32 %v3260, %v3263
    %v3265 = vsub.f32 1.0, %v3264
    %v3266 = vmul.f32 %v3263, %v3265
    %v3267 = vadd.f32 %v3263, %v3266
    %vm3268 = vweird.f32 %v3260
    %vm3269 = vweird.f32 %v3263
    %vm3270 = vmor %vm3268, %vm3269
    %v3271 = vsel %vm3270, %v3263, %v3267
    %v3272 = vand.u32 2147483647, %v3260
    %vm3273 = vcmp.eq.f32.partialorder %v3272, 8.507059e+37
    %v3274 = vand.u32 %v3260, 2147483648
    %v3275 = vor.u32 1.1754944e-38, %v3274
    %v3276 = vsel %vm3273, %v3275, %v3271
    %v3277 = vmul.f32 1.0, %v3276
    %v3278 = vrcp.pop %v3261
    %v3279 = vmul.f32 %v3261, %v3278
    %v3280 = vsub.f32 1.0, %v3279
    %v3281 = vmul.f32 %v3278, %v3280
    %v3282 = vadd.f32 %v3278, %v3281
    %vm3283 = vweird.f32 %v3261
    %vm3284 = vweird.f32 %v3278
    %vm3285 = vmor %vm3283, %vm3284
    %v3286 = vsel %vm3285, %v3278, %v3282
    %v3287 = vand.u32 2147483647, %v3261
    %vm3288 = vcmp.eq.f32.partialorder %v3287, 8.507059e+37
    %v3289 = vand.u32 %v3261, 2147483648
    %v3290 = vor.u32 1.1754944e-38, %v3289
    %v3291 = vsel %vm3288, %v3290, %v3286
    %v3292 = vmul.f32 1.0, %v3291
    %v3293 = vrcp.pop %v3262
    %v3294 = vmul.f32 %v3262, %v3293
    %v3295 = vsub.f32 1.0, %v3294
    %v3296 = vmul.f32 %v3293, %v3295
    %v3297 = vadd.f32 %v3293, %v3296
    %vm3298 = vweird.f32 %v3262
    %vm3299 = vweird.f32 %v3293
    %vm3300 = vmor %vm3298, %vm3299
    %v3301 = vsel %vm3300, %v3293, %v3297
    %v3302 = vand.u32 2147483647, %v3262
    %vm3303 = vcmp.eq.f32.partialorder %v3302, 8.507059e+37
    %v3304 = vand.u32 %v3262, 2147483648
    %v3305 = vor.u32 1.1754944e-38, %v3304
    %v3306 = vsel %vm3303, %v3305, %v3301
    %v3307 = vmul.f32 1.0, %v3306
    %v3308 = vtanh.pop %v3230
    %v3309 = vmul.f32 %v3292, 0.0
    %v3310 = vmul.f32 %v3277, %v3308
    %v3311 = vadd.f32 %v3309, %v3310
    %v3312 = vtanh.pop %v3311
    %v3313 = vmul.f32 %v3307, %v3312
    %v3314 = vxor.u32 %v3247, 2147483648
    %v3315 = vxor.u32 %v3248, 2147483648
    %v3316 = vxor.u32 %v3249, 2147483648
    %v3317 = vmul.f32 %v3314, 1.442695
    %v3318 = vpow.pop %v3317
    %v3319 = vmul.f32 %v3315, 1.442695
    %v3320 = vpow.pop %v3319
    %v3321 = vmul.f32 %v3316, 1.442695
    %v3322 = vpow.pop %v3321
    %v3323 = vadd.f32 %v3318, 1.0
    %v3324 = vadd.f32 %v3320, 1.0
    %v3325 = vadd.f32 %v3322, 1.0
    %v3326 = vrcp.pop %v3323
    %v3327 = vmul.f32 %v3323, %v3326
    %v3328 = vsub.f32 1.0, %v3327
    %v3329 = vmul.f32 %v3326, %v3328
    %v3330 = vadd.f32 %v3326, %v3329
    %vm3331 = vweird.f32 %v3323
    %vm3332 = vweird.f32 %v3326
    %vm3333 = vmor %vm3331, %vm3332
    %v3334 = vsel %vm3333, %v3326, %v3330
    %v3335 = vand.u32 2147483647, %v3323
    %vm3336 = vcmp.eq.f32.partialorder %v3335, 8.507059e+37
    %v3337 = vand.u32 %v3323, 2147483648
    %v3338 = vor.u32 1.1754944e-38, %v3337
    %v3339 = vsel %vm3336, %v3338, %v3334
    %v3340 = vmul.f32 1.0, %v3339
    %v3341 = vrcp.pop %v3324
    %v3342 = vmul.f32 %v3324, %v3341
    %v3343 = vsub.f32 1.0, %v3342
    %v3344 = vmul.f32 %v3341, %v3343
    %v3345 = vadd.f32 %v3341, %v3344
    %vm3346 = vweird.f32 %v3324
    %vm3347 = vweird.f32 %v3341
    %vm3348 = vmor %vm3346, %vm3347
    %v3349 = vsel %vm3348, %v3341, %v3345
    %v3350 = vand.u32 2147483647, %v3324
    %vm3351 = vcmp.eq.f32.partialorder %v3350, 8.507059e+37
    %v3352 = vand.u32 %v3324, 2147483648
    %v3353 = vor.u32 1.1754944e-38, %v3352
    %v3354 = vsel %vm3351, %v3353, %v3349
    %v3355 = vmul.f32 1.0, %v3354
    %v3356 = vrcp.pop %v3325
    %v3357 = vmul.f32 %v3325, %v3356
    %v3358 = vsub.f32 1.0, %v3357
    %v3359 = vmul.f32 %v3356, %v3358
    %v3360 = vadd.f32 %v3356, %v3359
    %vm3361 = vweird.f32 %v3325
    %vm3362 = vweird.f32 %v3356
    %vm3363 = vmor %vm3361, %vm3362
    %v3364 = vsel %vm3363, %v3356, %v3360
    %v3365 = vand.u32 2147483647, %v3325
    %vm3366 = vcmp.eq.f32.partialorder %v3365, 8.507059e+37
    %v3367 = vand.u32 %v3325, 2147483648
    %v3368 = vor.u32 1.1754944e-38, %v3367
    %v3369 = vsel %vm3366, %v3368, %v3364
    %v3370 = vmul.f32 1.0, %v3369
    %v3371 = vtanh.pop %v3250
    %v3372 = vmul.f32 %v3355, 0.0
    %v3373 = vmul.f32 %v3340, %v3371
    %v3374 = vadd.f32 %v3372, %v3373
    %v3375 = vtanh.pop %v3374
    %v3376 = vmul.f32 %v3370, %v3375
    %v3378 = vrot.slane %v3376, 6
    %v3380 = vadd.f32 %v3313, 0.0
    %v3381 = vadd.f32 %v3378, 0.0
    %v3382 = vpack.c.bf16 %v3313, %v3313
    %v3383 = vpack.c.bf16 %v3378, %v3378
    %3384 = vmatpush.bf16.msra.mxu0 %v2815
    %3385 = vmatpush.bf16.msra.mxu0 %v2807
    %3386 = vmatpush.bf16.msra.mxu0 %v2799
    %3387 = vmatpush.bf16.msra.mxu0 %v2791
    %3388 = vmatpush.bf16.msra.mxu0 %v2783
    %3389 = vmatpush.bf16.msra.mxu0 %v2775
    %3390 = vmatpush.bf16.msra.mxu0 %v2767
    %3391 = vmatpush.bf16.msra.mxu0 %v2759
    %3392 = vmatmul.bf16.gmra.mxu0 %v3382
    %v3393 = vpop.f32.mrf.mxu0
    %v3394 = vadd.f32 %v2359, %v3393
    %v3395 = vpop.f32.mrf.mxu0
    %3396 = vdwg.mxu0
    %3397 = vmatpush.bf16.msra.mxu0 %v2879
    %3398 = vmatpush.bf16.msra.mxu0 %v2871
    %3399 = vmatpush.bf16.msra.mxu0 %v2863
    %3400 = vmatpush.bf16.msra.mxu0 %v2855
    %3401 = vmatpush.bf16.msra.mxu0 %v2847
    %3402 = vmatpush.bf16.msra.mxu0 %v2839
    %3403 = vmatpush.bf16.msra.mxu0 %v2831
    %3404 = vmatpush.bf16.msra.mxu0 %v2823
    %3405 = vmatmul.bf16.gmra.mxu0 %v3383
    %v3406 = vpop.f32.mrf.mxu0
    %v3407 = vadd.f32 %v3394, %v3406
    %v3408 = vpop.f32.mrf.mxu0
    %3409 = vdwg.mxu0
    %3410 = vmatpush.bf16.msra.mxu0 %v2816
    %3411 = vmatpush.bf16.msra.mxu0 %v2808
    %3412 = vmatpush.bf16.msra.mxu0 %v2800
    %3413 = vmatpush.bf16.msra.mxu0 %v2792
    %3414 = vmatpush.bf16.msra.mxu0 %v2784
    %3415 = vmatpush.bf16.msra.mxu0 %v2776
    %3416 = vmatpush.bf16.msra.mxu0 %v2768
    %3417 = vmatpush.bf16.msra.mxu0 %v2760
    %3418 = vmatmul.bf16.gmra.mxu0 %v3382
    %v3419 = vpop.f32.mrf.mxu0
    %v3420 = vadd.f32 %v2360, %v3419
    %v3421 = vpop.f32.mrf.mxu0
    %3422 = vdwg.mxu0
    %3423 = vmatpush.bf16.msra.mxu0 %v2880
    %3424 = vmatpush.bf16.msra.mxu0 %v2872
    %3425 = vmatpush.bf16.msra.mxu0 %v2864
    %3426 = vmatpush.bf16.msra.mxu0 %v2856
    %3427 = vmatpush.bf16.msra.mxu0 %v2848
    %3428 = vmatpush.bf16.msra.mxu0 %v2840
    %3429 = vmatpush.bf16.msra.mxu0 %v2832
    %3430 = vmatpush.bf16.msra.mxu0 %v2824
    %3431 = vmatmul.bf16.gmra.mxu0 %v3383
    %v3432 = vpop.f32.mrf.mxu0
    %v3433 = vadd.f32 %v3420, %v3432
    %v3434 = vpop.f32.mrf.mxu0
    %3435 = vdwg.mxu0
    %3436 = vmatpush.bf16.msra.mxu0 %v2817
    %3437 = vmatpush.bf16.msra.mxu0 %v2809
    %3438 = vmatpush.bf16.msra.mxu0 %v2801
    %3439 = vmatpush.bf16.msra.mxu0 %v2793
    %3440 = vmatpush.bf16.msra.mxu0 %v2785
    %3441 = vmatpush.bf16.msra.mxu0 %v2777
    %3442 = vmatpush.bf16.msra.mxu0 %v2769
    %3443 = vmatpush.bf16.msra.mxu0 %v2761
    %3444 = vmatmul.bf16.gmra.mxu0 %v3382
    %v3445 = vpop.f32.mrf.mxu0
    %v3446 = vadd.f32 %v2361, %v3445
    %v3447 = vpop.f32.mrf.mxu0
    %3448 = vdwg.mxu0
    %3449 = vmatpush.bf16.msra.mxu0 %v2881
    %3450 = vmatpush.bf16.msra.mxu0 %v2873
    %3451 = vmatpush.bf16.msra.mxu0 %v2865
    %3452 = vmatpush.bf16.msra.mxu0 %v2857
    %3453 = vmatpush.bf16.msra.mxu0 %v2849
    %3454 = vmatpush.bf16.msra.mxu0 %v2841
    %3455 = vmatpush.bf16.msra.mxu0 %v2833
    %3456 = vmatpush.bf16.msra.mxu0 %v2825
    %3457 = vmatmul.bf16.gmra.mxu0 %v3383
    %v3458 = vpop.f32.mrf.mxu0
    %v3459 = vadd.f32 %v3446, %v3458
    %v3460 = vpop.f32.mrf.mxu0
    %3461 = vdwg.mxu0
    %3462 = vmatpush.bf16.msra.mxu0 %v2818
    %3463 = vmatpush.bf16.msra.mxu0 %v2810
    %3464 = vmatpush.bf16.msra.mxu0 %v2802
    %3465 = vmatpush.bf16.msra.mxu0 %v2794
    %3466 = vmatpush.bf16.msra.mxu0 %v2786
    %3467 = vmatpush.bf16.msra.mxu0 %v2778
    %3468 = vmatpush.bf16.msra.mxu0 %v2770
    %3469 = vmatpush.bf16.msra.mxu0 %v2762
    %3470 = vmatmul.bf16.gmra.mxu0 %v3382
    %v3471 = vpop.f32.mrf.mxu0
    %v3472 = vadd.f32 %v2362, %v3471
    %v3473 = vpop.f32.mrf.mxu0
    %3474 = vdwg.mxu0
    %3475 = vmatpush.bf16.msra.mxu0 %v2882
    %3476 = vmatpush.bf16.msra.mxu0 %v2874
    %3477 = vmatpush.bf16.msra.mxu0 %v2866
    %3478 = vmatpush.bf16.msra.mxu0 %v2858
    %3479 = vmatpush.bf16.msra.mxu0 %v2850
    %3480 = vmatpush.bf16.msra.mxu0 %v2842
    %3481 = vmatpush.bf16.msra.mxu0 %v2834
    %3482 = vmatpush.bf16.msra.mxu0 %v2826
    %3483 = vmatmul.bf16.gmra.mxu0 %v3383
    %v3484 = vpop.f32.mrf.mxu0
    %v3485 = vadd.f32 %v3472, %v3484
    %v3486 = vpop.f32.mrf.mxu0
    %3487 = vdwg.mxu0
    %3488 = vmatpush.bf16.msra.mxu0 %v2819
    %3489 = vmatpush.bf16.msra.mxu0 %v2811
    %3490 = vmatpush.bf16.msra.mxu0 %v2803
    %3491 = vmatpush.bf16.msra.mxu0 %v2795
    %3492 = vmatpush.bf16.msra.mxu0 %v2787
    %3493 = vmatpush.bf16.msra.mxu0 %v2779
    %3494 = vmatpush.bf16.msra.mxu0 %v2771
    %3495 = vmatpush.bf16.msra.mxu0 %v2763
    %3496 = vmatmul.bf16.gmra.mxu0 %v3382
    %v3497 = vpop.f32.mrf.mxu0
    %v3498 = vadd.f32 %v2363, %v3497
    %v3499 = vpop.f32.mrf.mxu0
    %3500 = vdwg.mxu0
    %3501 = vmatpush.bf16.msra.mxu0 %v2883
    %3502 = vmatpush.bf16.msra.mxu0 %v2875
    %3503 = vmatpush.bf16.msra.mxu0 %v2867
    %3504 = vmatpush.bf16.msra.mxu0 %v2859
    %3505 = vmatpush.bf16.msra.mxu0 %v2851
    %3506 = vmatpush.bf16.msra.mxu0 %v2843
    %3507 = vmatpush.bf16.msra.mxu0 %v2835
    %3508 = vmatpush.bf16.msra.mxu0 %v2827
    %3509 = vmatmul.bf16.gmra.mxu0 %v3383
    %v3510 = vpop.f32.mrf.mxu0
    %v3511 = vadd.f32 %v3498, %v3510
    %v3512 = vpop.f32.mrf.mxu0
    %3513 = vdwg.mxu0
    %3514 = vmatpush.bf16.msra.mxu0 %v2820
    %3515 = vmatpush.bf16.msra.mxu0 %v2812
    %3516 = vmatpush.bf16.msra.mxu0 %v2804
    %3517 = vmatpush.bf16.msra.mxu0 %v2796
    %3518 = vmatpush.bf16.msra.mxu0 %v2788
    %3519 = vmatpush.bf16.msra.mxu0 %v2780
    %3520 = vmatpush.bf16.msra.mxu0 %v2772
    %3521 = vmatpush.bf16.msra.mxu0 %v2764
    %3522 = vmatmul.bf16.gmra.mxu0 %v3382
    %v3523 = vpop.f32.mrf.mxu0
    %v3524 = vadd.f32 %v2364, %v3523
    %v3525 = vpop.f32.mrf.mxu0
    %3526 = vdwg.mxu0
    %3527 = vmatpush.bf16.msra.mxu0 %v2884
    %3528 = vmatpush.bf16.msra.mxu0 %v2876
    %3529 = vmatpush.bf16.msra.mxu0 %v2868
    %3530 = vmatpush.bf16.msra.mxu0 %v2860
    %3531 = vmatpush.bf16.msra.mxu0 %v2852
    %3532 = vmatpush.bf16.msra.mxu0 %v2844
    %3533 = vmatpush.bf16.msra.mxu0 %v2836
    %3534 = vmatpush.bf16.msra.mxu0 %v2828
    %3535 = vmatmul.bf16.gmra.mxu0 %v3383
    %v3536 = vpop.f32.mrf.mxu0
    %v3537 = vadd.f32 %v3524, %v3536
    %v3538 = vpop.f32.mrf.mxu0
    %3539 = vdwg.mxu0
    %3540 = vmatpush.bf16.msra.mxu0 %v2821
    %3541 = vmatpush.bf16.msra.mxu0 %v2813
    %3542 = vmatpush.bf16.msra.mxu0 %v2805
    %3543 = vmatpush.bf16.msra.mxu0 %v2797
    %3544 = vmatpush.bf16.msra.mxu0 %v2789
    %3545 = vmatpush.bf16.msra.mxu0 %v2781
    %3546 = vmatpush.bf16.msra.mxu0 %v2773
    %3547 = vmatpush.bf16.msra.mxu0 %v2765
    %3548 = vmatmul.bf16.gmra.mxu0 %v3382
    %v3549 = vpop.f32.mrf.mxu0
    %v3550 = vadd.f32 %v2365, %v3549
    %v3551 = vpop.f32.mrf.mxu0
    %3552 = vdwg.mxu0
    %3553 = vmatpush.bf16.msra.mxu0 %v2885
    %3554 = vmatpush.bf16.msra.mxu0 %v2877
    %3555 = vmatpush.bf16.msra.mxu0 %v2869
    %3556 = vmatpush.bf16.msra.mxu0 %v2861
    %3557 = vmatpush.bf16.msra.mxu0 %v2853
    %3558 = vmatpush.bf16.msra.mxu0 %v2845
    %3559 = vmatpush.bf16.msra.mxu0 %v2837
    %3560 = vmatpush.bf16.msra.mxu0 %v2829
    %3561 = vmatmul.bf16.gmra.mxu0 %v3383
    %v3562 = vpop.f32.mrf.mxu0
    %v3563 = vadd.f32 %v3550, %v3562
    %v3564 = vpop.f32.mrf.mxu0
    %3565 = vdwg.mxu0
    %3566 = vmatpush.bf16.msra.mxu0 %v2822
    %3567 = vmatpush.bf16.msra.mxu0 %v2814
    %3568 = vmatpush.bf16.msra.mxu0 %v2806
    %3569 = vmatpush.bf16.msra.mxu0 %v2798
    %3570 = vmatpush.bf16.msra.mxu0 %v2790
    %3571 = vmatpush.bf16.msra.mxu0 %v2782
    %3572 = vmatpush.bf16.msra.mxu0 %v2774
    %3573 = vmatpush.bf16.msra.mxu0 %v2766
    %3574 = vmatmul.bf16.gmra.mxu0 %v3382
    %v3575 = vpop.f32.mrf.mxu0
    %v3576 = vadd.f32 %v2366, %v3575
    %v3577 = vpop.f32.mrf.mxu0
    %3578 = vdwg.mxu0
    %3579 = vmatpush.bf16.msra.mxu0 %v2886
    %3580 = vmatpush.bf16.msra.mxu0 %v2878
    %3581 = vmatpush.bf16.msra.mxu0 %v2870
    %3582 = vmatpush.bf16.msra.mxu0 %v2862
    %3583 = vmatpush.bf16.msra.mxu0 %v2854
    %3584 = vmatpush.bf16.msra.mxu0 %v2846
    %3585 = vmatpush.bf16.msra.mxu0 %v2838
    %3586 = vmatpush.bf16.msra.mxu0 %v2830
    %3587 = vmatmul.bf16.gmra.mxu0 %v3383
    %v3588 = vpop.f32.mrf.mxu0
    %v3589 = vadd.f32 %v3576, %v3588
    %v3590 = vpop.f32.mrf.mxu0
    %3591 = vdwg.mxu0
    %v3592 = vld [vmem:[#allocation2] sm:$0xc]
    %v3593 = vld [vmem:[#allocation2 + $0x8] sm:$0xc]
    %v3594 = vld [vmem:[#allocation2 + $0x10] sm:$0xc]
    %v3595 = vld [vmem:[#allocation2 + $0x18] sm:$0xc]
    %v3600 = vrot.slane %v3407, 6
    %v3601 = vrot.slane %v3433, 6
    %v3602 = vrot.slane %v3459, 6
    %v3603 = vrot.slane %v3485, 6
    %v3608 = vadd.f32 %v3592, %v3600
    %v3609 = vadd.f32 %v3593, %v3601
    %v3610 = vadd.f32 %v3594, %v3602
    %v3611 = vadd.f32 %v3595, %v3603
    %v3612 = vld [vmem:[#allocation2 + $0x60] sm:$0x30]
    %v3613 = vld [vmem:[#allocation2 + $0x68] sm:$0x30]
    %v3614 = vld [vmem:[#allocation2 + $0x70] sm:$0x30]
    %v3615 = vld [vmem:[#allocation2 + $0x78] sm:$0x30]
    %v3620 = vrot.slane %v3511, 4
    %v3621 = vrot.slane %v3537, 4
    %v3622 = vrot.slane %v3563, 4
    %v3623 = vrot.slane %v3589, 4
    %v3628 = vadd.f32 %v3612, %v3620
    %v3629 = vadd.f32 %v3613, %v3621
    %v3630 = vadd.f32 %v3614, %v3622
    %v3631 = vadd.f32 %v3615, %v3623
    %v3632 = vxor.u32 %v3608, 2147483648
    %v3633 = vxor.u32 %v3609, 2147483648
    %v3634 = vxor.u32 %v3610, 2147483648
    %v3635 = vmul.f32 %v3632, 1.442695
    %v3636 = vpow.pop %v3635
    %v3637 = vmul.f32 %v3633, 1.442695
    %v3638 = vpow.pop %v3637
    %v3639 = vmul.f32 %v3634, 1.442695
    %v3640 = vpow.pop %v3639
    %v3641 = vadd.f32 %v3636, 1.0
    %v3642 = vadd.f32 %v3638, 1.0
    %v3643 = vadd.f32 %v3640, 1.0
    %v3644 = vrcp.pop %v3641
    %v3645 = vmul.f32 %v3641, %v3644
    %v3646 = vsub.f32 1.0, %v3645
    %v3647 = vmul.f32 %v3644, %v3646
    %v3648 = vadd.f32 %v3644, %v3647
    %vm3649 = vweird.f32 %v3641
    %vm3650 = vweird.f32 %v3644
    %vm3651 = vmor %vm3649, %vm3650
    %v3652 = vsel %vm3651, %v3644, %v3648
    %v3653 = vand.u32 2147483647, %v3641
    %vm3654 = vcmp.eq.f32.partialorder %v3653, 8.507059e+37
    %v3655 = vand.u32 %v3641, 2147483648
    %v3656 = vor.u32 1.1754944e-38, %v3655
    %v3657 = vsel %vm3654, %v3656, %v3652
    %v3658 = vmul.f32 1.0, %v3657
    %v3659 = vrcp.pop %v3642
    %v3660 = vmul.f32 %v3642, %v3659
    %v3661 = vsub.f32 1.0, %v3660
    %v3662 = vmul.f32 %v3659, %v3661
    %v3663 = vadd.f32 %v3659, %v3662
    %vm3664 = vweird.f32 %v3642
    %vm3665 = vweird.f32 %v3659
    %vm3666 = vmor %vm3664, %vm3665
    %v3667 = vsel %vm3666, %v3659, %v3663
    %v3668 = vand.u32 2147483647, %v3642
    %vm3669 = vcmp.eq.f32.partialorder %v3668, 8.507059e+37
    %v3670 = vand.u32 %v3642, 2147483648
    %v3671 = vor.u32 1.1754944e-38, %v3670
    %v3672 = vsel %vm3669, %v3671, %v3667
    %v3673 = vmul.f32 1.0, %v3672
    %v3674 = vrcp.pop %v3643
    %v3675 = vmul.f32 %v3643, %v3674
    %v3676 = vsub.f32 1.0, %v3675
    %v3677 = vmul.f32 %v3674, %v3676
    %v3678 = vadd.f32 %v3674, %v3677
    %vm3679 = vweird.f32 %v3643
    %vm3680 = vweird.f32 %v3674
    %vm3681 = vmor %vm3679, %vm3680
    %v3682 = vsel %vm3681, %v3674, %v3678
    %v3683 = vand.u32 2147483647, %v3643
    %vm3684 = vcmp.eq.f32.partialorder %v3683, 8.507059e+37
    %v3685 = vand.u32 %v3643, 2147483648
    %v3686 = vor.u32 1.1754944e-38, %v3685
    %v3687 = vsel %vm3684, %v3686, %v3682
    %v3688 = vmul.f32 1.0, %v3687
    %v3689 = vtanh.pop %v3611
    %v3691 = vrot.slane %v3311, 6
    %v3693 = vmul.f32 %v3673, %v3691
    %v3694 = vmul.f32 %v3658, %v3689
    %v3695 = vadd.f32 %v3693, %v3694
    %v3696 = vtanh.pop %v3695
    %v3697 = vmul.f32 %v3688, %v3696
    %v3698 = vxor.u32 %v3628, 2147483648
    %v3699 = vxor.u32 %v3629, 2147483648
    %v3700 = vxor.u32 %v3630, 2147483648
    %v3701 = vmul.f32 %v3698, 1.442695
    %v3702 = vpow.pop %v3701
    %v3703 = vmul.f32 %v3699, 1.442695
    %v3704 = vpow.pop %v3703
    %v3705 = vmul.f32 %v3700, 1.442695
    %v3706 = vpow.pop %v3705
    %v3707 = vadd.f32 %v3702, 1.0
    %v3708 = vadd.f32 %v3704, 1.0
    %v3709 = vadd.f32 %v3706, 1.0
    %v3710 = vrcp.pop %v3707
    %v3711 = vmul.f32 %v3707, %v3710
    %v3712 = vsub.f32 1.0, %v3711
    %v3713 = vmul.f32 %v3710, %v3712
    %v3714 = vadd.f32 %v3710, %v3713
    %vm3715 = vweird.f32 %v3707
    %vm3716 = vweird.f32 %v3710
    %vm3717 = vmor %vm3715, %vm3716
    %v3718 = vsel %vm3717, %v3710, %v3714
    %v3719 = vand.u32 2147483647, %v3707
    %vm3720 = vcmp.eq.f32.partialorder %v3719, 8.507059e+37
    %v3721 = vand.u32 %v3707, 2147483648
    %v3722 = vor.u32 1.1754944e-38, %v3721
    %v3723 = vsel %vm3720, %v3722, %v3718
    %v3724 = vmul.f32 1.0, %v3723
    %v3725 = vrcp.pop %v3708
    %v3726 = vmul.f32 %v3708, %v3725
    %v3727 = vsub.f32 1.0, %v3726
    %v3728 = vmul.f32 %v3725, %v3727
    %v3729 = vadd.f32 %v3725, %v3728
    %vm3730 = vweird.f32 %v3708
    %vm3731 = vweird.f32 %v3725
    %vm3732 = vmor %vm3730, %vm3731
    %v3733 = vsel %vm3732, %v3725, %v3729
    %v3734 = vand.u32 2147483647, %v3708
    %vm3735 = vcmp.eq.f32.partialorder %v3734, 8.507059e+37
    %v3736 = vand.u32 %v3708, 2147483648
    %v3737 = vor.u32 1.1754944e-38, %v3736
    %v3738 = vsel %vm3735, %v3737, %v3733
    %v3739 = vmul.f32 1.0, %v3738
    %v3740 = vrcp.pop %v3709
    %v3741 = vmul.f32 %v3709, %v3740
    %v3742 = vsub.f32 1.0, %v3741
    %v3743 = vmul.f32 %v3740, %v3742
    %v3744 = vadd.f32 %v3740, %v3743
    %vm3745 = vweird.f32 %v3709
    %vm3746 = vweird.f32 %v3740
    %vm3747 = vmor %vm3745, %vm3746
    %v3748 = vsel %vm3747, %v3740, %v3744
    %v3749 = vand.u32 2147483647, %v3709
    %vm3750 = vcmp.eq.f32.partialorder %v3749, 8.507059e+37
    %v3751 = vand.u32 %v3709, 2147483648
    %v3752 = vor.u32 1.1754944e-38, %v3751
    %v3753 = vsel %vm3750, %v3752, %v3748
    %v3754 = vmul.f32 1.0, %v3753
    %v3755 = vtanh.pop %v3631
    %v3757 = vrot.slane %v3374, 2
    %v3759 = vmul.f32 %v3739, %v3757
    %v3760 = vmul.f32 %v3724, %v3755
    %v3761 = vadd.f32 %v3759, %v3760
    %v3762 = vtanh.pop %v3761
    %v3763 = vmul.f32 %v3754, %v3762
    %v3765 = vrot.slane %v3763, 2
    %v3768 = vrot.slane %v3697, 2
    %v3769 = vrot.slane %v3765, 2
    %v3772 = vadd.f32 %v3380, %v3768
    %v3773 = vadd.f32 %v3381, %v3769
    %v3774 = vpack.c.bf16 %v3697, %v3697
    %v3775 = vpack.c.bf16 %v3765, %v3765
    %v3778 = vrot.slane %v3774, 1
    %v3779 = vrot.slane %v3775, 1
    %3782 = vmatpush.bf16.msra.mxu0 %v2815
    %3783 = vmatpush.bf16.msra.mxu0 %v2807
    %3784 = vmatpush.bf16.msra.mxu0 %v2799
    %3785 = vmatpush.bf16.msra.mxu0 %v2791
    %3786 = vmatpush.bf16.msra.mxu0 %v2783
    %3787 = vmatpush.bf16.msra.mxu0 %v2775
    %3788 = vmatpush.bf16.msra.mxu0 %v2767
    %3789 = vmatpush.bf16.msra.mxu0 %v2759
    %3790 = vmatmul.bf16.gmra.mxu0 %v3778
    %v3791 = vpop.f32.mrf.mxu0
    %v3792 = vadd.f32 %v2359, %v3791
    %v3793 = vpop.f32.mrf.mxu0
    %3794 = vdwg.mxu0
    %3795 = vmatpush.bf16.msra.mxu0 %v2879
    %3796 = vmatpush.bf16.msra.mxu0 %v2871
    %3797 = vmatpush.bf16.msra.mxu0 %v2863
    %3798 = vmatpush.bf16.msra.mxu0 %v2855
    %3799 = vmatpush.bf16.msra.mxu0 %v2847
    %3800 = vmatpush.bf16.msra.mxu0 %v2839
    %3801 = vmatpush.bf16.msra.mxu0 %v2831
    %3802 = vmatpush.bf16.msra.mxu0 %v2823
    %3803 = vmatmul.bf16.gmra.mxu0 %v3779
    %v3804 = vpop.f32.mrf.mxu0
    %v3805 = vadd.f32 %v3792, %v3804
    %v3806 = vpop.f32.mrf.mxu0
    %3807 = vdwg.mxu0
    %3808 = vmatpush.bf16.msra.mxu0 %v2816
    %3809 = vmatpush.bf16.msra.mxu0 %v2808
    %3810 = vmatpush.bf16.msra.mxu0 %v2800
    %3811 = vmatpush.bf16.msra.mxu0 %v2792
    %3812 = vmatpush.bf16.msra.mxu0 %v2784
    %3813 = vmatpush.bf16.msra.mxu0 %v2776
    %3814 = vmatpush.bf16.msra.mxu0 %v2768
    %3815 = vmatpush.bf16.msra.mxu0 %v2760
    %3816 = vmatmul.bf16.gmra.mxu0 %v3778
    %v3817 = vpop.f32.mrf.mxu0
    %v3818 = vadd.f32 %v2360, %v3817
    %v3819 = vpop.f32.mrf.mxu0
    %3820 = vdwg.mxu0
    %3821 = vmatpush.bf16.msra.mxu0 %v2880
    %3822 = vmatpush.bf16.msra.mxu0 %v2872
    %3823 = vmatpush.bf16.msra.mxu0 %v2864
    %3824 = vmatpush.bf16.msra.mxu0 %v2856
    %3825 = vmatpush.bf16.msra.mxu0 %v2848
    %3826 = vmatpush.bf16.msra.mxu0 %v2840
    %3827 = vmatpush.bf16.msra.mxu0 %v2832
    %3828 = vmatpush.bf16.msra.mxu0 %v2824
    %3829 = vmatmul.bf16.gmra.mxu0 %v3779
    %v3830 = vpop.f32.mrf.mxu0
    %v3831 = vadd.f32 %v3818, %v3830
    %v3832 = vpop.f32.mrf.mxu0
    %3833 = vdwg.mxu0
    %3834 = vmatpush.bf16.msra.mxu0 %v2817
    %3835 = vmatpush.bf16.msra.mxu0 %v2809
    %3836 = vmatpush.bf16.msra.mxu0 %v2801
    %3837 = vmatpush.bf16.msra.mxu0 %v2793
    %3838 = vmatpush.bf16.msra.mxu0 %v2785
    %3839 = vmatpush.bf16.msra.mxu0 %v2777
    %3840 = vmatpush.bf16.msra.mxu0 %v2769
    %3841 = vmatpush.bf16.msra.mxu0 %v2761
    %3842 = vmatmul.bf16.gmra.mxu0 %v3778
    %v3843 = vpop.f32.mrf.mxu0
    %v3844 = vadd.f32 %v2361, %v3843
    %v3845 = vpop.f32.mrf.mxu0
    %3846 = vdwg.mxu0
    %3847 = vmatpush.bf16.msra.mxu0 %v2881
    %3848 = vmatpush.bf16.msra.mxu0 %v2873
    %3849 = vmatpush.bf16.msra.mxu0 %v2865
    %3850 = vmatpush.bf16.msra.mxu0 %v2857
    %3851 = vmatpush.bf16.msra.mxu0 %v2849
    %3852 = vmatpush.bf16.msra.mxu0 %v2841
    %3853 = vmatpush.bf16.msra.mxu0 %v2833
    %3854 = vmatpush.bf16.msra.mxu0 %v2825
    %3855 = vmatmul.bf16.gmra.mxu0 %v3779
    %v3856 = vpop.f32.mrf.mxu0
    %v3857 = vadd.f32 %v3844, %v3856
    %v3858 = vpop.f32.mrf.mxu0
    %3859 = vdwg.mxu0
    %3860 = vmatpush.bf16.msra.mxu0 %v2818
    %3861 = vmatpush.bf16.msra.mxu0 %v2810
    %3862 = vmatpush.bf16.msra.mxu0 %v2802
    %3863 = vmatpush.bf16.msra.mxu0 %v2794
    %3864 = vmatpush.bf16.msra.mxu0 %v2786
    %3865 = vmatpush.bf16.msra.mxu0 %v2778
    %3866 = vmatpush.bf16.msra.mxu0 %v2770
    %3867 = vmatpush.bf16.msra.mxu0 %v2762
    %3868 = vmatmul.bf16.gmra.mxu0 %v3778
    %v3869 = vpop.f32.mrf.mxu0
    %v3870 = vadd.f32 %v2362, %v3869
    %v3871 = vpop.f32.mrf.mxu0
    %3872 = vdwg.mxu0
    %3873 = vmatpush.bf16.msra.mxu0 %v2882
    %3874 = vmatpush.bf16.msra.mxu0 %v2874
    %3875 = vmatpush.bf16.msra.mxu0 %v2866
    %3876 = vmatpush.bf16.msra.mxu0 %v2858
    %3877 = vmatpush.bf16.msra.mxu0 %v2850
    %3878 = vmatpush.bf16.msra.mxu0 %v2842
    %3879 = vmatpush.bf16.msra.mxu0 %v2834
    %3880 = vmatpush.bf16.msra.mxu0 %v2826
    %3881 = vmatmul.bf16.gmra.mxu0 %v3779
    %v3882 = vpop.f32.mrf.mxu0
    %v3883 = vadd.f32 %v3870, %v3882
    %v3884 = vpop.f32.mrf.mxu0
    %3885 = vdwg.mxu0
    %3886 = vmatpush.bf16.msra.mxu0 %v2819
    %3887 = vmatpush.bf16.msra.mxu0 %v2811
    %3888 = vmatpush.bf16.msra.mxu0 %v2803
    %3889 = vmatpush.bf16.msra.mxu0 %v2795
    %3890 = vmatpush.bf16.msra.mxu0 %v2787
    %3891 = vmatpush.bf16.msra.mxu0 %v2779
    %3892 = vmatpush.bf16.msra.mxu0 %v2771
    %3893 = vmatpush.bf16.msra.mxu0 %v2763
    %3894 = vmatmul.bf16.gmra.mxu0 %v3778
    %v3895 = vpop.f32.mrf.mxu0
    %v3896 = vadd.f32 %v2363, %v3895
    %v3897 = vpop.f32.mrf.mxu0
    %3898 = vdwg.mxu0
    %3899 = vmatpush.bf16.msra.mxu0 %v2883
    %3900 = vmatpush.bf16.msra.mxu0 %v2875
    %3901 = vmatpush.bf16.msra.mxu0 %v2867
    %3902 = vmatpush.bf16.msra.mxu0 %v2859
    %3903 = vmatpush.bf16.msra.mxu0 %v2851
    %3904 = vmatpush.bf16.msra.mxu0 %v2843
    %3905 = vmatpush.bf16.msra.mxu0 %v2835
    %3906 = vmatpush.bf16.msra.mxu0 %v2827
    %3907 = vmatmul.bf16.gmra.mxu0 %v3779
    %v3908 = vpop.f32.mrf.mxu0
    %v3909 = vadd.f32 %v3896, %v3908
    %v3910 = vpop.f32.mrf.mxu0
    %3911 = vdwg.mxu0
    %3912 = vmatpush.bf16.msra.mxu0 %v2820
    %3913 = vmatpush.bf16.msra.mxu0 %v2812
    %3914 = vmatpush.bf16.msra.mxu0 %v2804
    %3915 = vmatpush.bf16.msra.mxu0 %v2796
    %3916 = vmatpush.bf16.msra.mxu0 %v2788
    %3917 = vmatpush.bf16.msra.mxu0 %v2780
    %3918 = vmatpush.bf16.msra.mxu0 %v2772
    %3919 = vmatpush.bf16.msra.mxu0 %v2764
    %3920 = vmatmul.bf16.gmra.mxu0 %v3778
    %v3921 = vpop.f32.mrf.mxu0
    %v3922 = vadd.f32 %v2364, %v3921
    %v3923 = vpop.f32.mrf.mxu0
    %3924 = vdwg.mxu0
    %3925 = vmatpush.bf16.msra.mxu0 %v2884
    %3926 = vmatpush.bf16.msra.mxu0 %v2876
    %3927 = vmatpush.bf16.msra.mxu0 %v2868
    %3928 = vmatpush.bf16.msra.mxu0 %v2860
    %3929 = vmatpush.bf16.msra.mxu0 %v2852
    %3930 = vmatpush.bf16.msra.mxu0 %v2844
    %3931 = vmatpush.bf16.msra.mxu0 %v2836
    %3932 = vmatpush.bf16.msra.mxu0 %v2828
    %3933 = vmatmul.bf16.gmra.mxu0 %v3779
    %v3934 = vpop.f32.mrf.mxu0
    %v3935 = vadd.f32 %v3922, %v3934
    %v3936 = vpop.f32.mrf.mxu0
    %3937 = vdwg.mxu0
    %3938 = vmatpush.bf16.msra.mxu0 %v2821
    %3939 = vmatpush.bf16.msra.mxu0 %v2813
    %3940 = vmatpush.bf16.msra.mxu0 %v2805
    %3941 = vmatpush.bf16.msra.mxu0 %v2797
    %3942 = vmatpush.bf16.msra.mxu0 %v2789
    %3943 = vmatpush.bf16.msra.mxu0 %v2781
    %3944 = vmatpush.bf16.msra.mxu0 %v2773
    %3945 = vmatpush.bf16.msra.mxu0 %v2765
    %3946 = vmatmul.bf16.gmra.mxu0 %v3778
    %v3947 = vpop.f32.mrf.mxu0
    %v3948 = vadd.f32 %v2365, %v3947
    %v3949 = vpop.f32.mrf.mxu0
    %3950 = vdwg.mxu0
    %3951 = vmatpush.bf16.msra.mxu0 %v2885
    %3952 = vmatpush.bf16.msra.mxu0 %v2877
    %3953 = vmatpush.bf16.msra.mxu0 %v2869
    %3954 = vmatpush.bf16.msra.mxu0 %v2861
    %3955 = vmatpush.bf16.msra.mxu0 %v2853
    %3956 = vmatpush.bf16.msra.mxu0 %v2845
    %3957 = vmatpush.bf16.msra.mxu0 %v2837
    %3958 = vmatpush.bf16.msra.mxu0 %v2829
    %3959 = vmatmul.bf16.gmra.mxu0 %v3779
    %v3960 = vpop.f32.mrf.mxu0
    %v3961 = vadd.f32 %v3948, %v3960
    %v3962 = vpop.f32.mrf.mxu0
    %3963 = vdwg.mxu0
    %3964 = vmatpush.bf16.msra.mxu0 %v2822
    %3965 = vmatpush.bf16.msra.mxu0 %v2814
    %3966 = vmatpush.bf16.msra.mxu0 %v2806
    %3967 = vmatpush.bf16.msra.mxu0 %v2798
    %3968 = vmatpush.bf16.msra.mxu0 %v2790
    %3969 = vmatpush.bf16.msra.mxu0 %v2782
    %3970 = vmatpush.bf16.msra.mxu0 %v2774
    %3971 = vmatpush.bf16.msra.mxu0 %v2766
    %3972 = vmatmul.bf16.gmra.mxu0 %v3778
    %v3973 = vpop.f32.mrf.mxu0
    %v3974 = vadd.f32 %v2366, %v3973
    %v3975 = vpop.f32.mrf.mxu0
    %3976 = vdwg.mxu0
    %3977 = vmatpush.bf16.msra.mxu0 %v2886
    %3978 = vmatpush.bf16.msra.mxu0 %v2878
    %3979 = vmatpush.bf16.msra.mxu0 %v2870
    %3980 = vmatpush.bf16.msra.mxu0 %v2862
    %3981 = vmatpush.bf16.msra.mxu0 %v2854
    %3982 = vmatpush.bf16.msra.mxu0 %v2846
    %3983 = vmatpush.bf16.msra.mxu0 %v2838
    %3984 = vmatpush.bf16.msra.mxu0 %v2830
    %3985 = vmatmul.bf16.gmra.mxu0 %v3779
    %v3986 = vpop.f32.mrf.mxu0
    %v3987 = vadd.f32 %v3974, %v3986
    %v3988 = vpop.f32.mrf.mxu0
    %3989 = vdwg.mxu0
    %v3990 = vld [vmem:[#allocation2] sm:$0x30]
    %v3991 = vld [vmem:[#allocation2 + $0x8] sm:$0x30]
    %v3992 = vld [vmem:[#allocation2 + $0x10] sm:$0x30]
    %v3993 = vld [vmem:[#allocation2 + $0x18] sm:$0x30]
    %v3998 = vrot.slane %v3805, 4
    %v3999 = vrot.slane %v3831, 4
    %v4000 = vrot.slane %v3857, 4
    %v4001 = vrot.slane %v3883, 4
    %v4006 = vadd.f32 %v3990, %v3998
    %v4007 = vadd.f32 %v3991, %v3999
    %v4008 = vadd.f32 %v3992, %v4000
    %v4009 = vadd.f32 %v3993, %v4001
    %v4010 = vld [vmem:[#allocation2 + $0x60] sm:$0xc]
    %v4011 = vld [vmem:[#allocation2 + $0x68] sm:$0xc]
    %v4012 = vld [vmem:[#allocation2 + $0x70] sm:$0xc]
    %v4013 = vld [vmem:[#allocation2 + $0x78] sm:$0xc]
    %v4018 = vrot.slane %v3909, 6
    %v4019 = vrot.slane %v3935, 6
    %v4020 = vrot.slane %v3961, 6
    %v4021 = vrot.slane %v3987, 6
    %v4026 = vadd.f32 %v4010, %v4018
    %v4027 = vadd.f32 %v4011, %v4019
    %v4028 = vadd.f32 %v4012, %v4020
    %v4029 = vadd.f32 %v4013, %v4021
    %v4030 = vxor.u32 %v4006, 2147483648
    %v4031 = vxor.u32 %v4007, 2147483648
    %v4032 = vxor.u32 %v4008, 2147483648
    %v4033 = vmul.f32 %v4030, 1.442695
    %v4034 = vpow.pop %v4033
    %v4035 = vmul.f32 %v4031, 1.442695
    %v4036 = vpow.pop %v4035
    %v4037 = vmul.f32 %v4032, 1.442695
    %v4038 = vpow.pop %v4037
    %v4039 = vadd.f32 %v4034, 1.0
    %v4040 = vadd.f32 %v4036, 1.0
    %v4041 = vadd.f32 %v4038, 1.0
    %v4042 = vrcp.pop %v4039
    %v4043 = vmul.f32 %v4039, %v4042
    %v4044 = vsub.f32 1.0, %v4043
    %v4045 = vmul.f32 %v4042, %v4044
    %v4046 = vadd.f32 %v4042, %v4045
    %vm4047 = vweird.f32 %v4039
    %vm4048 = vweird.f32 %v4042
    %vm4049 = vmor %vm4047, %vm4048
    %v4050 = vsel %vm4049, %v4042, %v4046
    %v4051 = vand.u32 2147483647, %v4039
    %vm4052 = vcmp.eq.f32.partialorder %v4051, 8.507059e+37
    %v4053 = vand.u32 %v4039, 2147483648
    %v4054 = vor.u32 1.1754944e-38, %v4053
    %v4055 = vsel %vm4052, %v4054, %v4050
    %v4056 = vmul.f32 1.0, %v4055
    %v4057 = vrcp.pop %v4040
    %v4058 = vmul.f32 %v4040, %v4057
    %v4059 = vsub.f32 1.0, %v4058
    %v4060 = vmul.f32 %v4057, %v4059
    %v4061 = vadd.f32 %v4057, %v4060
    %vm4062 = vweird.f32 %v4040
    %vm4063 = vweird.f32 %v4057
    %vm4064 = vmor %vm4062, %vm4063
    %v4065 = vsel %vm4064, %v4057, %v4061
    %v4066 = vand.u32 2147483647, %v4040
    %vm4067 = vcmp.eq.f32.partialorder %v4066, 8.507059e+37
    %v4068 = vand.u32 %v4040, 2147483648
    %v4069 = vor.u32 1.1754944e-38, %v4068
    %v4070 = vsel %vm4067, %v4069, %v4065
    %v4071 = vmul.f32 1.0, %v4070
    %v4072 = vrcp.pop %v4041
    %v4073 = vmul.f32 %v4041, %v4072
    %v4074 = vsub.f32 1.0, %v4073
    %v4075 = vmul.f32 %v4072, %v4074
    %v4076 = vadd.f32 %v4072, %v4075
    %vm4077 = vweird.f32 %v4041
    %vm4078 = vweird.f32 %v4072
    %vm4079 = vmor %vm4077, %vm4078
    %v4080 = vsel %vm4079, %v4072, %v4076
    %v4081 = vand.u32 2147483647, %v4041
    %vm4082 = vcmp.eq.f32.partialorder %v4081, 8.507059e+37
    %v4083 = vand.u32 %v4041, 2147483648
    %v4084 = vor.u32 1.1754944e-38, %v4083
    %v4085 = vsel %vm4082, %v4084, %v4080
    %v4086 = vmul.f32 1.0, %v4085
    %v4087 = vtanh.pop %v4009
    %v4089 = vrot.slane %v3695, 6
    %v4091 = vmul.f32 %v4071, %v4089
    %v4092 = vmul.f32 %v4056, %v4087
    %v4093 = vadd.f32 %v4091, %v4092
    %v4094 = vtanh.pop %v4093
    %v4095 = vmul.f32 %v4086, %v4094
    %v4096 = vxor.u32 %v4026, 2147483648
    %v4097 = vxor.u32 %v4027, 2147483648
    %v4098 = vxor.u32 %v4028, 2147483648
    %v4099 = vmul.f32 %v4096, 1.442695
    %v4100 = vpow.pop %v4099
    %v4101 = vmul.f32 %v4097, 1.442695
    %v4102 = vpow.pop %v4101
    %v4103 = vmul.f32 %v4098, 1.442695
    %v4104 = vpow.pop %v4103
    %v4105 = vadd.f32 %v4100, 1.0
    %v4106 = vadd.f32 %v4102, 1.0
    %v4107 = vadd.f32 %v4104, 1.0
    %v4108 = vrcp.pop %v4105
    %v4109 = vmul.f32 %v4105, %v4108
    %v4110 = vsub.f32 1.0, %v4109
    %v4111 = vmul.f32 %v4108, %v4110
    %v4112 = vadd.f32 %v4108, %v4111
    %vm4113 = vweird.f32 %v4105
    %vm4114 = vweird.f32 %v4108
    %vm4115 = vmor %vm4113, %vm4114
    %v4116 = vsel %vm4115, %v4108, %v4112
    %v4117 = vand.u32 2147483647, %v4105
    %vm4118 = vcmp.eq.f32.partialorder %v4117, 8.507059e+37
    %v4119 = vand.u32 %v4105, 2147483648
    %v4120 = vor.u32 1.1754944e-38, %v4119
    %v4121 = vsel %vm4118, %v4120, %v4116
    %v4122 = vmul.f32 1.0, %v4121
    %v4123 = vrcp.pop %v4106
    %v4124 = vmul.f32 %v4106, %v4123
    %v4125 = vsub.f32 1.0, %v4124
    %v4126 = vmul.f32 %v4123, %v4125
    %v4127 = vadd.f32 %v4123, %v4126
    %vm4128 = vweird.f32 %v4106
    %vm4129 = vweird.f32 %v4123
    %vm4130 = vmor %vm4128, %vm4129
    %v4131 = vsel %vm4130, %v4123, %v4127
    %v4132 = vand.u32 2147483647, %v4106
    %vm4133 = vcmp.eq.f32.partialorder %v4132, 8.507059e+37
    %v4134 = vand.u32 %v4106, 2147483648
    %v4135 = vor.u32 1.1754944e-38, %v4134
    %v4136 = vsel %vm4133, %v4135, %v4131
    %v4137 = vmul.f32 1.0, %v4136
    %v4138 = vrcp.pop %v4107
    %v4139 = vmul.f32 %v4107, %v4138
    %v4140 = vsub.f32 1.0, %v4139
    %v4141 = vmul.f32 %v4138, %v4140
    %v4142 = vadd.f32 %v4138, %v4141
    %vm4143 = vweird.f32 %v4107
    %vm4144 = vweird.f32 %v4138
    %vm4145 = vmor %vm4143, %vm4144
    %v4146 = vsel %vm4145, %v4138, %v4142
    %v4147 = vand.u32 2147483647, %v4107
    %vm4148 = vcmp.eq.f32.partialorder %v4147, 8.507059e+37
    %v4149 = vand.u32 %v4107, 2147483648
    %v4150 = vor.u32 1.1754944e-38, %v4149
    %v4151 = vsel %vm4148, %v4150, %v4146
    %v4152 = vmul.f32 1.0, %v4151
    %v4153 = vtanh.pop %v4029
    %v4155 = vrot.slane %v3761, 2
    %v4157 = vmul.f32 %v4137, %v4155
    %v4158 = vmul.f32 %v4122, %v4153
    %v4159 = vadd.f32 %v4157, %v4158
    %v4160 = vtanh.pop %v4159
    %v4161 = vmul.f32 %v4152, %v4160
    %v4163 = vrot.slane %v4161, 6
    %v4166 = vrot.slane %v4095, 4
    %v4167 = vrot.slane %v4163, 4
    %v4170 = vadd.f32 %v3772, %v4166
    %v4171 = vadd.f32 %v3773, %v4167
    %v4172 = vpack.c.bf16 %v4095, %v4095
    %v4173 = vpack.c.bf16 %v4163, %v4163
    %v4176 = vrot.slane %v4172, 2
    %v4177 = vrot.slane %v4173, 2
    %4180 = vmatpush.bf16.msra.mxu0 %v2815
    %4181 = vmatpush.bf16.msra.mxu0 %v2807
    %4182 = vmatpush.bf16.msra.mxu0 %v2799
    %4183 = vmatpush.bf16.msra.mxu0 %v2791
    %4184 = vmatpush.bf16.msra.mxu0 %v2783
    %4185 = vmatpush.bf16.msra.mxu0 %v2775
    %4186 = vmatpush.bf16.msra.mxu0 %v2767
    %4187 = vmatpush.bf16.msra.mxu0 %v2759
    %4188 = vmatmul.bf16.gmra.mxu0 %v4176
    %v4189 = vpop.f32.mrf.mxu0
    %v4190 = vadd.f32 %v2359, %v4189
    %v4191 = vpop.f32.mrf.mxu0
    %4192 = vdwg.mxu0
    %4193 = vmatpush.bf16.msra.mxu0 %v2879
    %4194 = vmatpush.bf16.msra.mxu0 %v2871
    %4195 = vmatpush.bf16.msra.mxu0 %v2863
    %4196 = vmatpush.bf16.msra.mxu0 %v2855
    %4197 = vmatpush.bf16.msra.mxu0 %v2847
    %4198 = vmatpush.bf16.msra.mxu0 %v2839
    %4199 = vmatpush.bf16.msra.mxu0 %v2831
    %4200 = vmatpush.bf16.msra.mxu0 %v2823
    %4201 = vmatmul.bf16.gmra.mxu0 %v4177
    %v4202 = vpop.f32.mrf.mxu0
    %v4203 = vadd.f32 %v4190, %v4202
    %v4204 = vpop.f32.mrf.mxu0
    %4205 = vdwg.mxu0
    %4206 = vmatpush.bf16.msra.mxu0 %v2816
    %4207 = vmatpush.bf16.msra.mxu0 %v2808
    %4208 = vmatpush.bf16.msra.mxu0 %v2800
    %4209 = vmatpush.bf16.msra.mxu0 %v2792
    %4210 = vmatpush.bf16.msra.mxu0 %v2784
    %4211 = vmatpush.bf16.msra.mxu0 %v2776
    %4212 = vmatpush.bf16.msra.mxu0 %v2768
    %4213 = vmatpush.bf16.msra.mxu0 %v2760
    %4214 = vmatmul.bf16.gmra.mxu0 %v4176
    %v4215 = vpop.f32.mrf.mxu0
    %v4216 = vadd.f32 %v2360, %v4215
    %v4217 = vpop.f32.mrf.mxu0
    %4218 = vdwg.mxu0
    %4219 = vmatpush.bf16.msra.mxu0 %v2880
    %4220 = vmatpush.bf16.msra.mxu0 %v2872
    %4221 = vmatpush.bf16.msra.mxu0 %v2864
    %4222 = vmatpush.bf16.msra.mxu0 %v2856
    %4223 = vmatpush.bf16.msra.mxu0 %v2848
    %4224 = vmatpush.bf16.msra.mxu0 %v2840
    %4225 = vmatpush.bf16.msra.mxu0 %v2832
    %4226 = vmatpush.bf16.msra.mxu0 %v2824
    %4227 = vmatmul.bf16.gmra.mxu0 %v4177
    %v4228 = vpop.f32.mrf.mxu0
    %v4229 = vadd.f32 %v4216, %v4228
    %v4230 = vpop.f32.mrf.mxu0
    %4231 = vdwg.mxu0
    %4232 = vmatpush.bf16.msra.mxu0 %v2817
    %4233 = vmatpush.bf16.msra.mxu0 %v2809
    %4234 = vmatpush.bf16.msra.mxu0 %v2801
    %4235 = vmatpush.bf16.msra.mxu0 %v2793
    %4236 = vmatpush.bf16.msra.mxu0 %v2785
    %4237 = vmatpush.bf16.msra.mxu0 %v2777
    %4238 = vmatpush.bf16.msra.mxu0 %v2769
    %4239 = vmatpush.bf16.msra.mxu0 %v2761
    %4240 = vmatmul.bf16.gmra.mxu0 %v4176
    %v4241 = vpop.f32.mrf.mxu0
    %v4242 = vadd.f32 %v2361, %v4241
    %v4243 = vpop.f32.mrf.mxu0
    %4244 = vdwg.mxu0
    %4245 = vmatpush.bf16.msra.mxu0 %v2881
    %4246 = vmatpush.bf16.msra.mxu0 %v2873
    %4247 = vmatpush.bf16.msra.mxu0 %v2865
    %4248 = vmatpush.bf16.msra.mxu0 %v2857
    %4249 = vmatpush.bf16.msra.mxu0 %v2849
    %4250 = vmatpush.bf16.msra.mxu0 %v2841
    %4251 = vmatpush.bf16.msra.mxu0 %v2833
    %4252 = vmatpush.bf16.msra.mxu0 %v2825
    %4253 = vmatmul.bf16.gmra.mxu0 %v4177
    %v4254 = vpop.f32.mrf.mxu0
    %v4255 = vadd.f32 %v4242, %v4254
    %v4256 = vpop.f32.mrf.mxu0
    %4257 = vdwg.mxu0
    %4258 = vmatpush.bf16.msra.mxu0 %v2818
    %4259 = vmatpush.bf16.msra.mxu0 %v2810
    %4260 = vmatpush.bf16.msra.mxu0 %v2802
    %4261 = vmatpush.bf16.msra.mxu0 %v2794
    %4262 = vmatpush.bf16.msra.mxu0 %v2786
    %4263 = vmatpush.bf16.msra.mxu0 %v2778
    %4264 = vmatpush.bf16.msra.mxu0 %v2770
    %4265 = vmatpush.bf16.msra.mxu0 %v2762
    %4266 = vmatmul.bf16.gmra.mxu0 %v4176
    %v4267 = vpop.f32.mrf.mxu0
    %v4268 = vadd.f32 %v2362, %v4267
    %v4269 = vpop.f32.mrf.mxu0
    %4270 = vdwg.mxu0
    %4271 = vmatpush.bf16.msra.mxu0 %v2882
    %4272 = vmatpush.bf16.msra.mxu0 %v2874
    %4273 = vmatpush.bf16.msra.mxu0 %v2866
    %4274 = vmatpush.bf16.msra.mxu0 %v2858
    %4275 = vmatpush.bf16.msra.mxu0 %v2850
    %4276 = vmatpush.bf16.msra.mxu0 %v2842
    %4277 = vmatpush.bf16.msra.mxu0 %v2834
    %4278 = vmatpush.bf16.msra.mxu0 %v2826
    %4279 = vmatmul.bf16.gmra.mxu0 %v4177
    %v4280 = vpop.f32.mrf.mxu0
    %v4281 = vadd.f32 %v4268, %v4280
    %v4282 = vpop.f32.mrf.mxu0
    %4283 = vdwg.mxu0
    %4284 = vmatpush.bf16.msra.mxu0 %v2819
    %4285 = vmatpush.bf16.msra.mxu0 %v2811
    %4286 = vmatpush.bf16.msra.mxu0 %v2803
    %4287 = vmatpush.bf16.msra.mxu0 %v2795
    %4288 = vmatpush.bf16.msra.mxu0 %v2787
    %4289 = vmatpush.bf16.msra.mxu0 %v2779
    %4290 = vmatpush.bf16.msra.mxu0 %v2771
    %4291 = vmatpush.bf16.msra.mxu0 %v2763
    %4292 = vmatmul.bf16.gmra.mxu0 %v4176
    %v4293 = vpop.f32.mrf.mxu0
    %v4294 = vadd.f32 %v2363, %v4293
    %v4295 = vpop.f32.mrf.mxu0
    %4296 = vdwg.mxu0
    %4297 = vmatpush.bf16.msra.mxu0 %v2883
    %4298 = vmatpush.bf16.msra.mxu0 %v2875
    %4299 = vmatpush.bf16.msra.mxu0 %v2867
    %4300 = vmatpush.bf16.msra.mxu0 %v2859
    %4301 = vmatpush.bf16.msra.mxu0 %v2851
    %4302 = vmatpush.bf16.msra.mxu0 %v2843
    %4303 = vmatpush.bf16.msra.mxu0 %v2835
    %4304 = vmatpush.bf16.msra.mxu0 %v2827
    %4305 = vmatmul.bf16.gmra.mxu0 %v4177
    %v4306 = vpop.f32.mrf.mxu0
    %v4307 = vadd.f32 %v4294, %v4306
    %v4308 = vpop.f32.mrf.mxu0
    %4309 = vdwg.mxu0
    %4310 = vmatpush.bf16.msra.mxu0 %v2820
    %4311 = vmatpush.bf16.msra.mxu0 %v2812
    %4312 = vmatpush.bf16.msra.mxu0 %v2804
    %4313 = vmatpush.bf16.msra.mxu0 %v2796
    %4314 = vmatpush.bf16.msra.mxu0 %v2788
    %4315 = vmatpush.bf16.msra.mxu0 %v2780
    %4316 = vmatpush.bf16.msra.mxu0 %v2772
    %4317 = vmatpush.bf16.msra.mxu0 %v2764
    %4318 = vmatmul.bf16.gmra.mxu0 %v4176
    %v4319 = vpop.f32.mrf.mxu0
    %v4320 = vadd.f32 %v2364, %v4319
    %v4321 = vpop.f32.mrf.mxu0
    %4322 = vdwg.mxu0
    %4323 = vmatpush.bf16.msra.mxu0 %v2884
    %4324 = vmatpush.bf16.msra.mxu0 %v2876
    %4325 = vmatpush.bf16.msra.mxu0 %v2868
    %4326 = vmatpush.bf16.msra.mxu0 %v2860
    %4327 = vmatpush.bf16.msra.mxu0 %v2852
    %4328 = vmatpush.bf16.msra.mxu0 %v2844
    %4329 = vmatpush.bf16.msra.mxu0 %v2836
    %4330 = vmatpush.bf16.msra.mxu0 %v2828
    %4331 = vmatmul.bf16.gmra.mxu0 %v4177
    %v4332 = vpop.f32.mrf.mxu0
    %v4333 = vadd.f32 %v4320, %v4332
    %v4334 = vpop.f32.mrf.mxu0
    %4335 = vdwg.mxu0
    %4336 = vmatpush.bf16.msra.mxu0 %v2821
    %4337 = vmatpush.bf16.msra.mxu0 %v2813
    %4338 = vmatpush.bf16.msra.mxu0 %v2805
    %4339 = vmatpush.bf16.msra.mxu0 %v2797
    %4340 = vmatpush.bf16.msra.mxu0 %v2789
    %4341 = vmatpush.bf16.msra.mxu0 %v2781
    %4342 = vmatpush.bf16.msra.mxu0 %v2773
    %4343 = vmatpush.bf16.msra.mxu0 %v2765
    %4344 = vmatmul.bf16.gmra.mxu0 %v4176
    %v4345 = vpop.f32.mrf.mxu0
    %v4346 = vadd.f32 %v2365, %v4345
    %v4347 = vpop.f32.mrf.mxu0
    %4348 = vdwg.mxu0
    %4349 = vmatpush.bf16.msra.mxu0 %v2885
    %4350 = vmatpush.bf16.msra.mxu0 %v2877
    %4351 = vmatpush.bf16.msra.mxu0 %v2869
    %4352 = vmatpush.bf16.msra.mxu0 %v2861
    %4353 = vmatpush.bf16.msra.mxu0 %v2853
    %4354 = vmatpush.bf16.msra.mxu0 %v2845
    %4355 = vmatpush.bf16.msra.mxu0 %v2837
    %4356 = vmatpush.bf16.msra.mxu0 %v2829
    %4357 = vmatmul.bf16.gmra.mxu0 %v4177
    %v4358 = vpop.f32.mrf.mxu0
    %v4359 = vadd.f32 %v4346, %v4358
    %v4360 = vpop.f32.mrf.mxu0
    %4361 = vdwg.mxu0
    %4362 = vmatpush.bf16.msra.mxu0 %v2822
    %4363 = vmatpush.bf16.msra.mxu0 %v2814
    %4364 = vmatpush.bf16.msra.mxu0 %v2806
    %4365 = vmatpush.bf16.msra.mxu0 %v2798
    %4366 = vmatpush.bf16.msra.mxu0 %v2790
    %4367 = vmatpush.bf16.msra.mxu0 %v2782
    %4368 = vmatpush.bf16.msra.mxu0 %v2774
    %4369 = vmatpush.bf16.msra.mxu0 %v2766
    %4370 = vmatmul.bf16.gmra.mxu0 %v4176
    %v4371 = vpop.f32.mrf.mxu0
    %v4372 = vadd.f32 %v2366, %v4371
    %v4373 = vpop.f32.mrf.mxu0
    %4374 = vdwg.mxu0
    %4375 = vmatpush.bf16.msra.mxu0 %v2886
    %4376 = vmatpush.bf16.msra.mxu0 %v2878
    %4377 = vmatpush.bf16.msra.mxu0 %v2870
    %4378 = vmatpush.bf16.msra.mxu0 %v2862
    %4379 = vmatpush.bf16.msra.mxu0 %v2854
    %4380 = vmatpush.bf16.msra.mxu0 %v2846
    %4381 = vmatpush.bf16.msra.mxu0 %v2838
    %4382 = vmatpush.bf16.msra.mxu0 %v2830
    %4383 = vmatmul.bf16.gmra.mxu0 %v4177
    %v4384 = vpop.f32.mrf.mxu0
    %v4385 = vadd.f32 %v4372, %v4384
    %v4386 = vpop.f32.mrf.mxu0
    %4387 = vdwg.mxu0
    %v4388 = vld [vmem:[#allocation2] sm:$0xc0]
    %v4389 = vld [vmem:[#allocation2 + $0x8] sm:$0xc0]
    %v4390 = vld [vmem:[#allocation2 + $0x10] sm:$0xc0]
    %v4391 = vld [vmem:[#allocation2 + $0x18] sm:$0xc0]
    %v4396 = vrot.slane %v4203, 2
    %v4397 = vrot.slane %v4229, 2
    %v4398 = vrot.slane %v4255, 2
    %v4399 = vrot.slane %v4281, 2
    %v4404 = vadd.f32 %v4388, %v4396
    %v4405 = vadd.f32 %v4389, %v4397
    %v4406 = vadd.f32 %v4390, %v4398
    %v4407 = vadd.f32 %v4391, %v4399
    %v4408 = vld [vmem:[#allocation2 + $0x60] sm:$0x3]
    %v4409 = vld [vmem:[#allocation2 + $0x68] sm:$0x3]
    %v4410 = vld [vmem:[#allocation2 + $0x70] sm:$0x3]
    %v4411 = vld [vmem:[#allocation2 + $0x78] sm:$0x3]
    %v4412 = vadd.f32 %v4408, %v4307
    %v4413 = vadd.f32 %v4409, %v4333
    %v4414 = vadd.f32 %v4410, %v4359
    %v4415 = vadd.f32 %v4411, %v4385
    %v4416 = vxor.u32 %v4404, 2147483648
    %v4417 = vxor.u32 %v4405, 2147483648
    %v4418 = vxor.u32 %v4406, 2147483648
    %v4419 = vmul.f32 %v4416, 1.442695
    %v4420 = vpow.pop %v4419
    %v4421 = vmul.f32 %v4417, 1.442695
    %v4422 = vpow.pop %v4421
    %v4423 = vmul.f32 %v4418, 1.442695
    %v4424 = vpow.pop %v4423
    %v4425 = vadd.f32 %v4420, 1.0
    %v4426 = vadd.f32 %v4422, 1.0
    %v4427 = vadd.f32 %v4424, 1.0
    %v4428 = vrcp.pop %v4425
    %v4429 = vmul.f32 %v4425, %v4428
    %v4430 = vsub.f32 1.0, %v4429
    %v4431 = vmul.f32 %v4428, %v4430
    %v4432 = vadd.f32 %v4428, %v4431
    %vm4433 = vweird.f32 %v4425
    %vm4434 = vweird.f32 %v4428
    %vm4435 = vmor %vm4433, %vm4434
    %v4436 = vsel %vm4435, %v4428, %v4432
    %v4437 = vand.u32 2147483647, %v4425
    %vm4438 = vcmp.eq.f32.partialorder %v4437, 8.507059e+37
    %v4439 = vand.u32 %v4425, 2147483648
    %v4440 = vor.u32 1.1754944e-38, %v4439
    %v4441 = vsel %vm4438, %v4440, %v4436
    %v4442 = vmul.f32 1.0, %v4441
    %v4443 = vrcp.pop %v4426
    %v4444 = vmul.f32 %v4426, %v4443
    %v4445 = vsub.f32 1.0, %v4444
    %v4446 = vmul.f32 %v4443, %v4445
    %v4447 = vadd.f32 %v4443, %v4446
    %vm4448 = vweird.f32 %v4426
    %vm4449 = vweird.f32 %v4443
    %vm4450 = vmor %vm4448, %vm4449
    %v4451 = vsel %vm4450, %v4443, %v4447
    %v4452 = vand.u32 2147483647, %v4426
    %vm4453 = vcmp.eq.f32.partialorder %v4452, 8.507059e+37
    %v4454 = vand.u32 %v4426, 2147483648
    %v4455 = vor.u32 1.1754944e-38, %v4454
    %v4456 = vsel %vm4453, %v4455, %v4451
    %v4457 = vmul.f32 1.0, %v4456
    %v4458 = vrcp.pop %v4427
    %v4459 = vmul.f32 %v4427, %v4458
    %v4460 = vsub.f32 1.0, %v4459
    %v4461 = vmul.f32 %v4458, %v4460
    %v4462 = vadd.f32 %v4458, %v4461
    %vm4463 = vweird.f32 %v4427
    %vm4464 = vweird.f32 %v4458
    %vm4465 = vmor %vm4463, %vm4464
    %v4466 = vsel %vm4465, %v4458, %v4462
    %v4467 = vand.u32 2147483647, %v4427
    %vm4468 = vcmp.eq.f32.partialorder %v4467, 8.507059e+37
    %v4469 = vand.u32 %v4427, 2147483648
    %v4470 = vor.u32 1.1754944e-38, %v4469
    %v4471 = vsel %vm4468, %v4470, %v4466
    %v4472 = vmul.f32 1.0, %v4471
    %v4473 = vtanh.pop %v4407
    %v4475 = vrot.slane %v4093, 6
    %v4477 = vmul.f32 %v4457, %v4475
    %v4478 = vmul.f32 %v4442, %v4473
    %v4479 = vadd.f32 %v4477, %v4478
    %v4480 = vtanh.pop %v4479
    %v4481 = vmul.f32 %v4472, %v4480
    %v4482 = vxor.u32 %v4412, 2147483648
    %v4483 = vxor.u32 %v4413, 2147483648
    %v4484 = vxor.u32 %v4414, 2147483648
    %v4485 = vmul.f32 %v4482, 1.442695
    %v4486 = vpow.pop %v4485
    %v4487 = vmul.f32 %v4483, 1.442695
    %v4488 = vpow.pop %v4487
    %v4489 = vmul.f32 %v4484, 1.442695
    %v4490 = vpow.pop %v4489
    %v4491 = vadd.f32 %v4486, 1.0
    %v4492 = vadd.f32 %v4488, 1.0
    %v4493 = vadd.f32 %v4490, 1.0
    %v4494 = vrcp.pop %v4491
    %v4495 = vmul.f32 %v4491, %v4494
    %v4496 = vsub.f32 1.0, %v4495
    %v4497 = vmul.f32 %v4494, %v4496
    %v4498 = vadd.f32 %v4494, %v4497
    %vm4499 = vweird.f32 %v4491
    %vm4500 = vweird.f32 %v4494
    %vm4501 = vmor %vm4499, %vm4500
    %v4502 = vsel %vm4501, %v4494, %v4498
    %v4503 = vand.u32 2147483647, %v4491
    %vm4504 = vcmp.eq.f32.partialorder %v4503, 8.507059e+37
    %v4505 = vand.u32 %v4491, 2147483648
    %v4506 = vor.u32 1.1754944e-38, %v4505
    %v4507 = vsel %vm4504, %v4506, %v4502
    %v4508 = vmul.f32 1.0, %v4507
    %v4509 = vrcp.pop %v4492
    %v4510 = vmul.f32 %v4492, %v4509
    %v4511 = vsub.f32 1.0, %v4510
    %v4512 = vmul.f32 %v4509, %v4511
    %v4513 = vadd.f32 %v4509, %v4512
    %vm4514 = vweird.f32 %v4492
    %vm4515 = vweird.f32 %v4509
    %vm4516 = vmor %vm4514, %vm4515
    %v4517 = vsel %vm4516, %v4509, %v4513
    %v4518 = vand.u32 2147483647, %v4492
    %vm4519 = vcmp.eq.f32.partialorder %v4518, 8.507059e+37
    %v4520 = vand.u32 %v4492, 2147483648
    %v4521 = vor.u32 1.1754944e-38, %v4520
    %v4522 = vsel %vm4519, %v4521, %v4517
    %v4523 = vmul.f32 1.0, %v4522
    %v4524 = vrcp.pop %v4493
    %v4525 = vmul.f32 %v4493, %v4524
    %v4526 = vsub.f32 1.0, %v4525
    %v4527 = vmul.f32 %v4524, %v4526
    %v4528 = vadd.f32 %v4524, %v4527
    %vm4529 = vweird.f32 %v4493
    %vm4530 = vweird.f32 %v4524
    %vm4531 = vmor %vm4529, %vm4530
    %v4532 = vsel %vm4531, %v4524, %v4528
    %v4533 = vand.u32 2147483647, %v4493
    %vm4534 = vcmp.eq.f32.partialorder %v4533, 8.507059e+37
    %v4535 = vand.u32 %v4493, 2147483648
    %v4536 = vor.u32 1.1754944e-38, %v4535
    %v4537 = vsel %vm4534, %v4536, %v4532
    %v4538 = vmul.f32 1.0, %v4537
    %v4539 = vtanh.pop %v4415
    %v4541 = vrot.slane %v4159, 2
    %v4543 = vmul.f32 %v4523, %v4541
    %v4544 = vmul.f32 %v4508, %v4539
    %v4545 = vadd.f32 %v4543, %v4544
    %v4546 = vtanh.pop %v4545
    %v4547 = vmul.f32 %v4538, %v4546
    %v4549 = vrot.slane %v4547, 2
    %v4552 = vrot.slane %v4481, 6
    %v4553 = vrot.slane %v4549, 6
    %v4556 = vadd.f32 %v4170, %v4552
    %v4557 = vadd.f32 %v4171, %v4553
    %v4558 = vpack.c.bf16 %v4481, %v4481
    %v4559 = vpack.c.bf16 %v4549, %v4549
    %v4562 = vrot.slane %v4558, 3
    %v4563 = vrot.slane %v4559, 3
    %4566 = vmatpush.bf16.msra.mxu0 %v2815
    %4567 = vmatpush.bf16.msra.mxu0 %v2807
    %4568 = vmatpush.bf16.msra.mxu0 %v2799
    %4569 = vmatpush.bf16.msra.mxu0 %v2791
    %4570 = vmatpush.bf16.msra.mxu0 %v2783
    %4571 = vmatpush.bf16.msra.mxu0 %v2775
    %4572 = vmatpush.bf16.msra.mxu0 %v2767
    %4573 = vmatpush.bf16.msra.mxu0 %v2759
    %4574 = vmatmul.bf16.gmra.mxu0 %v4562
    %v4575 = vpop.f32.mrf.mxu0
    %v4576 = vadd.f32 %v2359, %v4575
    %v4577 = vpop.f32.mrf.mxu0
    %4578 = vdwg.mxu0
    %4579 = vmatpush.bf16.msra.mxu0 %v2879
    %4580 = vmatpush.bf16.msra.mxu0 %v2871
    %4581 = vmatpush.bf16.msra.mxu0 %v2863
    %4582 = vmatpush.bf16.msra.mxu0 %v2855
    %4583 = vmatpush.bf16.msra.mxu0 %v2847
    %4584 = vmatpush.bf16.msra.mxu0 %v2839
    %4585 = vmatpush.bf16.msra.mxu0 %v2831
    %4586 = vmatpush.bf16.msra.mxu0 %v2823
    %4587 = vmatmul.bf16.gmra.mxu0 %v4563
    %v4588 = vpop.f32.mrf.mxu0
    %v4589 = vadd.f32 %v4576, %v4588
    %v4590 = vpop.f32.mrf.mxu0
    %4591 = vdwg.mxu0
    %4592 = vmatpush.bf16.msra.mxu0 %v2816
    %4593 = vmatpush.bf16.msra.mxu0 %v2808
    %4594 = vmatpush.bf16.msra.mxu0 %v2800
    %4595 = vmatpush.bf16.msra.mxu0 %v2792
    %4596 = vmatpush.bf16.msra.mxu0 %v2784
    %4597 = vmatpush.bf16.msra.mxu0 %v2776
    %4598 = vmatpush.bf16.msra.mxu0 %v2768
    %4599 = vmatpush.bf16.msra.mxu0 %v2760
    %4600 = vmatmul.bf16.gmra.mxu0 %v4562
    %v4601 = vpop.f32.mrf.mxu0
    %v4602 = vadd.f32 %v2360, %v4601
    %v4603 = vpop.f32.mrf.mxu0
    %4604 = vdwg.mxu0
    %4605 = vmatpush.bf16.msra.mxu0 %v2880
    %4606 = vmatpush.bf16.msra.mxu0 %v2872
    %4607 = vmatpush.bf16.msra.mxu0 %v2864
    %4608 = vmatpush.bf16.msra.mxu0 %v2856
    %4609 = vmatpush.bf16.msra.mxu0 %v2848
    %4610 = vmatpush.bf16.msra.mxu0 %v2840
    %4611 = vmatpush.bf16.msra.mxu0 %v2832
    %4612 = vmatpush.bf16.msra.mxu0 %v2824
    %4613 = vmatmul.bf16.gmra.mxu0 %v4563
    %v4614 = vpop.f32.mrf.mxu0
    %v4615 = vadd.f32 %v4602, %v4614
    %v4616 = vpop.f32.mrf.mxu0
    %4617 = vdwg.mxu0
    %4618 = vmatpush.bf16.msra.mxu0 %v2817
    %4619 = vmatpush.bf16.msra.mxu0 %v2809
    %4620 = vmatpush.bf16.msra.mxu0 %v2801
    %4621 = vmatpush.bf16.msra.mxu0 %v2793
    %4622 = vmatpush.bf16.msra.mxu0 %v2785
    %4623 = vmatpush.bf16.msra.mxu0 %v2777
    %4624 = vmatpush.bf16.msra.mxu0 %v2769
    %4625 = vmatpush.bf16.msra.mxu0 %v2761
    %4626 = vmatmul.bf16.gmra.mxu0 %v4562
    %v4627 = vpop.f32.mrf.mxu0
    %v4628 = vadd.f32 %v2361, %v4627
    %v4629 = vpop.f32.mrf.mxu0
    %4630 = vdwg.mxu0
    %4631 = vmatpush.bf16.msra.mxu0 %v2881
    %4632 = vmatpush.bf16.msra.mxu0 %v2873
    %4633 = vmatpush.bf16.msra.mxu0 %v2865
    %4634 = vmatpush.bf16.msra.mxu0 %v2857
    %4635 = vmatpush.bf16.msra.mxu0 %v2849
    %4636 = vmatpush.bf16.msra.mxu0 %v2841
    %4637 = vmatpush.bf16.msra.mxu0 %v2833
    %4638 = vmatpush.bf16.msra.mxu0 %v2825
    %4639 = vmatmul.bf16.gmra.mxu0 %v4563
    %v4640 = vpop.f32.mrf.mxu0
    %v4641 = vadd.f32 %v4628, %v4640
    %v4642 = vpop.f32.mrf.mxu0
    %4643 = vdwg.mxu0
    %4644 = vmatpush.bf16.msra.mxu0 %v2818
    %4645 = vmatpush.bf16.msra.mxu0 %v2810
    %4646 = vmatpush.bf16.msra.mxu0 %v2802
    %4647 = vmatpush.bf16.msra.mxu0 %v2794
    %4648 = vmatpush.bf16.msra.mxu0 %v2786
    %4649 = vmatpush.bf16.msra.mxu0 %v2778
    %4650 = vmatpush.bf16.msra.mxu0 %v2770
    %4651 = vmatpush.bf16.msra.mxu0 %v2762
    %4652 = vmatmul.bf16.gmra.mxu0 %v4562
    %v4653 = vpop.f32.mrf.mxu0
    %v4654 = vadd.f32 %v2362, %v4653
    %v4655 = vpop.f32.mrf.mxu0
    %4656 = vdwg.mxu0
    %4657 = vmatpush.bf16.msra.mxu0 %v2882
    %4658 = vmatpush.bf16.msra.mxu0 %v2874
    %4659 = vmatpush.bf16.msra.mxu0 %v2866
    %4660 = vmatpush.bf16.msra.mxu0 %v2858
    %4661 = vmatpush.bf16.msra.mxu0 %v2850
    %4662 = vmatpush.bf16.msra.mxu0 %v2842
    %4663 = vmatpush.bf16.msra.mxu0 %v2834
    %4664 = vmatpush.bf16.msra.mxu0 %v2826
    %4665 = vmatmul.bf16.gmra.mxu0 %v4563
    %v4666 = vpop.f32.mrf.mxu0
    %v4667 = vadd.f32 %v4654, %v4666
    %v4668 = vpop.f32.mrf.mxu0
    %4669 = vdwg.mxu0
    %4670 = vmatpush.bf16.msra.mxu0 %v2819
    %4671 = vmatpush.bf16.msra.mxu0 %v2811
    %4672 = vmatpush.bf16.msra.mxu0 %v2803
    %4673 = vmatpush.bf16.msra.mxu0 %v2795
    %4674 = vmatpush.bf16.msra.mxu0 %v2787
    %4675 = vmatpush.bf16.msra.mxu0 %v2779
    %4676 = vmatpush.bf16.msra.mxu0 %v2771
    %4677 = vmatpush.bf16.msra.mxu0 %v2763
    %4678 = vmatmul.bf16.gmra.mxu0 %v4562
    %v4679 = vpop.f32.mrf.mxu0
    %v4680 = vadd.f32 %v2363, %v4679
    %v4681 = vpop.f32.mrf.mxu0
    %4682 = vdwg.mxu0
    %4683 = vmatpush.bf16.msra.mxu0 %v2883
    %4684 = vmatpush.bf16.msra.mxu0 %v2875
    %4685 = vmatpush.bf16.msra.mxu0 %v2867
    %4686 = vmatpush.bf16.msra.mxu0 %v2859
    %4687 = vmatpush.bf16.msra.mxu0 %v2851
    %4688 = vmatpush.bf16.msra.mxu0 %v2843
    %4689 = vmatpush.bf16.msra.mxu0 %v2835
    %4690 = vmatpush.bf16.msra.mxu0 %v2827
    %4691 = vmatmul.bf16.gmra.mxu0 %v4563
    %v4692 = vpop.f32.mrf.mxu0
    %v4693 = vadd.f32 %v4680, %v4692
    %v4694 = vpop.f32.mrf.mxu0
    %4695 = vdwg.mxu0
    %4696 = vmatpush.bf16.msra.mxu0 %v2820
    %4697 = vmatpush.bf16.msra.mxu0 %v2812
    %4698 = vmatpush.bf16.msra.mxu0 %v2804
    %4699 = vmatpush.bf16.msra.mxu0 %v2796
    %4700 = vmatpush.bf16.msra.mxu0 %v2788
    %4701 = vmatpush.bf16.msra.mxu0 %v2780
    %4702 = vmatpush.bf16.msra.mxu0 %v2772
    %4703 = vmatpush.bf16.msra.mxu0 %v2764
    %4704 = vmatmul.bf16.gmra.mxu0 %v4562
    %v4705 = vpop.f32.mrf.mxu0
    %v4706 = vadd.f32 %v2364, %v4705
    %v4707 = vpop.f32.mrf.mxu0
    %4708 = vdwg.mxu0
    %4709 = vmatpush.bf16.msra.mxu0 %v2884
    %4710 = vmatpush.bf16.msra.mxu0 %v2876
    %4711 = vmatpush.bf16.msra.mxu0 %v2868
    %4712 = vmatpush.bf16.msra.mxu0 %v2860
    %4713 = vmatpush.bf16.msra.mxu0 %v2852
    %4714 = vmatpush.bf16.msra.mxu0 %v2844
    %4715 = vmatpush.bf16.msra.mxu0 %v2836
    %4716 = vmatpush.bf16.msra.mxu0 %v2828
    %4717 = vmatmul.bf16.gmra.mxu0 %v4563
    %v4718 = vpop.f32.mrf.mxu0
    %v4719 = vadd.f32 %v4706, %v4718
    %v4720 = vpop.f32.mrf.mxu0
    %4721 = vdwg.mxu0
    %4722 = vmatpush.bf16.msra.mxu0 %v2821
    %4723 = vmatpush.bf16.msra.mxu0 %v2813
    %4724 = vmatpush.bf16.msra.mxu0 %v2805
    %4725 = vmatpush.bf16.msra.mxu0 %v2797
    %4726 = vmatpush.bf16.msra.mxu0 %v2789
    %4727 = vmatpush.bf16.msra.mxu0 %v2781
    %4728 = vmatpush.bf16.msra.mxu0 %v2773
    %4729 = vmatpush.bf16.msra.mxu0 %v2765
    %4730 = vmatmul.bf16.gmra.mxu0 %v4562
    %v4731 = vpop.f32.mrf.mxu0
    %v4732 = vadd.f32 %v2365, %v4731
    %v4733 = vpop.f32.mrf.mxu0
    %4734 = vdwg.mxu0
    %4735 = vmatpush.bf16.msra.mxu0 %v2885
    %4736 = vmatpush.bf16.msra.mxu0 %v2877
    %4737 = vmatpush.bf16.msra.mxu0 %v2869
    %4738 = vmatpush.bf16.msra.mxu0 %v2861
    %4739 = vmatpush.bf16.msra.mxu0 %v2853
    %4740 = vmatpush.bf16.msra.mxu0 %v2845
    %4741 = vmatpush.bf16.msra.mxu0 %v2837
    %4742 = vmatpush.bf16.msra.mxu0 %v2829
    %4743 = vmatmul.bf16.gmra.mxu0 %v4563
    %v4744 = vpop.f32.mrf.mxu0
    %v4745 = vadd.f32 %v4732, %v4744
    %v4746 = vpop.f32.mrf.mxu0
    %4747 = vdwg.mxu0
    %4748 = vmatpush.bf16.msra.mxu0 %v2822
    %4749 = vmatpush.bf16.msra.mxu0 %v2814
    %4750 = vmatpush.bf16.msra.mxu0 %v2806
    %4751 = vmatpush.bf16.msra.mxu0 %v2798
    %4752 = vmatpush.bf16.msra.mxu0 %v2790
    %4753 = vmatpush.bf16.msra.mxu0 %v2782
    %4754 = vmatpush.bf16.msra.mxu0 %v2774
    %4755 = vmatpush.bf16.msra.mxu0 %v2766
    %4756 = vmatmul.bf16.gmra.mxu0 %v4562
    %v4757 = vpop.f32.mrf.mxu0
    %v4758 = vadd.f32 %v2366, %v4757
    %v4759 = vpop.f32.mrf.mxu0
    %4760 = vdwg.mxu0
    %4761 = vmatpush.bf16.msra.mxu0 %v2886
    %4762 = vmatpush.bf16.msra.mxu0 %v2878
    %4763 = vmatpush.bf16.msra.mxu0 %v2870
    %4764 = vmatpush.bf16.msra.mxu0 %v2862
    %4765 = vmatpush.bf16.msra.mxu0 %v2854
    %4766 = vmatpush.bf16.msra.mxu0 %v2846
    %4767 = vmatpush.bf16.msra.mxu0 %v2838
    %4768 = vmatpush.bf16.msra.mxu0 %v2830
    %4769 = vmatmul.bf16.gmra.mxu0 %v4563
    %v4770 = vpop.f32.mrf.mxu0
    %v4771 = vadd.f32 %v4758, %v4770
    %v4772 = vpop.f32.mrf.mxu0
    %4773 = vdwg.mxu0
    %v4774 = vld [vmem:[#allocation2 + $0x40] sm:$0x3]
    %v4775 = vld [vmem:[#allocation2 + $0x48] sm:$0x3]
    %v4776 = vld [vmem:[#allocation2 + $0x50] sm:$0x3]
    %v4777 = vld [vmem:[#allocation2 + $0x58] sm:$0x3]
    %v4778 = vadd.f32 %v4774, %v4589
    %v4779 = vadd.f32 %v4775, %v4615
    %v4780 = vadd.f32 %v4776, %v4641
    %v4781 = vadd.f32 %v4777, %v4667
    %v4782 = vld [vmem:[#allocation2 + $0x20] sm:$0xc0]
    %v4783 = vld [vmem:[#allocation2 + $0x28] sm:$0xc0]
    %v4784 = vld [vmem:[#allocation2 + $0x30] sm:$0xc0]
    %v4785 = vld [vmem:[#allocation2 + $0x38] sm:$0xc0]
    %v4790 = vrot.slane %v4693, 2
    %v4791 = vrot.slane %v4719, 2
    %v4792 = vrot.slane %v4745, 2
    %v4793 = vrot.slane %v4771, 2
    %v4798 = vadd.f32 %v4782, %v4790
    %v4799 = vadd.f32 %v4783, %v4791
    %v4800 = vadd.f32 %v4784, %v4792
    %v4801 = vadd.f32 %v4785, %v4793
    %v4802 = vxor.u32 %v4778, 2147483648
    %v4803 = vxor.u32 %v4779, 2147483648
    %v4804 = vxor.u32 %v4780, 2147483648
    %v4805 = vmul.f32 %v4802, 1.442695
    %v4806 = vpow.pop %v4805
    %v4807 = vmul.f32 %v4803, 1.442695
    %v4808 = vpow.pop %v4807
    %v4809 = vmul.f32 %v4804, 1.442695
    %v4810 = vpow.pop %v4809
    %v4811 = vadd.f32 %v4806, 1.0
    %v4812 = vadd.f32 %v4808, 1.0
    %v4813 = vadd.f32 %v4810, 1.0
    %v4814 = vrcp.pop %v4811
    %v4815 = vmul.f32 %v4811, %v4814
    %v4816 = vsub.f32 1.0, %v4815
    %v4817 = vmul.f32 %v4814, %v4816
    %v4818 = vadd.f32 %v4814, %v4817
    %vm4819 = vweird.f32 %v4811
    %vm4820 = vweird.f32 %v4814
    %vm4821 = vmor %vm4819, %vm4820
    %v4822 = vsel %vm4821, %v4814, %v4818
    %v4823 = vand.u32 2147483647, %v4811
    %vm4824 = vcmp.eq.f32.partialorder %v4823, 8.507059e+37
    %v4825 = vand.u32 %v4811, 2147483648
    %v4826 = vor.u32 1.1754944e-38, %v4825
    %v4827 = vsel %vm4824, %v4826, %v4822
    %v4828 = vmul.f32 1.0, %v4827
    %v4829 = vrcp.pop %v4812
    %v4830 = vmul.f32 %v4812, %v4829
    %v4831 = vsub.f32 1.0, %v4830
    %v4832 = vmul.f32 %v4829, %v4831
    %v4833 = vadd.f32 %v4829, %v4832
    %vm4834 = vweird.f32 %v4812
    %vm4835 = vweird.f32 %v4829
    %vm4836 = vmor %vm4834, %vm4835
    %v4837 = vsel %vm4836, %v4829, %v4833
    %v4838 = vand.u32 2147483647, %v4812
    %vm4839 = vcmp.eq.f32.partialorder %v4838, 8.507059e+37
    %v4840 = vand.u32 %v4812, 2147483648
    %v4841 = vor.u32 1.1754944e-38, %v4840
    %v4842 = vsel %vm4839, %v4841, %v4837
    %v4843 = vmul.f32 1.0, %v4842
    %v4844 = vrcp.pop %v4813
    %v4845 = vmul.f32 %v4813, %v4844
    %v4846 = vsub.f32 1.0, %v4845
    %v4847 = vmul.f32 %v4844, %v4846
    %v4848 = vadd.f32 %v4844, %v4847
    %vm4849 = vweird.f32 %v4813
    %vm4850 = vweird.f32 %v4844
    %vm4851 = vmor %vm4849, %vm4850
    %v4852 = vsel %vm4851, %v4844, %v4848
    %v4853 = vand.u32 2147483647, %v4813
    %vm4854 = vcmp.eq.f32.partialorder %v4853, 8.507059e+37
    %v4855 = vand.u32 %v4813, 2147483648
    %v4856 = vor.u32 1.1754944e-38, %v4855
    %v4857 = vsel %vm4854, %v4856, %v4852
    %v4858 = vmul.f32 1.0, %v4857
    %v4859 = vtanh.pop %v4781
    %v4861 = vrot.slane %v4479, 6
    %v4863 = vmul.f32 %v4843, %v4861
    %v4864 = vmul.f32 %v4828, %v4859
    %v4865 = vadd.f32 %v4863, %v4864
    %v4866 = vtanh.pop %v4865
    %v4867 = vmul.f32 %v4858, %v4866
    %v4868 = vxor.u32 %v4798, 2147483648
    %v4869 = vxor.u32 %v4799, 2147483648
    %v4870 = vxor.u32 %v4800, 2147483648
    %v4871 = vmul.f32 %v4868, 1.442695
    %v4872 = vpow.pop %v4871
    %v4873 = vmul.f32 %v4869, 1.442695
    %v4874 = vpow.pop %v4873
    %v4875 = vmul.f32 %v4870, 1.442695
    %v4876 = vpow.pop %v4875
    %v4877 = vadd.f32 %v4872, 1.0
    %v4878 = vadd.f32 %v4874, 1.0
    %v4879 = vadd.f32 %v4876, 1.0
    %v4880 = vrcp.pop %v4877
    %v4881 = vmul.f32 %v4877, %v4880
    %v4882 = vsub.f32 1.0, %v4881
    %v4883 = vmul.f32 %v4880, %v4882
    %v4884 = vadd.f32 %v4880, %v4883
    %vm4885 = vweird.f32 %v4877
    %vm4886 = vweird.f32 %v4880
    %vm4887 = vmor %vm4885, %vm4886
    %v4888 = vsel %vm4887, %v4880, %v4884
    %v4889 = vand.u32 2147483647, %v4877
    %vm4890 = vcmp.eq.f32.partialorder %v4889, 8.507059e+37
    %v4891 = vand.u32 %v4877, 2147483648
    %v4892 = vor.u32 1.1754944e-38, %v4891
    %v4893 = vsel %vm4890, %v4892, %v4888
    %v4894 = vmul.f32 1.0, %v4893
    %v4895 = vrcp.pop %v4878
    %v4896 = vmul.f32 %v4878, %v4895
    %v4897 = vsub.f32 1.0, %v4896
    %v4898 = vmul.f32 %v4895, %v4897
    %v4899 = vadd.f32 %v4895, %v4898
    %vm4900 = vweird.f32 %v4878
    %vm4901 = vweird.f32 %v4895
    %vm4902 = vmor %vm4900, %vm4901
    %v4903 = vsel %vm4902, %v4895, %v4899
    %v4904 = vand.u32 2147483647, %v4878
    %vm4905 = vcmp.eq.f32.partialorder %v4904, 8.507059e+37
    %v4906 = vand.u32 %v4878, 2147483648
    %v4907 = vor.u32 1.1754944e-38, %v4906
    %v4908 = vsel %vm4905, %v4907, %v4903
    %v4909 = vmul.f32 1.0, %v4908
    %v4910 = vrcp.pop %v4879
    %v4911 = vmul.f32 %v4879, %v4910
    %v4912 = vsub.f32 1.0, %v4911
    %v4913 = vmul.f32 %v4910, %v4912
    %v4914 = vadd.f32 %v4910, %v4913
    %vm4915 = vweird.f32 %v4879
    %vm4916 = vweird.f32 %v4910
    %vm4917 = vmor %vm4915, %vm4916
    %v4918 = vsel %vm4917, %v4910, %v4914
    %v4919 = vand.u32 2147483647, %v4879
    %vm4920 = vcmp.eq.f32.partialorder %v4919, 8.507059e+37
    %v4921 = vand.u32 %v4879, 2147483648
    %v4922 = vor.u32 1.1754944e-38, %v4921
    %v4923 = vsel %vm4920, %v4922, %v4918
    %v4924 = vmul.f32 1.0, %v4923
    %v4925 = vtanh.pop %v4801
    %v4927 = vrot.slane %v4545, 2
    %v4929 = vmul.f32 %v4909, %v4927
    %v4930 = vmul.f32 %v4894, %v4925
    %v4931 = vadd.f32 %v4929, %v4930
    %v4932 = vtanh.pop %v4931
    %v4933 = vmul.f32 %v4924, %v4932
    %v4935 = vrot.slane %v4933, 6
    %v4937 = vadd.f32 %v4556, %v4867
    %v4938 = vadd.f32 %v4557, %v4935
    %v4939 = vpack.c.bf16 %v4867, %v4867
    %v4940 = vpack.c.bf16 %v4935, %v4935
    %4941 = vmatpush.bf16.msra.mxu0 %v2815
    %4942 = vmatpush.bf16.msra.mxu0 %v2807
    %4943 = vmatpush.bf16.msra.mxu0 %v2799
    %4944 = vmatpush.bf16.msra.mxu0 %v2791
    %4945 = vmatpush.bf16.msra.mxu0 %v2783
    %4946 = vmatpush.bf16.msra.mxu0 %v2775
    %4947 = vmatpush.bf16.msra.mxu0 %v2767
    %4948 = vmatpush.bf16.msra.mxu0 %v2759
    %4949 = vmatmul.bf16.gmra.mxu0 %v4939
    %v4950 = vpop.f32.mrf.mxu0
    %v4951 = vadd.f32 %v2359, %v4950
    %v4952 = vpop.f32.mrf.mxu0
    %4953 = vdwg.mxu0
    %4954 = vmatpush.bf16.msra.mxu0 %v2879
    %4955 = vmatpush.bf16.msra.mxu0 %v2871
    %4956 = vmatpush.bf16.msra.mxu0 %v2863
    %4957 = vmatpush.bf16.msra.mxu0 %v2855
    %4958 = vmatpush.bf16.msra.mxu0 %v2847
    %4959 = vmatpush.bf16.msra.mxu0 %v2839
    %4960 = vmatpush.bf16.msra.mxu0 %v2831
    %4961 = vmatpush.bf16.msra.mxu0 %v2823
    %4962 = vmatmul.bf16.gmra.mxu0 %v4940
    %v4963 = vpop.f32.mrf.mxu0
    %v4964 = vadd.f32 %v4951, %v4963
    %v4965 = vpop.f32.mrf.mxu0
    %4966 = vdwg.mxu0
    %4967 = vmatpush.bf16.msra.mxu0 %v2816
    %4968 = vmatpush.bf16.msra.mxu0 %v2808
    %4969 = vmatpush.bf16.msra.mxu0 %v2800
    %4970 = vmatpush.bf16.msra.mxu0 %v2792
    %4971 = vmatpush.bf16.msra.mxu0 %v2784
    %4972 = vmatpush.bf16.msra.mxu0 %v2776
    %4973 = vmatpush.bf16.msra.mxu0 %v2768
    %4974 = vmatpush.bf16.msra.mxu0 %v2760
    %4975 = vmatmul.bf16.gmra.mxu0 %v4939
    %v4976 = vpop.f32.mrf.mxu0
    %v4977 = vadd.f32 %v2360, %v4976
    %v4978 = vpop.f32.mrf.mxu0
    %4979 = vdwg.mxu0
    %4980 = vmatpush.bf16.msra.mxu0 %v2880
    %4981 = vmatpush.bf16.msra.mxu0 %v2872
    %4982 = vmatpush.bf16.msra.mxu0 %v2864
    %4983 = vmatpush.bf16.msra.mxu0 %v2856
    %4984 = vmatpush.bf16.msra.mxu0 %v2848
    %4985 = vmatpush.bf16.msra.mxu0 %v2840
    %4986 = vmatpush.bf16.msra.mxu0 %v2832
    %4987 = vmatpush.bf16.msra.mxu0 %v2824
    %4988 = vmatmul.bf16.gmra.mxu0 %v4940
    %v4989 = vpop.f32.mrf.mxu0
    %v4990 = vadd.f32 %v4977, %v4989
    %v4991 = vpop.f32.mrf.mxu0
    %4992 = vdwg.mxu0
    %4993 = vmatpush.bf16.msra.mxu0 %v2817
    %4994 = vmatpush.bf16.msra.mxu0 %v2809
    %4995 = vmatpush.bf16.msra.mxu0 %v2801
    %4996 = vmatpush.bf16.msra.mxu0 %v2793
    %4997 = vmatpush.bf16.msra.mxu0 %v2785
    %4998 = vmatpush.bf16.msra.mxu0 %v2777
    %4999 = vmatpush.bf16.msra.mxu0 %v2769
    %5000 = vmatpush.bf16.msra.mxu0 %v2761
    %5001 = vmatmul.bf16.gmra.mxu0 %v4939
    %v5002 = vpop.f32.mrf.mxu0
    %v5003 = vadd.f32 %v2361, %v5002
    %v5004 = vpop.f32.mrf.mxu0
    %5005 = vdwg.mxu0
    %5006 = vmatpush.bf16.msra.mxu0 %v2881
    %5007 = vmatpush.bf16.msra.mxu0 %v2873
    %5008 = vmatpush.bf16.msra.mxu0 %v2865
    %5009 = vmatpush.bf16.msra.mxu0 %v2857
    %5010 = vmatpush.bf16.msra.mxu0 %v2849
    %5011 = vmatpush.bf16.msra.mxu0 %v2841
    %5012 = vmatpush.bf16.msra.mxu0 %v2833
    %5013 = vmatpush.bf16.msra.mxu0 %v2825
    %5014 = vmatmul.bf16.gmra.mxu0 %v4940
    %v5015 = vpop.f32.mrf.mxu0
    %v5016 = vadd.f32 %v5003, %v5015
    %v5017 = vpop.f32.mrf.mxu0
    %5018 = vdwg.mxu0
    %5019 = vmatpush.bf16.msra.mxu0 %v2818
    %5020 = vmatpush.bf16.msra.mxu0 %v2810
    %5021 = vmatpush.bf16.msra.mxu0 %v2802
    %5022 = vmatpush.bf16.msra.mxu0 %v2794
    %5023 = vmatpush.bf16.msra.mxu0 %v2786
    %5024 = vmatpush.bf16.msra.mxu0 %v2778
    %5025 = vmatpush.bf16.msra.mxu0 %v2770
    %5026 = vmatpush.bf16.msra.mxu0 %v2762
    %5027 = vmatmul.bf16.gmra.mxu0 %v4939
    %v5028 = vpop.f32.mrf.mxu0
    %v5029 = vadd.f32 %v2362, %v5028
    %v5030 = vpop.f32.mrf.mxu0
    %5031 = vdwg.mxu0
    %5032 = vmatpush.bf16.msra.mxu0 %v2882
    %5033 = vmatpush.bf16.msra.mxu0 %v2874
    %5034 = vmatpush.bf16.msra.mxu0 %v2866
    %5035 = vmatpush.bf16.msra.mxu0 %v2858
    %5036 = vmatpush.bf16.msra.mxu0 %v2850
    %5037 = vmatpush.bf16.msra.mxu0 %v2842
    %5038 = vmatpush.bf16.msra.mxu0 %v2834
    %5039 = vmatpush.bf16.msra.mxu0 %v2826
    %5040 = vmatmul.bf16.gmra.mxu0 %v4940
    %v5041 = vpop.f32.mrf.mxu0
    %v5042 = vadd.f32 %v5029, %v5041
    %v5043 = vpop.f32.mrf.mxu0
    %5044 = vdwg.mxu0
    %5045 = vmatpush.bf16.msra.mxu0 %v2819
    %5046 = vmatpush.bf16.msra.mxu0 %v2811
    %5047 = vmatpush.bf16.msra.mxu0 %v2803
    %5048 = vmatpush.bf16.msra.mxu0 %v2795
    %5049 = vmatpush.bf16.msra.mxu0 %v2787
    %5050 = vmatpush.bf16.msra.mxu0 %v2779
    %5051 = vmatpush.bf16.msra.mxu0 %v2771
    %5052 = vmatpush.bf16.msra.mxu0 %v2763
    %5053 = vmatmul.bf16.gmra.mxu0 %v4939
    %v5054 = vpop.f32.mrf.mxu0
    %v5055 = vadd.f32 %v2363, %v5054
    %v5056 = vpop.f32.mrf.mxu0
    %5057 = vdwg.mxu0
    %5058 = vmatpush.bf16.msra.mxu0 %v2883
    %5059 = vmatpush.bf16.msra.mxu0 %v2875
    %5060 = vmatpush.bf16.msra.mxu0 %v2867
    %5061 = vmatpush.bf16.msra.mxu0 %v2859
    %5062 = vmatpush.bf16.msra.mxu0 %v2851
    %5063 = vmatpush.bf16.msra.mxu0 %v2843
    %5064 = vmatpush.bf16.msra.mxu0 %v2835
    %5065 = vmatpush.bf16.msra.mxu0 %v2827
    %5066 = vmatmul.bf16.gmra.mxu0 %v4940
    %v5067 = vpop.f32.mrf.mxu0
    %v5068 = vadd.f32 %v5055, %v5067
    %v5069 = vpop.f32.mrf.mxu0
    %5070 = vdwg.mxu0
    %5071 = vmatpush.bf16.msra.mxu0 %v2820
    %5072 = vmatpush.bf16.msra.mxu0 %v2812
    %5073 = vmatpush.bf16.msra.mxu0 %v2804
    %5074 = vmatpush.bf16.msra.mxu0 %v2796
    %5075 = vmatpush.bf16.msra.mxu0 %v2788
    %5076 = vmatpush.bf16.msra.mxu0 %v2780
    %5077 = vmatpush.bf16.msra.mxu0 %v2772
    %5078 = vmatpush.bf16.msra.mxu0 %v2764
    %5079 = vmatmul.bf16.gmra.mxu0 %v4939
    %v5080 = vpop.f32.mrf.mxu0
    %v5081 = vadd.f32 %v2364, %v5080
    %v5082 = vpop.f32.mrf.mxu0
    %5083 = vdwg.mxu0
    %5084 = vmatpush.bf16.msra.mxu0 %v2884
    %5085 = vmatpush.bf16.msra.mxu0 %v2876
    %5086 = vmatpush.bf16.msra.mxu0 %v2868
    %5087 = vmatpush.bf16.msra.mxu0 %v2860
    %5088 = vmatpush.bf16.msra.mxu0 %v2852
    %5089 = vmatpush.bf16.msra.mxu0 %v2844
    %5090 = vmatpush.bf16.msra.mxu0 %v2836
    %5091 = vmatpush.bf16.msra.mxu0 %v2828
    %5092 = vmatmul.bf16.gmra.mxu0 %v4940
    %v5093 = vpop.f32.mrf.mxu0
    %v5094 = vadd.f32 %v5081, %v5093
    %v5095 = vpop.f32.mrf.mxu0
    %5096 = vdwg.mxu0
    %5097 = vmatpush.bf16.msra.mxu0 %v2821
    %5098 = vmatpush.bf16.msra.mxu0 %v2813
    %5099 = vmatpush.bf16.msra.mxu0 %v2805
    %5100 = vmatpush.bf16.msra.mxu0 %v2797
    %5101 = vmatpush.bf16.msra.mxu0 %v2789
    %5102 = vmatpush.bf16.msra.mxu0 %v2781
    %5103 = vmatpush.bf16.msra.mxu0 %v2773
    %5104 = vmatpush.bf16.msra.mxu0 %v2765
    %5105 = vmatmul.bf16.gmra.mxu0 %v4939
    %v5106 = vpop.f32.mrf.mxu0
    %v5107 = vadd.f32 %v2365, %v5106
    %v5108 = vpop.f32.mrf.mxu0
    %5109 = vdwg.mxu0
    %5110 = vmatpush.bf16.msra.mxu0 %v2885
    %5111 = vmatpush.bf16.msra.mxu0 %v2877
    %5112 = vmatpush.bf16.msra.mxu0 %v2869
    %5113 = vmatpush.bf16.msra.mxu0 %v2861
    %5114 = vmatpush.bf16.msra.mxu0 %v2853
    %5115 = vmatpush.bf16.msra.mxu0 %v2845
    %5116 = vmatpush.bf16.msra.mxu0 %v2837
    %5117 = vmatpush.bf16.msra.mxu0 %v2829
    %5118 = vmatmul.bf16.gmra.mxu0 %v4940
    %v5119 = vpop.f32.mrf.mxu0
    %v5120 = vadd.f32 %v5107, %v5119
    %v5121 = vpop.f32.mrf.mxu0
    %5122 = vdwg.mxu0
    %5123 = vmatpush.bf16.msra.mxu0 %v2822
    %5124 = vmatpush.bf16.msra.mxu0 %v2814
    %5125 = vmatpush.bf16.msra.mxu0 %v2806
    %5126 = vmatpush.bf16.msra.mxu0 %v2798
    %5127 = vmatpush.bf16.msra.mxu0 %v2790
    %5128 = vmatpush.bf16.msra.mxu0 %v2782
    %5129 = vmatpush.bf16.msra.mxu0 %v2774
    %5130 = vmatpush.bf16.msra.mxu0 %v2766
    %5131 = vmatmul.bf16.gmra.mxu0 %v4939
    %v5132 = vpop.f32.mrf.mxu0
    %v5133 = vadd.f32 %v2366, %v5132
    %v5134 = vpop.f32.mrf.mxu0
    %5135 = vdwg.mxu0
    %5136 = vmatpush.bf16.msra.mxu0 %v2886
    %5137 = vmatpush.bf16.msra.mxu0 %v2878
    %5138 = vmatpush.bf16.msra.mxu0 %v2870
    %5139 = vmatpush.bf16.msra.mxu0 %v2862
    %5140 = vmatpush.bf16.msra.mxu0 %v2854
    %5141 = vmatpush.bf16.msra.mxu0 %v2846
    %5142 = vmatpush.bf16.msra.mxu0 %v2838
    %5143 = vmatpush.bf16.msra.mxu0 %v2830
    %5144 = vmatmul.bf16.gmra.mxu0 %v4940
    %v5145 = vpop.f32.mrf.mxu0
    %v5146 = vadd.f32 %v5133, %v5145
    %v5147 = vpop.f32.mrf.mxu0
    %5148 = vdwg.mxu0
    %v5149 = vld [vmem:[#allocation2 + $0x40] sm:$0xc]
    %v5150 = vld [vmem:[#allocation2 + $0x48] sm:$0xc]
    %v5151 = vld [vmem:[#allocation2 + $0x50] sm:$0xc]
    %v5152 = vld [vmem:[#allocation2 + $0x58] sm:$0xc]
    %v5157 = vrot.slane %v4964, 6
    %v5158 = vrot.slane %v4990, 6
    %v5159 = vrot.slane %v5016, 6
    %v5160 = vrot.slane %v5042, 6
    %v5165 = vadd.f32 %v5149, %v5157
    %v5166 = vadd.f32 %v5150, %v5158
    %v5167 = vadd.f32 %v5151, %v5159
    %v5168 = vadd.f32 %v5152, %v5160
    %v5169 = vld [vmem:[#allocation2 + $0x20] sm:$0x30]
    %v5170 = vld [vmem:[#allocation2 + $0x28] sm:$0x30]
    %v5171 = vld [vmem:[#allocation2 + $0x30] sm:$0x30]
    %v5172 = vld [vmem:[#allocation2 + $0x38] sm:$0x30]
    %v5177 = vrot.slane %v5068, 4
    %v5178 = vrot.slane %v5094, 4
    %v5179 = vrot.slane %v5120, 4
    %v5180 = vrot.slane %v5146, 4
    %v5185 = vadd.f32 %v5169, %v5177
    %v5186 = vadd.f32 %v5170, %v5178
    %v5187 = vadd.f32 %v5171, %v5179
    %v5188 = vadd.f32 %v5172, %v5180
    %v5189 = vxor.u32 %v5165, 2147483648
    %v5190 = vxor.u32 %v5166, 2147483648
    %v5191 = vxor.u32 %v5167, 2147483648
    %v5192 = vmul.f32 %v5189, 1.442695
    %v5193 = vpow.pop %v5192
    %v5194 = vmul.f32 %v5190, 1.442695
    %v5195 = vpow.pop %v5194
    %v5196 = vmul.f32 %v5191, 1.442695
    %v5197 = vpow.pop %v5196
    %v5198 = vadd.f32 %v5193, 1.0
    %v5199 = vadd.f32 %v5195, 1.0
    %v5200 = vadd.f32 %v5197, 1.0
    %v5201 = vrcp.pop %v5198
    %v5202 = vmul.f32 %v5198, %v5201
    %v5203 = vsub.f32 1.0, %v5202
    %v5204 = vmul.f32 %v5201, %v5203
    %v5205 = vadd.f32 %v5201, %v5204
    %vm5206 = vweird.f32 %v5198
    %vm5207 = vweird.f32 %v5201
    %vm5208 = vmor %vm5206, %vm5207
    %v5209 = vsel %vm5208, %v5201, %v5205
    %v5210 = vand.u32 2147483647, %v5198
    %vm5211 = vcmp.eq.f32.partialorder %v5210, 8.507059e+37
    %v5212 = vand.u32 %v5198, 2147483648
    %v5213 = vor.u32 1.1754944e-38, %v5212
    %v5214 = vsel %vm5211, %v5213, %v5209
    %v5215 = vmul.f32 1.0, %v5214
    %v5216 = vrcp.pop %v5199
    %v5217 = vmul.f32 %v5199, %v5216
    %v5218 = vsub.f32 1.0, %v5217
    %v5219 = vmul.f32 %v5216, %v5218
    %v5220 = vadd.f32 %v5216, %v5219
    %vm5221 = vweird.f32 %v5199
    %vm5222 = vweird.f32 %v5216
    %vm5223 = vmor %vm5221, %vm5222
    %v5224 = vsel %vm5223, %v5216, %v5220
    %v5225 = vand.u32 2147483647, %v5199
    %vm5226 = vcmp.eq.f32.partialorder %v5225, 8.507059e+37
    %v5227 = vand.u32 %v5199, 2147483648
    %v5228 = vor.u32 1.1754944e-38, %v5227
    %v5229 = vsel %vm5226, %v5228, %v5224
    %v5230 = vmul.f32 1.0, %v5229
    %v5231 = vrcp.pop %v5200
    %v5232 = vmul.f32 %v5200, %v5231
    %v5233 = vsub.f32 1.0, %v5232
    %v5234 = vmul.f32 %v5231, %v5233
    %v5235 = vadd.f32 %v5231, %v5234
    %vm5236 = vweird.f32 %v5200
    %vm5237 = vweird.f32 %v5231
    %vm5238 = vmor %vm5236, %vm5237
    %v5239 = vsel %vm5238, %v5231, %v5235
    %v5240 = vand.u32 2147483647, %v5200
    %vm5241 = vcmp.eq.f32.partialorder %v5240, 8.507059e+37
    %v5242 = vand.u32 %v5200, 2147483648
    %v5243 = vor.u32 1.1754944e-38, %v5242
    %v5244 = vsel %vm5241, %v5243, %v5239
    %v5245 = vmul.f32 1.0, %v5244
    %v5246 = vtanh.pop %v5168
    %v5248 = vrot.slane %v4865, 6
    %v5250 = vmul.f32 %v5230, %v5248
    %v5251 = vmul.f32 %v5215, %v5246
    %v5252 = vadd.f32 %v5250, %v5251
    %v5253 = vtanh.pop %v5252
    %v5254 = vmul.f32 %v5245, %v5253
    %v5255 = vxor.u32 %v5185, 2147483648
    %v5256 = vxor.u32 %v5186, 2147483648
    %v5257 = vxor.u32 %v5187, 2147483648
    %v5258 = vmul.f32 %v5255, 1.442695
    %v5259 = vpow.pop %v5258
    %v5260 = vmul.f32 %v5256, 1.442695
    %v5261 = vpow.pop %v5260
    %v5262 = vmul.f32 %v5257, 1.442695
    %v5263 = vpow.pop %v5262
    %v5264 = vadd.f32 %v5259, 1.0
    %v5265 = vadd.f32 %v5261, 1.0
    %v5266 = vadd.f32 %v5263, 1.0
    %v5267 = vrcp.pop %v5264
    %v5268 = vmul.f32 %v5264, %v5267
    %v5269 = vsub.f32 1.0, %v5268
    %v5270 = vmul.f32 %v5267, %v5269
    %v5271 = vadd.f32 %v5267, %v5270
    %vm5272 = vweird.f32 %v5264
    %vm5273 = vweird.f32 %v5267
    %vm5274 = vmor %vm5272, %vm5273
    %v5275 = vsel %vm5274, %v5267, %v5271
    %v5276 = vand.u32 2147483647, %v5264
    %vm5277 = vcmp.eq.f32.partialorder %v5276, 8.507059e+37
    %v5278 = vand.u32 %v5264, 2147483648
    %v5279 = vor.u32 1.1754944e-38, %v5278
    %v5280 = vsel %vm5277, %v5279, %v5275
    %v5281 = vmul.f32 1.0, %v5280
    %v5282 = vrcp.pop %v5265
    %v5283 = vmul.f32 %v5265, %v5282
    %v5284 = vsub.f32 1.0, %v5283
    %v5285 = vmul.f32 %v5282, %v5284
    %v5286 = vadd.f32 %v5282, %v5285
    %vm5287 = vweird.f32 %v5265
    %vm5288 = vweird.f32 %v5282
    %vm5289 = vmor %vm5287, %vm5288
    %v5290 = vsel %vm5289, %v5282, %v5286
    %v5291 = vand.u32 2147483647, %v5265
    %vm5292 = vcmp.eq.f32.partialorder %v5291, 8.507059e+37
    %v5293 = vand.u32 %v5265, 2147483648
    %v5294 = vor.u32 1.1754944e-38, %v5293
    %v5295 = vsel %vm5292, %v5294, %v5290
    %v5296 = vmul.f32 1.0, %v5295
    %v5297 = vrcp.pop %v5266
    %v5298 = vmul.f32 %v5266, %v5297
    %v5299 = vsub.f32 1.0, %v5298
    %v5300 = vmul.f32 %v5297, %v5299
    %v5301 = vadd.f32 %v5297, %v5300
    %vm5302 = vweird.f32 %v5266
    %vm5303 = vweird.f32 %v5297
    %vm5304 = vmor %vm5302, %vm5303
    %v5305 = vsel %vm5304, %v5297, %v5301
    %v5306 = vand.u32 2147483647, %v5266
    %vm5307 = vcmp.eq.f32.partialorder %v5306, 8.507059e+37
    %v5308 = vand.u32 %v5266, 2147483648
    %v5309 = vor.u32 1.1754944e-38, %v5308
    %v5310 = vsel %vm5307, %v5309, %v5305
    %v5311 = vmul.f32 1.0, %v5310
    %v5312 = vtanh.pop %v5188
    %v5314 = vrot.slane %v4931, 2
    %v5316 = vmul.f32 %v5296, %v5314
    %v5317 = vmul.f32 %v5281, %v5312
    %v5318 = vadd.f32 %v5316, %v5317
    %v5319 = vtanh.pop %v5318
    %v5320 = vmul.f32 %v5311, %v5319
    %v5322 = vrot.slane %v5320, 2
    %v5325 = vrot.slane %v5254, 2
    %v5326 = vrot.slane %v5322, 2
    %v5329 = vadd.f32 %v4937, %v5325
    %v5330 = vadd.f32 %v4938, %v5326
    %v5331 = vpack.c.bf16 %v5254, %v5254
    %v5332 = vpack.c.bf16 %v5322, %v5322
    %v5335 = vrot.slane %v5331, 1
    %v5336 = vrot.slane %v5332, 1
    %5339 = vmatpush.bf16.msra.mxu0 %v2815
    %5340 = vmatpush.bf16.msra.mxu0 %v2807
    %5341 = vmatpush.bf16.msra.mxu0 %v2799
    %5342 = vmatpush.bf16.msra.mxu0 %v2791
    %5343 = vmatpush.bf16.msra.mxu0 %v2783
    %5344 = vmatpush.bf16.msra.mxu0 %v2775
    %5345 = vmatpush.bf16.msra.mxu0 %v2767
    %5346 = vmatpush.bf16.msra.mxu0 %v2759
    %5347 = vmatmul.bf16.gmra.mxu0 %v5335
    %v5348 = vpop.f32.mrf.mxu0
    %v5349 = vadd.f32 %v2359, %v5348
    %v5350 = vpop.f32.mrf.mxu0
    %5351 = vdwg.mxu0
    %5352 = vmatpush.bf16.msra.mxu0 %v2879
    %5353 = vmatpush.bf16.msra.mxu0 %v2871
    %5354 = vmatpush.bf16.msra.mxu0 %v2863
    %5355 = vmatpush.bf16.msra.mxu0 %v2855
    %5356 = vmatpush.bf16.msra.mxu0 %v2847
    %5357 = vmatpush.bf16.msra.mxu0 %v2839
    %5358 = vmatpush.bf16.msra.mxu0 %v2831
    %5359 = vmatpush.bf16.msra.mxu0 %v2823
    %5360 = vmatmul.bf16.gmra.mxu0 %v5336
    %v5361 = vpop.f32.mrf.mxu0
    %v5362 = vadd.f32 %v5349, %v5361
    %v5363 = vpop.f32.mrf.mxu0
    %5364 = vdwg.mxu0
    %5365 = vmatpush.bf16.msra.mxu0 %v2816
    %5366 = vmatpush.bf16.msra.mxu0 %v2808
    %5367 = vmatpush.bf16.msra.mxu0 %v2800
    %5368 = vmatpush.bf16.msra.mxu0 %v2792
    %5369 = vmatpush.bf16.msra.mxu0 %v2784
    %5370 = vmatpush.bf16.msra.mxu0 %v2776
    %5371 = vmatpush.bf16.msra.mxu0 %v2768
    %5372 = vmatpush.bf16.msra.mxu0 %v2760
    %5373 = vmatmul.bf16.gmra.mxu0 %v5335
    %v5374 = vpop.f32.mrf.mxu0
    %v5375 = vadd.f32 %v2360, %v5374
    %v5376 = vpop.f32.mrf.mxu0
    %5377 = vdwg.mxu0
    %5378 = vmatpush.bf16.msra.mxu0 %v2880
    %5379 = vmatpush.bf16.msra.mxu0 %v2872
    %5380 = vmatpush.bf16.msra.mxu0 %v2864
    %5381 = vmatpush.bf16.msra.mxu0 %v2856
    %5382 = vmatpush.bf16.msra.mxu0 %v2848
    %5383 = vmatpush.bf16.msra.mxu0 %v2840
    %5384 = vmatpush.bf16.msra.mxu0 %v2832
    %5385 = vmatpush.bf16.msra.mxu0 %v2824
    %5386 = vmatmul.bf16.gmra.mxu0 %v5336
    %v5387 = vpop.f32.mrf.mxu0
    %v5388 = vadd.f32 %v5375, %v5387
    %v5389 = vpop.f32.mrf.mxu0
    %5390 = vdwg.mxu0
    %5391 = vmatpush.bf16.msra.mxu0 %v2817
    %5392 = vmatpush.bf16.msra.mxu0 %v2809
    %5393 = vmatpush.bf16.msra.mxu0 %v2801
    %5394 = vmatpush.bf16.msra.mxu0 %v2793
    %5395 = vmatpush.bf16.msra.mxu0 %v2785
    %5396 = vmatpush.bf16.msra.mxu0 %v2777
    %5397 = vmatpush.bf16.msra.mxu0 %v2769
    %5398 = vmatpush.bf16.msra.mxu0 %v2761
    %5399 = vmatmul.bf16.gmra.mxu0 %v5335
    %v5400 = vpop.f32.mrf.mxu0
    %v5401 = vadd.f32 %v2361, %v5400
    %v5402 = vpop.f32.mrf.mxu0
    %5403 = vdwg.mxu0
    %5404 = vmatpush.bf16.msra.mxu0 %v2881
    %5405 = vmatpush.bf16.msra.mxu0 %v2873
    %5406 = vmatpush.bf16.msra.mxu0 %v2865
    %5407 = vmatpush.bf16.msra.mxu0 %v2857
    %5408 = vmatpush.bf16.msra.mxu0 %v2849
    %5409 = vmatpush.bf16.msra.mxu0 %v2841
    %5410 = vmatpush.bf16.msra.mxu0 %v2833
    %5411 = vmatpush.bf16.msra.mxu0 %v2825
    %5412 = vmatmul.bf16.gmra.mxu0 %v5336
    %v5413 = vpop.f32.mrf.mxu0
    %v5414 = vadd.f32 %v5401, %v5413
    %v5415 = vpop.f32.mrf.mxu0
    %5416 = vdwg.mxu0
    %5417 = vmatpush.bf16.msra.mxu0 %v2818
    %5418 = vmatpush.bf16.msra.mxu0 %v2810
    %5419 = vmatpush.bf16.msra.mxu0 %v2802
    %5420 = vmatpush.bf16.msra.mxu0 %v2794
    %5421 = vmatpush.bf16.msra.mxu0 %v2786
    %5422 = vmatpush.bf16.msra.mxu0 %v2778
    %5423 = vmatpush.bf16.msra.mxu0 %v2770
    %5424 = vmatpush.bf16.msra.mxu0 %v2762
    %5425 = vmatmul.bf16.gmra.mxu0 %v5335
    %v5426 = vpop.f32.mrf.mxu0
    %v5427 = vadd.f32 %v2362, %v5426
    %v5428 = vpop.f32.mrf.mxu0
    %5429 = vdwg.mxu0
    %5430 = vmatpush.bf16.msra.mxu0 %v2882
    %5431 = vmatpush.bf16.msra.mxu0 %v2874
    %5432 = vmatpush.bf16.msra.mxu0 %v2866
    %5433 = vmatpush.bf16.msra.mxu0 %v2858
    %5434 = vmatpush.bf16.msra.mxu0 %v2850
    %5435 = vmatpush.bf16.msra.mxu0 %v2842
    %5436 = vmatpush.bf16.msra.mxu0 %v2834
    %5437 = vmatpush.bf16.msra.mxu0 %v2826
    %5438 = vmatmul.bf16.gmra.mxu0 %v5336
    %v5439 = vpop.f32.mrf.mxu0
    %v5440 = vadd.f32 %v5427, %v5439
    %v5441 = vpop.f32.mrf.mxu0
    %5442 = vdwg.mxu0
    %5443 = vmatpush.bf16.msra.mxu0 %v2819
    %5444 = vmatpush.bf16.msra.mxu0 %v2811
    %5445 = vmatpush.bf16.msra.mxu0 %v2803
    %5446 = vmatpush.bf16.msra.mxu0 %v2795
    %5447 = vmatpush.bf16.msra.mxu0 %v2787
    %5448 = vmatpush.bf16.msra.mxu0 %v2779
    %5449 = vmatpush.bf16.msra.mxu0 %v2771
    %5450 = vmatpush.bf16.msra.mxu0 %v2763
    %5451 = vmatmul.bf16.gmra.mxu0 %v5335
    %v5452 = vpop.f32.mrf.mxu0
    %v5453 = vadd.f32 %v2363, %v5452
    %v5454 = vpop.f32.mrf.mxu0
    %5455 = vdwg.mxu0
    %5456 = vmatpush.bf16.msra.mxu0 %v2883
    %5457 = vmatpush.bf16.msra.mxu0 %v2875
    %5458 = vmatpush.bf16.msra.mxu0 %v2867
    %5459 = vmatpush.bf16.msra.mxu0 %v2859
    %5460 = vmatpush.bf16.msra.mxu0 %v2851
    %5461 = vmatpush.bf16.msra.mxu0 %v2843
    %5462 = vmatpush.bf16.msra.mxu0 %v2835
    %5463 = vmatpush.bf16.msra.mxu0 %v2827
    %5464 = vmatmul.bf16.gmra.mxu0 %v5336
    %v5465 = vpop.f32.mrf.mxu0
    %v5466 = vadd.f32 %v5453, %v5465
    %v5467 = vpop.f32.mrf.mxu0
    %5468 = vdwg.mxu0
    %5469 = vmatpush.bf16.msra.mxu0 %v2820
    %5470 = vmatpush.bf16.msra.mxu0 %v2812
    %5471 = vmatpush.bf16.msra.mxu0 %v2804
    %5472 = vmatpush.bf16.msra.mxu0 %v2796
    %5473 = vmatpush.bf16.msra.mxu0 %v2788
    %5474 = vmatpush.bf16.msra.mxu0 %v2780
    %5475 = vmatpush.bf16.msra.mxu0 %v2772
    %5476 = vmatpush.bf16.msra.mxu0 %v2764
    %5477 = vmatmul.bf16.gmra.mxu0 %v5335
    %v5478 = vpop.f32.mrf.mxu0
    %v5479 = vadd.f32 %v2364, %v5478
    %v5480 = vpop.f32.mrf.mxu0
    %5481 = vdwg.mxu0
    %5482 = vmatpush.bf16.msra.mxu0 %v2884
    %5483 = vmatpush.bf16.msra.mxu0 %v2876
    %5484 = vmatpush.bf16.msra.mxu0 %v2868
    %5485 = vmatpush.bf16.msra.mxu0 %v2860
    %5486 = vmatpush.bf16.msra.mxu0 %v2852
    %5487 = vmatpush.bf16.msra.mxu0 %v2844
    %5488 = vmatpush.bf16.msra.mxu0 %v2836
    %5489 = vmatpush.bf16.msra.mxu0 %v2828
    %5490 = vmatmul.bf16.gmra.mxu0 %v5336
    %v5491 = vpop.f32.mrf.mxu0
    %v5492 = vadd.f32 %v5479, %v5491
    %v5493 = vpop.f32.mrf.mxu0
    %5494 = vdwg.mxu0
    %5495 = vmatpush.bf16.msra.mxu0 %v2821
    %5496 = vmatpush.bf16.msra.mxu0 %v2813
    %5497 = vmatpush.bf16.msra.mxu0 %v2805
    %5498 = vmatpush.bf16.msra.mxu0 %v2797
    %5499 = vmatpush.bf16.msra.mxu0 %v2789
    %5500 = vmatpush.bf16.msra.mxu0 %v2781
    %5501 = vmatpush.bf16.msra.mxu0 %v2773
    %5502 = vmatpush.bf16.msra.mxu0 %v2765
    %5503 = vmatmul.bf16.gmra.mxu0 %v5335
    %v5504 = vpop.f32.mrf.mxu0
    %v5505 = vadd.f32 %v2365, %v5504
    %v5506 = vpop.f32.mrf.mxu0
    %5507 = vdwg.mxu0
    %5508 = vmatpush.bf16.msra.mxu0 %v2885
    %5509 = vmatpush.bf16.msra.mxu0 %v2877
    %5510 = vmatpush.bf16.msra.mxu0 %v2869
    %5511 = vmatpush.bf16.msra.mxu0 %v2861
    %5512 = vmatpush.bf16.msra.mxu0 %v2853
    %5513 = vmatpush.bf16.msra.mxu0 %v2845
    %5514 = vmatpush.bf16.msra.mxu0 %v2837
    %5515 = vmatpush.bf16.msra.mxu0 %v2829
    %5516 = vmatmul.bf16.gmra.mxu0 %v5336
    %v5517 = vpop.f32.mrf.mxu0
    %v5518 = vadd.f32 %v5505, %v5517
    %v5519 = vpop.f32.mrf.mxu0
    %5520 = vdwg.mxu0
    %5521 = vmatpush.bf16.msra.mxu0 %v2822
    %5522 = vmatpush.bf16.msra.mxu0 %v2814
    %5523 = vmatpush.bf16.msra.mxu0 %v2806
    %5524 = vmatpush.bf16.msra.mxu0 %v2798
    %5525 = vmatpush.bf16.msra.mxu0 %v2790
    %5526 = vmatpush.bf16.msra.mxu0 %v2782
    %5527 = vmatpush.bf16.msra.mxu0 %v2774
    %5528 = vmatpush.bf16.msra.mxu0 %v2766
    %5529 = vmatmul.bf16.gmra.mxu0 %v5335
    %v5530 = vpop.f32.mrf.mxu0
    %v5531 = vadd.f32 %v2366, %v5530
    %v5532 = vpop.f32.mrf.mxu0
    %5533 = vdwg.mxu0
    %5534 = vmatpush.bf16.msra.mxu0 %v2886
    %5535 = vmatpush.bf16.msra.mxu0 %v2878
    %5536 = vmatpush.bf16.msra.mxu0 %v2870
    %5537 = vmatpush.bf16.msra.mxu0 %v2862
    %5538 = vmatpush.bf16.msra.mxu0 %v2854
    %5539 = vmatpush.bf16.msra.mxu0 %v2846
    %5540 = vmatpush.bf16.msra.mxu0 %v2838
    %5541 = vmatpush.bf16.msra.mxu0 %v2830
    %5542 = vmatmul.bf16.gmra.mxu0 %v5336
    %v5543 = vpop.f32.mrf.mxu0
    %v5544 = vadd.f32 %v5531, %v5543
    %v5545 = vpop.f32.mrf.mxu0
    %5546 = vdwg.mxu0
    %v5547 = vld [vmem:[#allocation2 + $0x40] sm:$0x30]
    %v5548 = vld [vmem:[#allocation2 + $0x48] sm:$0x30]
    %v5549 = vld [vmem:[#allocation2 + $0x50] sm:$0x30]
    %v5550 = vld [vmem:[#allocation2 + $0x58] sm:$0x30]
    %v5555 = vrot.slane %v5362, 4
    %v5556 = vrot.slane %v5388, 4
    %v5557 = vrot.slane %v5414, 4
    %v5558 = vrot.slane %v5440, 4
    %v5563 = vadd.f32 %v5547, %v5555
    %v5564 = vadd.f32 %v5548, %v5556
    %v5565 = vadd.f32 %v5549, %v5557
    %v5566 = vadd.f32 %v5550, %v5558
    %v5567 = vld [vmem:[#allocation2 + $0x20] sm:$0xc]
    %v5568 = vld [vmem:[#allocation2 + $0x28] sm:$0xc]
    %v5569 = vld [vmem:[#allocation2 + $0x30] sm:$0xc]
    %v5570 = vld [vmem:[#allocation2 + $0x38] sm:$0xc]
    %v5575 = vrot.slane %v5466, 6
    %v5576 = vrot.slane %v5492, 6
    %v5577 = vrot.slane %v5518, 6
    %v5578 = vrot.slane %v5544, 6
    %v5583 = vadd.f32 %v5567, %v5575
    %v5584 = vadd.f32 %v5568, %v5576
    %v5585 = vadd.f32 %v5569, %v5577
    %v5586 = vadd.f32 %v5570, %v5578
    %v5587 = vxor.u32 %v5563, 2147483648
    %v5588 = vxor.u32 %v5564, 2147483648
    %v5589 = vxor.u32 %v5565, 2147483648
    %v5590 = vmul.f32 %v5587, 1.442695
    %v5591 = vpow.pop %v5590
    %v5592 = vmul.f32 %v5588, 1.442695
    %v5593 = vpow.pop %v5592
    %v5594 = vmul.f32 %v5589, 1.442695
    %v5595 = vpow.pop %v5594
    %v5596 = vadd.f32 %v5591, 1.0
    %v5597 = vadd.f32 %v5593, 1.0
    %v5598 = vadd.f32 %v5595, 1.0
    %v5599 = vrcp.pop %v5596
    %v5600 = vmul.f32 %v5596, %v5599
    %v5601 = vsub.f32 1.0, %v5600
    %v5602 = vmul.f32 %v5599, %v5601
    %v5603 = vadd.f32 %v5599, %v5602
    %vm5604 = vweird.f32 %v5596
    %vm5605 = vweird.f32 %v5599
    %vm5606 = vmor %vm5604, %vm5605
    %v5607 = vsel %vm5606, %v5599, %v5603
    %v5608 = vand.u32 2147483647, %v5596
    %vm5609 = vcmp.eq.f32.partialorder %v5608, 8.507059e+37
    %v5610 = vand.u32 %v5596, 2147483648
    %v5611 = vor.u32 1.1754944e-38, %v5610
    %v5612 = vsel %vm5609, %v5611, %v5607
    %v5613 = vmul.f32 1.0, %v5612
    %v5614 = vrcp.pop %v5597
    %v5615 = vmul.f32 %v5597, %v5614
    %v5616 = vsub.f32 1.0, %v5615
    %v5617 = vmul.f32 %v5614, %v5616
    %v5618 = vadd.f32 %v5614, %v5617
    %vm5619 = vweird.f32 %v5597
    %vm5620 = vweird.f32 %v5614
    %vm5621 = vmor %vm5619, %vm5620
    %v5622 = vsel %vm5621, %v5614, %v5618
    %v5623 = vand.u32 2147483647, %v5597
    %vm5624 = vcmp.eq.f32.partialorder %v5623, 8.507059e+37
    %v5625 = vand.u32 %v5597, 2147483648
    %v5626 = vor.u32 1.1754944e-38, %v5625
    %v5627 = vsel %vm5624, %v5626, %v5622
    %v5628 = vmul.f32 1.0, %v5627
    %v5629 = vrcp.pop %v5598
    %v5630 = vmul.f32 %v5598, %v5629
    %v5631 = vsub.f32 1.0, %v5630
    %v5632 = vmul.f32 %v5629, %v5631
    %v5633 = vadd.f32 %v5629, %v5632
    %vm5634 = vweird.f32 %v5598
    %vm5635 = vweird.f32 %v5629
    %vm5636 = vmor %vm5634, %vm5635
    %v5637 = vsel %vm5636, %v5629, %v5633
    %v5638 = vand.u32 2147483647, %v5598
    %vm5639 = vcmp.eq.f32.partialorder %v5638, 8.507059e+37
    %v5640 = vand.u32 %v5598, 2147483648
    %v5641 = vor.u32 1.1754944e-38, %v5640
    %v5642 = vsel %vm5639, %v5641, %v5637
    %v5643 = vmul.f32 1.0, %v5642
    %v5644 = vtanh.pop %v5566
    %v5646 = vrot.slane %v5252, 6
    %v5648 = vmul.f32 %v5628, %v5646
    %v5649 = vmul.f32 %v5613, %v5644
    %v5650 = vadd.f32 %v5648, %v5649
    %v5651 = vtanh.pop %v5650
    %v5652 = vmul.f32 %v5643, %v5651
    %v5653 = vxor.u32 %v5583, 2147483648
    %v5654 = vxor.u32 %v5584, 2147483648
    %v5655 = vxor.u32 %v5585, 2147483648
    %v5656 = vmul.f32 %v5653, 1.442695
    %v5657 = vpow.pop %v5656
    %v5658 = vmul.f32 %v5654, 1.442695
    %v5659 = vpow.pop %v5658
    %v5660 = vmul.f32 %v5655, 1.442695
    %v5661 = vpow.pop %v5660
    %v5662 = vadd.f32 %v5657, 1.0
    %v5663 = vadd.f32 %v5659, 1.0
    %v5664 = vadd.f32 %v5661, 1.0
    %v5665 = vrcp.pop %v5662
    %v5666 = vmul.f32 %v5662, %v5665
    %v5667 = vsub.f32 1.0, %v5666
    %v5668 = vmul.f32 %v5665, %v5667
    %v5669 = vadd.f32 %v5665, %v5668
    %vm5670 = vweird.f32 %v5662
    %vm5671 = vweird.f32 %v5665
    %vm5672 = vmor %vm5670, %vm5671
    %v5673 = vsel %vm5672, %v5665, %v5669
    %v5674 = vand.u32 2147483647, %v5662
    %vm5675 = vcmp.eq.f32.partialorder %v5674, 8.507059e+37
    %v5676 = vand.u32 %v5662, 2147483648
    %v5677 = vor.u32 1.1754944e-38, %v5676
    %v5678 = vsel %vm5675, %v5677, %v5673
    %v5679 = vmul.f32 1.0, %v5678
    %v5680 = vrcp.pop %v5663
    %v5681 = vmul.f32 %v5663, %v5680
    %v5682 = vsub.f32 1.0, %v5681
    %v5683 = vmul.f32 %v5680, %v5682
    %v5684 = vadd.f32 %v5680, %v5683
    %vm5685 = vweird.f32 %v5663
    %vm5686 = vweird.f32 %v5680
    %vm5687 = vmor %vm5685, %vm5686
    %v5688 = vsel %vm5687, %v5680, %v5684
    %v5689 = vand.u32 2147483647, %v5663
    %vm5690 = vcmp.eq.f32.partialorder %v5689, 8.507059e+37
    %v5691 = vand.u32 %v5663, 2147483648
    %v5692 = vor.u32 1.1754944e-38, %v5691
    %v5693 = vsel %vm5690, %v5692, %v5688
    %v5694 = vmul.f32 1.0, %v5693
    %v5695 = vrcp.pop %v5664
    %v5696 = vmul.f32 %v5664, %v5695
    %v5697 = vsub.f32 1.0, %v5696
    %v5698 = vmul.f32 %v5695, %v5697
    %v5699 = vadd.f32 %v5695, %v5698
    %vm5700 = vweird.f32 %v5664
    %vm5701 = vweird.f32 %v5695
    %vm5702 = vmor %vm5700, %vm5701
    %v5703 = vsel %vm5702, %v5695, %v5699
    %v5704 = vand.u32 2147483647, %v5664
    %vm5705 = vcmp.eq.f32.partialorder %v5704, 8.507059e+37
    %v5706 = vand.u32 %v5664, 2147483648
    %v5707 = vor.u32 1.1754944e-38, %v5706
    %v5708 = vsel %vm5705, %v5707, %v5703
    %v5709 = vmul.f32 1.0, %v5708
    %v5710 = vtanh.pop %v5586
    %v5712 = vrot.slane %v5318, 2
    %v5714 = vmul.f32 %v5694, %v5712
    %v5715 = vmul.f32 %v5679, %v5710
    %v5716 = vadd.f32 %v5714, %v5715
    %v5717 = vtanh.pop %v5716
    %v5718 = vmul.f32 %v5709, %v5717
    %v5720 = vrot.slane %v5718, 6
    %v5723 = vrot.slane %v5652, 4
    %v5724 = vrot.slane %v5720, 4
    %v5727 = vadd.f32 %v5329, %v5723
    %v5728 = vadd.f32 %v5330, %v5724
    %v5729 = vpack.c.bf16 %v5652, %v5652
    %v5730 = vpack.c.bf16 %v5720, %v5720
    %v5733 = vrot.slane %v5729, 2
    %v5734 = vrot.slane %v5730, 2
    %5737 = vmatpush.bf16.msra.mxu0 %v2815
    %5738 = vmatpush.bf16.msra.mxu0 %v2807
    %5739 = vmatpush.bf16.msra.mxu0 %v2799
    %5740 = vmatpush.bf16.msra.mxu0 %v2791
    %5741 = vmatpush.bf16.msra.mxu0 %v2783
    %5742 = vmatpush.bf16.msra.mxu0 %v2775
    %5743 = vmatpush.bf16.msra.mxu0 %v2767
    %5744 = vmatpush.bf16.msra.mxu0 %v2759
    %5745 = vmatmul.bf16.gmra.mxu0 %v5733
    %v5746 = vpop.f32.mrf.mxu0
    %v5747 = vadd.f32 %v2359, %v5746
    %v5748 = vpop.f32.mrf.mxu0
    %5749 = vdwg.mxu0
    %5750 = vmatpush.bf16.msra.mxu0 %v2879
    %5751 = vmatpush.bf16.msra.mxu0 %v2871
    %5752 = vmatpush.bf16.msra.mxu0 %v2863
    %5753 = vmatpush.bf16.msra.mxu0 %v2855
    %5754 = vmatpush.bf16.msra.mxu0 %v2847
    %5755 = vmatpush.bf16.msra.mxu0 %v2839
    %5756 = vmatpush.bf16.msra.mxu0 %v2831
    %5757 = vmatpush.bf16.msra.mxu0 %v2823
    %5758 = vmatmul.bf16.gmra.mxu0 %v5734
    %v5759 = vpop.f32.mrf.mxu0
    %v5760 = vadd.f32 %v5747, %v5759
    %v5761 = vpop.f32.mrf.mxu0
    %5762 = vdwg.mxu0
    %5763 = vmatpush.bf16.msra.mxu0 %v2816
    %5764 = vmatpush.bf16.msra.mxu0 %v2808
    %5765 = vmatpush.bf16.msra.mxu0 %v2800
    %5766 = vmatpush.bf16.msra.mxu0 %v2792
    %5767 = vmatpush.bf16.msra.mxu0 %v2784
    %5768 = vmatpush.bf16.msra.mxu0 %v2776
    %5769 = vmatpush.bf16.msra.mxu0 %v2768
    %5770 = vmatpush.bf16.msra.mxu0 %v2760
    %5771 = vmatmul.bf16.gmra.mxu0 %v5733
    %v5772 = vpop.f32.mrf.mxu0
    %v5773 = vadd.f32 %v2360, %v5772
    %v5774 = vpop.f32.mrf.mxu0
    %5775 = vdwg.mxu0
    %5776 = vmatpush.bf16.msra.mxu0 %v2880
    %5777 = vmatpush.bf16.msra.mxu0 %v2872
    %5778 = vmatpush.bf16.msra.mxu0 %v2864
    %5779 = vmatpush.bf16.msra.mxu0 %v2856
    %5780 = vmatpush.bf16.msra.mxu0 %v2848
    %5781 = vmatpush.bf16.msra.mxu0 %v2840
    %5782 = vmatpush.bf16.msra.mxu0 %v2832
    %5783 = vmatpush.bf16.msra.mxu0 %v2824
    %5784 = vmatmul.bf16.gmra.mxu0 %v5734
    %v5785 = vpop.f32.mrf.mxu0
    %v5786 = vadd.f32 %v5773, %v5785
    %v5787 = vpop.f32.mrf.mxu0
    %5788 = vdwg.mxu0
    %5789 = vmatpush.bf16.msra.mxu0 %v2817
    %5790 = vmatpush.bf16.msra.mxu0 %v2809
    %5791 = vmatpush.bf16.msra.mxu0 %v2801
    %5792 = vmatpush.bf16.msra.mxu0 %v2793
    %5793 = vmatpush.bf16.msra.mxu0 %v2785
    %5794 = vmatpush.bf16.msra.mxu0 %v2777
    %5795 = vmatpush.bf16.msra.mxu0 %v2769
    %5796 = vmatpush.bf16.msra.mxu0 %v2761
    %5797 = vmatmul.bf16.gmra.mxu0 %v5733
    %v5798 = vpop.f32.mrf.mxu0
    %v5799 = vadd.f32 %v2361, %v5798
    %v5800 = vpop.f32.mrf.mxu0
    %5801 = vdwg.mxu0
    %5802 = vmatpush.bf16.msra.mxu0 %v2881
    %5803 = vmatpush.bf16.msra.mxu0 %v2873
    %5804 = vmatpush.bf16.msra.mxu0 %v2865
    %5805 = vmatpush.bf16.msra.mxu0 %v2857
    %5806 = vmatpush.bf16.msra.mxu0 %v2849
    %5807 = vmatpush.bf16.msra.mxu0 %v2841
    %5808 = vmatpush.bf16.msra.mxu0 %v2833
    %5809 = vmatpush.bf16.msra.mxu0 %v2825
    %5810 = vmatmul.bf16.gmra.mxu0 %v5734
    %v5811 = vpop.f32.mrf.mxu0
    %v5812 = vadd.f32 %v5799, %v5811
    %v5813 = vpop.f32.mrf.mxu0
    %5814 = vdwg.mxu0
    %5815 = vmatpush.bf16.msra.mxu0 %v2818
    %5816 = vmatpush.bf16.msra.mxu0 %v2810
    %5817 = vmatpush.bf16.msra.mxu0 %v2802
    %5818 = vmatpush.bf16.msra.mxu0 %v2794
    %5819 = vmatpush.bf16.msra.mxu0 %v2786
    %5820 = vmatpush.bf16.msra.mxu0 %v2778
    %5821 = vmatpush.bf16.msra.mxu0 %v2770
    %5822 = vmatpush.bf16.msra.mxu0 %v2762
    %5823 = vmatmul.bf16.gmra.mxu0 %v5733
    %v5824 = vpop.f32.mrf.mxu0
    %v5825 = vadd.f32 %v2362, %v5824
    %v5826 = vpop.f32.mrf.mxu0
    %5827 = vdwg.mxu0
    %5828 = vmatpush.bf16.msra.mxu0 %v2882
    %5829 = vmatpush.bf16.msra.mxu0 %v2874
    %5830 = vmatpush.bf16.msra.mxu0 %v2866
    %5831 = vmatpush.bf16.msra.mxu0 %v2858
    %5832 = vmatpush.bf16.msra.mxu0 %v2850
    %5833 = vmatpush.bf16.msra.mxu0 %v2842
    %5834 = vmatpush.bf16.msra.mxu0 %v2834
    %5835 = vmatpush.bf16.msra.mxu0 %v2826
    %5836 = vmatmul.bf16.gmra.mxu0 %v5734
    %v5837 = vpop.f32.mrf.mxu0
    %v5838 = vadd.f32 %v5825, %v5837
    %v5839 = vpop.f32.mrf.mxu0
    %5840 = vdwg.mxu0
    %5841 = vmatpush.bf16.msra.mxu0 %v2819
    %5842 = vmatpush.bf16.msra.mxu0 %v2811
    %5843 = vmatpush.bf16.msra.mxu0 %v2803
    %5844 = vmatpush.bf16.msra.mxu0 %v2795
    %5845 = vmatpush.bf16.msra.mxu0 %v2787
    %5846 = vmatpush.bf16.msra.mxu0 %v2779
    %5847 = vmatpush.bf16.msra.mxu0 %v2771
    %5848 = vmatpush.bf16.msra.mxu0 %v2763
    %5849 = vmatmul.bf16.gmra.mxu0 %v5733
    %v5850 = vpop.f32.mrf.mxu0
    %v5851 = vadd.f32 %v2363, %v5850
    %v5852 = vpop.f32.mrf.mxu0
    %5853 = vdwg.mxu0
    %5854 = vmatpush.bf16.msra.mxu0 %v2883
    %5855 = vmatpush.bf16.msra.mxu0 %v2875
    %5856 = vmatpush.bf16.msra.mxu0 %v2867
    %5857 = vmatpush.bf16.msra.mxu0 %v2859
    %5858 = vmatpush.bf16.msra.mxu0 %v2851
    %5859 = vmatpush.bf16.msra.mxu0 %v2843
    %5860 = vmatpush.bf16.msra.mxu0 %v2835
    %5861 = vmatpush.bf16.msra.mxu0 %v2827
    %5862 = vmatmul.bf16.gmra.mxu0 %v5734
    %v5863 = vpop.f32.mrf.mxu0
    %v5864 = vadd.f32 %v5851, %v5863
    %v5865 = vpop.f32.mrf.mxu0
    %5866 = vdwg.mxu0
    %5867 = vmatpush.bf16.msra.mxu0 %v2820
    %5868 = vmatpush.bf16.msra.mxu0 %v2812
    %5869 = vmatpush.bf16.msra.mxu0 %v2804
    %5870 = vmatpush.bf16.msra.mxu0 %v2796
    %5871 = vmatpush.bf16.msra.mxu0 %v2788
    %5872 = vmatpush.bf16.msra.mxu0 %v2780
    %5873 = vmatpush.bf16.msra.mxu0 %v2772
    %5874 = vmatpush.bf16.msra.mxu0 %v2764
    %5875 = vmatmul.bf16.gmra.mxu0 %v5733
    %v5876 = vpop.f32.mrf.mxu0
    %v5877 = vadd.f32 %v2364, %v5876
    %v5878 = vpop.f32.mrf.mxu0
    %5879 = vdwg.mxu0
    %5880 = vmatpush.bf16.msra.mxu0 %v2884
    %5881 = vmatpush.bf16.msra.mxu0 %v2876
    %5882 = vmatpush.bf16.msra.mxu0 %v2868
    %5883 = vmatpush.bf16.msra.mxu0 %v2860
    %5884 = vmatpush.bf16.msra.mxu0 %v2852
    %5885 = vmatpush.bf16.msra.mxu0 %v2844
    %5886 = vmatpush.bf16.msra.mxu0 %v2836
    %5887 = vmatpush.bf16.msra.mxu0 %v2828
    %5888 = vmatmul.bf16.gmra.mxu0 %v5734
    %v5889 = vpop.f32.mrf.mxu0
    %v5890 = vadd.f32 %v5877, %v5889
    %v5891 = vpop.f32.mrf.mxu0
    %5892 = vdwg.mxu0
    %5893 = vmatpush.bf16.msra.mxu0 %v2821
    %5894 = vmatpush.bf16.msra.mxu0 %v2813
    %5895 = vmatpush.bf16.msra.mxu0 %v2805
    %5896 = vmatpush.bf16.msra.mxu0 %v2797
    %5897 = vmatpush.bf16.msra.mxu0 %v2789
    %5898 = vmatpush.bf16.msra.mxu0 %v2781
    %5899 = vmatpush.bf16.msra.mxu0 %v2773
    %5900 = vmatpush.bf16.msra.mxu0 %v2765
    %5901 = vmatmul.bf16.gmra.mxu0 %v5733
    %v5902 = vpop.f32.mrf.mxu0
    %v5903 = vadd.f32 %v2365, %v5902
    %v5904 = vpop.f32.mrf.mxu0
    %5905 = vdwg.mxu0
    %5906 = vmatpush.bf16.msra.mxu0 %v2885
    %5907 = vmatpush.bf16.msra.mxu0 %v2877
    %5908 = vmatpush.bf16.msra.mxu0 %v2869
    %5909 = vmatpush.bf16.msra.mxu0 %v2861
    %5910 = vmatpush.bf16.msra.mxu0 %v2853
    %5911 = vmatpush.bf16.msra.mxu0 %v2845
    %5912 = vmatpush.bf16.msra.mxu0 %v2837
    %5913 = vmatpush.bf16.msra.mxu0 %v2829
    %5914 = vmatmul.bf16.gmra.mxu0 %v5734
    %v5915 = vpop.f32.mrf.mxu0
    %v5916 = vadd.f32 %v5903, %v5915
    %v5917 = vpop.f32.mrf.mxu0
    %5918 = vdwg.mxu0
    %5919 = vmatpush.bf16.msra.mxu0 %v2822
    %5920 = vmatpush.bf16.msra.mxu0 %v2814
    %5921 = vmatpush.bf16.msra.mxu0 %v2806
    %5922 = vmatpush.bf16.msra.mxu0 %v2798
    %5923 = vmatpush.bf16.msra.mxu0 %v2790
    %5924 = vmatpush.bf16.msra.mxu0 %v2782
    %5925 = vmatpush.bf16.msra.mxu0 %v2774
    %5926 = vmatpush.bf16.msra.mxu0 %v2766
    %5927 = vmatmul.bf16.gmra.mxu0 %v5733
    %v5928 = vpop.f32.mrf.mxu0
    %v5929 = vadd.f32 %v2366, %v5928
    %v5930 = vpop.f32.mrf.mxu0
    %5931 = vdwg.mxu0
    %5932 = vmatpush.bf16.msra.mxu0 %v2886
    %5933 = vmatpush.bf16.msra.mxu0 %v2878
    %5934 = vmatpush.bf16.msra.mxu0 %v2870
    %5935 = vmatpush.bf16.msra.mxu0 %v2862
    %5936 = vmatpush.bf16.msra.mxu0 %v2854
    %5937 = vmatpush.bf16.msra.mxu0 %v2846
    %5938 = vmatpush.bf16.msra.mxu0 %v2838
    %5939 = vmatpush.bf16.msra.mxu0 %v2830
    %5940 = vmatmul.bf16.gmra.mxu0 %v5734
    %v5941 = vpop.f32.mrf.mxu0
    %v5942 = vadd.f32 %v5929, %v5941
    %v5943 = vpop.f32.mrf.mxu0
    %5944 = vdwg.mxu0
    %v5945 = vld [vmem:[#allocation2 + $0x40] sm:$0xc0]
    %v5946 = vld [vmem:[#allocation2 + $0x48] sm:$0xc0]
    %v5947 = vld [vmem:[#allocation2 + $0x50] sm:$0xc0]
    %v5948 = vld [vmem:[#allocation2 + $0x58] sm:$0xc0]
    %v5953 = vrot.slane %v5760, 2
    %v5954 = vrot.slane %v5786, 2
    %v5955 = vrot.slane %v5812, 2
    %v5956 = vrot.slane %v5838, 2
    %v5961 = vadd.f32 %v5945, %v5953
    %v5962 = vadd.f32 %v5946, %v5954
    %v5963 = vadd.f32 %v5947, %v5955
    %v5964 = vadd.f32 %v5948, %v5956
    %v5965 = vld [vmem:[#allocation2 + $0x20] sm:$0x3]
    %v5966 = vld [vmem:[#allocation2 + $0x28] sm:$0x3]
    %v5967 = vld [vmem:[#allocation2 + $0x30] sm:$0x3]
    %v5968 = vld [vmem:[#allocation2 + $0x38] sm:$0x3]
    %v5969 = vadd.f32 %v5965, %v5864
    %v5970 = vadd.f32 %v5966, %v5890
    %v5971 = vadd.f32 %v5967, %v5916
    %v5972 = vadd.f32 %v5968, %v5942
    %v5973 = vxor.u32 %v5961, 2147483648
    %v5974 = vxor.u32 %v5962, 2147483648
    %v5975 = vxor.u32 %v5963, 2147483648
    %v5976 = vmul.f32 %v5973, 1.442695
    %v5977 = vpow.pop %v5976
    %v5978 = vmul.f32 %v5974, 1.442695
    %v5979 = vpow.pop %v5978
    %v5980 = vmul.f32 %v5975, 1.442695
    %v5981 = vpow.pop %v5980
    %v5982 = vadd.f32 %v5977, 1.0
    %v5983 = vadd.f32 %v5979, 1.0
    %v5984 = vadd.f32 %v5981, 1.0
    %v5985 = vrcp.pop %v5982
    %v5986 = vmul.f32 %v5982, %v5985
    %v5987 = vsub.f32 1.0, %v5986
    %v5988 = vmul.f32 %v5985, %v5987
    %v5989 = vadd.f32 %v5985, %v5988
    %vm5990 = vweird.f32 %v5982
    %vm5991 = vweird.f32 %v5985
    %vm5992 = vmor %vm5990, %vm5991
    %v5993 = vsel %vm5992, %v5985, %v5989
    %v5994 = vand.u32 2147483647, %v5982
    %vm5995 = vcmp.eq.f32.partialorder %v5994, 8.507059e+37
    %v5996 = vand.u32 %v5982, 2147483648
    %v5997 = vor.u32 1.1754944e-38, %v5996
    %v5998 = vsel %vm5995, %v5997, %v5993
    %v5999 = vmul.f32 1.0, %v5998
    %v6000 = vrcp.pop %v5983
    %v6001 = vmul.f32 %v5983, %v6000
    %v6002 = vsub.f32 1.0, %v6001
    %v6003 = vmul.f32 %v6000, %v6002
    %v6004 = vadd.f32 %v6000, %v6003
    %vm6005 = vweird.f32 %v5983
    %vm6006 = vweird.f32 %v6000
    %vm6007 = vmor %vm6005, %vm6006
    %v6008 = vsel %vm6007, %v6000, %v6004
    %v6009 = vand.u32 2147483647, %v5983
    %vm6010 = vcmp.eq.f32.partialorder %v6009, 8.507059e+37
    %v6011 = vand.u32 %v5983, 2147483648
    %v6012 = vor.u32 1.1754944e-38, %v6011
    %v6013 = vsel %vm6010, %v6012, %v6008
    %v6014 = vmul.f32 1.0, %v6013
    %v6015 = vrcp.pop %v5984
    %v6016 = vmul.f32 %v5984, %v6015
    %v6017 = vsub.f32 1.0, %v6016
    %v6018 = vmul.f32 %v6015, %v6017
    %v6019 = vadd.f32 %v6015, %v6018
    %vm6020 = vweird.f32 %v5984
    %vm6021 = vweird.f32 %v6015
    %vm6022 = vmor %vm6020, %vm6021
    %v6023 = vsel %vm6022, %v6015, %v6019
    %v6024 = vand.u32 2147483647, %v5984
    %vm6025 = vcmp.eq.f32.partialorder %v6024, 8.507059e+37
    %v6026 = vand.u32 %v5984, 2147483648
    %v6027 = vor.u32 1.1754944e-38, %v6026
    %v6028 = vsel %vm6025, %v6027, %v6023
    %v6029 = vmul.f32 1.0, %v6028
    %v6030 = vtanh.pop %v5964
    %v6032 = vrot.slane %v5650, 6
    %v6034 = vmul.f32 %v6014, %v6032
    %v6035 = vmul.f32 %v5999, %v6030
    %v6036 = vadd.f32 %v6034, %v6035
    %v6037 = vtanh.pop %v6036
    %v6038 = vmul.f32 %v6029, %v6037
    %v6039 = vxor.u32 %v5969, 2147483648
    %v6040 = vxor.u32 %v5970, 2147483648
    %v6041 = vxor.u32 %v5971, 2147483648
    %v6042 = vmul.f32 %v6039, 1.442695
    %v6043 = vpow.pop %v6042
    %v6044 = vmul.f32 %v6040, 1.442695
    %v6045 = vpow.pop %v6044
    %v6046 = vmul.f32 %v6041, 1.442695
    %v6047 = vpow.pop %v6046
    %v6048 = vadd.f32 %v6043, 1.0
    %v6049 = vadd.f32 %v6045, 1.0
    %v6050 = vadd.f32 %v6047, 1.0
    %v6051 = vrcp.pop %v6048
    %v6052 = vmul.f32 %v6048, %v6051
    %v6053 = vsub.f32 1.0, %v6052
    %v6054 = vmul.f32 %v6051, %v6053
    %v6055 = vadd.f32 %v6051, %v6054
    %vm6056 = vweird.f32 %v6048
    %vm6057 = vweird.f32 %v6051
    %vm6058 = vmor %vm6056, %vm6057
    %v6059 = vsel %vm6058, %v6051, %v6055
    %v6060 = vand.u32 2147483647, %v6048
    %vm6061 = vcmp.eq.f32.partialorder %v6060, 8.507059e+37
    %v6062 = vand.u32 %v6048, 2147483648
    %v6063 = vor.u32 1.1754944e-38, %v6062
    %v6064 = vsel %vm6061, %v6063, %v6059
    %v6065 = vmul.f32 1.0, %v6064
    %v6066 = vrcp.pop %v6049
    %v6067 = vmul.f32 %v6049, %v6066
    %v6068 = vsub.f32 1.0, %v6067
    %v6069 = vmul.f32 %v6066, %v6068
    %v6070 = vadd.f32 %v6066, %v6069
    %vm6071 = vweird.f32 %v6049
    %vm6072 = vweird.f32 %v6066
    %vm6073 = vmor %vm6071, %vm6072
    %v6074 = vsel %vm6073, %v6066, %v6070
    %v6075 = vand.u32 2147483647, %v6049
    %vm6076 = vcmp.eq.f32.partialorder %v6075, 8.507059e+37
    %v6077 = vand.u32 %v6049, 2147483648
    %v6078 = vor.u32 1.1754944e-38, %v6077
    %v6079 = vsel %vm6076, %v6078, %v6074
    %v6080 = vmul.f32 1.0, %v6079
    %v6081 = vrcp.pop %v6050
    %v6082 = vmul.f32 %v6050, %v6081
    %v6083 = vsub.f32 1.0, %v6082
    %v6084 = vmul.f32 %v6081, %v6083
    %v6085 = vadd.f32 %v6081, %v6084
    %vm6086 = vweird.f32 %v6050
    %vm6087 = vweird.f32 %v6081
    %vm6088 = vmor %vm6086, %vm6087
    %v6089 = vsel %vm6088, %v6081, %v6085
    %v6090 = vand.u32 2147483647, %v6050
    %vm6091 = vcmp.eq.f32.partialorder %v6090, 8.507059e+37
    %v6092 = vand.u32 %v6050, 2147483648
    %v6093 = vor.u32 1.1754944e-38, %v6092
    %v6094 = vsel %vm6091, %v6093, %v6089
    %v6095 = vmul.f32 1.0, %v6094
    %v6096 = vtanh.pop %v5972
    %v6098 = vrot.slane %v5716, 2
    %v6100 = vmul.f32 %v6080, %v6098
    %v6101 = vmul.f32 %v6065, %v6096
    %v6102 = vadd.f32 %v6100, %v6101
    %v6103 = vtanh.pop %v6102
    %v6104 = vmul.f32 %v6095, %v6103
    %v6106 = vrot.slane %v6104, 2
    %v6108 = vrot.slane %v6038, 6
    %v6109 = vrot.slane %v6106, 6
    %v6112 = vadd.f32 %v5727, %v6108
    %v6113 = vadd.f32 %v5728, %v6109
    %v6114 = vmul.f32 %v6112, 0.125
    %v6115 = vmul.f32 %v6113, 0.125
    %v6116 = vld [vmem:[%s5 + $0x1a] sm:$0x1]
    %v6117 = vld [vmem:[%s5 + $0x1b] sm:$0x1]
    %v6118 = vld [vmem:[%s5 + $0x1c] sm:$0x1]
    %v6119 = vld [vmem:[%s5 + $0x1d] sm:$0x1]
    %v6120 = vpack.c.bf16 %v6114, %v6114
    %v6121 = vpack.c.bf16 %v6115, %v6115
    %v6122 = vld [vmem:[#allocation8] sm:$0xf]
    %v6123 = vld [vmem:[#allocation8 + $0x4] sm:$0xf]
    %v6124 = vld [vmem:[#allocation8 + $0x8] sm:$0xf]
    %v6125 = vld [vmem:[#allocation8 + $0xc] sm:$0xf]
    %v6126 = vld [vmem:[#allocation8 + $0x10] sm:$0xf]
    %v6127 = vld [vmem:[#allocation8 + $0x14] sm:$0xf]
    %v6128 = vld [vmem:[#allocation8 + $0x18] sm:$0xf]
    %v6129 = vld [vmem:[#allocation8 + $0x1c] sm:$0xf]
    %v6130 = vld [vmem:[#allocation8 + $0x20] sm:$0xf]
    %v6131 = vld [vmem:[#allocation8 + $0x24] sm:$0xf]
    %v6132 = vld [vmem:[#allocation8 + $0x28] sm:$0xf]
    %v6133 = vld [vmem:[#allocation8 + $0x2c] sm:$0xf]
    %v6134 = vld [vmem:[#allocation8 + $0x30] sm:$0xf]
    %v6135 = vld [vmem:[#allocation8 + $0x34] sm:$0xf]
    %v6136 = vld [vmem:[#allocation8 + $0x38] sm:$0xf]
    %v6137 = vld [vmem:[#allocation8 + $0x3c] sm:$0xf]
    %v6138 = vld [vmem:[#allocation8 + $0x40] sm:$0xf]
    %v6139 = vld [vmem:[#allocation8 + $0x44] sm:$0xf]
    %v6140 = vld [vmem:[#allocation8 + $0x48] sm:$0xf]
    %v6141 = vld [vmem:[#allocation8 + $0x4c] sm:$0xf]
    %v6142 = vld [vmem:[#allocation8 + $0x50] sm:$0xf]
    %v6143 = vld [vmem:[#allocation8 + $0x54] sm:$0xf]
    %v6144 = vld [vmem:[#allocation8 + $0x58] sm:$0xf]
    %v6145 = vld [vmem:[#allocation8 + $0x5c] sm:$0xf]
    %v6146 = vld [vmem:[#allocation8 + $0x60] sm:$0xf]
    %v6147 = vld [vmem:[#allocation8 + $0x64] sm:$0xf]
    %v6148 = vld [vmem:[#allocation8 + $0x68] sm:$0xf]
    %v6149 = vld [vmem:[#allocation8 + $0x6c] sm:$0xf]
    %v6150 = vld [vmem:[#allocation8 + $0x70] sm:$0xf]
    %v6151 = vld [vmem:[#allocation8 + $0x74] sm:$0xf]
    %v6152 = vld [vmem:[#allocation8 + $0x78] sm:$0xf]
    %v6153 = vld [vmem:[#allocation8 + $0x7c] sm:$0xf]
    %v6154 = vperm.slane %v6116, 0
    %v6187 = vunpack.c.l.b16 %v6122
    %v6188 = vunpack.c.l.b16 %v6123
    %v6189 = vunpack.c.l.b16 %v6124
    %v6190 = vunpack.c.l.b16 %v6125
    %v6191 = vunpack.c.l.b16 %v6126
    %v6192 = vunpack.c.l.b16 %v6127
    %v6193 = vunpack.c.l.b16 %v6128
    %v6194 = vunpack.c.l.b16 %v6129
    %v6195 = vunpack.c.l.b16 %v6130
    %v6196 = vunpack.c.l.b16 %v6131
    %v6197 = vunpack.c.l.b16 %v6132
    %v6198 = vunpack.c.l.b16 %v6133
    %v6199 = vunpack.c.l.b16 %v6134
    %v6200 = vunpack.c.l.b16 %v6135
    %v6201 = vunpack.c.l.b16 %v6136
    %v6202 = vunpack.c.l.b16 %v6137
    %v6203 = vunpack.c.l.b16 %v6138
    %v6204 = vunpack.c.l.b16 %v6139
    %v6205 = vunpack.c.l.b16 %v6140
    %v6206 = vunpack.c.l.b16 %v6141
    %v6207 = vunpack.c.l.b16 %v6142
    %v6208 = vunpack.c.l.b16 %v6143
    %v6209 = vunpack.c.l.b16 %v6144
    %v6210 = vunpack.c.l.b16 %v6145
    %v6211 = vunpack.c.l.b16 %v6146
    %v6212 = vunpack.c.l.b16 %v6147
    %v6213 = vunpack.c.l.b16 %v6148
    %v6214 = vunpack.c.l.b16 %v6149
    %v6215 = vunpack.c.l.b16 %v6150
    %v6216 = vunpack.c.l.b16 %v6151
    %v6217 = vunpack.c.l.b16 %v6152
    %v6218 = vunpack.c.l.b16 %v6153
    %v6219 = vpack.c.b16 %v6188, %v6187
    %v6220 = vpack.c.b16 %v6190, %v6189
    %v6221 = vpack.c.b16 %v6192, %v6191
    %v6222 = vpack.c.b16 %v6194, %v6193
    %v6223 = vpack.c.b16 %v6196, %v6195
    %v6224 = vpack.c.b16 %v6198, %v6197
    %v6225 = vpack.c.b16 %v6200, %v6199
    %v6226 = vpack.c.b16 %v6202, %v6201
    %v6227 = vpack.c.b16 %v6204, %v6203
    %v6228 = vpack.c.b16 %v6206, %v6205
    %v6229 = vpack.c.b16 %v6208, %v6207
    %v6230 = vpack.c.b16 %v6210, %v6209
    %v6231 = vpack.c.b16 %v6212, %v6211
    %v6232 = vpack.c.b16 %v6214, %v6213
    %v6233 = vpack.c.b16 %v6216, %v6215
    %v6234 = vpack.c.b16 %v6218, %v6217
    %6251 = vmatpush.bf16.msra.mxu0 %v6226
    %6252 = vmatpush.bf16.msra.mxu0 %v6225
    %6253 = vmatpush.bf16.msra.mxu0 %v6224
    %6254 = vmatpush.bf16.msra.mxu0 %v6223
    %6255 = vmatpush.bf16.msra.mxu0 %v6222
    %6256 = vmatpush.bf16.msra.mxu0 %v6221
    %6257 = vmatpush.bf16.msra.mxu0 %v6220
    %6258 = vmatpush.bf16.msra.mxu0 %v6219
    %6259 = vmatmul.bf16.gmra.mxu0 %v6120
    %v6260 = vpop.f32.mrf.mxu0
    %v6261 = vadd.f32 %v6154, %v6260
    %v6262 = vpop.f32.mrf.mxu0
    %6263 = vdwg.mxu0
    %6264 = vmatpush.bf16.msra.mxu0 %v6234
    %6265 = vmatpush.bf16.msra.mxu0 %v6233
    %6266 = vmatpush.bf16.msra.mxu0 %v6232
    %6267 = vmatpush.bf16.msra.mxu0 %v6231
    %6268 = vmatpush.bf16.msra.mxu0 %v6230
    %6269 = vmatpush.bf16.msra.mxu0 %v6229
    %6270 = vmatpush.bf16.msra.mxu0 %v6228
    %6271 = vmatpush.bf16.msra.mxu0 %v6227
    %6272 = vmatmul.bf16.gmra.mxu0 %v6121
    %v6273 = vpop.f32.mrf.mxu0
    %v6274 = vadd.f32 %v6261, %v6273
    %v6275 = vpop.f32.mrf.mxu0
    %6276 = vdwg.mxu0
    %v6277 = vmax.f32 %v6274, 0.0
    %v6278 = vpack.c.bf16 %v6277, %v6277
    %v6279 = vld [vmem:[#allocation8 + $0x80] sm:$0xf]
    %v6280 = vld [vmem:[#allocation8 + $0x84] sm:$0xf]
    %v6281 = vld [vmem:[#allocation8 + $0x88] sm:$0xf]
    %v6282 = vld [vmem:[#allocation8 + $0x8c] sm:$0xf]
    %v6283 = vld [vmem:[#allocation8 + $0x90] sm:$0xf]
    %v6284 = vld [vmem:[#allocation8 + $0x94] sm:$0xf]
    %v6285 = vld [vmem:[#allocation8 + $0x98] sm:$0xf]
    %v6286 = vld [vmem:[#allocation8 + $0x9c] sm:$0xf]
    %v6287 = vld [vmem:[#allocation8 + $0xa0] sm:$0xf]
    %v6288 = vld [vmem:[#allocation8 + $0xa4] sm:$0xf]
    %v6289 = vld [vmem:[#allocation8 + $0xa8] sm:$0xf]
    %v6290 = vld [vmem:[#allocation8 + $0xac] sm:$0xf]
    %v6291 = vld [vmem:[#allocation8 + $0xb0] sm:$0xf]
    %v6292 = vld [vmem:[#allocation8 + $0xb4] sm:$0xf]
    %v6293 = vld [vmem:[#allocation8 + $0xb8] sm:$0xf]
    %v6294 = vld [vmem:[#allocation8 + $0xbc] sm:$0xf]
    %v6295 = vperm.slane %v6117, 0
    %v6312 = vunpack.c.l.b16 %v6279
    %v6313 = vunpack.c.l.b16 %v6280
    %v6314 = vunpack.c.l.b16 %v6281
    %v6315 = vunpack.c.l.b16 %v6282
    %v6316 = vunpack.c.l.b16 %v6283
    %v6317 = vunpack.c.l.b16 %v6284
    %v6318 = vunpack.c.l.b16 %v6285
    %v6319 = vunpack.c.l.b16 %v6286
    %v6320 = vunpack.c.l.b16 %v6287
    %v6321 = vunpack.c.l.b16 %v6288
    %v6322 = vunpack.c.l.b16 %v6289
    %v6323 = vunpack.c.l.b16 %v6290
    %v6324 = vunpack.c.l.b16 %v6291
    %v6325 = vunpack.c.l.b16 %v6292
    %v6326 = vunpack.c.l.b16 %v6293
    %v6327 = vunpack.c.l.b16 %v6294
    %v6328 = vpack.c.b16 %v6313, %v6312
    %v6329 = vpack.c.b16 %v6315, %v6314
    %v6330 = vpack.c.b16 %v6317, %v6316
    %v6331 = vpack.c.b16 %v6319, %v6318
    %v6332 = vpack.c.b16 %v6321, %v6320
    %v6333 = vpack.c.b16 %v6323, %v6322
    %v6334 = vpack.c.b16 %v6325, %v6324
    %v6335 = vpack.c.b16 %v6327, %v6326
    %6344 = vmatpush.bf16.msra.mxu0 %v6335
    %6345 = vmatpush.bf16.msra.mxu0 %v6334
    %6346 = vmatpush.bf16.msra.mxu0 %v6333
    %6347 = vmatpush.bf16.msra.mxu0 %v6332
    %6348 = vmatpush.bf16.msra.mxu0 %v6331
    %6349 = vmatpush.bf16.msra.mxu0 %v6330
    %6350 = vmatpush.bf16.msra.mxu0 %v6329
    %6351 = vmatpush.bf16.msra.mxu0 %v6328
    %6352 = vmatmul.bf16.gmra.mxu0 %v6278
    %v6353 = vpop.f32.mrf.mxu0
    %v6354 = vadd.f32 %v6295, %v6353
    %v6355 = vpop.f32.mrf.mxu0
    %6356 = vdwg.mxu0
    %v6357 = vmax.f32 %v6354, 0.0
    %v6358 = vpack.c.bf16 %v6357, %v6357
    %v6359 = vld [vmem:[#allocation8 + $0xc0] sm:$0xf]
    %v6360 = vld [vmem:[#allocation8 + $0xc4] sm:$0xf]
    %v6361 = vld [vmem:[#allocation8 + $0xc8] sm:$0xf]
    %v6362 = vld [vmem:[#allocation8 + $0xcc] sm:$0xf]
    %v6363 = vld [vmem:[#allocation8 + $0xd0] sm:$0xf]
    %v6364 = vld [vmem:[#allocation8 + $0xd4] sm:$0xf]
    %v6365 = vld [vmem:[#allocation8 + $0xd8] sm:$0xf]
    %v6366 = vld [vmem:[#allocation8 + $0xdc] sm:$0xf]
    %v6367 = vld [vmem:[#allocation8 + $0xe0] sm:$0xf]
    %v6368 = vld [vmem:[#allocation8 + $0xe4] sm:$0xf]
    %v6369 = vld [vmem:[#allocation8 + $0xe8] sm:$0xf]
    %v6370 = vld [vmem:[#allocation8 + $0xec] sm:$0xf]
    %v6371 = vld [vmem:[#allocation8 + $0xf0] sm:$0xf]
    %v6372 = vld [vmem:[#allocation8 + $0xf4] sm:$0xf]
    %v6373 = vld [vmem:[#allocation8 + $0xf8] sm:$0xf]
    %v6374 = vld [vmem:[#allocation8 + $0xfc] sm:$0xf]
    %v6375 = vperm.slane %v6118, 0
    %v6392 = vunpack.c.l.b16 %v6359
    %v6393 = vunpack.c.l.b16 %v6360
    %v6394 = vunpack.c.l.b16 %v6361
    %v6395 = vunpack.c.l.b16 %v6362
    %v6396 = vunpack.c.l.b16 %v6363
    %v6397 = vunpack.c.l.b16 %v6364
    %v6398 = vunpack.c.l.b16 %v6365
    %v6399 = vunpack.c.l.b16 %v6366
    %v6400 = vunpack.c.l.b16 %v6367
    %v6401 = vunpack.c.l.b16 %v6368
    %v6402 = vunpack.c.l.b16 %v6369
    %v6403 = vunpack.c.l.b16 %v6370
    %v6404 = vunpack.c.l.b16 %v6371
    %v6405 = vunpack.c.l.b16 %v6372
    %v6406 = vunpack.c.l.b16 %v6373
    %v6407 = vunpack.c.l.b16 %v6374
    %v6408 = vpack.c.b16 %v6393, %v6392
    %v6409 = vpack.c.b16 %v6395, %v6394
    %v6410 = vpack.c.b16 %v6397, %v6396
    %v6411 = vpack.c.b16 %v6399, %v6398
    %v6412 = vpack.c.b16 %v6401, %v6400
    %v6413 = vpack.c.b16 %v6403, %v6402
    %v6414 = vpack.c.b16 %v6405, %v6404
    %v6415 = vpack.c.b16 %v6407, %v6406
    %6424 = vmatpush.bf16.msra.mxu0 %v6415
    %6425 = vmatpush.bf16.msra.mxu0 %v6414
    %6426 = vmatpush.bf16.msra.mxu0 %v6413
    %6427 = vmatpush.bf16.msra.mxu0 %v6412
    %6428 = vmatpush.bf16.msra.mxu0 %v6411
    %6429 = vmatpush.bf16.msra.mxu0 %v6410
    %6430 = vmatpush.bf16.msra.mxu0 %v6409
    %6431 = vmatpush.bf16.msra.mxu0 %v6408
    %6432 = vmatmul.bf16.gmra.mxu0 %v6358
    %v6433 = vpop.f32.mrf.mxu0
    %v6434 = vadd.f32 %v6375, %v6433
    %v6435 = vpop.f32.mrf.mxu0
    %6436 = vdwg.mxu0
    %v6437 = vmax.f32 %v6434, 0.0
    %v6438 = vpack.c.bf16 %v6437, %v6437
    %v6439 = vld [vmem:[#allocation8 + $0x100] sm:$0xf]
    %v6440 = vld [vmem:[#allocation8 + $0x104] sm:$0xf]
    %v6441 = vld [vmem:[#allocation8 + $0x108] sm:$0xf]
    %v6442 = vld [vmem:[#allocation8 + $0x10c] sm:$0xf]
    %v6443 = vld [vmem:[#allocation8 + $0x110] sm:$0xf]
    %v6444 = vld [vmem:[#allocation8 + $0x114] sm:$0xf]
    %v6445 = vld [vmem:[#allocation8 + $0x118] sm:$0xf]
    %v6446 = vld [vmem:[#allocation8 + $0x11c] sm:$0xf]
    %v6447 = vld [vmem:[#allocation8 + $0x120] sm:$0xf]
    %v6448 = vld [vmem:[#allocation8 + $0x124] sm:$0xf]
    %v6449 = vld [vmem:[#allocation8 + $0x128] sm:$0xf]
    %v6450 = vld [vmem:[#allocation8 + $0x12c] sm:$0xf]
    %v6451 = vld [vmem:[#allocation8 + $0x130] sm:$0xf]
    %v6452 = vld [vmem:[#allocation8 + $0x134] sm:$0xf]
    %v6453 = vld [vmem:[#allocation8 + $0x138] sm:$0xf]
    %v6454 = vld [vmem:[#allocation8 + $0x13c] sm:$0xf]
    %v6455 = vperm.slane %v6119, 0
    %v6472 = vunpack.c.l.b16 %v6439
    %v6473 = vunpack.c.l.b16 %v6440
    %v6474 = vunpack.c.l.b16 %v6441
    %v6475 = vunpack.c.l.b16 %v6442
    %v6476 = vunpack.c.l.b16 %v6443
    %v6477 = vunpack.c.l.b16 %v6444
    %v6478 = vunpack.c.l.b16 %v6445
    %v6479 = vunpack.c.l.b16 %v6446
    %v6480 = vunpack.c.l.b16 %v6447
    %v6481 = vunpack.c.l.b16 %v6448
    %v6482 = vunpack.c.l.b16 %v6449
    %v6483 = vunpack.c.l.b16 %v6450
    %v6484 = vunpack.c.l.b16 %v6451
    %v6485 = vunpack.c.l.b16 %v6452
    %v6486 = vunpack.c.l.b16 %v6453
    %v6487 = vunpack.c.l.b16 %v6454
    %v6488 = vpack.c.b16 %v6473, %v6472
    %v6489 = vpack.c.b16 %v6475, %v6474
    %v6490 = vpack.c.b16 %v6477, %v6476
    %v6491 = vpack.c.b16 %v6479, %v6478
    %v6492 = vpack.c.b16 %v6481, %v6480
    %v6493 = vpack.c.b16 %v6483, %v6482
    %v6494 = vpack.c.b16 %v6485, %v6484
    %v6495 = vpack.c.b16 %v6487, %v6486
    %6504 = vmatpush.bf16.msra.mxu0 %v6495
    %6505 = vmatpush.bf16.msra.mxu0 %v6494
    %6506 = vmatpush.bf16.msra.mxu0 %v6493
    %6507 = vmatpush.bf16.msra.mxu0 %v6492
    %6508 = vmatpush.bf16.msra.mxu0 %v6491
    %6509 = vmatpush.bf16.msra.mxu0 %v6490
    %6510 = vmatpush.bf16.msra.mxu0 %v6489
    %6511 = vmatpush.bf16.msra.mxu0 %v6488
    %6512 = vmatmul.bf16.gmra.mxu0 %v6438
    %v6513 = vpop.f32.mrf.mxu0
    %v6514 = vadd.f32 %v6455, %v6513
    %v6515 = vpop.f32.mrf.mxu0
    %6516 = vdwg.mxu0
    %6517 = vst [vmem:[#allocation9] sm:$0x3] %v6514
    // Predicated region
    $region54: #{bert_classifier_forward.1} parent=1 // pred_check
      _
    $region55: #{bert_classifier_forward.1} parent=1 // pred_check_branch
      %6519 = sbr.rel (0) target = $region57
    $region56: #{bert_classifier_forward.1} parent=1 // pred_region
      %6521 = vsyncadd [#allocation5], 0
      %s6523 = sshll.u32 [#allocation9], 4
      %s6524 = int_to_ptr.vmem [resolvable:$true] %s6523
      %s6525 = sshll.u32 %s10, 4
      %s6526 = int_to_ptr.hbm [resolvable:$true] %s6525
      %6528 = dma.vmem_to_hbm [thread:$0]  %s6524, 32, %s6526, [#allocation5]
    $region57: #{bert_classifier_forward.1} parent=1 // pred_fallthru
      _
    // Predicated region
    $region58: #{bert_classifier_forward.1} parent=1 // pred_check
      _
    $region59: #{bert_classifier_forward.1} parent=1 // pred_check_branch
      %6530 = sbr.rel (0) target = $region61
    $region60: #{bert_classifier_forward.1} parent=1 // pred_region
      %6532 = dma.done [#allocation5], 32
    $region61: #{bert_classifier_forward.1} parent=1 // pred_fallthru
      _
    %6533 = vsyncpa [#allocation4], 1
    %6534 = vsyncpa [#allocation7], 1
    %6535 = vsyncpa [#allocation5], 1

</llo_original>
